<compile_context>
chip_gen: v5e
topology: v5e:2x2
jax: 0.10.0
libtpu: 0.0.40
codegen_flags: <defaults>
</compile_context>

<pallas_src>
import functools

import jax
import jax.numpy as jnp
from jax.experimental import pallas as pl
from jax.experimental.pallas import tpu as pltpu


# ----------------------------------------------------------------------------
# Fused Block8 kernel (one grid step == one image, NHWC flattened to (H*W, C))
# ----------------------------------------------------------------------------
def _block8_kernel(x_ref, wf_ref, bf_ref, w11_ref, b11_ref, w12_ref, b12_ref,
                   wc0_ref, wc1_ref, bc_ref, lmask_ref, rmask_ref,
                   o_ref, ybuf, zbuf, *, width, apply_relu):
    HW = x_ref.shape[0]
    W = width
    f32 = jnp.float32

    # ---- fused branch0 & branch1[0] 1x1 convs (+ folded BN) + ReLU ----------
    xb = x_ref[...].astype(jnp.bfloat16)
    t = jnp.dot(xb, wf_ref[...], preferred_element_type=f32) + bf_ref[...]
    t = jnp.maximum(t, 0.0)
    x0 = t[:, 0:192]        # branch0 output        (HW, 192)
    y = t[:, 192:384]       # branch1[0] output     (HW, 192)

    # ---- branch1[1]: (1,3) conv, padding (0,1), as 3 shifted matmuls --------
    # ybuf layout: rows [8, 8+HW) hold y; 8 zero rows below / above give the
    # +-1 (width-direction) shifted views; row-boundary taps are masked.
    zero8 = jnp.zeros((8, 192), f32)
    ybuf[0:8, :] = zero8
    ybuf[HW + 8:HW + 16, :] = zero8
    ybuf[8:HW + 8, :] = y
    d_l = jnp.dot(ybuf[7:HW + 7, :].astype(jnp.bfloat16), w11_ref[0],
                  preferred_element_type=f32)          # tap kw=0 -> in[w-1]
    d_c = jnp.dot(y.astype(jnp.bfloat16), w11_ref[1],
                  preferred_element_type=f32)          # tap kw=1 -> in[w]
    d_r = jnp.dot(ybuf[9:HW + 9, :].astype(jnp.bfloat16), w11_ref[2],
                  preferred_element_type=f32)          # tap kw=2 -> in[w+1]
    z = lmask_ref[...] * d_l + d_c + rmask_ref[...] * d_r + b11_ref[...]
    z = jnp.maximum(z, 0.0)                            # (HW, 224)

    # ---- branch1[2]: (3,1) conv, padding (1,0), as 3 shifted matmuls --------
    # Height-direction shift is a whole-row (W) shift: the zero pads land
    # exactly on the h==0 / h==H-1 taps, so no masking is needed.
    zeroW = jnp.zeros((W, 224), f32)
    zbuf[0:W, :] = zeroW
    zbuf[W + HW:2 * W + HW, :] = zeroW
    zbuf[W:W + HW, :] = z
    e_u = jnp.dot(zbuf[0:HW, :].astype(jnp.bfloat16), w12_ref[0],
                  preferred_element_type=f32)          # tap kh=0 -> in[h-1]
    e_c = jnp.dot(z.astype(jnp.bfloat16), w12_ref[1],
                  preferred_element_type=f32)          # tap kh=1 -> in[h]
    e_d = jnp.dot(zbuf[2 * W:2 * W + HW, :].astype(jnp.bfloat16), w12_ref[2],
                  preferred_element_type=f32)          # tap kh=2 -> in[h+1]
    x1 = jnp.maximum(e_u + e_c + e_d + b12_ref[...], 0.0)   # (HW, 256)

    # ---- final 1x1 conv (bias & Block8 scale folded) + residual + ReLU ------
    # "cat" is never materialized: split c2 weight, two accumulating dots.
    acc = (jnp.dot(x0.astype(jnp.bfloat16), wc0_ref[...], preferred_element_type=f32)
           + jnp.dot(x1.astype(jnp.bfloat16), wc1_ref[...], preferred_element_type=f32)
           + bc_ref[...])
    out = acc + x_ref[...]                             # residual in f32
    if apply_relu:
        out = jnp.maximum(out, 0.0)
    o_ref[...] = out


# ----------------------------------------------------------------------------
# Parameter generation (PyTorch layout) + folding into kernel layout
# ----------------------------------------------------------------------------
def init_block8_raw_params(key):
    """Deterministic raw params with the same shapes as Block8.__init__."""
    keys = iter(jax.random.split(key, 32))

    def conv_w(cout, cin, kh, kw):
        return 0.02 * jax.random.normal(next(keys), (cout, cin, kh, kw), jnp.float32)

    def bn(c):
        return dict(
            gamma=1.0 + 0.1 * jax.random.normal(next(keys), (c,), jnp.float32),
            beta=0.1 * jax.random.normal(next(keys), (c,), jnp.float32),
            mean=0.1 * jax.random.normal(next(keys), (c,), jnp.float32),
            var=1.0 + 0.1 * jnp.abs(jax.random.normal(next(keys), (c,), jnp.float32)),
        )

    p = {}
    p["b0_w"] = conv_w(192, 2080, 1, 1);   p["b0_bn"] = bn(192)
    p["b1_0_w"] = conv_w(192, 2080, 1, 1); p["b1_0_bn"] = bn(192)
    p["b1_1_w"] = conv_w(224, 192, 1, 3);  p["b1_1_bn"] = bn(224)
    p["b1_2_w"] = conv_w(256, 224, 3, 1);  p["b1_2_bn"] = bn(256)
    p["c2_w"] = conv_w(2080, 448, 1, 1)
    p["c2_b"] = 0.02 * jax.random.normal(next(keys), (2080,), jnp.float32)
    return p


def _bn_fold(bnp, eps=1e-3):
    s = bnp["gamma"] / jnp.sqrt(bnp["var"] + eps)
    return s, bnp["beta"] - bnp["mean"] * s


def prepare_block8_params(raw, scale=1.0):
    """Fold eval-mode BN + residual `scale` into bf16 matmul weights."""
    s0, a0 = _bn_fold(raw["b0_bn"])
    s10, a10 = _bn_fold(raw["b1_0_bn"])
    s11, a11 = _bn_fold(raw["b1_1_bn"])
    s12, a12 = _bn_fold(raw["b1_2_bn"])

    # branch0 + branch1[0] fused 1x1 weights: (2080, 192+192)
    w0 = jnp.transpose(raw["b0_w"][:, :, 0, 0], (1, 0)) * s0[None, :]
    w10 = jnp.transpose(raw["b1_0_w"][:, :, 0, 0], (1, 0)) * s10[None, :]
    wf = jnp.concatenate([w0, w10], axis=1).astype(jnp.bfloat16)         # (2080,384)
    bf = jnp.concatenate([a0, a10]).reshape(1, 384).astype(jnp.float32)

    # (1,3) conv: torch (224,192,1,3) -> per-tap (192,224), taps stacked first
    w11 = jnp.transpose(raw["b1_1_w"][:, :, 0, :], (2, 1, 0)) * s11[None, None, :]
    w11 = w11.astype(jnp.bfloat16)                                       # (3,192,224)
    b11 = a11.reshape(1, 224).astype(jnp.float32)

    # (3,1) conv: torch (256,224,3,1) -> per-tap (224,256)
    w12 = jnp.transpose(raw["b1_2_w"][:, :, :, 0], (2, 1, 0)) * s12[None, None, :]
    w12 = w12.astype(jnp.bfloat16)                                       # (3,224,256)
    b12 = a12.reshape(1, 256).astype(jnp.float32)

    # final 1x1 conv: fold Block8 scale, split by cat order [x0(192) | x1(256)]
    wc = jnp.transpose(raw["c2_w"][:, :, 0, 0], (1, 0)) * scale          # (448,2080)
    wc0 = wc[:192].astype(jnp.bfloat16)
    wc1 = wc[192:].astype(jnp.bfloat16)
    bc = (raw["c2_b"] * scale).reshape(1, 2080).astype(jnp.float32)

    return dict(wf=wf, bf=bf, w11=w11, b11=b11, w12=w12, b12=b12,
                wc0=wc0, wc1=wc1, bc=bc)


# ----------------------------------------------------------------------------
# Forward wrapper (NCHW in / NCHW out, like the PyTorch module)
# ----------------------------------------------------------------------------
def block8_forward(x_nchw, kp, no_relu=False):
    B, C, H, W = x_nchw.shape
    assert C == 2080, "Block8 is defined for 2080 input channels"
    HW = H * W
    assert HW % 8 == 0, "H*W must be a multiple of 8 for the per-image tile"

    # NCHW -> NHWC -> (B*H*W, C).  Matmuls keep channels on the lane axis.
    x_mat = jnp.transpose(x_nchw, (0, 2, 3, 1)).astype(jnp.float32).reshape(B * HW, C)

    # Width-boundary masks for the (1,3) conv taps (shift by +-1 crosses rows).
    w_idx = jnp.arange(HW, dtype=jnp.int32) % W
    lmask = (w_idx != 0).astype(jnp.float32).reshape(HW, 1)
    rmask = (w_idx != W - 1).astype(jnp.float32).reshape(HW, 1)

    kern = functools.partial(_block8_kernel, width=W, apply_relu=not no_relu)
    c2 = lambda b: (0, 0)
    c3 = lambda b: (0, 0, 0)

    out_mat = pl.pallas_call(
        kern,
        out_shape=jax.ShapeDtypeStruct((B * HW, C), jnp.float32),
        grid=(B,),
        in_specs=[
            pl.BlockSpec((HW, C), lambda b: (b, 0)),      # x (per-image tile)
            pl.BlockSpec((C, 384), c2),                   # wf   (resident)
            pl.BlockSpec((1, 384), c2),                   # bf
            pl.BlockSpec((3, 192, 224), c3),              # w11
            pl.BlockSpec((1, 224), c2),                   # b11
            pl.BlockSpec((3, 224, 256), c3),              # w12
            pl.BlockSpec((1, 256), c2),                   # b12
            pl.BlockSpec((192, C), c2),                   # wc0
            pl.BlockSpec((256, C), c2),                   # wc1
            pl.BlockSpec((1, C), c2),                     # bc
            pl.BlockSpec((HW, 1), c2),                    # lmask
            pl.BlockSpec((HW, 1), c2),                    # rmask
        ],
        out_specs=pl.BlockSpec((HW, C), lambda b: (b, 0)),
        scratch_shapes=[
            pltpu.VMEM((HW + 16, 192), jnp.float32),      # padded y (1x3 taps)
            pltpu.VMEM((HW + 2 * W, 224), jnp.float32),   # padded z (3x1 taps)
        ],
        compiler_params=pltpu.CompilerParams(
            dimension_semantics=("parallel",),            # shard images on v7x TCs
            vmem_limit_bytes=32 * 1024 * 1024,
        ),
    )(x_mat, kp["wf"], kp["bf"], kp["w11"], kp["b11"], kp["w12"], kp["b12"],
      kp["wc0"], kp["wc1"], kp["bc"], lmask, rmask)

    out = out_mat.reshape(B, H, W, C)
    return jnp.transpose(out, (0, 3, 1, 2))               # NHWC -> NCHW


# ----------------------------------------------------------------------------
# Pure-JAX reference (eval-mode BN), for a numerical sanity check
# ----------------------------------------------------------------------------
def block8_reference(x_nchw, raw, scale=1.0, no_relu=False, eps=1e-3):
    x = jnp.transpose(x_nchw, (0, 2, 3, 1)).astype(jnp.float32)

    def conv(h, w_torch, padding):
        w = jnp.transpose(w_torch, (2, 3, 1, 0))          # OIHW -> HWIO
        return jax.lax.conv_general_dilated(
            h, w, window_strides=(1, 1), padding=padding,
            dimension_numbers=("NHWC", "HWIO", "NHWC"),
            precision=jax.lax.Precision.HIGHEST)

    def bn_relu(h, p):
        s = p["gamma"] / jnp.sqrt(p["var"] + eps)
        return jnp.maximum(h * s + (p["beta"] - p["mean"] * s), 0.0)

    x0 = bn_relu(conv(x, raw["b0_w"], [(0, 0), (0, 0)]), raw["b0_bn"])
    y = bn_relu(conv(x, raw["b1_0_w"], [(0, 0), (0, 0)]), raw["b1_0_bn"])
    y = bn_relu(conv(y, raw["b1_1_w"], [(0, 0), (1, 1)]), raw["b1_1_bn"])
    x1 = bn_relu(conv(y, raw["b1_2_w"], [(1, 1), (0, 0)]), raw["b1_2_bn"])
    out = conv(jnp.concatenate([x0, x1], axis=-1), raw["c2_w"], [(0, 0), (0, 0)])
    out = (out + raw["c2_b"]) * scale + x
    if not no_relu:
        out = jnp.maximum(out, 0.0)
    return jnp.transpose(out, (0, 3, 1, 2))


# ----------------------------------------------------------------------------
if __name__ == "__main__":
    key = jax.random.PRNGKey(0)
    kparam, kx = jax.random.split(key)

    scale = 0.2
    raw = init_block8_raw_params(kparam)
    params = prepare_block8_params(raw, scale=scale)

    # Block8 operates on 2080-channel 8x8 feature maps; channels are fixed by
    # the module, so only batch/spatial are kept small.
    x = jax.random.normal(kx, (2, 2080, 8, 8), jnp.float32)   # NCHW

    fwd = jax.jit(functools.partial(block8_forward, no_relu=False))
    out = jax.block_until_ready(fwd(x, params))

    assert out.shape == (2, 2080, 8, 8)
    assert out.dtype == jnp.float32

    # Sanity check against the f32 XLA reference (bf16 matmul tolerance).
    ref = jax.block_until_ready(block8_reference(x, raw, scale=scale, no_relu=False))
    max_err = float(jnp.max(jnp.abs(out - ref)))
    assert max_err < 2e-2, f"max abs err {max_err}"

    print("KERNEL_OK")
</pallas_src>

<mosaic_0001>
module attributes {stable_mosaic.version = 11 : i64} {
  func.func @_block8_kernel(%arg0: i32, %arg1: memref<64x2080xf32, #tpu.memory_space<vmem>>, %arg2: memref<2080x384xbf16, #tpu.memory_space<vmem>>, %arg3: memref<1x384xf32, #tpu.memory_space<vmem>>, %arg4: memref<3x192x224xbf16, #tpu.memory_space<vmem>>, %arg5: memref<1x224xf32, #tpu.memory_space<vmem>>, %arg6: memref<3x224x256xbf16, #tpu.memory_space<vmem>>, %arg7: memref<1x256xf32, #tpu.memory_space<vmem>>, %arg8: memref<192x2080xbf16, #tpu.memory_space<vmem>>, %arg9: memref<256x2080xbf16, #tpu.memory_space<vmem>>, %arg10: memref<1x2080xf32, #tpu.memory_space<vmem>>, %arg11: memref<64x1xf32, #tpu.memory_space<vmem>>, %arg12: memref<64x1xf32, #tpu.memory_space<vmem>>, %arg13: memref<64x2080xf32, #tpu.memory_space<vmem>>, %arg14: memref<80x192xf32, #tpu.memory_space<vmem>>, %arg15: memref<80x224xf32, #tpu.memory_space<vmem>>) attributes {dimension_semantics = [#tpu.dimension_semantics<parallel>], iteration_bounds = array<i64: 2>, scalar_prefetch = 0 : i64, scratch_operands = 2 : i64, tpu.core_type = #tpu.core_type<tc>, window_params = [{transform_indices = @transform_0, window_bounds = array<i64: 64, 2080>}, {pipeline_mode = #tpu.pipeline_mode<synchronous>, transform_indices = @transform_1, window_bounds = array<i64: 2080, 384>}, {pipeline_mode = #tpu.pipeline_mode<synchronous>, transform_indices = @transform_2, window_bounds = array<i64: 1, 384>}, {pipeline_mode = #tpu.pipeline_mode<synchronous>, transform_indices = @transform_3, window_bounds = array<i64: 3, 192, 224>}, {pipeline_mode = #tpu.pipeline_mode<synchronous>, transform_indices = @transform_4, window_bounds = array<i64: 1, 224>}, {pipeline_mode = #tpu.pipeline_mode<synchronous>, transform_indices = @transform_5, window_bounds = array<i64: 3, 224, 256>}, {pipeline_mode = #tpu.pipeline_mode<synchronous>, transform_indices = @transform_6, window_bounds = array<i64: 1, 256>}, {pipeline_mode = #tpu.pipeline_mode<synchronous>, transform_indices = @transform_7, window_bounds = array<i64: 192, 2080>}, {pipeline_mode = #tpu.pipeline_mode<synchronous>, transform_indices = @transform_8, window_bounds = array<i64: 256, 2080>}, {pipeline_mode = #tpu.pipeline_mode<synchronous>, transform_indices = @transform_9, window_bounds = array<i64: 1, 2080>}, {pipeline_mode = #tpu.pipeline_mode<synchronous>, transform_indices = @transform_10, window_bounds = array<i64: 64, 1>}, {pipeline_mode = #tpu.pipeline_mode<synchronous>, transform_indices = @transform_11, window_bounds = array<i64: 64, 1>}, {transform_indices = @transform_12, window_bounds = array<i64: 64, 2080>}]} {
    %c0 = arith.constant 0 : index
    %c0_0 = arith.constant 0 : index
    %0 = vector.load %arg1[%c0, %c0_0] : memref<64x2080xf32, #tpu.memory_space<vmem>>, vector<64x2080xf32>
    %1 = arith.truncf %0 : vector<64x2080xf32> to vector<64x2080xbf16>
    %c0_1 = arith.constant 0 : index
    %c0_2 = arith.constant 0 : index
    %2 = vector.load %arg2[%c0_1, %c0_2] : memref<2080x384xbf16, #tpu.memory_space<vmem>>, vector<2080x384xbf16>
    %cst = arith.constant dense<0.000000e+00> : vector<64x384xf32>
    %3 = tpu.matmul %1, %2, %cst {dimension_numbers = #tpu.dot_dimension_numbers<[1], [0], [0], [1], [0, 0, 1, 1], [], []>} : vector<64x2080xbf16>, vector<2080x384xbf16>, vector<64x384xf32> -> vector<64x384xf32>
    %c0_3 = arith.constant 0 : index
    %c0_4 = arith.constant 0 : index
    %4 = vector.load %arg3[%c0_3, %c0_4] : memref<1x384xf32, #tpu.memory_space<vmem>>, vector<1x384xf32>
    %5 = vector.broadcast %4 : vector<1x384xf32> to vector<64x384xf32>
    %6 = arith.addf %3, %5 : vector<64x384xf32>
    %cst_5 = arith.constant 0.000000e+00 : f32
    %7 = vector.broadcast %cst_5 : f32 to vector<64x384xf32>
    %8 = arith.maximumf %6, %7 : vector<64x384xf32>
    %9 = vector.extract_strided_slice %8 {offsets = [0, 0], sizes = [64, 192], strides = [1, 1]} : vector<64x384xf32> to vector<64x192xf32>
    %10 = vector.extract_strided_slice %8 {offsets = [0, 192], sizes = [64, 192], strides = [1, 1]} : vector<64x384xf32> to vector<64x192xf32>
    %cst_6 = arith.constant 0.000000e+00 : f32
    %11 = vector.broadcast %cst_6 : f32 to vector<8x192xf32>
    %c0_7 = arith.constant 0 : index
    %c0_8 = arith.constant 0 : index
    %12 = vector.load %arg14[%c0_7, %c0_8] : memref<80x192xf32, #tpu.memory_space<vmem>>, vector<8x192xf32>
    tpu.vector_store %arg14[%c0_7, %c0_8], %11 {strides = array<i32>} : memref<80x192xf32, #tpu.memory_space<vmem>>, vector<8x192xf32>,
    %c72 = arith.constant 72 : index
    %c0_9 = arith.constant 0 : index
    %13 = vector.load %arg14[%c72, %c0_9] : memref<80x192xf32, #tpu.memory_space<vmem>>, vector<8x192xf32>
    tpu.vector_store %arg14[%c72, %c0_9], %11 {strides = array<i32>} : memref<80x192xf32, #tpu.memory_space<vmem>>, vector<8x192xf32>,
    %c8 = arith.constant 8 : index
    %c0_10 = arith.constant 0 : index
    %14 = vector.load %arg14[%c8, %c0_10] : memref<80x192xf32, #tpu.memory_space<vmem>>, vector<64x192xf32>
    tpu.vector_store %arg14[%c8, %c0_10], %10 {strides = array<i32>} : memref<80x192xf32, #tpu.memory_space<vmem>>, vector<64x192xf32>,
    %c7 = arith.constant 7 : index
    %c0_11 = arith.constant 0 : index
    %15 = vector.load %arg14[%c7, %c0_11] : memref<80x192xf32, #tpu.memory_space<vmem>>, vector<64x192xf32>
    %16 = arith.truncf %15 : vector<64x192xf32> to vector<64x192xbf16>
    %c0_12 = arith.constant 0 : index
    %c0_13 = arith.constant 0 : index
    %c0_14 = arith.constant 0 : index
    %17 = vector.load %arg4[%c0_12, %c0_13, %c0_14] : memref<3x192x224xbf16, #tpu.memory_space<vmem>>, vector<1x192x224xbf16>
    %18 = vector.shape_cast %17 : vector<1x192x224xbf16> to vector<192x224xbf16>
    %cst_15 = arith.constant dense<0.000000e+00> : vector<64x224xf32>
    %19 = tpu.matmul %16, %18, %cst_15 {dimension_numbers = #tpu.dot_dimension_numbers<[1], [0], [0], [1], [0, 0, 1, 1], [], []>} : vector<64x192xbf16>, vector<192x224xbf16>, vector<64x224xf32> -> vector<64x224xf32>
    %20 = arith.truncf %10 : vector<64x192xf32> to vector<64x192xbf16>
    %c1 = arith.constant 1 : index
    %c0_16 = arith.constant 0 : index
    %c0_17 = arith.constant 0 : index
    %21 = vector.load %arg4[%c1, %c0_16, %c0_17] : memref<3x192x224xbf16, #tpu.memory_space<vmem>>, vector<1x192x224xbf16>
    %22 = vector.shape_cast %21 : vector<1x192x224xbf16> to vector<192x224xbf16>
    %cst_18 = arith.constant dense<0.000000e+00> : vector<64x224xf32>
    %23 = tpu.matmul %20, %22, %cst_18 {dimension_numbers = #tpu.dot_dimension_numbers<[1], [0], [0], [1], [0, 0, 1, 1], [], []>} : vector<64x192xbf16>, vector<192x224xbf16>, vector<64x224xf32> -> vector<64x224xf32>
    %c9 = arith.constant 9 : index
    %c0_19 = arith.constant 0 : index
    %24 = vector.load %arg14[%c9, %c0_19] : memref<80x192xf32, #tpu.memory_space<vmem>>, vector<64x192xf32>
    %25 = arith.truncf %24 : vector<64x192xf32> to vector<64x192xbf16>
    %c2 = arith.constant 2 : index
    %c0_20 = arith.constant 0 : index
    %c0_21 = arith.constant 0 : index
    %26 = vector.load %arg4[%c2, %c0_20, %c0_21] : memref<3x192x224xbf16, #tpu.memory_space<vmem>>, vector<1x192x224xbf16>
    %27 = vector.shape_cast %26 : vector<1x192x224xbf16> to vector<192x224xbf16>
    %cst_22 = arith.constant dense<0.000000e+00> : vector<64x224xf32>
    %28 = tpu.matmul %25, %27, %cst_22 {dimension_numbers = #tpu.dot_dimension_numbers<[1], [0], [0], [1], [0, 0, 1, 1], [], []>} : vector<64x192xbf16>, vector<192x224xbf16>, vector<64x224xf32> -> vector<64x224xf32>
    %c0_23 = arith.constant 0 : index
    %c0_24 = arith.constant 0 : index
    %29 = vector.load %arg11[%c0_23, %c0_24] : memref<64x1xf32, #tpu.memory_space<vmem>>, vector<64x1xf32>
    %30 = vector.broadcast %29 : vector<64x1xf32> to vector<64x224xf32>
    %31 = arith.mulf %30, %19 : vector<64x224xf32>
    %32 = arith.addf %31, %23 : vector<64x224xf32>
    %c0_25 = arith.constant 0 : index
    %c0_26 = arith.constant 0 : index
    %33 = vector.load %arg12[%c0_25, %c0_26] : memref<64x1xf32, #tpu.memory_space<vmem>>, vector<64x1xf32>
    %34 = vector.broadcast %33 : vector<64x1xf32> to vector<64x224xf32>
    %35 = arith.mulf %34, %28 : vector<64x224xf32>
    %36 = arith.addf %32, %35 : vector<64x224xf32>
    %c0_27 = arith.constant 0 : index
    %c0_28 = arith.constant 0 : index
    %37 = vector.load %arg5[%c0_27, %c0_28] : memref<1x224xf32, #tpu.memory_space<vmem>>, vector<1x224xf32>
    %38 = vector.broadcast %37 : vector<1x224xf32> to vector<64x224xf32>
    %39 = arith.addf %36, %38 : vector<64x224xf32>
    %cst_29 = arith.constant 0.000000e+00 : f32
    %40 = vector.broadcast %cst_29 : f32 to vector<64x224xf32>
    %41 = arith.maximumf %39, %40 : vector<64x224xf32>
    %cst_30 = arith.constant 0.000000e+00 : f32
    %42 = vector.broadcast %cst_30 : f32 to vector<8x224xf32>
    %c0_31 = arith.constant 0 : index
    %c0_32 = arith.constant 0 : index
    %43 = vector.load %arg15[%c0_31, %c0_32] : memref<80x224xf32, #tpu.memory_space<vmem>>, vector<8x224xf32>
    tpu.vector_store %arg15[%c0_31, %c0_32], %42 {strides = array<i32>} : memref<80x224xf32, #tpu.memory_space<vmem>>, vector<8x224xf32>,
    %c72_33 = arith.constant 72 : index
    %c0_34 = arith.constant 0 : index
    %44 = vector.load %arg15[%c72_33, %c0_34] : memref<80x224xf32, #tpu.memory_space<vmem>>, vector<8x224xf32>
    tpu.vector_store %arg15[%c72_33, %c0_34], %42 {strides = array<i32>} : memref<80x224xf32, #tpu.memory_space<vmem>>, vector<8x224xf32>,
    %c8_35 = arith.constant 8 : index
    %c0_36 = arith.constant 0 : index
    %45 = vector.load %arg15[%c8_35, %c0_36] : memref<80x224xf32, #tpu.memory_space<vmem>>, vector<64x224xf32>
    tpu.vector_store %arg15[%c8_35, %c0_36], %41 {strides = array<i32>} : memref<80x224xf32, #tpu.memory_space<vmem>>, vector<64x224xf32>,
    %c0_37 = arith.constant 0 : index
    %c0_38 = arith.constant 0 : index
    %46 = vector.load %arg15[%c0_37, %c0_38] : memref<80x224xf32, #tpu.memory_space<vmem>>, vector<64x224xf32>
    %47 = arith.truncf %46 : vector<64x224xf32> to vector<64x224xbf16>
    %c0_39 = arith.constant 0 : index
    %c0_40 = arith.constant 0 : index
    %c0_41 = arith.constant 0 : index
    %48 = vector.load %arg6[%c0_39, %c0_40, %c0_41] : memref<3x224x256xbf16, #tpu.memory_space<vmem>>, vector<1x224x256xbf16>
    %49 = vector.shape_cast %48 : vector<1x224x256xbf16> to vector<224x256xbf16>
    %cst_42 = arith.constant dense<0.000000e+00> : vector<64x256xf32>
    %50 = tpu.matmul %47, %49, %cst_42 {dimension_numbers = #tpu.dot_dimension_numbers<[1], [0], [0], [1], [0, 0, 1, 1], [], []>} : vector<64x224xbf16>, vector<224x256xbf16>, vector<64x256xf32> -> vector<64x256xf32>
    %51 = arith.truncf %41 : vector<64x224xf32> to vector<64x224xbf16>
    %c1_43 = arith.constant 1 : index
    %c0_44 = arith.constant 0 : index
    %c0_45 = arith.constant 0 : index
    %52 = vector.load %arg6[%c1_43, %c0_44, %c0_45] : memref<3x224x256xbf16, #tpu.memory_space<vmem>>, vector<1x224x256xbf16>
    %53 = vector.shape_cast %52 : vector<1x224x256xbf16> to vector<224x256xbf16>
    %cst_46 = arith.constant dense<0.000000e+00> : vector<64x256xf32>
    %54 = tpu.matmul %51, %53, %cst_46 {dimension_numbers = #tpu.dot_dimension_numbers<[1], [0], [0], [1], [0, 0, 1, 1], [], []>} : vector<64x224xbf16>, vector<224x256xbf16>, vector<64x256xf32> -> vector<64x256xf32>
    %c16 = arith.constant 16 : index
    %c0_47 = arith.constant 0 : index
    %55 = vector.load %arg15[%c16, %c0_47] : memref<80x224xf32, #tpu.memory_space<vmem>>, vector<64x224xf32>
    %56 = arith.truncf %55 : vector<64x224xf32> to vector<64x224xbf16>
    %c2_48 = arith.constant 2 : index
    %c0_49 = arith.constant 0 : index
    %c0_50 = arith.constant 0 : index
    %57 = vector.load %arg6[%c2_48, %c0_49, %c0_50] : memref<3x224x256xbf16, #tpu.memory_space<vmem>>, vector<1x224x256xbf16>
    %58 = vector.shape_cast %57 : vector<1x224x256xbf16> to vector<224x256xbf16>
    %cst_51 = arith.constant dense<0.000000e+00> : vector<64x256xf32>
    %59 = tpu.matmul %56, %58, %cst_51 {dimension_numbers = #tpu.dot_dimension_numbers<[1], [0], [0], [1], [0, 0, 1, 1], [], []>} : vector<64x224xbf16>, vector<224x256xbf16>, vector<64x256xf32> -> vector<64x256xf32>
    %60 = arith.addf %50, %54 : vector<64x256xf32>
    %61 = arith.addf %60, %59 : vector<64x256xf32>
    %c0_52 = arith.constant 0 : index
    %c0_53 = arith.constant 0 : index
    %62 = vector.load %arg7[%c0_52, %c0_53] : memref<1x256xf32, #tpu.memory_space<vmem>>, vector<1x256xf32>
    %63 = vector.broadcast %62 : vector<1x256xf32> to vector<64x256xf32>
    %64 = arith.addf %61, %63 : vector<64x256xf32>
    %cst_54 = arith.constant 0.000000e+00 : f32
    %65 = vector.broadcast %cst_54 : f32 to vector<64x256xf32>
    %66 = arith.maximumf %64, %65 : vector<64x256xf32>
    %67 = arith.truncf %9 : vector<64x192xf32> to vector<64x192xbf16>
    %c0_55 = arith.constant 0 : index
    %c0_56 = arith.constant 0 : index
    %68 = vector.load %arg8[%c0_55, %c0_56] : memref<192x2080xbf16, #tpu.memory_space<vmem>>, vector<192x2080xbf16>
    %cst_57 = arith.constant dense<0.000000e+00> : vector<64x2080xf32>
    %69 = tpu.matmul %67, %68, %cst_57 {dimension_numbers = #tpu.dot_dimension_numbers<[1], [0], [0], [1], [0, 0, 1, 1], [], []>} : vector<64x192xbf16>, vector<192x2080xbf16>, vector<64x2080xf32> -> vector<64x2080xf32>
    %70 = arith.truncf %66 : vector<64x256xf32> to vector<64x256xbf16>
    %c0_58 = arith.constant 0 : index
    %c0_59 = arith.constant 0 : index
    %71 = vector.load %arg9[%c0_58, %c0_59] : memref<256x2080xbf16, #tpu.memory_space<vmem>>, vector<256x2080xbf16>
    %cst_60 = arith.constant dense<0.000000e+00> : vector<64x2080xf32>
    %72 = tpu.matmul %70, %71, %cst_60 {dimension_numbers = #tpu.dot_dimension_numbers<[1], [0], [0], [1], [0, 0, 1, 1], [], []>} : vector<64x256xbf16>, vector<256x2080xbf16>, vector<64x2080xf32> -> vector<64x2080xf32>
    %73 = arith.addf %69, %72 : vector<64x2080xf32>
    %c0_61 = arith.constant 0 : index
    %c0_62 = arith.constant 0 : index
    %74 = vector.load %arg10[%c0_61, %c0_62] : memref<1x2080xf32, #tpu.memory_space<vmem>>, vector<1x2080xf32>
    %75 = vector.broadcast %74 : vector<1x2080xf32> to vector<64x2080xf32>
    %76 = arith.addf %73, %75 : vector<64x2080xf32>
    %c0_63 = arith.constant 0 : index
    %c0_64 = arith.constant 0 : index
    %77 = vector.load %arg1[%c0_63, %c0_64] : memref<64x2080xf32, #tpu.memory_space<vmem>>, vector<64x2080xf32>
    %78 = arith.addf %76, %77 : vector<64x2080xf32>
    %cst_65 = arith.constant 0.000000e+00 : f32
    %79 = vector.broadcast %cst_65 : f32 to vector<64x2080xf32>
    %80 = arith.maximumf %78, %79 : vector<64x2080xf32>
    %c0_66 = arith.constant 0 : index
    %c0_67 = arith.constant 0 : index
    %81 = vector.load %arg13[%c0_66, %c0_67] : memref<64x2080xf32, #tpu.memory_space<vmem>>, vector<64x2080xf32>
    tpu.vector_store %arg13[%c0_66, %c0_67], %80 {strides = array<i32>} : memref<64x2080xf32, #tpu.memory_space<vmem>>, vector<64x2080xf32>,
    return
  }
  func.func @transform_0(%arg0: i32) -> (i32, i32) {
    %c0_i32 = arith.constant 0 : i32
    %c0_i32_0 = arith.constant 0 : i32
    return %arg0, %c0_i32 : i32, i32
  }
  func.func @transform_1(%arg0: i32) -> (i32, i32) {
    %c0_i32 = arith.constant 0 : i32
    %c0_i32_0 = arith.constant 0 : i32
    %c0_i32_1 = arith.constant 0 : i32
    return %c0_i32, %c0_i32_0 : i32, i32
  }
  func.func @transform_2(%arg0: i32) -> (i32, i32) {
    %c0_i32 = arith.constant 0 : i32
    %c0_i32_0 = arith.constant 0 : i32
    %c0_i32_1 = arith.constant 0 : i32
    return %c0_i32, %c0_i32_0 : i32, i32
  }
  func.func @transform_3(%arg0: i32) -> (i32, i32, i32) {
    %c0_i32 = arith.constant 0 : i32
    %c0_i32_0 = arith.constant 0 : i32
    %c0_i32_1 = arith.constant 0 : i32
    %c0_i32_2 = arith.constant 0 : i32
    return %c0_i32, %c0_i32_0, %c0_i32_1 : i32, i32, i32
  }
  func.func @transform_4(%arg0: i32) -> (i32, i32) {
    %c0_i32 = arith.constant 0 : i32
    %c0_i32_0 = arith.constant 0 : i32
    %c0_i32_1 = arith.constant 0 : i32
    return %c0_i32, %c0_i32_0 : i32, i32
  }
  func.func @transform_5(%arg0: i32) -> (i32, i32, i32) {
    %c0_i32 = arith.constant 0 : i32
    %c0_i32_0 = arith.constant 0 : i32
    %c0_i32_1 = arith.constant 0 : i32
    %c0_i32_2 = arith.constant 0 : i32
    return %c0_i32, %c0_i32_0, %c0_i32_1 : i32, i32, i32
  }
  func.func @transform_6(%arg0: i32) -> (i32, i32) {
    %c0_i32 = arith.constant 0 : i32
    %c0_i32_0 = arith.constant 0 : i32
    %c0_i32_1 = arith.constant 0 : i32
    return %c0_i32, %c0_i32_0 : i32, i32
  }
  func.func @transform_7(%arg0: i32) -> (i32, i32) {
    %c0_i32 = arith.constant 0 : i32
    %c0_i32_0 = arith.constant 0 : i32
    %c0_i32_1 = arith.constant 0 : i32
    return %c0_i32, %c0_i32_0 : i32, i32
  }
  func.func @transform_8(%arg0: i32) -> (i32, i32) {
    %c0_i32 = arith.constant 0 : i32
    %c0_i32_0 = arith.constant 0 : i32
    %c0_i32_1 = arith.constant 0 : i32
    return %c0_i32, %c0_i32_0 : i32, i32
  }
  func.func @transform_9(%arg0: i32) -> (i32, i32) {
    %c0_i32 = arith.constant 0 : i32
    %c0_i32_0 = arith.constant 0 : i32
    %c0_i32_1 = arith.constant 0 : i32
    return %c0_i32, %c0_i32_0 : i32, i32
  }
  func.func @transform_10(%arg0: i32) -> (i32, i32) {
    %c0_i32 = arith.constant 0 : i32
    %c0_i32_0 = arith.constant 0 : i32
    %c0_i32_1 = arith.constant 0 : i32
    return %c0_i32, %c0_i32_0 : i32, i32
  }
  func.func @transform_11(%arg0: i32) -> (i32, i32) {
    %c0_i32 = arith.constant 0 : i32
    %c0_i32_0 = arith.constant 0 : i32
    %c0_i32_1 = arith.constant 0 : i32
    return %c0_i32, %c0_i32_0 : i32, i32
  }
  func.func @transform_12(%arg0: i32) -> (i32, i32) {
    %c0_i32 = arith.constant 0 : i32
    %c0_i32_0 = arith.constant 0 : i32
    return %arg0, %c0_i32 : i32, i32
  }
}

</mosaic_0001>

<llo_original>
// kernel: block8_forward.1
$region0: #{block8_forward.1}
  #allocation0 [shape = 'u32[]', space=smem, size = 0x4, offset = 0x4, fixed_abs, tag = 'smem constant byte address 0x4 - core index']
  #allocation1 [shape = 'u32[72,128]{1,0:T(1,128)}', space=vmem, size = 0x9000, scoped, tag = 'internal scratch']
  #allocation2 [shape = 'f32[80,192]{1,0:T(8,128)}', space=vmem, size = 0x14000, scoped, tag = 'scratch operand']
  #allocation3 [shape = 'f32[80,224]{1,0:T(8,128)}', space=vmem, size = 0x14000, scoped, tag = 'scratch operand']
  %s0 = inlined_call_operand.hbm [shape: f32[128,2080], index: 0, kind: input, shape index: {}]
  %s1 = inlined_call_operand.vmem [shape: bf16[2080,384], index: 1, kind: input, shape index: {}]
  %s2 = inlined_call_operand.hbm [shape: f32[1,384], index: 2, kind: input, shape index: {}]
  %s3 = inlined_call_operand.vmem [shape: bf16[3,192,224], index: 3, kind: input, shape index: {}]
  %s4 = inlined_call_operand.hbm [shape: f32[1,224], index: 4, kind: input, shape index: {}]
  %s5 = inlined_call_operand.vmem [shape: bf16[3,224,256], index: 5, kind: input, shape index: {}]
  %s6 = inlined_call_operand.hbm [shape: f32[1,256], index: 6, kind: input, shape index: {}]
  %s7 = inlined_call_operand.hbm [shape: bf16[192,2080], index: 7, kind: input, shape index: {}]
  %s8 = inlined_call_operand.vmem [shape: bf16[256,2080], index: 8, kind: input, shape index: {}]
  %s9 = inlined_call_operand.vmem [shape: f32[1,2080], index: 9, kind: input, shape index: {}]
  %s10 = inlined_call_operand.vmem [shape: f32[64,1], index: 10, kind: input, shape index: {}]
  %s11 = inlined_call_operand.vmem [shape: f32[64,1], index: 11, kind: input, shape index: {}]
  %s12 = inlined_call_operand.hbm [shape: f32[128,2080], index: 12, kind: output, shape index: {}]
  %s13 = sld [smem:[#allocation0]]
  $region101: #{block8_forward.1} parent=0
    _
  %s15 = ssub.s32 1, %s13
  %s16 = scalar_select 0, %s15, %s13
  $region1: #{block8_forward.1} parent=0
    #allocation4 [shape = 'u8[1114112]{0}', space=vmem, size = 0x110000, scoped, tag = 'input window, operand 0']
    #allocation5 [shape = 's32[2]{0}', space=sflag, size = 0x8, scoped, tag = 'scoped memory for block8_forward.1']
    #allocation6 [shape = 's32[2]{0}', space=sflag, size = 0x8, scoped, tag = 'scoped memory for block8_forward.1']
    #allocation7 [shape = 'u8[1536]{0}', space=vmem, size = 0x800, scoped, tag = 'input window, operand 2, single buffered']
    #allocation8 [shape = 's32[1]{0}', space=sflag, size = 0x4, scoped, tag = 'scoped memory for block8_forward.1']
    #allocation9 [shape = 'u8[1024]{0}', space=vmem, size = 0x400, scoped, tag = 'input window, operand 4, single buffered']
    #allocation10 [shape = 'u8[1024]{0}', space=vmem, size = 0x400, scoped, tag = 'input window, operand 6, single buffered']
    #allocation11 [shape = 's32[1]{0}', space=sflag, size = 0x4, scoped, tag = 'scoped memory for block8_forward.1']
    #allocation12 [shape = 'u8[835584]{0}', space=vmem, size = 0xcc000, scoped, tag = 'input window, operand 7, single buffered']
    #allocation13 [shape = 'u8[1114112]{0}', space=vmem, size = 0x110000, scoped, tag = 'output window, operand 0']
    %17 = vsyncpa [#allocation5], 0
    %s18 = scalar_lea.sflag [#allocation5], 1
    %19 = vsyncpa %s18, 0
    %20 = vsyncpa [#allocation8], 0
    %21 = vsyncpa [#allocation11], 0
    %22 = vsyncpa [#allocation6], 0
    %s23 = scalar_lea.sflag [#allocation6], 1
    %24 = vsyncpa %s23, 0
    loop: start=0, step=1, limit=4
    $region2: #{block8_forward.1} parent=1 // loop_pre_header
      _
    $region3: #{block8_forward.1} parent=1 // loop_header
      %s26 = sphi 0, %s30
      %p27 = scmp.ge.s32.totalorder %s26, 4
      %s36 = sphi 0, %s38
      %s39 = sphi 0, %s36
      %s40 = sphi 0, %s39
      %s56 = sphi 0, %s40
      %s60 = sphi 0, %s60
      %s62 = sphi 0, %s60
      %s63 = sphi 0, %s62
      %s77 = sphi 0, %s63
      %s81 = sphi 0, %s81
      %s83 = sphi 0, %s81
      %s84 = sphi 0, %s83
      %s98 = sphi 0, %s84
      %s102 = sphi 0, %s102
      %s104 = sphi 0, %s102
      %s105 = sphi 0, %s104
      %s119 = sphi 0, %s105
      %s123 = sphi 0, %s123
      %s125 = sphi 0, %s123
      %s126 = sphi 0, %s125
      %s140 = sphi 0, %s126
      %s144 = sphi 0, %s144
      %s146 = sphi 0, %s144
      %s147 = sphi 0, %s146
      %s161 = sphi 0, %s147
      %s165 = sphi 0, %s165
      %s167 = sphi 0, %s165
      %s168 = sphi 0, %s167
      %s182 = sphi 0, %s168
      %s186 = sphi 0, %s186
      %s188 = sphi 0, %s186
      %s189 = sphi 0, %s188
      %s203 = sphi 0, %s189
      %s207 = sphi 0, %s207
      %s209 = sphi 0, %s207
      %s210 = sphi 0, %s209
      %s224 = sphi 0, %s210
      %s228 = sphi 0, %s228
      %s230 = sphi 0, %s228
      %s231 = sphi 0, %s230
      %s245 = sphi 0, %s231
      %s249 = sphi 0, %s249
      %s251 = sphi 0, %s249
      %s252 = sphi 0, %s251
      %s266 = sphi 0, %s252
      %s270 = sphi 0, %s270
      %s272 = sphi 0, %s270
      %s273 = sphi 0, %s272
      %s287 = sphi 0, %s273
      %s293 = sphi 0, %s295
      %s296 = sphi 0, %s293
      %s297 = sphi 0, %s296
      %s313 = sphi 0, %s297
    $region4: #{block8_forward.1} parent=1 // loop_header_branch
      %29 = sbr.rel (%p27) target = $region8
    $region5: #{block8_forward.1} parent=1 // loop_body
      %s31 = ssub.s32 %s26, 1
      %s32 = ssub.s32 %s26, 2
      %s33 = sadd.s32 %s26, 1
      %s34 = ssub.s32 %s26, %s33
      %p35 = scmp.eq.s32.totalorder %s34, 0
      %s37 = sadd.s32 %s36, 1
      %s38 = scalar_select %p35, %s36, %s37
      %p41 = pneg %p35
      %p42 = scmp.eq.s32.totalorder %s26, 1
      %p43 = por %p41, %p42
      %p44 = scmp.ne.s32.totalorder %s36, %s39
      %p45 = scmp.eq.s32.totalorder %s26, 0
      %p46 = por %p44, %p45
      %p47 = scmp.ne.s32.totalorder %s36, %s39
      %p48 = scmp.eq.s32.totalorder %s31, 1
      %p49 = por %p47, %p48
      %p50 = scmp.ne.s32.totalorder %s39, %s40
      %p51 = scmp.eq.s32.totalorder %s31, 0
      %p52 = por %p50, %p51
      %p53 = scmp.ne.s32.totalorder %s39, %s40
      %p54 = scmp.eq.s32.totalorder %s32, 1
      %p55 = por %p53, %p54
      %p57 = scmp.ne.s32.totalorder %s40, %s56
      %p58 = scmp.eq.s32.totalorder %s32, 0
      %p59 = por %p57, %p58
      %s61 = sadd.s32 %s60, 1
      %p64 = scmp.eq.s32.totalorder %s26, 1
      %p65 = scmp.ne.s32.totalorder %s60, %s62
      %p66 = scmp.eq.s32.totalorder %s26, 0
      %p67 = por %p65, %p66
      %p68 = scmp.ne.s32.totalorder %s60, %s62
      %p69 = scmp.eq.s32.totalorder %s31, 1
      %p70 = por %p68, %p69
      %p71 = scmp.ne.s32.totalorder %s62, %s63
      %p72 = scmp.eq.s32.totalorder %s31, 0
      %p73 = por %p71, %p72
      %p74 = scmp.ne.s32.totalorder %s62, %s63
      %p75 = scmp.eq.s32.totalorder %s32, 1
      %p76 = por %p74, %p75
      %p78 = scmp.ne.s32.totalorder %s63, %s77
      %p79 = scmp.eq.s32.totalorder %s32, 0
      %p80 = por %p78, %p79
      %s82 = sadd.s32 %s81, 1
      %p85 = scmp.eq.s32.totalorder %s26, 1
      %p86 = scmp.ne.s32.totalorder %s81, %s83
      %p87 = scmp.eq.s32.totalorder %s26, 0
      %p88 = por %p86, %p87
      %p89 = scmp.ne.s32.totalorder %s81, %s83
      %p90 = scmp.eq.s32.totalorder %s31, 1
      %p91 = por %p89, %p90
      %p92 = scmp.ne.s32.totalorder %s83, %s84
      %p93 = scmp.eq.s32.totalorder %s31, 0
      %p94 = por %p92, %p93
      %p95 = scmp.ne.s32.totalorder %s83, %s84
      %p96 = scmp.eq.s32.totalorder %s32, 1
      %p97 = por %p95, %p96
      %p99 = scmp.ne.s32.totalorder %s84, %s98
      %p100 = scmp.eq.s32.totalorder %s32, 0
      %p101 = por %p99, %p100
      %s103 = sadd.s32 %s102, 1
      %p106 = scmp.eq.s32.totalorder %s26, 1
      %p107 = scmp.ne.s32.totalorder %s102, %s104
      %p108 = scmp.eq.s32.totalorder %s26, 0
      %p109 = por %p107, %p108
      %p110 = scmp.ne.s32.totalorder %s102, %s104
      %p111 = scmp.eq.s32.totalorder %s31, 1
      %p112 = por %p110, %p111
      %p113 = scmp.ne.s32.totalorder %s104, %s105
      %p114 = scmp.eq.s32.totalorder %s31, 0
      %p115 = por %p113, %p114
      %p116 = scmp.ne.s32.totalorder %s104, %s105
      %p117 = scmp.eq.s32.totalorder %s32, 1
      %p118 = por %p116, %p117
      %p120 = scmp.ne.s32.totalorder %s105, %s119
      %p121 = scmp.eq.s32.totalorder %s32, 0
      %p122 = por %p120, %p121
      %s124 = sadd.s32 %s123, 1
      %p127 = scmp.eq.s32.totalorder %s26, 1
      %p128 = scmp.ne.s32.totalorder %s123, %s125
      %p129 = scmp.eq.s32.totalorder %s26, 0
      %p130 = por %p128, %p129
      %p131 = scmp.ne.s32.totalorder %s123, %s125
      %p132 = scmp.eq.s32.totalorder %s31, 1
      %p133 = por %p131, %p132
      %p134 = scmp.ne.s32.totalorder %s125, %s126
      %p135 = scmp.eq.s32.totalorder %s31, 0
      %p136 = por %p134, %p135
      %p137 = scmp.ne.s32.totalorder %s125, %s126
      %p138 = scmp.eq.s32.totalorder %s32, 1
      %p139 = por %p137, %p138
      %p141 = scmp.ne.s32.totalorder %s126, %s140
      %p142 = scmp.eq.s32.totalorder %s32, 0
      %p143 = por %p141, %p142
      %s145 = sadd.s32 %s144, 1
      %p148 = scmp.eq.s32.totalorder %s26, 1
      %p149 = scmp.ne.s32.totalorder %s144, %s146
      %p150 = scmp.eq.s32.totalorder %s26, 0
      %p151 = por %p149, %p150
      %p152 = scmp.ne.s32.totalorder %s144, %s146
      %p153 = scmp.eq.s32.totalorder %s31, 1
      %p154 = por %p152, %p153
      %p155 = scmp.ne.s32.totalorder %s146, %s147
      %p156 = scmp.eq.s32.totalorder %s31, 0
      %p157 = por %p155, %p156
      %p158 = scmp.ne.s32.totalorder %s146, %s147
      %p159 = scmp.eq.s32.totalorder %s32, 1
      %p160 = por %p158, %p159
      %p162 = scmp.ne.s32.totalorder %s147, %s161
      %p163 = scmp.eq.s32.totalorder %s32, 0
      %p164 = por %p162, %p163
      %s166 = sadd.s32 %s165, 1
      %p169 = scmp.eq.s32.totalorder %s26, 1
      %p170 = scmp.ne.s32.totalorder %s165, %s167
      %p171 = scmp.eq.s32.totalorder %s26, 0
      %p172 = por %p170, %p171
      %p173 = scmp.ne.s32.totalorder %s165, %s167
      %p174 = scmp.eq.s32.totalorder %s31, 1
      %p175 = por %p173, %p174
      %p176 = scmp.ne.s32.totalorder %s167, %s168
      %p177 = scmp.eq.s32.totalorder %s31, 0
      %p178 = por %p176, %p177
      %p179 = scmp.ne.s32.totalorder %s167, %s168
      %p180 = scmp.eq.s32.totalorder %s32, 1
      %p181 = por %p179, %p180
      %p183 = scmp.ne.s32.totalorder %s168, %s182
      %p184 = scmp.eq.s32.totalorder %s32, 0
      %p185 = por %p183, %p184
      %s187 = sadd.s32 %s186, 1
      %p190 = scmp.eq.s32.totalorder %s26, 1
      %p191 = scmp.ne.s32.totalorder %s186, %s188
      %p192 = scmp.eq.s32.totalorder %s26, 0
      %p193 = por %p191, %p192
      %p194 = scmp.ne.s32.totalorder %s186, %s188
      %p195 = scmp.eq.s32.totalorder %s31, 1
      %p196 = por %p194, %p195
      %p197 = scmp.ne.s32.totalorder %s188, %s189
      %p198 = scmp.eq.s32.totalorder %s31, 0
      %p199 = por %p197, %p198
      %p200 = scmp.ne.s32.totalorder %s188, %s189
      %p201 = scmp.eq.s32.totalorder %s32, 1
      %p202 = por %p200, %p201
      %p204 = scmp.ne.s32.totalorder %s189, %s203
      %p205 = scmp.eq.s32.totalorder %s32, 0
      %p206 = por %p204, %p205
      %s208 = sadd.s32 %s207, 1
      %p211 = scmp.eq.s32.totalorder %s26, 1
      %p212 = scmp.ne.s32.totalorder %s207, %s209
      %p213 = scmp.eq.s32.totalorder %s26, 0
      %p214 = por %p212, %p213
      %p215 = scmp.ne.s32.totalorder %s207, %s209
      %p216 = scmp.eq.s32.totalorder %s31, 1
      %p217 = por %p215, %p216
      %p218 = scmp.ne.s32.totalorder %s209, %s210
      %p219 = scmp.eq.s32.totalorder %s31, 0
      %p220 = por %p218, %p219
      %p221 = scmp.ne.s32.totalorder %s209, %s210
      %p222 = scmp.eq.s32.totalorder %s32, 1
      %p223 = por %p221, %p222
      %p225 = scmp.ne.s32.totalorder %s210, %s224
      %p226 = scmp.eq.s32.totalorder %s32, 0
      %p227 = por %p225, %p226
      %s229 = sadd.s32 %s228, 1
      %p232 = scmp.eq.s32.totalorder %s26, 1
      %p233 = scmp.ne.s32.totalorder %s228, %s230
      %p234 = scmp.eq.s32.totalorder %s26, 0
      %p235 = por %p233, %p234
      %p236 = scmp.ne.s32.totalorder %s228, %s230
      %p237 = scmp.eq.s32.totalorder %s31, 1
      %p238 = por %p236, %p237
      %p239 = scmp.ne.s32.totalorder %s230, %s231
      %p240 = scmp.eq.s32.totalorder %s31, 0
      %p241 = por %p239, %p240
      %p242 = scmp.ne.s32.totalorder %s230, %s231
      %p243 = scmp.eq.s32.totalorder %s32, 1
      %p244 = por %p242, %p243
      %p246 = scmp.ne.s32.totalorder %s231, %s245
      %p247 = scmp.eq.s32.totalorder %s32, 0
      %p248 = por %p246, %p247
      %s250 = sadd.s32 %s249, 1
      %p253 = scmp.eq.s32.totalorder %s26, 1
      %p254 = scmp.ne.s32.totalorder %s249, %s251
      %p255 = scmp.eq.s32.totalorder %s26, 0
      %p256 = por %p254, %p255
      %p257 = scmp.ne.s32.totalorder %s249, %s251
      %p258 = scmp.eq.s32.totalorder %s31, 1
      %p259 = por %p257, %p258
      %p260 = scmp.ne.s32.totalorder %s251, %s252
      %p261 = scmp.eq.s32.totalorder %s31, 0
      %p262 = por %p260, %p261
      %p263 = scmp.ne.s32.totalorder %s251, %s252
      %p264 = scmp.eq.s32.totalorder %s32, 1
      %p265 = por %p263, %p264
      %p267 = scmp.ne.s32.totalorder %s252, %s266
      %p268 = scmp.eq.s32.totalorder %s32, 0
      %p269 = por %p267, %p268
      %s271 = sadd.s32 %s270, 1
      %p274 = scmp.eq.s32.totalorder %s26, 1
      %p275 = scmp.ne.s32.totalorder %s270, %s272
      %p276 = scmp.eq.s32.totalorder %s26, 0
      %p277 = por %p275, %p276
      %p278 = scmp.ne.s32.totalorder %s270, %s272
      %p279 = scmp.eq.s32.totalorder %s31, 1
      %p280 = por %p278, %p279
      %p281 = scmp.ne.s32.totalorder %s272, %s273
      %p282 = scmp.eq.s32.totalorder %s31, 0
      %p283 = por %p281, %p282
      %p284 = scmp.ne.s32.totalorder %s272, %s273
      %p285 = scmp.eq.s32.totalorder %s32, 1
      %p286 = por %p284, %p285
      %p288 = scmp.ne.s32.totalorder %s273, %s287
      %p289 = scmp.eq.s32.totalorder %s32, 0
      %p290 = por %p288, %p289
      %s291 = ssub.s32 %s26, %s33
      %p292 = scmp.eq.s32.totalorder %s291, 0
      %s294 = sadd.s32 %s293, 1
      %s295 = scalar_select %p292, %s293, %s294
      %p298 = pneg %p292
      %p299 = scmp.eq.s32.totalorder %s26, 1
      %p300 = por %p298, %p299
      %p301 = scmp.ne.s32.totalorder %s293, %s296
      %p302 = scmp.eq.s32.totalorder %s26, 0
      %p303 = por %p301, %p302
      %p304 = scmp.ne.s32.totalorder %s293, %s296
      %p305 = scmp.eq.s32.totalorder %s31, 1
      %p306 = por %p304, %p305
      %p307 = scmp.ne.s32.totalorder %s296, %s297
      %p308 = scmp.eq.s32.totalorder %s31, 0
      %p309 = por %p307, %p308
      %p310 = scmp.ne.s32.totalorder %s296, %s297
      %p311 = scmp.eq.s32.totalorder %s32, 1
      %p312 = por %p310, %p311
      %p314 = scmp.ne.s32.totalorder %s297, %s313
      %p315 = scmp.eq.s32.totalorder %s32, 0
      %p316 = por %p314, %p315
      %p317 = scmp.le.s32.totalorder 1, %s26
      %p318 = scmp.lt.s32.totalorder %s26, 3
      %p319 = pnand %p317, %p318
      %p320 = pneg %p319
      // Predicated region
      $region9: #{block8_forward.1} parent=5 // pred_check
        _
      $region10: #{block8_forward.1} parent=5 // pred_check_branch
        %322 = sbr.rel (%p319) target = $region12
      $region11: #{block8_forward.1} parent=5 // pred_region
        %s323 = ssub.s32 %s26, 1
        // Predicated region
        $region13: #{block8_forward.1} parent=11 // pred_check
          %p324 = pneg %p73
        $region14: #{block8_forward.1} parent=11 // pred_check_branch
          %326 = sbr.rel (%p324) target = $region16
        $region15: #{block8_forward.1} parent=11 // pred_region
          _
        $region16: #{block8_forward.1} parent=11 // pred_fallthru
          _
        // Predicated region
        $region17: #{block8_forward.1} parent=11 // pred_check
          %p327 = pneg %p94
        $region18: #{block8_forward.1} parent=11 // pred_check_branch
          %329 = sbr.rel (%p327) target = $region20
        $region19: #{block8_forward.1} parent=11 // pred_region
          %331 = vsyncadd [#allocation8], 0
          %s333 = sshll.u32 %s2, 4
          %s334 = int_to_ptr.hbm [resolvable:$true] %s333
          %s335 = sshll.u32 [#allocation7], 4
          %s336 = int_to_ptr.vmem [resolvable:$true] %s335
          %338 = dma.hbm_to_vmem [thread:$0]  %s334, 48, %s336, [#allocation8]
        $region20: #{block8_forward.1} parent=11 // pred_fallthru
          _
        // Predicated region
        $region21: #{block8_forward.1} parent=11 // pred_check
          %p339 = pneg %p115
        $region22: #{block8_forward.1} parent=11 // pred_check_branch
          %341 = sbr.rel (%p339) target = $region24
        $region23: #{block8_forward.1} parent=11 // pred_region
          _
        $region24: #{block8_forward.1} parent=11 // pred_fallthru
          _
        // Predicated region
        $region25: #{block8_forward.1} parent=11 // pred_check
          %p342 = pneg %p136
        $region26: #{block8_forward.1} parent=11 // pred_check_branch
          %344 = sbr.rel (%p342) target = $region28
        $region27: #{block8_forward.1} parent=11 // pred_region
          %346 = vsyncadd [#allocation8], 0
          %s348 = sshll.u32 %s4, 4
          %s349 = int_to_ptr.hbm [resolvable:$true] %s348
          %s350 = sshll.u32 [#allocation9], 4
          %s351 = int_to_ptr.vmem [resolvable:$true] %s350
          %353 = dma.hbm_to_vmem [thread:$0]  %s349, 32, %s351, [#allocation8]
        $region28: #{block8_forward.1} parent=11 // pred_fallthru
          _
        // Predicated region
        $region29: #{block8_forward.1} parent=11 // pred_check
          %p354 = pneg %p157
        $region30: #{block8_forward.1} parent=11 // pred_check_branch
          %356 = sbr.rel (%p354) target = $region32
        $region31: #{block8_forward.1} parent=11 // pred_region
          _
        $region32: #{block8_forward.1} parent=11 // pred_fallthru
          _
        // Predicated region
        $region33: #{block8_forward.1} parent=11 // pred_check
          %p357 = pneg %p178
        $region34: #{block8_forward.1} parent=11 // pred_check_branch
          %359 = sbr.rel (%p357) target = $region36
        $region35: #{block8_forward.1} parent=11 // pred_region
          %361 = vsyncadd [#allocation11], 0
          %s363 = sshll.u32 %s6, 4
          %s364 = int_to_ptr.hbm [resolvable:$true] %s363
          %s365 = sshll.u32 [#allocation10], 4
          %s366 = int_to_ptr.vmem [resolvable:$true] %s365
          %368 = dma.hbm_to_vmem [thread:$0]  %s364, 32, %s366, [#allocation11]
        $region36: #{block8_forward.1} parent=11 // pred_fallthru
          _
        // Predicated region
        $region37: #{block8_forward.1} parent=11 // pred_check
          %p369 = pneg %p199
        $region38: #{block8_forward.1} parent=11 // pred_check_branch
          %371 = sbr.rel (%p369) target = $region40
        $region39: #{block8_forward.1} parent=11 // pred_region
          %373 = vsyncadd [#allocation11], 0
          %s374 = sshll.u32 %s7, 4
          %s375 = int_to_ptr.hbm [resolvable:$true] %s374
          %s376 = sshll.u32 [#allocation12], 4
          %s377 = int_to_ptr.vmem [resolvable:$true] %s376
          %382 = dma.hbm_to_vmem [thread:$0]  %s375, 26112, %s377, [#allocation11], 1088, 1088, 68
        $region40: #{block8_forward.1} parent=11 // pred_fallthru
          _
        // Predicated region
        $region41: #{block8_forward.1} parent=11 // pred_check
          %p383 = pneg %p220
        $region42: #{block8_forward.1} parent=11 // pred_check_branch
          %385 = sbr.rel (%p383) target = $region44
        $region43: #{block8_forward.1} parent=11 // pred_region
          _
        $region44: #{block8_forward.1} parent=11 // pred_fallthru
          _
        // Predicated region
        $region45: #{block8_forward.1} parent=11 // pred_check
          %p386 = pneg %p241
        $region46: #{block8_forward.1} parent=11 // pred_check_branch
          %388 = sbr.rel (%p386) target = $region48
        $region47: #{block8_forward.1} parent=11 // pred_region
          _
        $region48: #{block8_forward.1} parent=11 // pred_fallthru
          _
        // Predicated region
        $region49: #{block8_forward.1} parent=11 // pred_check
          %p389 = pneg %p262
        $region50: #{block8_forward.1} parent=11 // pred_check_branch
          %391 = sbr.rel (%p389) target = $region52
        $region51: #{block8_forward.1} parent=11 // pred_region
          _
        $region52: #{block8_forward.1} parent=11 // pred_fallthru
          _
        // Predicated region
        $region53: #{block8_forward.1} parent=11 // pred_check
          %p392 = pneg %p283
        $region54: #{block8_forward.1} parent=11 // pred_check_branch
          %394 = sbr.rel (%p392) target = $region56
        $region55: #{block8_forward.1} parent=11 // pred_region
          _
        $region56: #{block8_forward.1} parent=11 // pred_fallthru
          _
      $region12: #{block8_forward.1} parent=5 // pred_fallthru
        _
      %p395 = scmp.lt.s32.totalorder %s26, 2
      // Predicated region
      $region57: #{block8_forward.1} parent=5 // pred_check
        %p396 = pneg %p395
      $region58: #{block8_forward.1} parent=5 // pred_check_branch
        %398 = sbr.rel (%p396) target = $region60
      $region59: #{block8_forward.1} parent=5 // pred_region
        // Predicated region
        $region61: #{block8_forward.1} parent=59 // pred_check
          %p399 = pneg %p46
        $region62: #{block8_forward.1} parent=59 // pred_check_branch
          %401 = sbr.rel (%p399) target = $region64
        $region63: #{block8_forward.1} parent=59 // pred_region
          %s402 = sand.u32 %s36, 1
          %s403 = scalar_lea.sflag [#allocation5], %s402
          %s404 = sand.u32 %s36, 1
          %s405 = smul.addr %s404, 1088
          %s406 = scalar_lea.vmem [#allocation4], %s405
          %s407 = smul.u32 8, %s26
          %409 = vsyncadd %s403, 0
          %s410 = smul.addr %s407, 17
          %s411 = smul.addr %s410, 8
          %s412 = scalar_lea.hbm %s0, %s411
          %s413 = sshll.u32 %s412, 4
          %s414 = int_to_ptr.hbm [resolvable:$true] %s413
          %s415 = sshll.u32 %s406, 4
          %s416 = int_to_ptr.vmem [resolvable:$true] %s415
          %421 = dma.hbm_to_vmem [thread:$0]  %s414, 17408, %s416, %s403, 2176, 2176, 136
        $region64: #{block8_forward.1} parent=59 // pred_fallthru
          _
      $region60: #{block8_forward.1} parent=5 // pred_fallthru
        _
      %p422 = scmp.le.s32.totalorder 1, %s26
      %p423 = scmp.lt.s32.totalorder %s26, 3
      %p424 = pnand %p422, %p423
      %p425 = pneg %p424
      // Predicated region
      $region65: #{block8_forward.1} parent=5 // pred_check
        _
      $region66: #{block8_forward.1} parent=5 // pred_check_branch
        %427 = sbr.rel (%p424) target = $region68
      $region67: #{block8_forward.1} parent=5 // pred_region
        %s428 = ssub.s32 %s26, 1
        %s429 = sand.u32 %s39, 1
        %s430 = scalar_lea.sflag [#allocation5], %s429
        %s431 = sand.u32 %s39, 1
        %s432 = smul.addr %s431, 1088
        %s433 = scalar_lea.vmem [#allocation4], %s432
        // Predicated region
        $region69: #{block8_forward.1} parent=67 // pred_check
          %p434 = pneg %p52
        $region70: #{block8_forward.1} parent=67 // pred_check_branch
          %436 = sbr.rel (%p434) target = $region72
        $region71: #{block8_forward.1} parent=67 // pred_region
          %438 = dma.done %s430, 17408
        $region72: #{block8_forward.1} parent=67 // pred_fallthru
          _
        // Predicated region
        $region73: #{block8_forward.1} parent=67 // pred_check
          %p439 = pneg %p94
        $region74: #{block8_forward.1} parent=67 // pred_check_branch
          %441 = sbr.rel (%p439) target = $region76
        $region75: #{block8_forward.1} parent=67 // pred_region
          %443 = dma.done [#allocation8], 48
        $region76: #{block8_forward.1} parent=67 // pred_fallthru
          _
        // Predicated region
        $region77: #{block8_forward.1} parent=67 // pred_check
          %p444 = pneg %p136
        $region78: #{block8_forward.1} parent=67 // pred_check_branch
          %446 = sbr.rel (%p444) target = $region80
        $region79: #{block8_forward.1} parent=67 // pred_region
          %448 = dma.done [#allocation8], 32
        $region80: #{block8_forward.1} parent=67 // pred_fallthru
          _
        // Predicated region
        $region81: #{block8_forward.1} parent=67 // pred_check
          %p449 = pneg %p178
        $region82: #{block8_forward.1} parent=67 // pred_check_branch
          %451 = sbr.rel (%p449) target = $region84
        $region83: #{block8_forward.1} parent=67 // pred_region
          %453 = dma.done [#allocation11], 32
        $region84: #{block8_forward.1} parent=67 // pred_fallthru
          _
        // Predicated region
        $region85: #{block8_forward.1} parent=67 // pred_check
          %p454 = pneg %p199
        $region86: #{block8_forward.1} parent=67 // pred_check_branch
          %456 = sbr.rel (%p454) target = $region88
        $region87: #{block8_forward.1} parent=67 // pred_region
          %458 = dma.done [#allocation11], 26112
        $region88: #{block8_forward.1} parent=67 // pred_fallthru
          _
        %s459 = sand.u32 %s39, 1
        %s460 = scalar_lea.sflag [#allocation5], %s459
        %s461 = sand.u32 %s39, 1
        %s462 = smul.addr %s461, 1088
        %s463 = scalar_lea.vmem [#allocation4], %s462
        %p464 = pneg %p52
        %p465 = pneg %p49
        %p466 = pneg %p73
        %p467 = pneg %p70
        %p468 = pneg %p94
        %p469 = pneg %p91
        %p470 = pneg %p115
        %p471 = pneg %p112
        %p472 = pneg %p136
        %p473 = pneg %p133
        %p474 = pneg %p157
        %p475 = pneg %p154
        %p476 = pneg %p178
        %p477 = pneg %p175
        %p478 = pneg %p199
        %p479 = pneg %p196
        %p480 = pneg %p220
        %p481 = pneg %p217
        %p482 = pneg %p241
        %p483 = pneg %p238
        %p484 = pneg %p262
        %p485 = pneg %p259
        %p486 = pneg %p283
        %p487 = pneg %p280
        %p488 = pneg %p309
        %p489 = pneg %p306
        %s490 = sand.u32 %s296, 1
        %s491 = scalar_lea.sflag [#allocation6], %s490
        %s492 = sand.u32 %s296, 1
        %s493 = smul.addr %s492, 1088
        %s494 = scalar_lea.vmem [#allocation13], %s493
        %s495 = smul.u32 8, %s31
        %s496 = smul.u32 8, %s31
        %v498 = vld [vmem:[%s433] sm:$0xff]
        %v499 = vld [vmem:[%s433 + $0x8] sm:$0xff]
        %v500 = vld [vmem:[%s433 + $0x10] sm:$0xff]
        %v501 = vld [vmem:[%s433 + $0x18] sm:$0xff]
        %v502 = vld [vmem:[%s433 + $0x20] sm:$0xff]
        %v503 = vld [vmem:[%s433 + $0x28] sm:$0xff]
        %v504 = vld [vmem:[%s433 + $0x30] sm:$0xff]
        %v505 = vld [vmem:[%s433 + $0x38] sm:$0xff]
        %v506 = vld [vmem:[%s433 + $0x40] sm:$0xff]
        %v507 = vld [vmem:[%s433 + $0x48] sm:$0xff]
        %v508 = vld [vmem:[%s433 + $0x50] sm:$0xff]
        %v509 = vld [vmem:[%s433 + $0x58] sm:$0xff]
        %v510 = vld [vmem:[%s433 + $0x60] sm:$0xff]
        %v511 = vld [vmem:[%s433 + $0x68] sm:$0xff]
        %v512 = vld [vmem:[%s433 + $0x70] sm:$0xff]
        %v513 = vld [vmem:[%s433 + $0x78] sm:$0xff]
        %v514 = vld [vmem:[%s433 + $0x80] sm:$0xff]
        %v515 = vld [vmem:[%s433 + $0x88] sm:$0xff]
        %v516 = vld [vmem:[%s433 + $0x90] sm:$0xff]
        %v517 = vld [vmem:[%s433 + $0x98] sm:$0xff]
        %v518 = vld [vmem:[%s433 + $0xa0] sm:$0xff]
        %v519 = vld [vmem:[%s433 + $0xa8] sm:$0xff]
        %v520 = vld [vmem:[%s433 + $0xb0] sm:$0xff]
        %v521 = vld [vmem:[%s433 + $0xb8] sm:$0xff]
        %v522 = vld [vmem:[%s433 + $0xc0] sm:$0xff]
        %v523 = vld [vmem:[%s433 + $0xc8] sm:$0xff]
        %v524 = vld [vmem:[%s433 + $0xd0] sm:$0xff]
        %v525 = vld [vmem:[%s433 + $0xd8] sm:$0xff]
        %v526 = vld [vmem:[%s433 + $0xe0] sm:$0xff]
        %v527 = vld [vmem:[%s433 + $0xe8] sm:$0xff]
        %v528 = vld [vmem:[%s433 + $0xf0] sm:$0xff]
        %v529 = vld [vmem:[%s433 + $0xf8] sm:$0xff]
        %v530 = vld [vmem:[%s433 + $0x100] sm:$0xff]
        %v531 = vld [vmem:[%s433 + $0x108] sm:$0xff]
        %v532 = vld [vmem:[%s433 + $0x110] sm:$0xff]
        %v533 = vld [vmem:[%s433 + $0x118] sm:$0xff]
        %v534 = vld [vmem:[%s433 + $0x120] sm:$0xff]
        %v535 = vld [vmem:[%s433 + $0x128] sm:$0xff]
        %v536 = vld [vmem:[%s433 + $0x130] sm:$0xff]
        %v537 = vld [vmem:[%s433 + $0x138] sm:$0xff]
        %v538 = vld [vmem:[%s433 + $0x140] sm:$0xff]
        %v539 = vld [vmem:[%s433 + $0x148] sm:$0xff]
        %v540 = vld [vmem:[%s433 + $0x150] sm:$0xff]
        %v541 = vld [vmem:[%s433 + $0x158] sm:$0xff]
        %v542 = vld [vmem:[%s433 + $0x160] sm:$0xff]
        %v543 = vld [vmem:[%s433 + $0x168] sm:$0xff]
        %v544 = vld [vmem:[%s433 + $0x170] sm:$0xff]
        %v545 = vld [vmem:[%s433 + $0x178] sm:$0xff]
        %v546 = vld [vmem:[%s433 + $0x180] sm:$0xff]
        %v547 = vld [vmem:[%s433 + $0x188] sm:$0xff]
        %v548 = vld [vmem:[%s433 + $0x190] sm:$0xff]
        %v549 = vld [vmem:[%s433 + $0x198] sm:$0xff]
        %v550 = vld [vmem:[%s433 + $0x1a0] sm:$0xff]
        %v551 = vld [vmem:[%s433 + $0x1a8] sm:$0xff]
        %v552 = vld [vmem:[%s433 + $0x1b0] sm:$0xff]
        %v553 = vld [vmem:[%s433 + $0x1b8] sm:$0xff]
        %v554 = vld [vmem:[%s433 + $0x1c0] sm:$0xff]
        %v555 = vld [vmem:[%s433 + $0x1c8] sm:$0xff]
        %v556 = vld [vmem:[%s433 + $0x1d0] sm:$0xff]
        %v557 = vld [vmem:[%s433 + $0x1d8] sm:$0xff]
        %v558 = vld [vmem:[%s433 + $0x1e0] sm:$0xff]
        %v559 = vld [vmem:[%s433 + $0x1e8] sm:$0xff]
        %v560 = vld [vmem:[%s433 + $0x1f0] sm:$0xff]
        %v561 = vld [vmem:[%s433 + $0x1f8] sm:$0xff]
        %v562 = vld [vmem:[%s433 + $0x200] sm:$0xff]
        %v563 = vld [vmem:[%s433 + $0x208] sm:$0xff]
        %v564 = vld [vmem:[%s433 + $0x210] sm:$0xff]
        %v565 = vld [vmem:[%s433 + $0x218] sm:$0xff]
        %v566 = vld [vmem:[%s433 + $0x220] sm:$0xff]
        %v567 = vld [vmem:[%s433 + $0x228] sm:$0xff]
        %v568 = vld [vmem:[%s433 + $0x230] sm:$0xff]
        %v569 = vld [vmem:[%s433 + $0x238] sm:$0xff]
        %v570 = vld [vmem:[%s433 + $0x240] sm:$0xff]
        %v571 = vld [vmem:[%s433 + $0x248] sm:$0xff]
        %v572 = vld [vmem:[%s433 + $0x250] sm:$0xff]
        %v573 = vld [vmem:[%s433 + $0x258] sm:$0xff]
        %v574 = vld [vmem:[%s433 + $0x260] sm:$0xff]
        %v575 = vld [vmem:[%s433 + $0x268] sm:$0xff]
        %v576 = vld [vmem:[%s433 + $0x270] sm:$0xff]
        %v577 = vld [vmem:[%s433 + $0x278] sm:$0xff]
        %v578 = vld [vmem:[%s433 + $0x280] sm:$0xff]
        %v579 = vld [vmem:[%s433 + $0x288] sm:$0xff]
        %v580 = vld [vmem:[%s433 + $0x290] sm:$0xff]
        %v581 = vld [vmem:[%s433 + $0x298] sm:$0xff]
        %v582 = vld [vmem:[%s433 + $0x2a0] sm:$0xff]
        %v583 = vld [vmem:[%s433 + $0x2a8] sm:$0xff]
        %v584 = vld [vmem:[%s433 + $0x2b0] sm:$0xff]
        %v585 = vld [vmem:[%s433 + $0x2b8] sm:$0xff]
        %v586 = vld [vmem:[%s433 + $0x2c0] sm:$0xff]
        %v587 = vld [vmem:[%s433 + $0x2c8] sm:$0xff]
        %v588 = vld [vmem:[%s433 + $0x2d0] sm:$0xff]
        %v589 = vld [vmem:[%s433 + $0x2d8] sm:$0xff]
        %v590 = vld [vmem:[%s433 + $0x2e0] sm:$0xff]
        %v591 = vld [vmem:[%s433 + $0x2e8] sm:$0xff]
        %v592 = vld [vmem:[%s433 + $0x2f0] sm:$0xff]
        %v593 = vld [vmem:[%s433 + $0x2f8] sm:$0xff]
        %v594 = vld [vmem:[%s433 + $0x300] sm:$0xff]
        %v595 = vld [vmem:[%s433 + $0x308] sm:$0xff]
        %v596 = vld [vmem:[%s433 + $0x310] sm:$0xff]
        %v597 = vld [vmem:[%s433 + $0x318] sm:$0xff]
        %v598 = vld [vmem:[%s433 + $0x320] sm:$0xff]
        %v599 = vld [vmem:[%s433 + $0x328] sm:$0xff]
        %v600 = vld [vmem:[%s433 + $0x330] sm:$0xff]
        %v601 = vld [vmem:[%s433 + $0x338] sm:$0xff]
        %v602 = vld [vmem:[%s433 + $0x340] sm:$0xff]
        %v603 = vld [vmem:[%s433 + $0x348] sm:$0xff]
        %v604 = vld [vmem:[%s433 + $0x350] sm:$0xff]
        %v605 = vld [vmem:[%s433 + $0x358] sm:$0xff]
        %v606 = vld [vmem:[%s433 + $0x360] sm:$0xff]
        %v607 = vld [vmem:[%s433 + $0x368] sm:$0xff]
        %v608 = vld [vmem:[%s433 + $0x370] sm:$0xff]
        %v609 = vld [vmem:[%s433 + $0x378] sm:$0xff]
        %v610 = vld [vmem:[%s433 + $0x380] sm:$0xff]
        %v611 = vld [vmem:[%s433 + $0x388] sm:$0xff]
        %v612 = vld [vmem:[%s433 + $0x390] sm:$0xff]
        %v613 = vld [vmem:[%s433 + $0x398] sm:$0xff]
        %v614 = vld [vmem:[%s433 + $0x3a0] sm:$0xff]
        %v615 = vld [vmem:[%s433 + $0x3a8] sm:$0xff]
        %v616 = vld [vmem:[%s433 + $0x3b0] sm:$0xff]
        %v617 = vld [vmem:[%s433 + $0x3b8] sm:$0xff]
        %v618 = vld [vmem:[%s433 + $0x3c0] sm:$0xff]
        %v619 = vld [vmem:[%s433 + $0x3c8] sm:$0xff]
        %v620 = vld [vmem:[%s433 + $0x3d0] sm:$0xff]
        %v621 = vld [vmem:[%s433 + $0x3d8] sm:$0xff]
        %v622 = vld [vmem:[%s433 + $0x3e0] sm:$0xff]
        %v623 = vld [vmem:[%s433 + $0x3e8] sm:$0xff]
        %v624 = vld [vmem:[%s433 + $0x3f0] sm:$0xff]
        %v625 = vld [vmem:[%s433 + $0x3f8] sm:$0xff]
        %v626 = vld [vmem:[%s433 + $0x400] sm:$0xff]
        %v627 = vld [vmem:[%s433 + $0x408] sm:$0xff]
        %v628 = vld [vmem:[%s433 + $0x410] sm:$0xff]
        %v629 = vld [vmem:[%s433 + $0x418] sm:$0xff]
        %v630 = vld [vmem:[%s433 + $0x420] sm:$0xff]
        %v631 = vld [vmem:[%s433 + $0x428] sm:$0xff]
        %v632 = vld [vmem:[%s433 + $0x430] sm:$0xff]
        %v633 = vld [vmem:[%s433 + $0x438] sm:$0xff]
        %v634 = vpack.c.bf16 %v515, %v498
        %v635 = vpack.c.bf16 %v516, %v499
        %v636 = vpack.c.bf16 %v517, %v500
        %v637 = vpack.c.bf16 %v518, %v501
        %v638 = vpack.c.bf16 %v519, %v502
        %v639 = vpack.c.bf16 %v520, %v503
        %v640 = vpack.c.bf16 %v521, %v504
        %v641 = vpack.c.bf16 %v522, %v505
        %v642 = vpack.c.bf16 %v523, %v506
        %v643 = vpack.c.bf16 %v524, %v507
        %v644 = vpack.c.bf16 %v525, %v508
        %v645 = vpack.c.bf16 %v526, %v509
        %v646 = vpack.c.bf16 %v527, %v510
        %v647 = vpack.c.bf16 %v528, %v511
        %v648 = vpack.c.bf16 %v529, %v512
        %v649 = vpack.c.bf16 %v530, %v513
        %v650 = vpack.c.bf16 %v531, %v514
        %v651 = vpack.c.bf16 %v549, %v532
        %v652 = vpack.c.bf16 %v550, %v533
        %v653 = vpack.c.bf16 %v551, %v534
        %v654 = vpack.c.bf16 %v552, %v535
        %v655 = vpack.c.bf16 %v553, %v536
        %v656 = vpack.c.bf16 %v554, %v537
        %v657 = vpack.c.bf16 %v555, %v538
        %v658 = vpack.c.bf16 %v556, %v539
        %v659 = vpack.c.bf16 %v557, %v540
        %v660 = vpack.c.bf16 %v558, %v541
        %v661 = vpack.c.bf16 %v559, %v542
        %v662 = vpack.c.bf16 %v560, %v543
        %v663 = vpack.c.bf16 %v561, %v544
        %v664 = vpack.c.bf16 %v562, %v545
        %v665 = vpack.c.bf16 %v563, %v546
        %v666 = vpack.c.bf16 %v564, %v547
        %v667 = vpack.c.bf16 %v565, %v548
        %v668 = vpack.c.bf16 %v583, %v566
        %v669 = vpack.c.bf16 %v584, %v567
        %v670 = vpack.c.bf16 %v585, %v568
        %v671 = vpack.c.bf16 %v586, %v569
        %v672 = vpack.c.bf16 %v587, %v570
        %v673 = vpack.c.bf16 %v588, %v571
        %v674 = vpack.c.bf16 %v589, %v572
        %v675 = vpack.c.bf16 %v590, %v573
        %v676 = vpack.c.bf16 %v591, %v574
        %v677 = vpack.c.bf16 %v592, %v575
        %v678 = vpack.c.bf16 %v593, %v576
        %v679 = vpack.c.bf16 %v594, %v577
        %v680 = vpack.c.bf16 %v595, %v578
        %v681 = vpack.c.bf16 %v596, %v579
        %v682 = vpack.c.bf16 %v597, %v580
        %v683 = vpack.c.bf16 %v598, %v581
        %v684 = vpack.c.bf16 %v599, %v582
        %v685 = vpack.c.bf16 %v617, %v600
        %v686 = vpack.c.bf16 %v618, %v601
        %v687 = vpack.c.bf16 %v619, %v602
        %v688 = vpack.c.bf16 %v620, %v603
        %v689 = vpack.c.bf16 %v621, %v604
        %v690 = vpack.c.bf16 %v622, %v605
        %v691 = vpack.c.bf16 %v623, %v606
        %v692 = vpack.c.bf16 %v624, %v607
        %v693 = vpack.c.bf16 %v625, %v608
        %v694 = vpack.c.bf16 %v626, %v609
        %v695 = vpack.c.bf16 %v627, %v610
        %v696 = vpack.c.bf16 %v628, %v611
        %v697 = vpack.c.bf16 %v629, %v612
        %v698 = vpack.c.bf16 %v630, %v613
        %v699 = vpack.c.bf16 %v631, %v614
        %v700 = vpack.c.bf16 %v632, %v615
        %v701 = vpack.c.bf16 %v633, %v616
        %v702 = vld [vmem:[%s1] sm:$0xff]
        %v703 = vld [vmem:[%s1 + $0x8] sm:$0xf]
        %v704 = vld [vmem:[%s1 + $0xc] sm:$0xff]
        %v705 = vld [vmem:[%s1 + $0x14] sm:$0xf]
        %v706 = vld [vmem:[%s1 + $0x18] sm:$0xff]
        %v707 = vld [vmem:[%s1 + $0x20] sm:$0xf]
        %v708 = vld [vmem:[%s1 + $0x24] sm:$0xff]
        %v709 = vld [vmem:[%s1 + $0x2c] sm:$0xf]
        %v710 = vld [vmem:[%s1 + $0x30] sm:$0xff]
        %v711 = vld [vmem:[%s1 + $0x38] sm:$0xf]
        %v712 = vld [vmem:[%s1 + $0x3c] sm:$0xff]
        %v713 = vld [vmem:[%s1 + $0x44] sm:$0xf]
        %v714 = vld [vmem:[%s1 + $0x48] sm:$0xff]
        %v715 = vld [vmem:[%s1 + $0x50] sm:$0xf]
        %v716 = vld [vmem:[%s1 + $0x54] sm:$0xff]
        %v717 = vld [vmem:[%s1 + $0x5c] sm:$0xf]
        %v718 = vld [vmem:[%s1 + $0x60] sm:$0xff]
        %v719 = vld [vmem:[%s1 + $0x68] sm:$0xf]
        %v720 = vld [vmem:[%s1 + $0x6c] sm:$0xff]
        %v721 = vld [vmem:[%s1 + $0x74] sm:$0xf]
        %v722 = vld [vmem:[%s1 + $0x78] sm:$0xff]
        %v723 = vld [vmem:[%s1 + $0x80] sm:$0xf]
        %v724 = vld [vmem:[%s1 + $0x84] sm:$0xff]
        %v725 = vld [vmem:[%s1 + $0x8c] sm:$0xf]
        %v726 = vld [vmem:[%s1 + $0x90] sm:$0xff]
        %v727 = vld [vmem:[%s1 + $0x98] sm:$0xf]
        %v728 = vld [vmem:[%s1 + $0x9c] sm:$0xff]
        %v729 = vld [vmem:[%s1 + $0xa4] sm:$0xf]
        %v730 = vld [vmem:[%s1 + $0xa8] sm:$0xff]
        %v731 = vld [vmem:[%s1 + $0xb0] sm:$0xf]
        %v732 = vld [vmem:[%s1 + $0xb4] sm:$0xff]
        %v733 = vld [vmem:[%s1 + $0xbc] sm:$0xf]
        %v734 = vld [vmem:[%s1 + $0xc0] sm:$0xff]
        %v735 = vld [vmem:[%s1 + $0xc8] sm:$0xf]
        %v736 = vld [vmem:[%s1 + $0xcc] sm:$0xff]
        %v737 = vld [vmem:[%s1 + $0xd4] sm:$0xf]
        %v738 = vld [vmem:[%s1 + $0xd8] sm:$0xff]
        %v739 = vld [vmem:[%s1 + $0xe0] sm:$0xf]
        %v740 = vld [vmem:[%s1 + $0xe4] sm:$0xff]
        %v741 = vld [vmem:[%s1 + $0xec] sm:$0xf]
        %v742 = vld [vmem:[%s1 + $0xf0] sm:$0xff]
        %v743 = vld [vmem:[%s1 + $0xf8] sm:$0xf]
        %v744 = vld [vmem:[%s1 + $0xfc] sm:$0xff]
        %v745 = vld [vmem:[%s1 + $0x104] sm:$0xf]
        %v746 = vld [vmem:[%s1 + $0x108] sm:$0xff]
        %v747 = vld [vmem:[%s1 + $0x110] sm:$0xf]
        %v748 = vld [vmem:[%s1 + $0x114] sm:$0xff]
        %v749 = vld [vmem:[%s1 + $0x11c] sm:$0xf]
        %v750 = vld [vmem:[%s1 + $0x120] sm:$0xff]
        %v751 = vld [vmem:[%s1 + $0x128] sm:$0xf]
        %v752 = vld [vmem:[%s1 + $0x12c] sm:$0xff]
        %v753 = vld [vmem:[%s1 + $0x134] sm:$0xf]
        %v754 = vld [vmem:[%s1 + $0x138] sm:$0xff]
        %v755 = vld [vmem:[%s1 + $0x140] sm:$0xf]
        %v756 = vld [vmem:[%s1 + $0x144] sm:$0xff]
        %v757 = vld [vmem:[%s1 + $0x14c] sm:$0xf]
        %v758 = vld [vmem:[%s1 + $0x150] sm:$0xff]
        %v759 = vld [vmem:[%s1 + $0x158] sm:$0xf]
        %v760 = vld [vmem:[%s1 + $0x15c] sm:$0xff]
        %v761 = vld [vmem:[%s1 + $0x164] sm:$0xf]
        %v762 = vld [vmem:[%s1 + $0x168] sm:$0xff]
        %v763 = vld [vmem:[%s1 + $0x170] sm:$0xf]
        %v764 = vld [vmem:[%s1 + $0x174] sm:$0xff]
        %v765 = vld [vmem:[%s1 + $0x17c] sm:$0xf]
        %v766 = vld [vmem:[%s1 + $0x180] sm:$0xff]
        %v767 = vld [vmem:[%s1 + $0x188] sm:$0xf]
        %v768 = vld [vmem:[%s1 + $0x18c] sm:$0xff]
        %v769 = vld [vmem:[%s1 + $0x194] sm:$0xf]
        %v770 = vld [vmem:[%s1 + $0x198] sm:$0xff]
        %v771 = vld [vmem:[%s1 + $0x1a0] sm:$0xf]
        %v772 = vld [vmem:[%s1 + $0x1a4] sm:$0xff]
        %v773 = vld [vmem:[%s1 + $0x1ac] sm:$0xf]
        %v774 = vld [vmem:[%s1 + $0x1b0] sm:$0xff]
        %v775 = vld [vmem:[%s1 + $0x1b8] sm:$0xf]
        %v776 = vld [vmem:[%s1 + $0x1bc] sm:$0xff]
        %v777 = vld [vmem:[%s1 + $0x1c4] sm:$0xf]
        %v778 = vld [vmem:[%s1 + $0x1c8] sm:$0xff]
        %v779 = vld [vmem:[%s1 + $0x1d0] sm:$0xf]
        %v780 = vld [vmem:[%s1 + $0x1d4] sm:$0xff]
        %v781 = vld [vmem:[%s1 + $0x1dc] sm:$0xf]
        %v782 = vld [vmem:[%s1 + $0x1e0] sm:$0xff]
        %v783 = vld [vmem:[%s1 + $0x1e8] sm:$0xf]
        %v784 = vld [vmem:[%s1 + $0x1ec] sm:$0xff]
        %v785 = vld [vmem:[%s1 + $0x1f4] sm:$0xf]
        %v786 = vld [vmem:[%s1 + $0x1f8] sm:$0xff]
        %v787 = vld [vmem:[%s1 + $0x200] sm:$0xf]
        %v788 = vld [vmem:[%s1 + $0x204] sm:$0xff]
        %v789 = vld [vmem:[%s1 + $0x20c] sm:$0xf]
        %v790 = vld [vmem:[%s1 + $0x210] sm:$0xff]
        %v791 = vld [vmem:[%s1 + $0x218] sm:$0xf]
        %v792 = vld [vmem:[%s1 + $0x21c] sm:$0xff]
        %v793 = vld [vmem:[%s1 + $0x224] sm:$0xf]
        %v794 = vld [vmem:[%s1 + $0x228] sm:$0xff]
        %v795 = vld [vmem:[%s1 + $0x230] sm:$0xf]
        %v796 = vld [vmem:[%s1 + $0x234] sm:$0xff]
        %v797 = vld [vmem:[%s1 + $0x23c] sm:$0xf]
        %v798 = vld [vmem:[%s1 + $0x240] sm:$0xff]
        %v799 = vld [vmem:[%s1 + $0x248] sm:$0xf]
        %v800 = vld [vmem:[%s1 + $0x24c] sm:$0xff]
        %v801 = vld [vmem:[%s1 + $0x254] sm:$0xf]
        %v802 = vld [vmem:[%s1 + $0x258] sm:$0xff]
        %v803 = vld [vmem:[%s1 + $0x260] sm:$0xf]
        %v804 = vld [vmem:[%s1 + $0x264] sm:$0xff]
        %v805 = vld [vmem:[%s1 + $0x26c] sm:$0xf]
        %v806 = vld [vmem:[%s1 + $0x270] sm:$0xff]
        %v807 = vld [vmem:[%s1 + $0x278] sm:$0xf]
        %v808 = vld [vmem:[%s1 + $0x27c] sm:$0xff]
        %v809 = vld [vmem:[%s1 + $0x284] sm:$0xf]
        %v810 = vld [vmem:[%s1 + $0x288] sm:$0xff]
        %v811 = vld [vmem:[%s1 + $0x290] sm:$0xf]
        %v812 = vld [vmem:[%s1 + $0x294] sm:$0xff]
        %v813 = vld [vmem:[%s1 + $0x29c] sm:$0xf]
        %v814 = vld [vmem:[%s1 + $0x2a0] sm:$0xff]
        %v815 = vld [vmem:[%s1 + $0x2a8] sm:$0xf]
        %v816 = vld [vmem:[%s1 + $0x2ac] sm:$0xff]
        %v817 = vld [vmem:[%s1 + $0x2b4] sm:$0xf]
        %v818 = vld [vmem:[%s1 + $0x2b8] sm:$0xff]
        %v819 = vld [vmem:[%s1 + $0x2c0] sm:$0xf]
        %v820 = vld [vmem:[%s1 + $0x2c4] sm:$0xff]
        %v821 = vld [vmem:[%s1 + $0x2cc] sm:$0xf]
        %v822 = vld [vmem:[%s1 + $0x2d0] sm:$0xff]
        %v823 = vld [vmem:[%s1 + $0x2d8] sm:$0xf]
        %v824 = vld [vmem:[%s1 + $0x2dc] sm:$0xff]
        %v825 = vld [vmem:[%s1 + $0x2e4] sm:$0xf]
        %v826 = vld [vmem:[%s1 + $0x2e8] sm:$0xff]
        %v827 = vld [vmem:[%s1 + $0x2f0] sm:$0xf]
        %v828 = vld [vmem:[%s1 + $0x2f4] sm:$0xff]
        %v829 = vld [vmem:[%s1 + $0x2fc] sm:$0xf]
        %v830 = vld [vmem:[%s1 + $0x300] sm:$0xff]
        %v831 = vld [vmem:[%s1 + $0x308] sm:$0xf]
        %v832 = vld [vmem:[%s1 + $0x30c] sm:$0xff]
        %v833 = vld [vmem:[%s1 + $0x314] sm:$0xf]
        %v834 = vld [vmem:[%s1 + $0x318] sm:$0xff]
        %v835 = vld [vmem:[%s1 + $0x320] sm:$0xf]
        %v836 = vld [vmem:[%s1 + $0x324] sm:$0xff]
        %v837 = vld [vmem:[%s1 + $0x32c] sm:$0xf]
        %v838 = vld [vmem:[%s1 + $0x330] sm:$0xff]
        %v839 = vld [vmem:[%s1 + $0x338] sm:$0xf]
        %v840 = vld [vmem:[%s1 + $0x33c] sm:$0xff]
        %v841 = vld [vmem:[%s1 + $0x344] sm:$0xf]
        %v842 = vld [vmem:[%s1 + $0x348] sm:$0xff]
        %v843 = vld [vmem:[%s1 + $0x350] sm:$0xf]
        %v844 = vld [vmem:[%s1 + $0x354] sm:$0xff]
        %v845 = vld [vmem:[%s1 + $0x35c] sm:$0xf]
        %v846 = vld [vmem:[%s1 + $0x360] sm:$0xff]
        %v847 = vld [vmem:[%s1 + $0x368] sm:$0xf]
        %v848 = vld [vmem:[%s1 + $0x36c] sm:$0xff]
        %v849 = vld [vmem:[%s1 + $0x374] sm:$0xf]
        %v850 = vld [vmem:[%s1 + $0x378] sm:$0xff]
        %v851 = vld [vmem:[%s1 + $0x380] sm:$0xf]
        %v852 = vld [vmem:[%s1 + $0x384] sm:$0xff]
        %v853 = vld [vmem:[%s1 + $0x38c] sm:$0xf]
        %v854 = vld [vmem:[%s1 + $0x390] sm:$0xff]
        %v855 = vld [vmem:[%s1 + $0x398] sm:$0xf]
        %v856 = vld [vmem:[%s1 + $0x39c] sm:$0xff]
        %v857 = vld [vmem:[%s1 + $0x3a4] sm:$0xf]
        %v858 = vld [vmem:[%s1 + $0x3a8] sm:$0xff]
        %v859 = vld [vmem:[%s1 + $0x3b0] sm:$0xf]
        %v860 = vld [vmem:[%s1 + $0x3b4] sm:$0xff]
        %v861 = vld [vmem:[%s1 + $0x3bc] sm:$0xf]
        %v862 = vld [vmem:[%s1 + $0x3c0] sm:$0xff]
        %v863 = vld [vmem:[%s1 + $0x3c8] sm:$0xf]
        %v864 = vld [vmem:[%s1 + $0x3cc] sm:$0xff]
        %v865 = vld [vmem:[%s1 + $0x3d4] sm:$0xf]
        %v866 = vld [vmem:[%s1 + $0x3d8] sm:$0xff]
        %v867 = vld [vmem:[%s1 + $0x3e0] sm:$0xf]
        %v868 = vld [vmem:[%s1 + $0x3e4] sm:$0xff]
        %v869 = vld [vmem:[%s1 + $0x3ec] sm:$0xf]
        %v870 = vld [vmem:[%s1 + $0x3f0] sm:$0xff]
        %v871 = vld [vmem:[%s1 + $0x3f8] sm:$0xf]
        %v872 = vld [vmem:[%s1 + $0x3fc] sm:$0xff]
        %v873 = vld [vmem:[%s1 + $0x404] sm:$0xf]
        %v874 = vld [vmem:[%s1 + $0x408] sm:$0xff]
        %v875 = vld [vmem:[%s1 + $0x410] sm:$0xf]
        %v876 = vld [vmem:[%s1 + $0x414] sm:$0xff]
        %v877 = vld [vmem:[%s1 + $0x41c] sm:$0xf]
        %v878 = vld [vmem:[%s1 + $0x420] sm:$0xff]
        %v879 = vld [vmem:[%s1 + $0x428] sm:$0xf]
        %v880 = vld [vmem:[%s1 + $0x42c] sm:$0xff]
        %v881 = vld [vmem:[%s1 + $0x434] sm:$0xf]
        %v882 = vld [vmem:[%s1 + $0x438] sm:$0xff]
        %v883 = vld [vmem:[%s1 + $0x440] sm:$0xf]
        %v884 = vld [vmem:[%s1 + $0x444] sm:$0xff]
        %v885 = vld [vmem:[%s1 + $0x44c] sm:$0xf]
        %v886 = vld [vmem:[%s1 + $0x450] sm:$0xff]
        %v887 = vld [vmem:[%s1 + $0x458] sm:$0xf]
        %v888 = vld [vmem:[%s1 + $0x45c] sm:$0xff]
        %v889 = vld [vmem:[%s1 + $0x464] sm:$0xf]
        %v890 = vld [vmem:[%s1 + $0x468] sm:$0xff]
        %v891 = vld [vmem:[%s1 + $0x470] sm:$0xf]
        %v892 = vld [vmem:[%s1 + $0x474] sm:$0xff]
        %v893 = vld [vmem:[%s1 + $0x47c] sm:$0xf]
        %v894 = vld [vmem:[%s1 + $0x480] sm:$0xff]
        %v895 = vld [vmem:[%s1 + $0x488] sm:$0xf]
        %v896 = vld [vmem:[%s1 + $0x48c] sm:$0xff]
        %v897 = vld [vmem:[%s1 + $0x494] sm:$0xf]
        %v898 = vld [vmem:[%s1 + $0x498] sm:$0xff]
        %v899 = vld [vmem:[%s1 + $0x4a0] sm:$0xf]
        %v900 = vld [vmem:[%s1 + $0x4a4] sm:$0xff]
        %v901 = vld [vmem:[%s1 + $0x4ac] sm:$0xf]
        %v902 = vld [vmem:[%s1 + $0x4b0] sm:$0xff]
        %v903 = vld [vmem:[%s1 + $0x4b8] sm:$0xf]
        %v904 = vld [vmem:[%s1 + $0x4bc] sm:$0xff]
        %v905 = vld [vmem:[%s1 + $0x4c4] sm:$0xf]
        %v906 = vld [vmem:[%s1 + $0x4c8] sm:$0xff]
        %v907 = vld [vmem:[%s1 + $0x4d0] sm:$0xf]
        %v908 = vld [vmem:[%s1 + $0x4d4] sm:$0xff]
        %v909 = vld [vmem:[%s1 + $0x4dc] sm:$0xf]
        %v910 = vld [vmem:[%s1 + $0x4e0] sm:$0xff]
        %v911 = vld [vmem:[%s1 + $0x4e8] sm:$0xf]
        %v912 = vld [vmem:[%s1 + $0x4ec] sm:$0xff]
        %v913 = vld [vmem:[%s1 + $0x4f4] sm:$0xf]
        %v914 = vld [vmem:[%s1 + $0x4f8] sm:$0xff]
        %v915 = vld [vmem:[%s1 + $0x500] sm:$0xf]
        %v916 = vld [vmem:[%s1 + $0x504] sm:$0xff]
        %v917 = vld [vmem:[%s1 + $0x50c] sm:$0xf]
        %v918 = vld [vmem:[%s1 + $0x510] sm:$0xff]
        %v919 = vld [vmem:[%s1 + $0x518] sm:$0xf]
        %v920 = vld [vmem:[%s1 + $0x51c] sm:$0xff]
        %v921 = vld [vmem:[%s1 + $0x524] sm:$0xf]
        %v922 = vld [vmem:[%s1 + $0x528] sm:$0xff]
        %v923 = vld [vmem:[%s1 + $0x530] sm:$0xf]
        %v924 = vld [vmem:[%s1 + $0x534] sm:$0xff]
        %v925 = vld [vmem:[%s1 + $0x53c] sm:$0xf]
        %v926 = vld [vmem:[%s1 + $0x540] sm:$0xff]
        %v927 = vld [vmem:[%s1 + $0x548] sm:$0xf]
        %v928 = vld [vmem:[%s1 + $0x54c] sm:$0xff]
        %v929 = vld [vmem:[%s1 + $0x554] sm:$0xf]
        %v930 = vld [vmem:[%s1 + $0x558] sm:$0xff]
        %v931 = vld [vmem:[%s1 + $0x560] sm:$0xf]
        %v932 = vld [vmem:[%s1 + $0x564] sm:$0xff]
        %v933 = vld [vmem:[%s1 + $0x56c] sm:$0xf]
        %v934 = vld [vmem:[%s1 + $0x570] sm:$0xff]
        %v935 = vld [vmem:[%s1 + $0x578] sm:$0xf]
        %v936 = vld [vmem:[%s1 + $0x57c] sm:$0xff]
        %v937 = vld [vmem:[%s1 + $0x584] sm:$0xf]
        %v938 = vld [vmem:[%s1 + $0x588] sm:$0xff]
        %v939 = vld [vmem:[%s1 + $0x590] sm:$0xf]
        %v940 = vld [vmem:[%s1 + $0x594] sm:$0xff]
        %v941 = vld [vmem:[%s1 + $0x59c] sm:$0xf]
        %v942 = vld [vmem:[%s1 + $0x5a0] sm:$0xff]
        %v943 = vld [vmem:[%s1 + $0x5a8] sm:$0xf]
        %v944 = vld [vmem:[%s1 + $0x5ac] sm:$0xff]
        %v945 = vld [vmem:[%s1 + $0x5b4] sm:$0xf]
        %v946 = vld [vmem:[%s1 + $0x5b8] sm:$0xff]
        %v947 = vld [vmem:[%s1 + $0x5c0] sm:$0xf]
        %v948 = vld [vmem:[%s1 + $0x5c4] sm:$0xff]
        %v949 = vld [vmem:[%s1 + $0x5cc] sm:$0xf]
        %v950 = vld [vmem:[%s1 + $0x5d0] sm:$0xff]
        %v951 = vld [vmem:[%s1 + $0x5d8] sm:$0xf]
        %v952 = vld [vmem:[%s1 + $0x5dc] sm:$0xff]
        %v953 = vld [vmem:[%s1 + $0x5e4] sm:$0xf]
        %v954 = vld [vmem:[%s1 + $0x5e8] sm:$0xff]
        %v955 = vld [vmem:[%s1 + $0x5f0] sm:$0xf]
        %v956 = vld [vmem:[%s1 + $0x5f4] sm:$0xff]
        %v957 = vld [vmem:[%s1 + $0x5fc] sm:$0xf]
        %v958 = vld [vmem:[%s1 + $0x600] sm:$0xff]
        %v959 = vld [vmem:[%s1 + $0x608] sm:$0xf]
        %v960 = vld [vmem:[%s1 + $0x60c] sm:$0xff]
        %v961 = vld [vmem:[%s1 + $0x614] sm:$0xf]
        %v962 = vld [vmem:[%s1 + $0x618] sm:$0xff]
        %v963 = vld [vmem:[%s1 + $0x620] sm:$0xf]
        %v964 = vld [vmem:[%s1 + $0x624] sm:$0xff]
        %v965 = vld [vmem:[%s1 + $0x62c] sm:$0xf]
        %v966 = vld [vmem:[%s1 + $0x630] sm:$0xff]
        %v967 = vld [vmem:[%s1 + $0x638] sm:$0xf]
        %v968 = vld [vmem:[%s1 + $0x63c] sm:$0xff]
        %v969 = vld [vmem:[%s1 + $0x644] sm:$0xf]
        %v970 = vld [vmem:[%s1 + $0x648] sm:$0xff]
        %v971 = vld [vmem:[%s1 + $0x650] sm:$0xf]
        %v972 = vld [vmem:[%s1 + $0x654] sm:$0xff]
        %v973 = vld [vmem:[%s1 + $0x65c] sm:$0xf]
        %v974 = vld [vmem:[%s1 + $0x660] sm:$0xff]
        %v975 = vld [vmem:[%s1 + $0x668] sm:$0xf]
        %v976 = vld [vmem:[%s1 + $0x66c] sm:$0xff]
        %v977 = vld [vmem:[%s1 + $0x674] sm:$0xf]
        %v978 = vld [vmem:[%s1 + $0x678] sm:$0xff]
        %v979 = vld [vmem:[%s1 + $0x680] sm:$0xf]
        %v980 = vld [vmem:[%s1 + $0x684] sm:$0xff]
        %v981 = vld [vmem:[%s1 + $0x68c] sm:$0xf]
        %v982 = vld [vmem:[%s1 + $0x690] sm:$0xff]
        %v983 = vld [vmem:[%s1 + $0x698] sm:$0xf]
        %v984 = vld [vmem:[%s1 + $0x69c] sm:$0xff]
        %v985 = vld [vmem:[%s1 + $0x6a4] sm:$0xf]
        %v986 = vld [vmem:[%s1 + $0x6a8] sm:$0xff]
        %v987 = vld [vmem:[%s1 + $0x6b0] sm:$0xf]
        %v988 = vld [vmem:[%s1 + $0x6b4] sm:$0xff]
        %v989 = vld [vmem:[%s1 + $0x6bc] sm:$0xf]
        %v990 = vld [vmem:[%s1 + $0x6c0] sm:$0xff]
        %v991 = vld [vmem:[%s1 + $0x6c8] sm:$0xf]
        %v992 = vld [vmem:[%s1 + $0x6cc] sm:$0xff]
        %v993 = vld [vmem:[%s1 + $0x6d4] sm:$0xf]
        %v994 = vld [vmem:[%s1 + $0x6d8] sm:$0xff]
        %v995 = vld [vmem:[%s1 + $0x6e0] sm:$0xf]
        %v996 = vld [vmem:[%s1 + $0x6e4] sm:$0xff]
        %v997 = vld [vmem:[%s1 + $0x6ec] sm:$0xf]
        %v998 = vld [vmem:[%s1 + $0x6f0] sm:$0xff]
        %v999 = vld [vmem:[%s1 + $0x6f8] sm:$0xf]
        %v1000 = vld [vmem:[%s1 + $0x6fc] sm:$0xff]
        %v1001 = vld [vmem:[%s1 + $0x704] sm:$0xf]
        %v1002 = vld [vmem:[%s1 + $0x708] sm:$0xff]
        %v1003 = vld [vmem:[%s1 + $0x710] sm:$0xf]
        %v1004 = vld [vmem:[%s1 + $0x714] sm:$0xff]
        %v1005 = vld [vmem:[%s1 + $0x71c] sm:$0xf]
        %v1006 = vld [vmem:[%s1 + $0x720] sm:$0xff]
        %v1007 = vld [vmem:[%s1 + $0x728] sm:$0xf]
        %v1008 = vld [vmem:[%s1 + $0x72c] sm:$0xff]
        %v1009 = vld [vmem:[%s1 + $0x734] sm:$0xf]
        %v1010 = vld [vmem:[%s1 + $0x738] sm:$0xff]
        %v1011 = vld [vmem:[%s1 + $0x740] sm:$0xf]
        %v1012 = vld [vmem:[%s1 + $0x744] sm:$0xff]
        %v1013 = vld [vmem:[%s1 + $0x74c] sm:$0xf]
        %v1014 = vld [vmem:[%s1 + $0x750] sm:$0xff]
        %v1015 = vld [vmem:[%s1 + $0x758] sm:$0xf]
        %v1016 = vld [vmem:[%s1 + $0x75c] sm:$0xff]
        %v1017 = vld [vmem:[%s1 + $0x764] sm:$0xf]
        %v1018 = vld [vmem:[%s1 + $0x768] sm:$0xff]
        %v1019 = vld [vmem:[%s1 + $0x770] sm:$0xf]
        %v1020 = vld [vmem:[%s1 + $0x774] sm:$0xff]
        %v1021 = vld [vmem:[%s1 + $0x77c] sm:$0xf]
        %v1022 = vld [vmem:[%s1 + $0x780] sm:$0xff]
        %v1023 = vld [vmem:[%s1 + $0x788] sm:$0xf]
        %v1024 = vld [vmem:[%s1 + $0x78c] sm:$0xff]
        %v1025 = vld [vmem:[%s1 + $0x794] sm:$0xf]
        %v1026 = vld [vmem:[%s1 + $0x798] sm:$0xff]
        %v1027 = vld [vmem:[%s1 + $0x7a0] sm:$0xf]
        %v1028 = vld [vmem:[%s1 + $0x7a4] sm:$0xff]
        %v1029 = vld [vmem:[%s1 + $0x7ac] sm:$0xf]
        %v1030 = vld [vmem:[%s1 + $0x7b0] sm:$0xff]
        %v1031 = vld [vmem:[%s1 + $0x7b8] sm:$0xf]
        %v1032 = vld [vmem:[%s1 + $0x7bc] sm:$0xff]
        %v1033 = vld [vmem:[%s1 + $0x7c4] sm:$0xf]
        %v1034 = vld [vmem:[%s1 + $0x7c8] sm:$0xff]
        %v1035 = vld [vmem:[%s1 + $0x7d0] sm:$0xf]
        %v1036 = vld [vmem:[%s1 + $0x7d4] sm:$0xff]
        %v1037 = vld [vmem:[%s1 + $0x7dc] sm:$0xf]
        %v1038 = vld [vmem:[%s1 + $0x7e0] sm:$0xff]
        %v1039 = vld [vmem:[%s1 + $0x7e8] sm:$0xf]
        %v1040 = vld [vmem:[%s1 + $0x7ec] sm:$0xff]
        %v1041 = vld [vmem:[%s1 + $0x7f4] sm:$0xf]
        %v1042 = vld [vmem:[%s1 + $0x7f8] sm:$0xff]
        %v1043 = vld [vmem:[%s1 + $0x800] sm:$0xf]
        %v1044 = vld [vmem:[%s1 + $0x804] sm:$0xff]
        %v1045 = vld [vmem:[%s1 + $0x80c] sm:$0xf]
        %v1046 = vld [vmem:[%s1 + $0x810] sm:$0xff]
        %v1047 = vld [vmem:[%s1 + $0x818] sm:$0xf]
        %v1048 = vld [vmem:[%s1 + $0x81c] sm:$0xff]
        %v1049 = vld [vmem:[%s1 + $0x824] sm:$0xf]
        %v1050 = vld [vmem:[%s1 + $0x828] sm:$0xff]
        %v1051 = vld [vmem:[%s1 + $0x830] sm:$0xf]
        %v1052 = vld [vmem:[%s1 + $0x834] sm:$0xff]
        %v1053 = vld [vmem:[%s1 + $0x83c] sm:$0xf]
        %v1054 = vld [vmem:[%s1 + $0x840] sm:$0xff]
        %v1055 = vld [vmem:[%s1 + $0x848] sm:$0xf]
        %v1056 = vld [vmem:[%s1 + $0x84c] sm:$0xff]
        %v1057 = vld [vmem:[%s1 + $0x854] sm:$0xf]
        %v1058 = vld [vmem:[%s1 + $0x858] sm:$0xff]
        %v1059 = vld [vmem:[%s1 + $0x860] sm:$0xf]
        %v1060 = vld [vmem:[%s1 + $0x864] sm:$0xff]
        %v1061 = vld [vmem:[%s1 + $0x86c] sm:$0xf]
        %v1062 = vld [vmem:[%s1 + $0x870] sm:$0xff]
        %v1063 = vld [vmem:[%s1 + $0x878] sm:$0xf]
        %v1064 = vld [vmem:[%s1 + $0x87c] sm:$0xff]
        %v1065 = vld [vmem:[%s1 + $0x884] sm:$0xf]
        %v1066 = vld [vmem:[%s1 + $0x888] sm:$0xff]
        %v1067 = vld [vmem:[%s1 + $0x890] sm:$0xf]
        %v1068 = vld [vmem:[%s1 + $0x894] sm:$0xff]
        %v1069 = vld [vmem:[%s1 + $0x89c] sm:$0xf]
        %v1070 = vld [vmem:[%s1 + $0x8a0] sm:$0xff]
        %v1071 = vld [vmem:[%s1 + $0x8a8] sm:$0xf]
        %v1072 = vld [vmem:[%s1 + $0x8ac] sm:$0xff]
        %v1073 = vld [vmem:[%s1 + $0x8b4] sm:$0xf]
        %v1074 = vld [vmem:[%s1 + $0x8b8] sm:$0xff]
        %v1075 = vld [vmem:[%s1 + $0x8c0] sm:$0xf]
        %v1076 = vld [vmem:[%s1 + $0x8c4] sm:$0xff]
        %v1077 = vld [vmem:[%s1 + $0x8cc] sm:$0xf]
        %v1078 = vld [vmem:[%s1 + $0x8d0] sm:$0xff]
        %v1079 = vld [vmem:[%s1 + $0x8d8] sm:$0xf]
        %v1080 = vld [vmem:[%s1 + $0x8dc] sm:$0xff]
        %v1081 = vld [vmem:[%s1 + $0x8e4] sm:$0xf]
        %v1082 = vld [vmem:[%s1 + $0x8e8] sm:$0xff]
        %v1083 = vld [vmem:[%s1 + $0x8f0] sm:$0xf]
        %v1084 = vld [vmem:[%s1 + $0x8f4] sm:$0xff]
        %v1085 = vld [vmem:[%s1 + $0x8fc] sm:$0xf]
        %v1086 = vld [vmem:[%s1 + $0x900] sm:$0xff]
        %v1087 = vld [vmem:[%s1 + $0x908] sm:$0xf]
        %v1088 = vld [vmem:[%s1 + $0x90c] sm:$0xff]
        %v1089 = vld [vmem:[%s1 + $0x914] sm:$0xf]
        %v1090 = vld [vmem:[%s1 + $0x918] sm:$0xff]
        %v1091 = vld [vmem:[%s1 + $0x920] sm:$0xf]
        %v1092 = vld [vmem:[%s1 + $0x924] sm:$0xff]
        %v1093 = vld [vmem:[%s1 + $0x92c] sm:$0xf]
        %v1094 = vld [vmem:[%s1 + $0x930] sm:$0xff]
        %v1095 = vld [vmem:[%s1 + $0x938] sm:$0xf]
        %v1096 = vld [vmem:[%s1 + $0x93c] sm:$0xff]
        %v1097 = vld [vmem:[%s1 + $0x944] sm:$0xf]
        %v1098 = vld [vmem:[%s1 + $0x948] sm:$0xff]
        %v1099 = vld [vmem:[%s1 + $0x950] sm:$0xf]
        %v1100 = vld [vmem:[%s1 + $0x954] sm:$0xff]
        %v1101 = vld [vmem:[%s1 + $0x95c] sm:$0xf]
        %v1102 = vld [vmem:[%s1 + $0x960] sm:$0xff]
        %v1103 = vld [vmem:[%s1 + $0x968] sm:$0xf]
        %v1104 = vld [vmem:[%s1 + $0x96c] sm:$0xff]
        %v1105 = vld [vmem:[%s1 + $0x974] sm:$0xf]
        %v1106 = vld [vmem:[%s1 + $0x978] sm:$0xff]
        %v1107 = vld [vmem:[%s1 + $0x980] sm:$0xf]
        %v1108 = vld [vmem:[%s1 + $0x984] sm:$0xff]
        %v1109 = vld [vmem:[%s1 + $0x98c] sm:$0xf]
        %v1110 = vld [vmem:[%s1 + $0x990] sm:$0xff]
        %v1111 = vld [vmem:[%s1 + $0x998] sm:$0xf]
        %v1112 = vld [vmem:[%s1 + $0x99c] sm:$0xff]
        %v1113 = vld [vmem:[%s1 + $0x9a4] sm:$0xf]
        %v1114 = vld [vmem:[%s1 + $0x9a8] sm:$0xff]
        %v1115 = vld [vmem:[%s1 + $0x9b0] sm:$0xf]
        %v1116 = vld [vmem:[%s1 + $0x9b4] sm:$0xff]
        %v1117 = vld [vmem:[%s1 + $0x9bc] sm:$0xf]
        %v1118 = vld [vmem:[%s1 + $0x9c0] sm:$0xff]
        %v1119 = vld [vmem:[%s1 + $0x9c8] sm:$0xf]
        %v1120 = vld [vmem:[%s1 + $0x9cc] sm:$0xff]
        %v1121 = vld [vmem:[%s1 + $0x9d4] sm:$0xf]
        %v1122 = vld [vmem:[%s1 + $0x9d8] sm:$0xff]
        %v1123 = vld [vmem:[%s1 + $0x9e0] sm:$0xf]
        %v1124 = vld [vmem:[%s1 + $0x9e4] sm:$0xff]
        %v1125 = vld [vmem:[%s1 + $0x9ec] sm:$0xf]
        %v1126 = vld [vmem:[%s1 + $0x9f0] sm:$0xff]
        %v1127 = vld [vmem:[%s1 + $0x9f8] sm:$0xf]
        %v1128 = vld [vmem:[%s1 + $0x9fc] sm:$0xff]
        %v1129 = vld [vmem:[%s1 + $0xa04] sm:$0xf]
        %v1130 = vld [vmem:[%s1 + $0xa08] sm:$0xff]
        %v1131 = vld [vmem:[%s1 + $0xa10] sm:$0xf]
        %v1132 = vld [vmem:[%s1 + $0xa14] sm:$0xff]
        %v1133 = vld [vmem:[%s1 + $0xa1c] sm:$0xf]
        %v1134 = vld [vmem:[%s1 + $0xa20] sm:$0xff]
        %v1135 = vld [vmem:[%s1 + $0xa28] sm:$0xf]
        %v1136 = vld [vmem:[%s1 + $0xa2c] sm:$0xff]
        %v1137 = vld [vmem:[%s1 + $0xa34] sm:$0xf]
        %v1138 = vld [vmem:[%s1 + $0xa38] sm:$0xff]
        %v1139 = vld [vmem:[%s1 + $0xa40] sm:$0xf]
        %v1140 = vld [vmem:[%s1 + $0xa44] sm:$0xff]
        %v1141 = vld [vmem:[%s1 + $0xa4c] sm:$0xf]
        %v1142 = vld [vmem:[%s1 + $0xa50] sm:$0xff]
        %v1143 = vld [vmem:[%s1 + $0xa58] sm:$0xf]
        %v1144 = vld [vmem:[%s1 + $0xa5c] sm:$0xff]
        %v1145 = vld [vmem:[%s1 + $0xa64] sm:$0xf]
        %v1146 = vld [vmem:[%s1 + $0xa68] sm:$0xff]
        %v1147 = vld [vmem:[%s1 + $0xa70] sm:$0xf]
        %v1148 = vld [vmem:[%s1 + $0xa74] sm:$0xff]
        %v1149 = vld [vmem:[%s1 + $0xa7c] sm:$0xf]
        %v1150 = vld [vmem:[%s1 + $0xa80] sm:$0xff]
        %v1151 = vld [vmem:[%s1 + $0xa88] sm:$0xf]
        %v1152 = vld [vmem:[%s1 + $0xa8c] sm:$0xff]
        %v1153 = vld [vmem:[%s1 + $0xa94] sm:$0xf]
        %v1154 = vld [vmem:[%s1 + $0xa98] sm:$0xff]
        %v1155 = vld [vmem:[%s1 + $0xaa0] sm:$0xf]
        %v1156 = vld [vmem:[%s1 + $0xaa4] sm:$0xff]
        %v1157 = vld [vmem:[%s1 + $0xaac] sm:$0xf]
        %v1158 = vld [vmem:[%s1 + $0xab0] sm:$0xff]
        %v1159 = vld [vmem:[%s1 + $0xab8] sm:$0xf]
        %v1160 = vld [vmem:[%s1 + $0xabc] sm:$0xff]
        %v1161 = vld [vmem:[%s1 + $0xac4] sm:$0xf]
        %v1162 = vld [vmem:[%s1 + $0xac8] sm:$0xff]
        %v1163 = vld [vmem:[%s1 + $0xad0] sm:$0xf]
        %v1164 = vld [vmem:[%s1 + $0xad4] sm:$0xff]
        %v1165 = vld [vmem:[%s1 + $0xadc] sm:$0xf]
        %v1166 = vld [vmem:[%s1 + $0xae0] sm:$0xff]
        %v1167 = vld [vmem:[%s1 + $0xae8] sm:$0xf]
        %v1168 = vld [vmem:[%s1 + $0xaec] sm:$0xff]
        %v1169 = vld [vmem:[%s1 + $0xaf4] sm:$0xf]
        %v1170 = vld [vmem:[%s1 + $0xaf8] sm:$0xff]
        %v1171 = vld [vmem:[%s1 + $0xb00] sm:$0xf]
        %v1172 = vld [vmem:[%s1 + $0xb04] sm:$0xff]
        %v1173 = vld [vmem:[%s1 + $0xb0c] sm:$0xf]
        %v1174 = vld [vmem:[%s1 + $0xb10] sm:$0xff]
        %v1175 = vld [vmem:[%s1 + $0xb18] sm:$0xf]
        %v1176 = vld [vmem:[%s1 + $0xb1c] sm:$0xff]
        %v1177 = vld [vmem:[%s1 + $0xb24] sm:$0xf]
        %v1178 = vld [vmem:[%s1 + $0xb28] sm:$0xff]
        %v1179 = vld [vmem:[%s1 + $0xb30] sm:$0xf]
        %v1180 = vld [vmem:[%s1 + $0xb34] sm:$0xff]
        %v1181 = vld [vmem:[%s1 + $0xb3c] sm:$0xf]
        %v1182 = vld [vmem:[%s1 + $0xb40] sm:$0xff]
        %v1183 = vld [vmem:[%s1 + $0xb48] sm:$0xf]
        %v1184 = vld [vmem:[%s1 + $0xb4c] sm:$0xff]
        %v1185 = vld [vmem:[%s1 + $0xb54] sm:$0xf]
        %v1186 = vld [vmem:[%s1 + $0xb58] sm:$0xff]
        %v1187 = vld [vmem:[%s1 + $0xb60] sm:$0xf]
        %v1188 = vld [vmem:[%s1 + $0xb64] sm:$0xff]
        %v1189 = vld [vmem:[%s1 + $0xb6c] sm:$0xf]
        %v1190 = vld [vmem:[%s1 + $0xb70] sm:$0xff]
        %v1191 = vld [vmem:[%s1 + $0xb78] sm:$0xf]
        %v1192 = vld [vmem:[%s1 + $0xb7c] sm:$0xff]
        %v1193 = vld [vmem:[%s1 + $0xb84] sm:$0xf]
        %v1194 = vld [vmem:[%s1 + $0xb88] sm:$0xff]
        %v1195 = vld [vmem:[%s1 + $0xb90] sm:$0xf]
        %v1196 = vld [vmem:[%s1 + $0xb94] sm:$0xff]
        %v1197 = vld [vmem:[%s1 + $0xb9c] sm:$0xf]
        %v1198 = vld [vmem:[%s1 + $0xba0] sm:$0xff]
        %v1199 = vld [vmem:[%s1 + $0xba8] sm:$0xf]
        %v1200 = vld [vmem:[%s1 + $0xbac] sm:$0xff]
        %v1201 = vld [vmem:[%s1 + $0xbb4] sm:$0xf]
        %v1202 = vld [vmem:[%s1 + $0xbb8] sm:$0xff]
        %v1203 = vld [vmem:[%s1 + $0xbc0] sm:$0xf]
        %v1204 = vld [vmem:[%s1 + $0xbc4] sm:$0xff]
        %v1205 = vld [vmem:[%s1 + $0xbcc] sm:$0xf]
        %v1206 = vld [vmem:[%s1 + $0xbd0] sm:$0xff]
        %v1207 = vld [vmem:[%s1 + $0xbd8] sm:$0xf]
        %v1208 = vld [vmem:[%s1 + $0xbdc] sm:$0xff]
        %v1209 = vld [vmem:[%s1 + $0xbe4] sm:$0xf]
        %v1210 = vld [vmem:[%s1 + $0xbe8] sm:$0xff]
        %v1211 = vld [vmem:[%s1 + $0xbf0] sm:$0xf]
        %v1212 = vld [vmem:[%s1 + $0xbf4] sm:$0xff]
        %v1213 = vld [vmem:[%s1 + $0xbfc] sm:$0xf]
        %v1214 = vld [vmem:[%s1 + $0xc00] sm:$0xff]
        %v1215 = vld [vmem:[%s1 + $0xc08] sm:$0xf]
        %v1216 = vld [vmem:[%s1 + $0xc0c] sm:$0xff]
        %v1217 = vld [vmem:[%s1 + $0xc14] sm:$0xf]
        %v1218 = vld [vmem:[%s1 + $0xc18] sm:$0xff]
        %v1219 = vld [vmem:[%s1 + $0xc20] sm:$0xf]
        %v1220 = vld [vmem:[%s1 + $0xc24] sm:$0xff]
        %v1221 = vld [vmem:[%s1 + $0xc2c] sm:$0xf]
        %v1222 = vld [vmem:[#allocation7] sm:$0x7]
        %v1224 = vperm.slane %v1222, 0
        %v1225 = vperm.slane %v1222, 1
        %v1226 = vperm.slane %v1222, 2
        %v1750 = vunpack.c.l.b16 %v702
        %v1751 = vunpack.c.h.b16 %v702
        %v1752 = vunpack.c.l.b16 %v703
        %v1753 = vunpack.c.l.b16 %v704
        %v1754 = vunpack.c.h.b16 %v704
        %v1755 = vunpack.c.l.b16 %v705
        %v1756 = vunpack.c.l.b16 %v706
        %v1757 = vunpack.c.h.b16 %v706
        %v1758 = vunpack.c.l.b16 %v707
        %v1759 = vunpack.c.l.b16 %v708
        %v1760 = vunpack.c.h.b16 %v708
        %v1761 = vunpack.c.l.b16 %v709
        %v1762 = vunpack.c.l.b16 %v710
        %v1763 = vunpack.c.h.b16 %v710
        %v1764 = vunpack.c.l.b16 %v711
        %v1765 = vunpack.c.l.b16 %v712
        %v1766 = vunpack.c.h.b16 %v712
        %v1767 = vunpack.c.l.b16 %v713
        %v1768 = vunpack.c.l.b16 %v714
        %v1769 = vunpack.c.h.b16 %v714
        %v1770 = vunpack.c.l.b16 %v715
        %v1771 = vunpack.c.l.b16 %v716
        %v1772 = vunpack.c.h.b16 %v716
        %v1773 = vunpack.c.l.b16 %v717
        %v1774 = vunpack.c.l.b16 %v718
        %v1775 = vunpack.c.h.b16 %v718
        %v1776 = vunpack.c.l.b16 %v719
        %v1777 = vunpack.c.l.b16 %v720
        %v1778 = vunpack.c.h.b16 %v720
        %v1779 = vunpack.c.l.b16 %v721
        %v1780 = vunpack.c.l.b16 %v722
        %v1781 = vunpack.c.h.b16 %v722
        %v1782 = vunpack.c.l.b16 %v723
        %v1783 = vunpack.c.l.b16 %v724
        %v1784 = vunpack.c.h.b16 %v724
        %v1785 = vunpack.c.l.b16 %v725
        %v1786 = vunpack.c.l.b16 %v726
        %v1787 = vunpack.c.h.b16 %v726
        %v1788 = vunpack.c.l.b16 %v727
        %v1789 = vunpack.c.l.b16 %v728
        %v1790 = vunpack.c.h.b16 %v728
        %v1791 = vunpack.c.l.b16 %v729
        %v1792 = vunpack.c.l.b16 %v730
        %v1793 = vunpack.c.h.b16 %v730
        %v1794 = vunpack.c.l.b16 %v731
        %v1795 = vunpack.c.l.b16 %v732
        %v1796 = vunpack.c.h.b16 %v732
        %v1797 = vunpack.c.l.b16 %v733
        %v1798 = vunpack.c.l.b16 %v734
        %v1799 = vunpack.c.h.b16 %v734
        %v1800 = vunpack.c.l.b16 %v735
        %v1801 = vunpack.c.l.b16 %v736
        %v1802 = vunpack.c.h.b16 %v736
        %v1803 = vunpack.c.l.b16 %v737
        %v1804 = vunpack.c.l.b16 %v738
        %v1805 = vunpack.c.h.b16 %v738
        %v1806 = vunpack.c.l.b16 %v739
        %v1807 = vunpack.c.l.b16 %v740
        %v1808 = vunpack.c.h.b16 %v740
        %v1809 = vunpack.c.l.b16 %v741
        %v1810 = vunpack.c.l.b16 %v742
        %v1811 = vunpack.c.h.b16 %v742
        %v1812 = vunpack.c.l.b16 %v743
        %v1813 = vunpack.c.l.b16 %v744
        %v1814 = vunpack.c.h.b16 %v744
        %v1815 = vunpack.c.l.b16 %v745
        %v1816 = vunpack.c.l.b16 %v746
        %v1817 = vunpack.c.h.b16 %v746
        %v1818 = vunpack.c.l.b16 %v747
        %v1819 = vunpack.c.l.b16 %v748
        %v1820 = vunpack.c.h.b16 %v748
        %v1821 = vunpack.c.l.b16 %v749
        %v1822 = vunpack.c.l.b16 %v750
        %v1823 = vunpack.c.h.b16 %v750
        %v1824 = vunpack.c.l.b16 %v751
        %v1825 = vunpack.c.l.b16 %v752
        %v1826 = vunpack.c.h.b16 %v752
        %v1827 = vunpack.c.l.b16 %v753
        %v1828 = vunpack.c.l.b16 %v754
        %v1829 = vunpack.c.h.b16 %v754
        %v1830 = vunpack.c.l.b16 %v755
        %v1831 = vunpack.c.l.b16 %v756
        %v1832 = vunpack.c.h.b16 %v756
        %v1833 = vunpack.c.l.b16 %v757
        %v1834 = vunpack.c.l.b16 %v758
        %v1835 = vunpack.c.h.b16 %v758
        %v1836 = vunpack.c.l.b16 %v759
        %v1837 = vunpack.c.l.b16 %v760
        %v1838 = vunpack.c.h.b16 %v760
        %v1839 = vunpack.c.l.b16 %v761
        %v1840 = vunpack.c.l.b16 %v762
        %v1841 = vunpack.c.h.b16 %v762
        %v1842 = vunpack.c.l.b16 %v763
        %v1843 = vunpack.c.l.b16 %v764
        %v1844 = vunpack.c.h.b16 %v764
        %v1845 = vunpack.c.l.b16 %v765
        %v1846 = vunpack.c.l.b16 %v766
        %v1847 = vunpack.c.h.b16 %v766
        %v1848 = vunpack.c.l.b16 %v767
        %v1849 = vunpack.c.l.b16 %v768
        %v1850 = vunpack.c.h.b16 %v768
        %v1851 = vunpack.c.l.b16 %v769
        %v1852 = vunpack.c.l.b16 %v770
        %v1853 = vunpack.c.h.b16 %v770
        %v1854 = vunpack.c.l.b16 %v771
        %v1855 = vunpack.c.l.b16 %v772
        %v1856 = vunpack.c.h.b16 %v772
        %v1857 = vunpack.c.l.b16 %v773
        %v1858 = vunpack.c.l.b16 %v774
        %v1859 = vunpack.c.h.b16 %v774
        %v1860 = vunpack.c.l.b16 %v775
        %v1861 = vunpack.c.l.b16 %v776
        %v1862 = vunpack.c.h.b16 %v776
        %v1863 = vunpack.c.l.b16 %v777
        %v1864 = vunpack.c.l.b16 %v778
        %v1865 = vunpack.c.h.b16 %v778
        %v1866 = vunpack.c.l.b16 %v779
        %v1867 = vunpack.c.l.b16 %v780
        %v1868 = vunpack.c.h.b16 %v780
        %v1869 = vunpack.c.l.b16 %v781
        %v1870 = vunpack.c.l.b16 %v782
        %v1871 = vunpack.c.h.b16 %v782
        %v1872 = vunpack.c.l.b16 %v783
        %v1873 = vunpack.c.l.b16 %v784
        %v1874 = vunpack.c.h.b16 %v784
        %v1875 = vunpack.c.l.b16 %v785
        %v1876 = vunpack.c.l.b16 %v786
        %v1877 = vunpack.c.h.b16 %v786
        %v1878 = vunpack.c.l.b16 %v787
        %v1879 = vunpack.c.l.b16 %v788
        %v1880 = vunpack.c.h.b16 %v788
        %v1881 = vunpack.c.l.b16 %v789
        %v1882 = vunpack.c.l.b16 %v790
        %v1883 = vunpack.c.h.b16 %v790
        %v1884 = vunpack.c.l.b16 %v791
        %v1885 = vunpack.c.l.b16 %v792
        %v1886 = vunpack.c.h.b16 %v792
        %v1887 = vunpack.c.l.b16 %v793
        %v1888 = vunpack.c.l.b16 %v794
        %v1889 = vunpack.c.h.b16 %v794
        %v1890 = vunpack.c.l.b16 %v795
        %v1891 = vunpack.c.l.b16 %v796
        %v1892 = vunpack.c.h.b16 %v796
        %v1893 = vunpack.c.l.b16 %v797
        %v1894 = vunpack.c.l.b16 %v798
        %v1895 = vunpack.c.h.b16 %v798
        %v1896 = vunpack.c.l.b16 %v799
        %v1897 = vunpack.c.l.b16 %v800
        %v1898 = vunpack.c.h.b16 %v800
        %v1899 = vunpack.c.l.b16 %v801
        %v1900 = vunpack.c.l.b16 %v802
        %v1901 = vunpack.c.h.b16 %v802
        %v1902 = vunpack.c.l.b16 %v803
        %v1903 = vunpack.c.l.b16 %v804
        %v1904 = vunpack.c.h.b16 %v804
        %v1905 = vunpack.c.l.b16 %v805
        %v1906 = vunpack.c.l.b16 %v806
        %v1907 = vunpack.c.h.b16 %v806
        %v1908 = vunpack.c.l.b16 %v807
        %v1909 = vunpack.c.l.b16 %v808
        %v1910 = vunpack.c.h.b16 %v808
        %v1911 = vunpack.c.l.b16 %v809
        %v1912 = vunpack.c.l.b16 %v810
        %v1913 = vunpack.c.h.b16 %v810
        %v1914 = vunpack.c.l.b16 %v811
        %v1915 = vunpack.c.l.b16 %v812
        %v1916 = vunpack.c.h.b16 %v812
        %v1917 = vunpack.c.l.b16 %v813
        %v1918 = vunpack.c.l.b16 %v814
        %v1919 = vunpack.c.h.b16 %v814
        %v1920 = vunpack.c.l.b16 %v815
        %v1921 = vunpack.c.l.b16 %v816
        %v1922 = vunpack.c.h.b16 %v816
        %v1923 = vunpack.c.l.b16 %v817
        %v1924 = vunpack.c.l.b16 %v818
        %v1925 = vunpack.c.h.b16 %v818
        %v1926 = vunpack.c.l.b16 %v819
        %v1927 = vunpack.c.l.b16 %v820
        %v1928 = vunpack.c.h.b16 %v820
        %v1929 = vunpack.c.l.b16 %v821
        %v1930 = vunpack.c.l.b16 %v822
        %v1931 = vunpack.c.h.b16 %v822
        %v1932 = vunpack.c.l.b16 %v823
        %v1933 = vunpack.c.l.b16 %v824
        %v1934 = vunpack.c.h.b16 %v824
        %v1935 = vunpack.c.l.b16 %v825
        %v1936 = vunpack.c.l.b16 %v826
        %v1937 = vunpack.c.h.b16 %v826
        %v1938 = vunpack.c.l.b16 %v827
        %v1939 = vunpack.c.l.b16 %v828
        %v1940 = vunpack.c.h.b16 %v828
        %v1941 = vunpack.c.l.b16 %v829
        %v1942 = vunpack.c.l.b16 %v830
        %v1943 = vunpack.c.h.b16 %v830
        %v1944 = vunpack.c.l.b16 %v831
        %v1945 = vunpack.c.l.b16 %v832
        %v1946 = vunpack.c.h.b16 %v832
        %v1947 = vunpack.c.l.b16 %v833
        %v1948 = vunpack.c.l.b16 %v834
        %v1949 = vunpack.c.h.b16 %v834
        %v1950 = vunpack.c.l.b16 %v835
        %v1951 = vunpack.c.l.b16 %v836
        %v1952 = vunpack.c.h.b16 %v836
        %v1953 = vunpack.c.l.b16 %v837
        %v1954 = vunpack.c.l.b16 %v838
        %v1955 = vunpack.c.h.b16 %v838
        %v1956 = vunpack.c.l.b16 %v839
        %v1957 = vunpack.c.l.b16 %v840
        %v1958 = vunpack.c.h.b16 %v840
        %v1959 = vunpack.c.l.b16 %v841
        %v1960 = vunpack.c.l.b16 %v842
        %v1961 = vunpack.c.h.b16 %v842
        %v1962 = vunpack.c.l.b16 %v843
        %v1963 = vunpack.c.l.b16 %v844
        %v1964 = vunpack.c.h.b16 %v844
        %v1965 = vunpack.c.l.b16 %v845
        %v1966 = vunpack.c.l.b16 %v846
        %v1967 = vunpack.c.h.b16 %v846
        %v1968 = vunpack.c.l.b16 %v847
        %v1969 = vunpack.c.l.b16 %v848
        %v1970 = vunpack.c.h.b16 %v848
        %v1971 = vunpack.c.l.b16 %v849
        %v1972 = vunpack.c.l.b16 %v850
        %v1973 = vunpack.c.h.b16 %v850
        %v1974 = vunpack.c.l.b16 %v851
        %v1975 = vunpack.c.l.b16 %v852
        %v1976 = vunpack.c.h.b16 %v852
        %v1977 = vunpack.c.l.b16 %v853
        %v1978 = vunpack.c.l.b16 %v854
        %v1979 = vunpack.c.h.b16 %v854
        %v1980 = vunpack.c.l.b16 %v855
        %v1981 = vunpack.c.l.b16 %v856
        %v1982 = vunpack.c.h.b16 %v856
        %v1983 = vunpack.c.l.b16 %v857
        %v1984 = vunpack.c.l.b16 %v858
        %v1985 = vunpack.c.h.b16 %v858
        %v1986 = vunpack.c.l.b16 %v859
        %v1987 = vunpack.c.l.b16 %v860
        %v1988 = vunpack.c.h.b16 %v860
        %v1989 = vunpack.c.l.b16 %v861
        %v1990 = vunpack.c.l.b16 %v862
        %v1991 = vunpack.c.h.b16 %v862
        %v1992 = vunpack.c.l.b16 %v863
        %v1993 = vunpack.c.l.b16 %v864
        %v1994 = vunpack.c.h.b16 %v864
        %v1995 = vunpack.c.l.b16 %v865
        %v1996 = vunpack.c.l.b16 %v866
        %v1997 = vunpack.c.h.b16 %v866
        %v1998 = vunpack.c.l.b16 %v867
        %v1999 = vunpack.c.l.b16 %v868
        %v2000 = vunpack.c.h.b16 %v868
        %v2001 = vunpack.c.l.b16 %v869
        %v2002 = vunpack.c.l.b16 %v870
        %v2003 = vunpack.c.h.b16 %v870
        %v2004 = vunpack.c.l.b16 %v871
        %v2005 = vunpack.c.l.b16 %v872
        %v2006 = vunpack.c.h.b16 %v872
        %v2007 = vunpack.c.l.b16 %v873
        %v2008 = vunpack.c.l.b16 %v874
        %v2009 = vunpack.c.h.b16 %v874
        %v2010 = vunpack.c.l.b16 %v875
        %v2011 = vunpack.c.l.b16 %v876
        %v2012 = vunpack.c.h.b16 %v876
        %v2013 = vunpack.c.l.b16 %v877
        %v2014 = vunpack.c.l.b16 %v878
        %v2015 = vunpack.c.h.b16 %v878
        %v2016 = vunpack.c.l.b16 %v879
        %v2017 = vunpack.c.l.b16 %v880
        %v2018 = vunpack.c.h.b16 %v880
        %v2019 = vunpack.c.l.b16 %v881
        %v2020 = vunpack.c.l.b16 %v882
        %v2021 = vunpack.c.h.b16 %v882
        %v2022 = vunpack.c.l.b16 %v883
        %v2023 = vunpack.c.l.b16 %v884
        %v2024 = vunpack.c.h.b16 %v884
        %v2025 = vunpack.c.l.b16 %v885
        %v2026 = vunpack.c.l.b16 %v886
        %v2027 = vunpack.c.h.b16 %v886
        %v2028 = vunpack.c.l.b16 %v887
        %v2029 = vunpack.c.l.b16 %v888
        %v2030 = vunpack.c.h.b16 %v888
        %v2031 = vunpack.c.l.b16 %v889
        %v2032 = vunpack.c.l.b16 %v890
        %v2033 = vunpack.c.h.b16 %v890
        %v2034 = vunpack.c.l.b16 %v891
        %v2035 = vunpack.c.l.b16 %v892
        %v2036 = vunpack.c.h.b16 %v892
        %v2037 = vunpack.c.l.b16 %v893
        %v2038 = vunpack.c.l.b16 %v894
        %v2039 = vunpack.c.h.b16 %v894
        %v2040 = vunpack.c.l.b16 %v895
        %v2041 = vunpack.c.l.b16 %v896
        %v2042 = vunpack.c.h.b16 %v896
        %v2043 = vunpack.c.l.b16 %v897
        %v2044 = vunpack.c.l.b16 %v898
        %v2045 = vunpack.c.h.b16 %v898
        %v2046 = vunpack.c.l.b16 %v899
        %v2047 = vunpack.c.l.b16 %v900
        %v2048 = vunpack.c.h.b16 %v900
        %v2049 = vunpack.c.l.b16 %v901
        %v2050 = vunpack.c.l.b16 %v902
        %v2051 = vunpack.c.h.b16 %v902
        %v2052 = vunpack.c.l.b16 %v903
        %v2053 = vunpack.c.l.b16 %v904
        %v2054 = vunpack.c.h.b16 %v904
        %v2055 = vunpack.c.l.b16 %v905
        %v2056 = vunpack.c.l.b16 %v906
        %v2057 = vunpack.c.h.b16 %v906
        %v2058 = vunpack.c.l.b16 %v907
        %v2059 = vunpack.c.l.b16 %v908
        %v2060 = vunpack.c.h.b16 %v908
        %v2061 = vunpack.c.l.b16 %v909
        %v2062 = vunpack.c.l.b16 %v910
        %v2063 = vunpack.c.h.b16 %v910
        %v2064 = vunpack.c.l.b16 %v911
        %v2065 = vunpack.c.l.b16 %v912
        %v2066 = vunpack.c.h.b16 %v912
        %v2067 = vunpack.c.l.b16 %v913
        %v2068 = vunpack.c.l.b16 %v914
        %v2069 = vunpack.c.h.b16 %v914
        %v2070 = vunpack.c.l.b16 %v915
        %v2071 = vunpack.c.l.b16 %v916
        %v2072 = vunpack.c.h.b16 %v916
        %v2073 = vunpack.c.l.b16 %v917
        %v2074 = vunpack.c.l.b16 %v918
        %v2075 = vunpack.c.h.b16 %v918
        %v2076 = vunpack.c.l.b16 %v919
        %v2077 = vunpack.c.l.b16 %v920
        %v2078 = vunpack.c.h.b16 %v920
        %v2079 = vunpack.c.l.b16 %v921
        %v2080 = vunpack.c.l.b16 %v922
        %v2081 = vunpack.c.h.b16 %v922
        %v2082 = vunpack.c.l.b16 %v923
        %v2083 = vunpack.c.l.b16 %v924
        %v2084 = vunpack.c.h.b16 %v924
        %v2085 = vunpack.c.l.b16 %v925
        %v2086 = vunpack.c.l.b16 %v926
        %v2087 = vunpack.c.h.b16 %v926
        %v2088 = vunpack.c.l.b16 %v927
        %v2089 = vunpack.c.l.b16 %v928
        %v2090 = vunpack.c.h.b16 %v928
        %v2091 = vunpack.c.l.b16 %v929
        %v2092 = vunpack.c.l.b16 %v930
        %v2093 = vunpack.c.h.b16 %v930
        %v2094 = vunpack.c.l.b16 %v931
        %v2095 = vunpack.c.l.b16 %v932
        %v2096 = vunpack.c.h.b16 %v932
        %v2097 = vunpack.c.l.b16 %v933
        %v2098 = vunpack.c.l.b16 %v934
        %v2099 = vunpack.c.h.b16 %v934
        %v2100 = vunpack.c.l.b16 %v935
        %v2101 = vunpack.c.l.b16 %v936
        %v2102 = vunpack.c.h.b16 %v936
        %v2103 = vunpack.c.l.b16 %v937
        %v2104 = vunpack.c.l.b16 %v938
        %v2105 = vunpack.c.h.b16 %v938
        %v2106 = vunpack.c.l.b16 %v939
        %v2107 = vunpack.c.l.b16 %v940
        %v2108 = vunpack.c.h.b16 %v940
        %v2109 = vunpack.c.l.b16 %v941
        %v2110 = vunpack.c.l.b16 %v942
        %v2111 = vunpack.c.h.b16 %v942
        %v2112 = vunpack.c.l.b16 %v943
        %v2113 = vunpack.c.l.b16 %v944
        %v2114 = vunpack.c.h.b16 %v944
        %v2115 = vunpack.c.l.b16 %v945
        %v2116 = vunpack.c.l.b16 %v946
        %v2117 = vunpack.c.h.b16 %v946
        %v2118 = vunpack.c.l.b16 %v947
        %v2119 = vunpack.c.l.b16 %v948
        %v2120 = vunpack.c.h.b16 %v948
        %v2121 = vunpack.c.l.b16 %v949
        %v2122 = vunpack.c.l.b16 %v950
        %v2123 = vunpack.c.h.b16 %v950
        %v2124 = vunpack.c.l.b16 %v951
        %v2125 = vunpack.c.l.b16 %v952
        %v2126 = vunpack.c.h.b16 %v952
        %v2127 = vunpack.c.l.b16 %v953
        %v2128 = vunpack.c.l.b16 %v954
        %v2129 = vunpack.c.h.b16 %v954
        %v2130 = vunpack.c.l.b16 %v955
        %v2131 = vunpack.c.l.b16 %v956
        %v2132 = vunpack.c.h.b16 %v956
        %v2133 = vunpack.c.l.b16 %v957
        %v2134 = vunpack.c.l.b16 %v958
        %v2135 = vunpack.c.h.b16 %v958
        %v2136 = vunpack.c.l.b16 %v959
        %v2137 = vunpack.c.l.b16 %v960
        %v2138 = vunpack.c.h.b16 %v960
        %v2139 = vunpack.c.l.b16 %v961
        %v2140 = vunpack.c.l.b16 %v962
        %v2141 = vunpack.c.h.b16 %v962
        %v2142 = vunpack.c.l.b16 %v963
        %v2143 = vunpack.c.l.b16 %v964
        %v2144 = vunpack.c.h.b16 %v964
        %v2145 = vunpack.c.l.b16 %v965
        %v2146 = vunpack.c.l.b16 %v966
        %v2147 = vunpack.c.h.b16 %v966
        %v2148 = vunpack.c.l.b16 %v967
        %v2149 = vunpack.c.l.b16 %v968
        %v2150 = vunpack.c.h.b16 %v968
        %v2151 = vunpack.c.l.b16 %v969
        %v2152 = vunpack.c.l.b16 %v970
        %v2153 = vunpack.c.h.b16 %v970
        %v2154 = vunpack.c.l.b16 %v971
        %v2155 = vunpack.c.l.b16 %v972
        %v2156 = vunpack.c.h.b16 %v972
        %v2157 = vunpack.c.l.b16 %v973
        %v2158 = vunpack.c.l.b16 %v974
        %v2159 = vunpack.c.h.b16 %v974
        %v2160 = vunpack.c.l.b16 %v975
        %v2161 = vunpack.c.l.b16 %v976
        %v2162 = vunpack.c.h.b16 %v976
        %v2163 = vunpack.c.l.b16 %v977
        %v2164 = vunpack.c.l.b16 %v978
        %v2165 = vunpack.c.h.b16 %v978
        %v2166 = vunpack.c.l.b16 %v979
        %v2167 = vunpack.c.l.b16 %v980
        %v2168 = vunpack.c.h.b16 %v980
        %v2169 = vunpack.c.l.b16 %v981
        %v2170 = vunpack.c.l.b16 %v982
        %v2171 = vunpack.c.h.b16 %v982
        %v2172 = vunpack.c.l.b16 %v983
        %v2173 = vunpack.c.l.b16 %v984
        %v2174 = vunpack.c.h.b16 %v984
        %v2175 = vunpack.c.l.b16 %v985
        %v2176 = vunpack.c.l.b16 %v986
        %v2177 = vunpack.c.h.b16 %v986
        %v2178 = vunpack.c.l.b16 %v987
        %v2179 = vunpack.c.l.b16 %v988
        %v2180 = vunpack.c.h.b16 %v988
        %v2181 = vunpack.c.l.b16 %v989
        %v2182 = vunpack.c.l.b16 %v990
        %v2183 = vunpack.c.h.b16 %v990
        %v2184 = vunpack.c.l.b16 %v991
        %v2185 = vunpack.c.l.b16 %v992
        %v2186 = vunpack.c.h.b16 %v992
        %v2187 = vunpack.c.l.b16 %v993
        %v2188 = vunpack.c.l.b16 %v994
        %v2189 = vunpack.c.h.b16 %v994
        %v2190 = vunpack.c.l.b16 %v995
        %v2191 = vunpack.c.l.b16 %v996
        %v2192 = vunpack.c.h.b16 %v996
        %v2193 = vunpack.c.l.b16 %v997
        %v2194 = vunpack.c.l.b16 %v998
        %v2195 = vunpack.c.h.b16 %v998
        %v2196 = vunpack.c.l.b16 %v999
        %v2197 = vunpack.c.l.b16 %v1000
        %v2198 = vunpack.c.h.b16 %v1000
        %v2199 = vunpack.c.l.b16 %v1001
        %v2200 = vunpack.c.l.b16 %v1002
        %v2201 = vunpack.c.h.b16 %v1002
        %v2202 = vunpack.c.l.b16 %v1003
        %v2203 = vunpack.c.l.b16 %v1004
        %v2204 = vunpack.c.h.b16 %v1004
        %v2205 = vunpack.c.l.b16 %v1005
        %v2206 = vunpack.c.l.b16 %v1006
        %v2207 = vunpack.c.h.b16 %v1006
        %v2208 = vunpack.c.l.b16 %v1007
        %v2209 = vunpack.c.l.b16 %v1008
        %v2210 = vunpack.c.h.b16 %v1008
        %v2211 = vunpack.c.l.b16 %v1009
        %v2212 = vunpack.c.l.b16 %v1010
        %v2213 = vunpack.c.h.b16 %v1010
        %v2214 = vunpack.c.l.b16 %v1011
        %v2215 = vunpack.c.l.b16 %v1012
        %v2216 = vunpack.c.h.b16 %v1012
        %v2217 = vunpack.c.l.b16 %v1013
        %v2218 = vunpack.c.l.b16 %v1014
        %v2219 = vunpack.c.h.b16 %v1014
        %v2220 = vunpack.c.l.b16 %v1015
        %v2221 = vunpack.c.l.b16 %v1016
        %v2222 = vunpack.c.h.b16 %v1016
        %v2223 = vunpack.c.l.b16 %v1017
        %v2224 = vunpack.c.l.b16 %v1018
        %v2225 = vunpack.c.h.b16 %v1018
        %v2226 = vunpack.c.l.b16 %v1019
        %v2227 = vunpack.c.l.b16 %v1020
        %v2228 = vunpack.c.h.b16 %v1020
        %v2229 = vunpack.c.l.b16 %v1021
        %v2230 = vunpack.c.l.b16 %v1022
        %v2231 = vunpack.c.h.b16 %v1022
        %v2232 = vunpack.c.l.b16 %v1023
        %v2233 = vunpack.c.l.b16 %v1024
        %v2234 = vunpack.c.h.b16 %v1024
        %v2235 = vunpack.c.l.b16 %v1025
        %v2236 = vunpack.c.l.b16 %v1026
        %v2237 = vunpack.c.h.b16 %v1026
        %v2238 = vunpack.c.l.b16 %v1027
        %v2239 = vunpack.c.l.b16 %v1028
        %v2240 = vunpack.c.h.b16 %v1028
        %v2241 = vunpack.c.l.b16 %v1029
        %v2242 = vunpack.c.l.b16 %v1030
        %v2243 = vunpack.c.h.b16 %v1030
        %v2244 = vunpack.c.l.b16 %v1031
        %v2245 = vunpack.c.l.b16 %v1032
        %v2246 = vunpack.c.h.b16 %v1032
        %v2247 = vunpack.c.l.b16 %v1033
        %v2248 = vunpack.c.l.b16 %v1034
        %v2249 = vunpack.c.h.b16 %v1034
        %v2250 = vunpack.c.l.b16 %v1035
        %v2251 = vunpack.c.l.b16 %v1036
        %v2252 = vunpack.c.h.b16 %v1036
        %v2253 = vunpack.c.l.b16 %v1037
        %v2254 = vunpack.c.l.b16 %v1038
        %v2255 = vunpack.c.h.b16 %v1038
        %v2256 = vunpack.c.l.b16 %v1039
        %v2257 = vunpack.c.l.b16 %v1040
        %v2258 = vunpack.c.h.b16 %v1040
        %v2259 = vunpack.c.l.b16 %v1041
        %v2260 = vunpack.c.l.b16 %v1042
        %v2261 = vunpack.c.h.b16 %v1042
        %v2262 = vunpack.c.l.b16 %v1043
        %v2263 = vunpack.c.l.b16 %v1044
        %v2264 = vunpack.c.h.b16 %v1044
        %v2265 = vunpack.c.l.b16 %v1045
        %v2266 = vunpack.c.l.b16 %v1046
        %v2267 = vunpack.c.h.b16 %v1046
        %v2268 = vunpack.c.l.b16 %v1047
        %v2269 = vunpack.c.l.b16 %v1048
        %v2270 = vunpack.c.h.b16 %v1048
        %v2271 = vunpack.c.l.b16 %v1049
        %v2272 = vunpack.c.l.b16 %v1050
        %v2273 = vunpack.c.h.b16 %v1050
        %v2274 = vunpack.c.l.b16 %v1051
        %v2275 = vunpack.c.l.b16 %v1052
        %v2276 = vunpack.c.h.b16 %v1052
        %v2277 = vunpack.c.l.b16 %v1053
        %v2278 = vunpack.c.l.b16 %v1054
        %v2279 = vunpack.c.h.b16 %v1054
        %v2280 = vunpack.c.l.b16 %v1055
        %v2281 = vunpack.c.l.b16 %v1056
        %v2282 = vunpack.c.h.b16 %v1056
        %v2283 = vunpack.c.l.b16 %v1057
        %v2284 = vunpack.c.l.b16 %v1058
        %v2285 = vunpack.c.h.b16 %v1058
        %v2286 = vunpack.c.l.b16 %v1059
        %v2287 = vunpack.c.l.b16 %v1060
        %v2288 = vunpack.c.h.b16 %v1060
        %v2289 = vunpack.c.l.b16 %v1061
        %v2290 = vunpack.c.l.b16 %v1062
        %v2291 = vunpack.c.h.b16 %v1062
        %v2292 = vunpack.c.l.b16 %v1063
        %v2293 = vunpack.c.l.b16 %v1064
        %v2294 = vunpack.c.h.b16 %v1064
        %v2295 = vunpack.c.l.b16 %v1065
        %v2296 = vunpack.c.l.b16 %v1066
        %v2297 = vunpack.c.h.b16 %v1066
        %v2298 = vunpack.c.l.b16 %v1067
        %v2299 = vunpack.c.l.b16 %v1068
        %v2300 = vunpack.c.h.b16 %v1068
        %v2301 = vunpack.c.l.b16 %v1069
        %v2302 = vunpack.c.l.b16 %v1070
        %v2303 = vunpack.c.h.b16 %v1070
        %v2304 = vunpack.c.l.b16 %v1071
        %v2305 = vunpack.c.l.b16 %v1072
        %v2306 = vunpack.c.h.b16 %v1072
        %v2307 = vunpack.c.l.b16 %v1073
        %v2308 = vunpack.c.l.b16 %v1074
        %v2309 = vunpack.c.h.b16 %v1074
        %v2310 = vunpack.c.l.b16 %v1075
        %v2311 = vunpack.c.l.b16 %v1076
        %v2312 = vunpack.c.h.b16 %v1076
        %v2313 = vunpack.c.l.b16 %v1077
        %v2314 = vunpack.c.l.b16 %v1078
        %v2315 = vunpack.c.h.b16 %v1078
        %v2316 = vunpack.c.l.b16 %v1079
        %v2317 = vunpack.c.l.b16 %v1080
        %v2318 = vunpack.c.h.b16 %v1080
        %v2319 = vunpack.c.l.b16 %v1081
        %v2320 = vunpack.c.l.b16 %v1082
        %v2321 = vunpack.c.h.b16 %v1082
        %v2322 = vunpack.c.l.b16 %v1083
        %v2323 = vunpack.c.l.b16 %v1084
        %v2324 = vunpack.c.h.b16 %v1084
        %v2325 = vunpack.c.l.b16 %v1085
        %v2326 = vunpack.c.l.b16 %v1086
        %v2327 = vunpack.c.h.b16 %v1086
        %v2328 = vunpack.c.l.b16 %v1087
        %v2329 = vunpack.c.l.b16 %v1088
        %v2330 = vunpack.c.h.b16 %v1088
        %v2331 = vunpack.c.l.b16 %v1089
        %v2332 = vunpack.c.l.b16 %v1090
        %v2333 = vunpack.c.h.b16 %v1090
        %v2334 = vunpack.c.l.b16 %v1091
        %v2335 = vunpack.c.l.b16 %v1092
        %v2336 = vunpack.c.h.b16 %v1092
        %v2337 = vunpack.c.l.b16 %v1093
        %v2338 = vunpack.c.l.b16 %v1094
        %v2339 = vunpack.c.h.b16 %v1094
        %v2340 = vunpack.c.l.b16 %v1095
        %v2341 = vunpack.c.l.b16 %v1096
        %v2342 = vunpack.c.h.b16 %v1096
        %v2343 = vunpack.c.l.b16 %v1097
        %v2344 = vunpack.c.l.b16 %v1098
        %v2345 = vunpack.c.h.b16 %v1098
        %v2346 = vunpack.c.l.b16 %v1099
        %v2347 = vunpack.c.l.b16 %v1100
        %v2348 = vunpack.c.h.b16 %v1100
        %v2349 = vunpack.c.l.b16 %v1101
        %v2350 = vunpack.c.l.b16 %v1102
        %v2351 = vunpack.c.h.b16 %v1102
        %v2352 = vunpack.c.l.b16 %v1103
        %v2353 = vunpack.c.l.b16 %v1104
        %v2354 = vunpack.c.h.b16 %v1104
        %v2355 = vunpack.c.l.b16 %v1105
        %v2356 = vunpack.c.l.b16 %v1106
        %v2357 = vunpack.c.h.b16 %v1106
        %v2358 = vunpack.c.l.b16 %v1107
        %v2359 = vunpack.c.l.b16 %v1108
        %v2360 = vunpack.c.h.b16 %v1108
        %v2361 = vunpack.c.l.b16 %v1109
        %v2362 = vunpack.c.l.b16 %v1110
        %v2363 = vunpack.c.h.b16 %v1110
        %v2364 = vunpack.c.l.b16 %v1111
        %v2365 = vunpack.c.l.b16 %v1112
        %v2366 = vunpack.c.h.b16 %v1112
        %v2367 = vunpack.c.l.b16 %v1113
        %v2368 = vunpack.c.l.b16 %v1114
        %v2369 = vunpack.c.h.b16 %v1114
        %v2370 = vunpack.c.l.b16 %v1115
        %v2371 = vunpack.c.l.b16 %v1116
        %v2372 = vunpack.c.h.b16 %v1116
        %v2373 = vunpack.c.l.b16 %v1117
        %v2374 = vunpack.c.l.b16 %v1118
        %v2375 = vunpack.c.h.b16 %v1118
        %v2376 = vunpack.c.l.b16 %v1119
        %v2377 = vunpack.c.l.b16 %v1120
        %v2378 = vunpack.c.h.b16 %v1120
        %v2379 = vunpack.c.l.b16 %v1121
        %v2380 = vunpack.c.l.b16 %v1122
        %v2381 = vunpack.c.h.b16 %v1122
        %v2382 = vunpack.c.l.b16 %v1123
        %v2383 = vunpack.c.l.b16 %v1124
        %v2384 = vunpack.c.h.b16 %v1124
        %v2385 = vunpack.c.l.b16 %v1125
        %v2386 = vunpack.c.l.b16 %v1126
        %v2387 = vunpack.c.h.b16 %v1126
        %v2388 = vunpack.c.l.b16 %v1127
        %v2389 = vunpack.c.l.b16 %v1128
        %v2390 = vunpack.c.h.b16 %v1128
        %v2391 = vunpack.c.l.b16 %v1129
        %v2392 = vunpack.c.l.b16 %v1130
        %v2393 = vunpack.c.h.b16 %v1130
        %v2394 = vunpack.c.l.b16 %v1131
        %v2395 = vunpack.c.l.b16 %v1132
        %v2396 = vunpack.c.h.b16 %v1132
        %v2397 = vunpack.c.l.b16 %v1133
        %v2398 = vunpack.c.l.b16 %v1134
        %v2399 = vunpack.c.h.b16 %v1134
        %v2400 = vunpack.c.l.b16 %v1135
        %v2401 = vunpack.c.l.b16 %v1136
        %v2402 = vunpack.c.h.b16 %v1136
        %v2403 = vunpack.c.l.b16 %v1137
        %v2404 = vunpack.c.l.b16 %v1138
        %v2405 = vunpack.c.h.b16 %v1138
        %v2406 = vunpack.c.l.b16 %v1139
        %v2407 = vunpack.c.l.b16 %v1140
        %v2408 = vunpack.c.h.b16 %v1140
        %v2409 = vunpack.c.l.b16 %v1141
        %v2410 = vunpack.c.l.b16 %v1142
        %v2411 = vunpack.c.h.b16 %v1142
        %v2412 = vunpack.c.l.b16 %v1143
        %v2413 = vunpack.c.l.b16 %v1144
        %v2414 = vunpack.c.h.b16 %v1144
        %v2415 = vunpack.c.l.b16 %v1145
        %v2416 = vunpack.c.l.b16 %v1146
        %v2417 = vunpack.c.h.b16 %v1146
        %v2418 = vunpack.c.l.b16 %v1147
        %v2419 = vunpack.c.l.b16 %v1148
        %v2420 = vunpack.c.h.b16 %v1148
        %v2421 = vunpack.c.l.b16 %v1149
        %v2422 = vunpack.c.l.b16 %v1150
        %v2423 = vunpack.c.h.b16 %v1150
        %v2424 = vunpack.c.l.b16 %v1151
        %v2425 = vunpack.c.l.b16 %v1152
        %v2426 = vunpack.c.h.b16 %v1152
        %v2427 = vunpack.c.l.b16 %v1153
        %v2428 = vunpack.c.l.b16 %v1154
        %v2429 = vunpack.c.h.b16 %v1154
        %v2430 = vunpack.c.l.b16 %v1155
        %v2431 = vunpack.c.l.b16 %v1156
        %v2432 = vunpack.c.h.b16 %v1156
        %v2433 = vunpack.c.l.b16 %v1157
        %v2434 = vunpack.c.l.b16 %v1158
        %v2435 = vunpack.c.h.b16 %v1158
        %v2436 = vunpack.c.l.b16 %v1159
        %v2437 = vunpack.c.l.b16 %v1160
        %v2438 = vunpack.c.h.b16 %v1160
        %v2439 = vunpack.c.l.b16 %v1161
        %v2440 = vunpack.c.l.b16 %v1162
        %v2441 = vunpack.c.h.b16 %v1162
        %v2442 = vunpack.c.l.b16 %v1163
        %v2443 = vunpack.c.l.b16 %v1164
        %v2444 = vunpack.c.h.b16 %v1164
        %v2445 = vunpack.c.l.b16 %v1165
        %v2446 = vunpack.c.l.b16 %v1166
        %v2447 = vunpack.c.h.b16 %v1166
        %v2448 = vunpack.c.l.b16 %v1167
        %v2449 = vunpack.c.l.b16 %v1168
        %v2450 = vunpack.c.h.b16 %v1168
        %v2451 = vunpack.c.l.b16 %v1169
        %v2452 = vunpack.c.l.b16 %v1170
        %v2453 = vunpack.c.h.b16 %v1170
        %v2454 = vunpack.c.l.b16 %v1171
        %v2455 = vunpack.c.l.b16 %v1172
        %v2456 = vunpack.c.h.b16 %v1172
        %v2457 = vunpack.c.l.b16 %v1173
        %v2458 = vunpack.c.l.b16 %v1174
        %v2459 = vunpack.c.h.b16 %v1174
        %v2460 = vunpack.c.l.b16 %v1175
        %v2461 = vunpack.c.l.b16 %v1176
        %v2462 = vunpack.c.h.b16 %v1176
        %v2463 = vunpack.c.l.b16 %v1177
        %v2464 = vunpack.c.l.b16 %v1178
        %v2465 = vunpack.c.h.b16 %v1178
        %v2466 = vunpack.c.l.b16 %v1179
        %v2467 = vunpack.c.l.b16 %v1180
        %v2468 = vunpack.c.h.b16 %v1180
        %v2469 = vunpack.c.l.b16 %v1181
        %v2470 = vunpack.c.l.b16 %v1182
        %v2471 = vunpack.c.h.b16 %v1182
        %v2472 = vunpack.c.l.b16 %v1183
        %v2473 = vunpack.c.l.b16 %v1184
        %v2474 = vunpack.c.h.b16 %v1184
        %v2475 = vunpack.c.l.b16 %v1185
        %v2476 = vunpack.c.l.b16 %v1186
        %v2477 = vunpack.c.h.b16 %v1186
        %v2478 = vunpack.c.l.b16 %v1187
        %v2479 = vunpack.c.l.b16 %v1188
        %v2480 = vunpack.c.h.b16 %v1188
        %v2481 = vunpack.c.l.b16 %v1189
        %v2482 = vunpack.c.l.b16 %v1190
        %v2483 = vunpack.c.h.b16 %v1190
        %v2484 = vunpack.c.l.b16 %v1191
        %v2485 = vunpack.c.l.b16 %v1192
        %v2486 = vunpack.c.h.b16 %v1192
        %v2487 = vunpack.c.l.b16 %v1193
        %v2488 = vunpack.c.l.b16 %v1194
        %v2489 = vunpack.c.h.b16 %v1194
        %v2490 = vunpack.c.l.b16 %v1195
        %v2491 = vunpack.c.l.b16 %v1196
        %v2492 = vunpack.c.h.b16 %v1196
        %v2493 = vunpack.c.l.b16 %v1197
        %v2494 = vunpack.c.l.b16 %v1198
        %v2495 = vunpack.c.h.b16 %v1198
        %v2496 = vunpack.c.l.b16 %v1199
        %v2497 = vunpack.c.l.b16 %v1200
        %v2498 = vunpack.c.h.b16 %v1200
        %v2499 = vunpack.c.l.b16 %v1201
        %v2500 = vunpack.c.l.b16 %v1202
        %v2501 = vunpack.c.h.b16 %v1202
        %v2502 = vunpack.c.l.b16 %v1203
        %v2503 = vunpack.c.l.b16 %v1204
        %v2504 = vunpack.c.h.b16 %v1204
        %v2505 = vunpack.c.l.b16 %v1205
        %v2506 = vunpack.c.l.b16 %v1206
        %v2507 = vunpack.c.h.b16 %v1206
        %v2508 = vunpack.c.l.b16 %v1207
        %v2509 = vunpack.c.l.b16 %v1208
        %v2510 = vunpack.c.h.b16 %v1208
        %v2511 = vunpack.c.l.b16 %v1209
        %v2512 = vunpack.c.l.b16 %v1210
        %v2513 = vunpack.c.h.b16 %v1210
        %v2514 = vunpack.c.l.b16 %v1211
        %v2515 = vunpack.c.l.b16 %v1212
        %v2516 = vunpack.c.h.b16 %v1212
        %v2517 = vunpack.c.l.b16 %v1213
        %v2518 = vunpack.c.l.b16 %v1214
        %v2519 = vunpack.c.h.b16 %v1214
        %v2520 = vunpack.c.l.b16 %v1215
        %v2521 = vunpack.c.l.b16 %v1216
        %v2522 = vunpack.c.h.b16 %v1216
        %v2523 = vunpack.c.l.b16 %v1217
        %v2524 = vunpack.c.l.b16 %v1218
        %v2525 = vunpack.c.h.b16 %v1218
        %v2526 = vunpack.c.l.b16 %v1219
        %v2527 = vunpack.c.l.b16 %v1220
        %v2528 = vunpack.c.h.b16 %v1220
        %v2529 = vunpack.c.l.b16 %v1221
        %v2530 = vpack.c.b16 %v1753, %v1750
        %v2531 = vpack.c.b16 %v1754, %v1751
        %v2532 = vpack.c.b16 %v1755, %v1752
        %v2533 = vpack.c.b16 %v1759, %v1756
        %v2534 = vpack.c.b16 %v1760, %v1757
        %v2535 = vpack.c.b16 %v1761, %v1758
        %v2536 = vpack.c.b16 %v1765, %v1762
        %v2537 = vpack.c.b16 %v1766, %v1763
        %v2538 = vpack.c.b16 %v1767, %v1764
        %v2539 = vpack.c.b16 %v1771, %v1768
        %v2540 = vpack.c.b16 %v1772, %v1769
        %v2541 = vpack.c.b16 %v1773, %v1770
        %v2542 = vpack.c.b16 %v1777, %v1774
        %v2543 = vpack.c.b16 %v1778, %v1775
        %v2544 = vpack.c.b16 %v1779, %v1776
        %v2545 = vpack.c.b16 %v1783, %v1780
        %v2546 = vpack.c.b16 %v1784, %v1781
        %v2547 = vpack.c.b16 %v1785, %v1782
        %v2548 = vpack.c.b16 %v1789, %v1786
        %v2549 = vpack.c.b16 %v1790, %v1787
        %v2550 = vpack.c.b16 %v1791, %v1788
        %v2551 = vpack.c.b16 %v1795, %v1792
        %v2552 = vpack.c.b16 %v1796, %v1793
        %v2553 = vpack.c.b16 %v1797, %v1794
        %v2554 = vpack.c.b16 %v1801, %v1798
        %v2555 = vpack.c.b16 %v1802, %v1799
        %v2556 = vpack.c.b16 %v1803, %v1800
        %v2557 = vpack.c.b16 %v1807, %v1804
        %v2558 = vpack.c.b16 %v1808, %v1805
        %v2559 = vpack.c.b16 %v1809, %v1806
        %v2560 = vpack.c.b16 %v1813, %v1810
        %v2561 = vpack.c.b16 %v1814, %v1811
        %v2562 = vpack.c.b16 %v1815, %v1812
        %v2563 = vpack.c.b16 %v1819, %v1816
        %v2564 = vpack.c.b16 %v1820, %v1817
        %v2565 = vpack.c.b16 %v1821, %v1818
        %v2566 = vpack.c.b16 %v1825, %v1822
        %v2567 = vpack.c.b16 %v1826, %v1823
        %v2568 = vpack.c.b16 %v1827, %v1824
        %v2569 = vpack.c.b16 %v1831, %v1828
        %v2570 = vpack.c.b16 %v1832, %v1829
        %v2571 = vpack.c.b16 %v1833, %v1830
        %v2572 = vpack.c.b16 %v1837, %v1834
        %v2573 = vpack.c.b16 %v1838, %v1835
        %v2574 = vpack.c.b16 %v1839, %v1836
        %v2575 = vpack.c.b16 %v1843, %v1840
        %v2576 = vpack.c.b16 %v1844, %v1841
        %v2577 = vpack.c.b16 %v1845, %v1842
        %v2578 = vpack.c.b16 %v1849, %v1846
        %v2579 = vpack.c.b16 %v1850, %v1847
        %v2580 = vpack.c.b16 %v1851, %v1848
        %v2581 = vpack.c.b16 %v1855, %v1852
        %v2582 = vpack.c.b16 %v1856, %v1853
        %v2583 = vpack.c.b16 %v1857, %v1854
        %v2584 = vpack.c.b16 %v1861, %v1858
        %v2585 = vpack.c.b16 %v1862, %v1859
        %v2586 = vpack.c.b16 %v1863, %v1860
        %v2587 = vpack.c.b16 %v1867, %v1864
        %v2588 = vpack.c.b16 %v1868, %v1865
        %v2589 = vpack.c.b16 %v1869, %v1866
        %v2590 = vpack.c.b16 %v1873, %v1870
        %v2591 = vpack.c.b16 %v1874, %v1871
        %v2592 = vpack.c.b16 %v1875, %v1872
        %v2593 = vpack.c.b16 %v1879, %v1876
        %v2594 = vpack.c.b16 %v1880, %v1877
        %v2595 = vpack.c.b16 %v1881, %v1878
        %v2596 = vpack.c.b16 %v1885, %v1882
        %v2597 = vpack.c.b16 %v1886, %v1883
        %v2598 = vpack.c.b16 %v1887, %v1884
        %v2599 = vpack.c.b16 %v1891, %v1888
        %v2600 = vpack.c.b16 %v1892, %v1889
        %v2601 = vpack.c.b16 %v1893, %v1890
        %v2602 = vpack.c.b16 %v1897, %v1894
        %v2603 = vpack.c.b16 %v1898, %v1895
        %v2604 = vpack.c.b16 %v1899, %v1896
        %v2605 = vpack.c.b16 %v1903, %v1900
        %v2606 = vpack.c.b16 %v1904, %v1901
        %v2607 = vpack.c.b16 %v1905, %v1902
        %v2608 = vpack.c.b16 %v1909, %v1906
        %v2609 = vpack.c.b16 %v1910, %v1907
        %v2610 = vpack.c.b16 %v1911, %v1908
        %v2611 = vpack.c.b16 %v1915, %v1912
        %v2612 = vpack.c.b16 %v1916, %v1913
        %v2613 = vpack.c.b16 %v1917, %v1914
        %v2614 = vpack.c.b16 %v1921, %v1918
        %v2615 = vpack.c.b16 %v1922, %v1919
        %v2616 = vpack.c.b16 %v1923, %v1920
        %v2617 = vpack.c.b16 %v1927, %v1924
        %v2618 = vpack.c.b16 %v1928, %v1925
        %v2619 = vpack.c.b16 %v1929, %v1926
        %v2620 = vpack.c.b16 %v1933, %v1930
        %v2621 = vpack.c.b16 %v1934, %v1931
        %v2622 = vpack.c.b16 %v1935, %v1932
        %v2623 = vpack.c.b16 %v1939, %v1936
        %v2624 = vpack.c.b16 %v1940, %v1937
        %v2625 = vpack.c.b16 %v1941, %v1938
        %v2626 = vpack.c.b16 %v1945, %v1942
        %v2627 = vpack.c.b16 %v1946, %v1943
        %v2628 = vpack.c.b16 %v1947, %v1944
        %v2629 = vpack.c.b16 %v1951, %v1948
        %v2630 = vpack.c.b16 %v1952, %v1949
        %v2631 = vpack.c.b16 %v1953, %v1950
        %v2632 = vpack.c.b16 %v1957, %v1954
        %v2633 = vpack.c.b16 %v1958, %v1955
        %v2634 = vpack.c.b16 %v1959, %v1956
        %v2635 = vpack.c.b16 %v1963, %v1960
        %v2636 = vpack.c.b16 %v1964, %v1961
        %v2637 = vpack.c.b16 %v1965, %v1962
        %v2638 = vpack.c.b16 %v1969, %v1966
        %v2639 = vpack.c.b16 %v1970, %v1967
        %v2640 = vpack.c.b16 %v1971, %v1968
        %v2641 = vpack.c.b16 %v1975, %v1972
        %v2642 = vpack.c.b16 %v1976, %v1973
        %v2643 = vpack.c.b16 %v1977, %v1974
        %v2644 = vpack.c.b16 %v1981, %v1978
        %v2645 = vpack.c.b16 %v1982, %v1979
        %v2646 = vpack.c.b16 %v1983, %v1980
        %v2647 = vpack.c.b16 %v1987, %v1984
        %v2648 = vpack.c.b16 %v1988, %v1985
        %v2649 = vpack.c.b16 %v1989, %v1986
        %v2650 = vpack.c.b16 %v1993, %v1990
        %v2651 = vpack.c.b16 %v1994, %v1991
        %v2652 = vpack.c.b16 %v1995, %v1992
        %v2653 = vpack.c.b16 %v1999, %v1996
        %v2654 = vpack.c.b16 %v2000, %v1997
        %v2655 = vpack.c.b16 %v2001, %v1998
        %v2656 = vpack.c.b16 %v2005, %v2002
        %v2657 = vpack.c.b16 %v2006, %v2003
        %v2658 = vpack.c.b16 %v2007, %v2004
        %v2659 = vpack.c.b16 %v2011, %v2008
        %v2660 = vpack.c.b16 %v2012, %v2009
        %v2661 = vpack.c.b16 %v2013, %v2010
        %v2662 = vpack.c.b16 %v2017, %v2014
        %v2663 = vpack.c.b16 %v2018, %v2015
        %v2664 = vpack.c.b16 %v2019, %v2016
        %v2665 = vpack.c.b16 %v2023, %v2020
        %v2666 = vpack.c.b16 %v2024, %v2021
        %v2667 = vpack.c.b16 %v2025, %v2022
        %v2668 = vpack.c.b16 %v2029, %v2026
        %v2669 = vpack.c.b16 %v2030, %v2027
        %v2670 = vpack.c.b16 %v2031, %v2028
        %v2671 = vpack.c.b16 %v2035, %v2032
        %v2672 = vpack.c.b16 %v2036, %v2033
        %v2673 = vpack.c.b16 %v2037, %v2034
        %v2674 = vpack.c.b16 %v2041, %v2038
        %v2675 = vpack.c.b16 %v2042, %v2039
        %v2676 = vpack.c.b16 %v2043, %v2040
        %v2677 = vpack.c.b16 %v2047, %v2044
        %v2678 = vpack.c.b16 %v2048, %v2045
        %v2679 = vpack.c.b16 %v2049, %v2046
        %v2680 = vpack.c.b16 %v2053, %v2050
        %v2681 = vpack.c.b16 %v2054, %v2051
        %v2682 = vpack.c.b16 %v2055, %v2052
        %v2683 = vpack.c.b16 %v2059, %v2056
        %v2684 = vpack.c.b16 %v2060, %v2057
        %v2685 = vpack.c.b16 %v2061, %v2058
        %v2686 = vpack.c.b16 %v2065, %v2062
        %v2687 = vpack.c.b16 %v2066, %v2063
        %v2688 = vpack.c.b16 %v2067, %v2064
        %v2689 = vpack.c.b16 %v2071, %v2068
        %v2690 = vpack.c.b16 %v2072, %v2069
        %v2691 = vpack.c.b16 %v2073, %v2070
        %v2692 = vpack.c.b16 %v2077, %v2074
        %v2693 = vpack.c.b16 %v2078, %v2075
        %v2694 = vpack.c.b16 %v2079, %v2076
        %v2695 = vpack.c.b16 %v2083, %v2080
        %v2696 = vpack.c.b16 %v2084, %v2081
        %v2697 = vpack.c.b16 %v2085, %v2082
        %v2698 = vpack.c.b16 %v2089, %v2086
        %v2699 = vpack.c.b16 %v2090, %v2087
        %v2700 = vpack.c.b16 %v2091, %v2088
        %v2701 = vpack.c.b16 %v2095, %v2092
        %v2702 = vpack.c.b16 %v2096, %v2093
        %v2703 = vpack.c.b16 %v2097, %v2094
        %v2704 = vpack.c.b16 %v2101, %v2098
        %v2705 = vpack.c.b16 %v2102, %v2099
        %v2706 = vpack.c.b16 %v2103, %v2100
        %v2707 = vpack.c.b16 %v2107, %v2104
        %v2708 = vpack.c.b16 %v2108, %v2105
        %v2709 = vpack.c.b16 %v2109, %v2106
        %v2710 = vpack.c.b16 %v2113, %v2110
        %v2711 = vpack.c.b16 %v2114, %v2111
        %v2712 = vpack.c.b16 %v2115, %v2112
        %v2713 = vpack.c.b16 %v2119, %v2116
        %v2714 = vpack.c.b16 %v2120, %v2117
        %v2715 = vpack.c.b16 %v2121, %v2118
        %v2716 = vpack.c.b16 %v2125, %v2122
        %v2717 = vpack.c.b16 %v2126, %v2123
        %v2718 = vpack.c.b16 %v2127, %v2124
        %v2719 = vpack.c.b16 %v2131, %v2128
        %v2720 = vpack.c.b16 %v2132, %v2129
        %v2721 = vpack.c.b16 %v2133, %v2130
        %v2722 = vpack.c.b16 %v2137, %v2134
        %v2723 = vpack.c.b16 %v2138, %v2135
        %v2724 = vpack.c.b16 %v2139, %v2136
        %v2725 = vpack.c.b16 %v2143, %v2140
        %v2726 = vpack.c.b16 %v2144, %v2141
        %v2727 = vpack.c.b16 %v2145, %v2142
        %v2728 = vpack.c.b16 %v2149, %v2146
        %v2729 = vpack.c.b16 %v2150, %v2147
        %v2730 = vpack.c.b16 %v2151, %v2148
        %v2731 = vpack.c.b16 %v2155, %v2152
        %v2732 = vpack.c.b16 %v2156, %v2153
        %v2733 = vpack.c.b16 %v2157, %v2154
        %v2734 = vpack.c.b16 %v2161, %v2158
        %v2735 = vpack.c.b16 %v2162, %v2159
        %v2736 = vpack.c.b16 %v2163, %v2160
        %v2737 = vpack.c.b16 %v2167, %v2164
        %v2738 = vpack.c.b16 %v2168, %v2165
        %v2739 = vpack.c.b16 %v2169, %v2166
        %v2740 = vpack.c.b16 %v2173, %v2170
        %v2741 = vpack.c.b16 %v2174, %v2171
        %v2742 = vpack.c.b16 %v2175, %v2172
        %v2743 = vpack.c.b16 %v2179, %v2176
        %v2744 = vpack.c.b16 %v2180, %v2177
        %v2745 = vpack.c.b16 %v2181, %v2178
        %v2746 = vpack.c.b16 %v2185, %v2182
        %v2747 = vpack.c.b16 %v2186, %v2183
        %v2748 = vpack.c.b16 %v2187, %v2184
        %v2749 = vpack.c.b16 %v2191, %v2188
        %v2750 = vpack.c.b16 %v2192, %v2189
        %v2751 = vpack.c.b16 %v2193, %v2190
        %v2752 = vpack.c.b16 %v2197, %v2194
        %v2753 = vpack.c.b16 %v2198, %v2195
        %v2754 = vpack.c.b16 %v2199, %v2196
        %v2755 = vpack.c.b16 %v2203, %v2200
        %v2756 = vpack.c.b16 %v2204, %v2201
        %v2757 = vpack.c.b16 %v2205, %v2202
        %v2758 = vpack.c.b16 %v2209, %v2206
        %v2759 = vpack.c.b16 %v2210, %v2207
        %v2760 = vpack.c.b16 %v2211, %v2208
        %v2761 = vpack.c.b16 %v2215, %v2212
        %v2762 = vpack.c.b16 %v2216, %v2213
        %v2763 = vpack.c.b16 %v2217, %v2214
        %v2764 = vpack.c.b16 %v2221, %v2218
        %v2765 = vpack.c.b16 %v2222, %v2219
        %v2766 = vpack.c.b16 %v2223, %v2220
        %v2767 = vpack.c.b16 %v2227, %v2224
        %v2768 = vpack.c.b16 %v2228, %v2225
        %v2769 = vpack.c.b16 %v2229, %v2226
        %v2770 = vpack.c.b16 %v2233, %v2230
        %v2771 = vpack.c.b16 %v2234, %v2231
        %v2772 = vpack.c.b16 %v2235, %v2232
        %v2773 = vpack.c.b16 %v2239, %v2236
        %v2774 = vpack.c.b16 %v2240, %v2237
        %v2775 = vpack.c.b16 %v2241, %v2238
        %v2776 = vpack.c.b16 %v2245, %v2242
        %v2777 = vpack.c.b16 %v2246, %v2243
        %v2778 = vpack.c.b16 %v2247, %v2244
        %v2779 = vpack.c.b16 %v2251, %v2248
        %v2780 = vpack.c.b16 %v2252, %v2249
        %v2781 = vpack.c.b16 %v2253, %v2250
        %v2782 = vpack.c.b16 %v2257, %v2254
        %v2783 = vpack.c.b16 %v2258, %v2255
        %v2784 = vpack.c.b16 %v2259, %v2256
        %v2785 = vpack.c.b16 %v2263, %v2260
        %v2786 = vpack.c.b16 %v2264, %v2261
        %v2787 = vpack.c.b16 %v2265, %v2262
        %v2788 = vpack.c.b16 %v2269, %v2266
        %v2789 = vpack.c.b16 %v2270, %v2267
        %v2790 = vpack.c.b16 %v2271, %v2268
        %v2791 = vpack.c.b16 %v2275, %v2272
        %v2792 = vpack.c.b16 %v2276, %v2273
        %v2793 = vpack.c.b16 %v2277, %v2274
        %v2794 = vpack.c.b16 %v2281, %v2278
        %v2795 = vpack.c.b16 %v2282, %v2279
        %v2796 = vpack.c.b16 %v2283, %v2280
        %v2797 = vpack.c.b16 %v2287, %v2284
        %v2798 = vpack.c.b16 %v2288, %v2285
        %v2799 = vpack.c.b16 %v2289, %v2286
        %v2800 = vpack.c.b16 %v2293, %v2290
        %v2801 = vpack.c.b16 %v2294, %v2291
        %v2802 = vpack.c.b16 %v2295, %v2292
        %v2803 = vpack.c.b16 %v2299, %v2296
        %v2804 = vpack.c.b16 %v2300, %v2297
        %v2805 = vpack.c.b16 %v2301, %v2298
        %v2806 = vpack.c.b16 %v2305, %v2302
        %v2807 = vpack.c.b16 %v2306, %v2303
        %v2808 = vpack.c.b16 %v2307, %v2304
        %v2809 = vpack.c.b16 %v2311, %v2308
        %v2810 = vpack.c.b16 %v2312, %v2309
        %v2811 = vpack.c.b16 %v2313, %v2310
        %v2812 = vpack.c.b16 %v2317, %v2314
        %v2813 = vpack.c.b16 %v2318, %v2315
        %v2814 = vpack.c.b16 %v2319, %v2316
        %v2815 = vpack.c.b16 %v2323, %v2320
        %v2816 = vpack.c.b16 %v2324, %v2321
        %v2817 = vpack.c.b16 %v2325, %v2322
        %v2818 = vpack.c.b16 %v2329, %v2326
        %v2819 = vpack.c.b16 %v2330, %v2327
        %v2820 = vpack.c.b16 %v2331, %v2328
        %v2821 = vpack.c.b16 %v2335, %v2332
        %v2822 = vpack.c.b16 %v2336, %v2333
        %v2823 = vpack.c.b16 %v2337, %v2334
        %v2824 = vpack.c.b16 %v2341, %v2338
        %v2825 = vpack.c.b16 %v2342, %v2339
        %v2826 = vpack.c.b16 %v2343, %v2340
        %v2827 = vpack.c.b16 %v2347, %v2344
        %v2828 = vpack.c.b16 %v2348, %v2345
        %v2829 = vpack.c.b16 %v2349, %v2346
        %v2830 = vpack.c.b16 %v2353, %v2350
        %v2831 = vpack.c.b16 %v2354, %v2351
        %v2832 = vpack.c.b16 %v2355, %v2352
        %v2833 = vpack.c.b16 %v2359, %v2356
        %v2834 = vpack.c.b16 %v2360, %v2357
        %v2835 = vpack.c.b16 %v2361, %v2358
        %v2836 = vpack.c.b16 %v2365, %v2362
        %v2837 = vpack.c.b16 %v2366, %v2363
        %v2838 = vpack.c.b16 %v2367, %v2364
        %v2839 = vpack.c.b16 %v2371, %v2368
        %v2840 = vpack.c.b16 %v2372, %v2369
        %v2841 = vpack.c.b16 %v2373, %v2370
        %v2842 = vpack.c.b16 %v2377, %v2374
        %v2843 = vpack.c.b16 %v2378, %v2375
        %v2844 = vpack.c.b16 %v2379, %v2376
        %v2845 = vpack.c.b16 %v2383, %v2380
        %v2846 = vpack.c.b16 %v2384, %v2381
        %v2847 = vpack.c.b16 %v2385, %v2382
        %v2848 = vpack.c.b16 %v2389, %v2386
        %v2849 = vpack.c.b16 %v2390, %v2387
        %v2850 = vpack.c.b16 %v2391, %v2388
        %v2851 = vpack.c.b16 %v2395, %v2392
        %v2852 = vpack.c.b16 %v2396, %v2393
        %v2853 = vpack.c.b16 %v2397, %v2394
        %v2854 = vpack.c.b16 %v2401, %v2398
        %v2855 = vpack.c.b16 %v2402, %v2399
        %v2856 = vpack.c.b16 %v2403, %v2400
        %v2857 = vpack.c.b16 %v2407, %v2404
        %v2858 = vpack.c.b16 %v2408, %v2405
        %v2859 = vpack.c.b16 %v2409, %v2406
        %v2860 = vpack.c.b16 %v2413, %v2410
        %v2861 = vpack.c.b16 %v2414, %v2411
        %v2862 = vpack.c.b16 %v2415, %v2412
        %v2863 = vpack.c.b16 %v2419, %v2416
        %v2864 = vpack.c.b16 %v2420, %v2417
        %v2865 = vpack.c.b16 %v2421, %v2418
        %v2866 = vpack.c.b16 %v2425, %v2422
        %v2867 = vpack.c.b16 %v2426, %v2423
        %v2868 = vpack.c.b16 %v2427, %v2424
        %v2869 = vpack.c.b16 %v2431, %v2428
        %v2870 = vpack.c.b16 %v2432, %v2429
        %v2871 = vpack.c.b16 %v2433, %v2430
        %v2872 = vpack.c.b16 %v2437, %v2434
        %v2873 = vpack.c.b16 %v2438, %v2435
        %v2874 = vpack.c.b16 %v2439, %v2436
        %v2875 = vpack.c.b16 %v2443, %v2440
        %v2876 = vpack.c.b16 %v2444, %v2441
        %v2877 = vpack.c.b16 %v2445, %v2442
        %v2878 = vpack.c.b16 %v2449, %v2446
        %v2879 = vpack.c.b16 %v2450, %v2447
        %v2880 = vpack.c.b16 %v2451, %v2448
        %v2881 = vpack.c.b16 %v2455, %v2452
        %v2882 = vpack.c.b16 %v2456, %v2453
        %v2883 = vpack.c.b16 %v2457, %v2454
        %v2884 = vpack.c.b16 %v2461, %v2458
        %v2885 = vpack.c.b16 %v2462, %v2459
        %v2886 = vpack.c.b16 %v2463, %v2460
        %v2887 = vpack.c.b16 %v2467, %v2464
        %v2888 = vpack.c.b16 %v2468, %v2465
        %v2889 = vpack.c.b16 %v2469, %v2466
        %v2890 = vpack.c.b16 %v2473, %v2470
        %v2891 = vpack.c.b16 %v2474, %v2471
        %v2892 = vpack.c.b16 %v2475, %v2472
        %v2893 = vpack.c.b16 %v2479, %v2476
        %v2894 = vpack.c.b16 %v2480, %v2477
        %v2895 = vpack.c.b16 %v2481, %v2478
        %v2896 = vpack.c.b16 %v2485, %v2482
        %v2897 = vpack.c.b16 %v2486, %v2483
        %v2898 = vpack.c.b16 %v2487, %v2484
        %v2899 = vpack.c.b16 %v2491, %v2488
        %v2900 = vpack.c.b16 %v2492, %v2489
        %v2901 = vpack.c.b16 %v2493, %v2490
        %v2902 = vpack.c.b16 %v2497, %v2494
        %v2903 = vpack.c.b16 %v2498, %v2495
        %v2904 = vpack.c.b16 %v2499, %v2496
        %v2905 = vpack.c.b16 %v2503, %v2500
        %v2906 = vpack.c.b16 %v2504, %v2501
        %v2907 = vpack.c.b16 %v2505, %v2502
        %v2908 = vpack.c.b16 %v2509, %v2506
        %v2909 = vpack.c.b16 %v2510, %v2507
        %v2910 = vpack.c.b16 %v2511, %v2508
        %v2911 = vpack.c.b16 %v2515, %v2512
        %v2912 = vpack.c.b16 %v2516, %v2513
        %v2913 = vpack.c.b16 %v2517, %v2514
        %v2914 = vpack.c.b16 %v2521, %v2518
        %v2915 = vpack.c.b16 %v2522, %v2519
        %v2916 = vpack.c.b16 %v2523, %v2520
        %v2917 = vpack.c.b16 %v2527, %v2524
        %v2918 = vpack.c.b16 %v2528, %v2525
        %v2919 = vpack.c.b16 %v2529, %v2526
        %vm3310 = vcmask 261120
        %v3312 = vsel %vm3310, %v650, 0
        %v3315 = vsel %vm3310, %v667, 0
        %v3318 = vsel %vm3310, %v684, 0
        %v3321 = vsel %vm3310, %v701, 0
        %3323 = vmatpush.bf16.msra.mxu0 %v2551
        %3324 = vmatpush.bf16.msra.mxu0 %v2548
        %3325 = vmatpush.bf16.msra.mxu0 %v2545
        %3326 = vmatpush.bf16.msra.mxu0 %v2542
        %3327 = vmatpush.bf16.msra.mxu0 %v2539
        %3328 = vmatpush.bf16.msra.mxu0 %v2536
        %3329 = vmatpush.bf16.msra.mxu0 %v2533
        %3330 = vmatpush.bf16.msra.mxu0 %v2530
        %3331 = vmatmul.bf16.gmra.mxu0 %v634
        %v3332 = vpop.f32.mrf.mxu0
        %v3333 = vadd.f32 %v1224, %v3332
        %v3334 = vpop.f32.mrf.mxu0
        %v3335 = vadd.f32 %v1224, %v3334
        %3336 = vmatmul.bf16.gmra.mxu0 %v651
        %v3337 = vpop.f32.mrf.mxu0
        %v3338 = vadd.f32 %v1224, %v3337
        %v3339 = vpop.f32.mrf.mxu0
        %v3340 = vadd.f32 %v1224, %v3339
        %3341 = vmatmul.bf16.gmra.mxu0 %v668
        %v3342 = vpop.f32.mrf.mxu0
        %v3343 = vadd.f32 %v1224, %v3342
        %v3344 = vpop.f32.mrf.mxu0
        %v3345 = vadd.f32 %v1224, %v3344
        %3346 = vmatmul.bf16.gmra.mxu0 %v685
        %v3347 = vpop.f32.mrf.mxu0
        %v3348 = vadd.f32 %v1224, %v3347
        %v3349 = vpop.f32.mrf.mxu0
        %v3350 = vadd.f32 %v1224, %v3349
        %3351 = vdwg.mxu0
        %3352 = vmatpush.bf16.msra.mxu0 %v2575
        %3353 = vmatpush.bf16.msra.mxu0 %v2572
        %3354 = vmatpush.bf16.msra.mxu0 %v2569
        %3355 = vmatpush.bf16.msra.mxu0 %v2566
        %3356 = vmatpush.bf16.msra.mxu0 %v2563
        %3357 = vmatpush.bf16.msra.mxu0 %v2560
        %3358 = vmatpush.bf16.msra.mxu0 %v2557
        %3359 = vmatpush.bf16.msra.mxu0 %v2554
        %3360 = vmatmul.bf16.gmra.mxu0 %v635
        %v3361 = vpop.f32.mrf.mxu0
        %v3362 = vadd.f32 %v3333, %v3361
        %v3363 = vpop.f32.mrf.mxu0
        %v3364 = vadd.f32 %v3335, %v3363
        %3365 = vmatmul.bf16.gmra.mxu0 %v652
        %v3366 = vpop.f32.mrf.mxu0
        %v3367 = vadd.f32 %v3338, %v3366
        %v3368 = vpop.f32.mrf.mxu0
        %v3369 = vadd.f32 %v3340, %v3368
        %3370 = vmatmul.bf16.gmra.mxu0 %v669
        %v3371 = vpop.f32.mrf.mxu0
        %v3372 = vadd.f32 %v3343, %v3371
        %v3373 = vpop.f32.mrf.mxu0
        %v3374 = vadd.f32 %v3345, %v3373
        %3375 = vmatmul.bf16.gmra.mxu0 %v686
        %v3376 = vpop.f32.mrf.mxu0
        %v3377 = vadd.f32 %v3348, %v3376
        %v3378 = vpop.f32.mrf.mxu0
        %v3379 = vadd.f32 %v3350, %v3378
        %3380 = vdwg.mxu0
        %3381 = vmatpush.bf16.msra.mxu0 %v2599
        %3382 = vmatpush.bf16.msra.mxu0 %v2596
        %3383 = vmatpush.bf16.msra.mxu0 %v2593
        %3384 = vmatpush.bf16.msra.mxu0 %v2590
        %3385 = vmatpush.bf16.msra.mxu0 %v2587
        %3386 = vmatpush.bf16.msra.mxu0 %v2584
        %3387 = vmatpush.bf16.msra.mxu0 %v2581
        %3388 = vmatpush.bf16.msra.mxu0 %v2578
        %3389 = vmatmul.bf16.gmra.mxu0 %v636
        %v3390 = vpop.f32.mrf.mxu0
        %v3391 = vadd.f32 %v3362, %v3390
        %v3392 = vpop.f32.mrf.mxu0
        %v3393 = vadd.f32 %v3364, %v3392
        %3394 = vmatmul.bf16.gmra.mxu0 %v653
        %v3395 = vpop.f32.mrf.mxu0
        %v3396 = vadd.f32 %v3367, %v3395
        %v3397 = vpop.f32.mrf.mxu0
        %v3398 = vadd.f32 %v3369, %v3397
        %3399 = vmatmul.bf16.gmra.mxu0 %v670
        %v3400 = vpop.f32.mrf.mxu0
        %v3401 = vadd.f32 %v3372, %v3400
        %v3402 = vpop.f32.mrf.mxu0
        %v3403 = vadd.f32 %v3374, %v3402
        %3404 = vmatmul.bf16.gmra.mxu0 %v687
        %v3405 = vpop.f32.mrf.mxu0
        %v3406 = vadd.f32 %v3377, %v3405
        %v3407 = vpop.f32.mrf.mxu0
        %v3408 = vadd.f32 %v3379, %v3407
        %3409 = vdwg.mxu0
        %3410 = vmatpush.bf16.msra.mxu0 %v2623
        %3411 = vmatpush.bf16.msra.mxu0 %v2620
        %3412 = vmatpush.bf16.msra.mxu0 %v2617
        %3413 = vmatpush.bf16.msra.mxu0 %v2614
        %3414 = vmatpush.bf16.msra.mxu0 %v2611
        %3415 = vmatpush.bf16.msra.mxu0 %v2608
        %3416 = vmatpush.bf16.msra.mxu0 %v2605
        %3417 = vmatpush.bf16.msra.mxu0 %v2602
        %3418 = vmatmul.bf16.gmra.mxu0 %v637
        %v3419 = vpop.f32.mrf.mxu0
        %v3420 = vadd.f32 %v3391, %v3419
        %v3421 = vpop.f32.mrf.mxu0
        %v3422 = vadd.f32 %v3393, %v3421
        %3423 = vmatmul.bf16.gmra.mxu0 %v654
        %v3424 = vpop.f32.mrf.mxu0
        %v3425 = vadd.f32 %v3396, %v3424
        %v3426 = vpop.f32.mrf.mxu0
        %v3427 = vadd.f32 %v3398, %v3426
        %3428 = vmatmul.bf16.gmra.mxu0 %v671
        %v3429 = vpop.f32.mrf.mxu0
        %v3430 = vadd.f32 %v3401, %v3429
        %v3431 = vpop.f32.mrf.mxu0
        %v3432 = vadd.f32 %v3403, %v3431
        %3433 = vmatmul.bf16.gmra.mxu0 %v688
        %v3434 = vpop.f32.mrf.mxu0
        %v3435 = vadd.f32 %v3406, %v3434
        %v3436 = vpop.f32.mrf.mxu0
        %v3437 = vadd.f32 %v3408, %v3436
        %3438 = vdwg.mxu0
        %3439 = vmatpush.bf16.msra.mxu0 %v2647
        %3440 = vmatpush.bf16.msra.mxu0 %v2644
        %3441 = vmatpush.bf16.msra.mxu0 %v2641
        %3442 = vmatpush.bf16.msra.mxu0 %v2638
        %3443 = vmatpush.bf16.msra.mxu0 %v2635
        %3444 = vmatpush.bf16.msra.mxu0 %v2632
        %3445 = vmatpush.bf16.msra.mxu0 %v2629
        %3446 = vmatpush.bf16.msra.mxu0 %v2626
        %3447 = vmatmul.bf16.gmra.mxu0 %v638
        %v3448 = vpop.f32.mrf.mxu0
        %v3449 = vadd.f32 %v3420, %v3448
        %v3450 = vpop.f32.mrf.mxu0
        %v3451 = vadd.f32 %v3422, %v3450
        %3452 = vmatmul.bf16.gmra.mxu0 %v655
        %v3453 = vpop.f32.mrf.mxu0
        %v3454 = vadd.f32 %v3425, %v3453
        %v3455 = vpop.f32.mrf.mxu0
        %v3456 = vadd.f32 %v3427, %v3455
        %3457 = vmatmul.bf16.gmra.mxu0 %v672
        %v3458 = vpop.f32.mrf.mxu0
        %v3459 = vadd.f32 %v3430, %v3458
        %v3460 = vpop.f32.mrf.mxu0
        %v3461 = vadd.f32 %v3432, %v3460
        %3462 = vmatmul.bf16.gmra.mxu0 %v689
        %v3463 = vpop.f32.mrf.mxu0
        %v3464 = vadd.f32 %v3435, %v3463
        %v3465 = vpop.f32.mrf.mxu0
        %v3466 = vadd.f32 %v3437, %v3465
        %3467 = vdwg.mxu0
        %3468 = vmatpush.bf16.msra.mxu0 %v2671
        %3469 = vmatpush.bf16.msra.mxu0 %v2668
        %3470 = vmatpush.bf16.msra.mxu0 %v2665
        %3471 = vmatpush.bf16.msra.mxu0 %v2662
        %3472 = vmatpush.bf16.msra.mxu0 %v2659
        %3473 = vmatpush.bf16.msra.mxu0 %v2656
        %3474 = vmatpush.bf16.msra.mxu0 %v2653
        %3475 = vmatpush.bf16.msra.mxu0 %v2650
        %3476 = vmatmul.bf16.gmra.mxu0 %v639
        %v3477 = vpop.f32.mrf.mxu0
        %v3478 = vadd.f32 %v3449, %v3477
        %v3479 = vpop.f32.mrf.mxu0
        %v3480 = vadd.f32 %v3451, %v3479
        %3481 = vmatmul.bf16.gmra.mxu0 %v656
        %v3482 = vpop.f32.mrf.mxu0
        %v3483 = vadd.f32 %v3454, %v3482
        %v3484 = vpop.f32.mrf.mxu0
        %v3485 = vadd.f32 %v3456, %v3484
        %3486 = vmatmul.bf16.gmra.mxu0 %v673
        %v3487 = vpop.f32.mrf.mxu0
        %v3488 = vadd.f32 %v3459, %v3487
        %v3489 = vpop.f32.mrf.mxu0
        %v3490 = vadd.f32 %v3461, %v3489
        %3491 = vmatmul.bf16.gmra.mxu0 %v690
        %v3492 = vpop.f32.mrf.mxu0
        %v3493 = vadd.f32 %v3464, %v3492
        %v3494 = vpop.f32.mrf.mxu0
        %v3495 = vadd.f32 %v3466, %v3494
        %3496 = vdwg.mxu0
        %3497 = vmatpush.bf16.msra.mxu0 %v2695
        %3498 = vmatpush.bf16.msra.mxu0 %v2692
        %3499 = vmatpush.bf16.msra.mxu0 %v2689
        %3500 = vmatpush.bf16.msra.mxu0 %v2686
        %3501 = vmatpush.bf16.msra.mxu0 %v2683
        %3502 = vmatpush.bf16.msra.mxu0 %v2680
        %3503 = vmatpush.bf16.msra.mxu0 %v2677
        %3504 = vmatpush.bf16.msra.mxu0 %v2674
        %3505 = vmatmul.bf16.gmra.mxu0 %v640
        %v3506 = vpop.f32.mrf.mxu0
        %v3507 = vadd.f32 %v3478, %v3506
        %v3508 = vpop.f32.mrf.mxu0
        %v3509 = vadd.f32 %v3480, %v3508
        %3510 = vmatmul.bf16.gmra.mxu0 %v657
        %v3511 = vpop.f32.mrf.mxu0
        %v3512 = vadd.f32 %v3483, %v3511
        %v3513 = vpop.f32.mrf.mxu0
        %v3514 = vadd.f32 %v3485, %v3513
        %3515 = vmatmul.bf16.gmra.mxu0 %v674
        %v3516 = vpop.f32.mrf.mxu0
        %v3517 = vadd.f32 %v3488, %v3516
        %v3518 = vpop.f32.mrf.mxu0
        %v3519 = vadd.f32 %v3490, %v3518
        %3520 = vmatmul.bf16.gmra.mxu0 %v691
        %v3521 = vpop.f32.mrf.mxu0
        %v3522 = vadd.f32 %v3493, %v3521
        %v3523 = vpop.f32.mrf.mxu0
        %v3524 = vadd.f32 %v3495, %v3523
        %3525 = vdwg.mxu0
        %3526 = vmatpush.bf16.msra.mxu0 %v2719
        %3527 = vmatpush.bf16.msra.mxu0 %v2716
        %3528 = vmatpush.bf16.msra.mxu0 %v2713
        %3529 = vmatpush.bf16.msra.mxu0 %v2710
        %3530 = vmatpush.bf16.msra.mxu0 %v2707
        %3531 = vmatpush.bf16.msra.mxu0 %v2704
        %3532 = vmatpush.bf16.msra.mxu0 %v2701
        %3533 = vmatpush.bf16.msra.mxu0 %v2698
        %3534 = vmatmul.bf16.gmra.mxu0 %v641
        %v3535 = vpop.f32.mrf.mxu0
        %v3536 = vadd.f32 %v3507, %v3535
        %v3537 = vpop.f32.mrf.mxu0
        %v3538 = vadd.f32 %v3509, %v3537
        %3539 = vmatmul.bf16.gmra.mxu0 %v658
        %v3540 = vpop.f32.mrf.mxu0
        %v3541 = vadd.f32 %v3512, %v3540
        %v3542 = vpop.f32.mrf.mxu0
        %v3543 = vadd.f32 %v3514, %v3542
        %3544 = vmatmul.bf16.gmra.mxu0 %v675
        %v3545 = vpop.f32.mrf.mxu0
        %v3546 = vadd.f32 %v3517, %v3545
        %v3547 = vpop.f32.mrf.mxu0
        %v3548 = vadd.f32 %v3519, %v3547
        %3549 = vmatmul.bf16.gmra.mxu0 %v692
        %v3550 = vpop.f32.mrf.mxu0
        %v3551 = vadd.f32 %v3522, %v3550
        %v3552 = vpop.f32.mrf.mxu0
        %v3553 = vadd.f32 %v3524, %v3552
        %3554 = vdwg.mxu0
        %3555 = vmatpush.bf16.msra.mxu0 %v2743
        %3556 = vmatpush.bf16.msra.mxu0 %v2740
        %3557 = vmatpush.bf16.msra.mxu0 %v2737
        %3558 = vmatpush.bf16.msra.mxu0 %v2734
        %3559 = vmatpush.bf16.msra.mxu0 %v2731
        %3560 = vmatpush.bf16.msra.mxu0 %v2728
        %3561 = vmatpush.bf16.msra.mxu0 %v2725
        %3562 = vmatpush.bf16.msra.mxu0 %v2722
        %3563 = vmatmul.bf16.gmra.mxu0 %v642
        %v3564 = vpop.f32.mrf.mxu0
        %v3565 = vadd.f32 %v3536, %v3564
        %v3566 = vpop.f32.mrf.mxu0
        %v3567 = vadd.f32 %v3538, %v3566
        %3568 = vmatmul.bf16.gmra.mxu0 %v659
        %v3569 = vpop.f32.mrf.mxu0
        %v3570 = vadd.f32 %v3541, %v3569
        %v3571 = vpop.f32.mrf.mxu0
        %v3572 = vadd.f32 %v3543, %v3571
        %3573 = vmatmul.bf16.gmra.mxu0 %v676
        %v3574 = vpop.f32.mrf.mxu0
        %v3575 = vadd.f32 %v3546, %v3574
        %v3576 = vpop.f32.mrf.mxu0
        %v3577 = vadd.f32 %v3548, %v3576
        %3578 = vmatmul.bf16.gmra.mxu0 %v693
        %v3579 = vpop.f32.mrf.mxu0
        %v3580 = vadd.f32 %v3551, %v3579
        %v3581 = vpop.f32.mrf.mxu0
        %v3582 = vadd.f32 %v3553, %v3581
        %3583 = vdwg.mxu0
        %3584 = vmatpush.bf16.msra.mxu0 %v2767
        %3585 = vmatpush.bf16.msra.mxu0 %v2764
        %3586 = vmatpush.bf16.msra.mxu0 %v2761
        %3587 = vmatpush.bf16.msra.mxu0 %v2758
        %3588 = vmatpush.bf16.msra.mxu0 %v2755
        %3589 = vmatpush.bf16.msra.mxu0 %v2752
        %3590 = vmatpush.bf16.msra.mxu0 %v2749
        %3591 = vmatpush.bf16.msra.mxu0 %v2746
        %3592 = vmatmul.bf16.gmra.mxu0 %v643
        %v3593 = vpop.f32.mrf.mxu0
        %v3594 = vadd.f32 %v3565, %v3593
        %v3595 = vpop.f32.mrf.mxu0
        %v3596 = vadd.f32 %v3567, %v3595
        %3597 = vmatmul.bf16.gmra.mxu0 %v660
        %v3598 = vpop.f32.mrf.mxu0
        %v3599 = vadd.f32 %v3570, %v3598
        %v3600 = vpop.f32.mrf.mxu0
        %v3601 = vadd.f32 %v3572, %v3600
        %3602 = vmatmul.bf16.gmra.mxu0 %v677
        %v3603 = vpop.f32.mrf.mxu0
        %v3604 = vadd.f32 %v3575, %v3603
        %v3605 = vpop.f32.mrf.mxu0
        %v3606 = vadd.f32 %v3577, %v3605
        %3607 = vmatmul.bf16.gmra.mxu0 %v694
        %v3608 = vpop.f32.mrf.mxu0
        %v3609 = vadd.f32 %v3580, %v3608
        %v3610 = vpop.f32.mrf.mxu0
        %v3611 = vadd.f32 %v3582, %v3610
        %3612 = vdwg.mxu0
        %3613 = vmatpush.bf16.msra.mxu0 %v2791
        %3614 = vmatpush.bf16.msra.mxu0 %v2788
        %3615 = vmatpush.bf16.msra.mxu0 %v2785
        %3616 = vmatpush.bf16.msra.mxu0 %v2782
        %3617 = vmatpush.bf16.msra.mxu0 %v2779
        %3618 = vmatpush.bf16.msra.mxu0 %v2776
        %3619 = vmatpush.bf16.msra.mxu0 %v2773
        %3620 = vmatpush.bf16.msra.mxu0 %v2770
        %3621 = vmatmul.bf16.gmra.mxu0 %v644
        %v3622 = vpop.f32.mrf.mxu0
        %v3623 = vadd.f32 %v3594, %v3622
        %v3624 = vpop.f32.mrf.mxu0
        %v3625 = vadd.f32 %v3596, %v3624
        %3626 = vmatmul.bf16.gmra.mxu0 %v661
        %v3627 = vpop.f32.mrf.mxu0
        %v3628 = vadd.f32 %v3599, %v3627
        %v3629 = vpop.f32.mrf.mxu0
        %v3630 = vadd.f32 %v3601, %v3629
        %3631 = vmatmul.bf16.gmra.mxu0 %v678
        %v3632 = vpop.f32.mrf.mxu0
        %v3633 = vadd.f32 %v3604, %v3632
        %v3634 = vpop.f32.mrf.mxu0
        %v3635 = vadd.f32 %v3606, %v3634
        %3636 = vmatmul.bf16.gmra.mxu0 %v695
        %v3637 = vpop.f32.mrf.mxu0
        %v3638 = vadd.f32 %v3609, %v3637
        %v3639 = vpop.f32.mrf.mxu0
        %v3640 = vadd.f32 %v3611, %v3639
        %3641 = vdwg.mxu0
        %3642 = vmatpush.bf16.msra.mxu0 %v2815
        %3643 = vmatpush.bf16.msra.mxu0 %v2812
        %3644 = vmatpush.bf16.msra.mxu0 %v2809
        %3645 = vmatpush.bf16.msra.mxu0 %v2806
        %3646 = vmatpush.bf16.msra.mxu0 %v2803
        %3647 = vmatpush.bf16.msra.mxu0 %v2800
        %3648 = vmatpush.bf16.msra.mxu0 %v2797
        %3649 = vmatpush.bf16.msra.mxu0 %v2794
        %3650 = vmatmul.bf16.gmra.mxu0 %v645
        %v3651 = vpop.f32.mrf.mxu0
        %v3652 = vadd.f32 %v3623, %v3651
        %v3653 = vpop.f32.mrf.mxu0
        %v3654 = vadd.f32 %v3625, %v3653
        %3655 = vmatmul.bf16.gmra.mxu0 %v662
        %v3656 = vpop.f32.mrf.mxu0
        %v3657 = vadd.f32 %v3628, %v3656
        %v3658 = vpop.f32.mrf.mxu0
        %v3659 = vadd.f32 %v3630, %v3658
        %3660 = vmatmul.bf16.gmra.mxu0 %v679
        %v3661 = vpop.f32.mrf.mxu0
        %v3662 = vadd.f32 %v3633, %v3661
        %v3663 = vpop.f32.mrf.mxu0
        %v3664 = vadd.f32 %v3635, %v3663
        %3665 = vmatmul.bf16.gmra.mxu0 %v696
        %v3666 = vpop.f32.mrf.mxu0
        %v3667 = vadd.f32 %v3638, %v3666
        %v3668 = vpop.f32.mrf.mxu0
        %v3669 = vadd.f32 %v3640, %v3668
        %3670 = vdwg.mxu0
        %3671 = vmatpush.bf16.msra.mxu0 %v2839
        %3672 = vmatpush.bf16.msra.mxu0 %v2836
        %3673 = vmatpush.bf16.msra.mxu0 %v2833
        %3674 = vmatpush.bf16.msra.mxu0 %v2830
        %3675 = vmatpush.bf16.msra.mxu0 %v2827
        %3676 = vmatpush.bf16.msra.mxu0 %v2824
        %3677 = vmatpush.bf16.msra.mxu0 %v2821
        %3678 = vmatpush.bf16.msra.mxu0 %v2818
        %3679 = vmatmul.bf16.gmra.mxu0 %v646
        %v3680 = vpop.f32.mrf.mxu0
        %v3681 = vadd.f32 %v3652, %v3680
        %v3682 = vpop.f32.mrf.mxu0
        %v3683 = vadd.f32 %v3654, %v3682
        %3684 = vmatmul.bf16.gmra.mxu0 %v663
        %v3685 = vpop.f32.mrf.mxu0
        %v3686 = vadd.f32 %v3657, %v3685
        %v3687 = vpop.f32.mrf.mxu0
        %v3688 = vadd.f32 %v3659, %v3687
        %3689 = vmatmul.bf16.gmra.mxu0 %v680
        %v3690 = vpop.f32.mrf.mxu0
        %v3691 = vadd.f32 %v3662, %v3690
        %v3692 = vpop.f32.mrf.mxu0
        %v3693 = vadd.f32 %v3664, %v3692
        %3694 = vmatmul.bf16.gmra.mxu0 %v697
        %v3695 = vpop.f32.mrf.mxu0
        %v3696 = vadd.f32 %v3667, %v3695
        %v3697 = vpop.f32.mrf.mxu0
        %v3698 = vadd.f32 %v3669, %v3697
        %3699 = vdwg.mxu0
        %3700 = vmatpush.bf16.msra.mxu0 %v2863
        %3701 = vmatpush.bf16.msra.mxu0 %v2860
        %3702 = vmatpush.bf16.msra.mxu0 %v2857
        %3703 = vmatpush.bf16.msra.mxu0 %v2854
        %3704 = vmatpush.bf16.msra.mxu0 %v2851
        %3705 = vmatpush.bf16.msra.mxu0 %v2848
        %3706 = vmatpush.bf16.msra.mxu0 %v2845
        %3707 = vmatpush.bf16.msra.mxu0 %v2842
        %3708 = vmatmul.bf16.gmra.mxu0 %v647
        %v3709 = vpop.f32.mrf.mxu0
        %v3710 = vadd.f32 %v3681, %v3709
        %v3711 = vpop.f32.mrf.mxu0
        %v3712 = vadd.f32 %v3683, %v3711
        %3713 = vmatmul.bf16.gmra.mxu0 %v664
        %v3714 = vpop.f32.mrf.mxu0
        %v3715 = vadd.f32 %v3686, %v3714
        %v3716 = vpop.f32.mrf.mxu0
        %v3717 = vadd.f32 %v3688, %v3716
        %3718 = vmatmul.bf16.gmra.mxu0 %v681
        %v3719 = vpop.f32.mrf.mxu0
        %v3720 = vadd.f32 %v3691, %v3719
        %v3721 = vpop.f32.mrf.mxu0
        %v3722 = vadd.f32 %v3693, %v3721
        %3723 = vmatmul.bf16.gmra.mxu0 %v698
        %v3724 = vpop.f32.mrf.mxu0
        %v3725 = vadd.f32 %v3696, %v3724
        %v3726 = vpop.f32.mrf.mxu0
        %v3727 = vadd.f32 %v3698, %v3726
        %3728 = vdwg.mxu0
        %3729 = vmatpush.bf16.msra.mxu0 %v2887
        %3730 = vmatpush.bf16.msra.mxu0 %v2884
        %3731 = vmatpush.bf16.msra.mxu0 %v2881
        %3732 = vmatpush.bf16.msra.mxu0 %v2878
        %3733 = vmatpush.bf16.msra.mxu0 %v2875
        %3734 = vmatpush.bf16.msra.mxu0 %v2872
        %3735 = vmatpush.bf16.msra.mxu0 %v2869
        %3736 = vmatpush.bf16.msra.mxu0 %v2866
        %3737 = vmatmul.bf16.gmra.mxu0 %v648
        %v3738 = vpop.f32.mrf.mxu0
        %v3739 = vadd.f32 %v3710, %v3738
        %v3740 = vpop.f32.mrf.mxu0
        %v3741 = vadd.f32 %v3712, %v3740
        %3742 = vmatmul.bf16.gmra.mxu0 %v665
        %v3743 = vpop.f32.mrf.mxu0
        %v3744 = vadd.f32 %v3715, %v3743
        %v3745 = vpop.f32.mrf.mxu0
        %v3746 = vadd.f32 %v3717, %v3745
        %3747 = vmatmul.bf16.gmra.mxu0 %v682
        %v3748 = vpop.f32.mrf.mxu0
        %v3749 = vadd.f32 %v3720, %v3748
        %v3750 = vpop.f32.mrf.mxu0
        %v3751 = vadd.f32 %v3722, %v3750
        %3752 = vmatmul.bf16.gmra.mxu0 %v699
        %v3753 = vpop.f32.mrf.mxu0
        %v3754 = vadd.f32 %v3725, %v3753
        %v3755 = vpop.f32.mrf.mxu0
        %v3756 = vadd.f32 %v3727, %v3755
        %3757 = vdwg.mxu0
        %3758 = vmatpush.bf16.msra.mxu0 %v2911
        %3759 = vmatpush.bf16.msra.mxu0 %v2908
        %3760 = vmatpush.bf16.msra.mxu0 %v2905
        %3761 = vmatpush.bf16.msra.mxu0 %v2902
        %3762 = vmatpush.bf16.msra.mxu0 %v2899
        %3763 = vmatpush.bf16.msra.mxu0 %v2896
        %3764 = vmatpush.bf16.msra.mxu0 %v2893
        %3765 = vmatpush.bf16.msra.mxu0 %v2890
        %3766 = vmatmul.bf16.gmra.mxu0 %v649
        %v3767 = vpop.f32.mrf.mxu0
        %v3768 = vadd.f32 %v3739, %v3767
        %v3769 = vpop.f32.mrf.mxu0
        %v3770 = vadd.f32 %v3741, %v3769
        %3771 = vmatmul.bf16.gmra.mxu0 %v666
        %v3772 = vpop.f32.mrf.mxu0
        %v3773 = vadd.f32 %v3744, %v3772
        %v3774 = vpop.f32.mrf.mxu0
        %v3775 = vadd.f32 %v3746, %v3774
        %3776 = vmatmul.bf16.gmra.mxu0 %v683
        %v3777 = vpop.f32.mrf.mxu0
        %v3778 = vadd.f32 %v3749, %v3777
        %v3779 = vpop.f32.mrf.mxu0
        %v3780 = vadd.f32 %v3751, %v3779
        %3781 = vmatmul.bf16.gmra.mxu0 %v700
        %v3782 = vpop.f32.mrf.mxu0
        %v3783 = vadd.f32 %v3754, %v3782
        %v3784 = vpop.f32.mrf.mxu0
        %v3785 = vadd.f32 %v3756, %v3784
        %3786 = vdwg.mxu0
        %3787 = vmatpush.bf16.msra.mxu0 0
        %3788 = vmatpush.bf16.msra.mxu0 0
        %3789 = vmatpush.bf16.msra.mxu0 0
        %3790 = vmatpush.bf16.msra.mxu0 0
        %3791 = vmatpush.bf16.msra.mxu0 0
        %3792 = vmatpush.bf16.msra.mxu0 0
        %3793 = vmatpush.bf16.msra.mxu0 %v2917
        %3794 = vmatpush.bf16.msra.mxu0 %v2914
        %3795 = vmatmul.bf16.gmra.mxu0 %v3312
        %v3796 = vpop.f32.mrf.mxu0
        %v3797 = vadd.f32 %v3768, %v3796
        %v3798 = vpop.f32.mrf.mxu0
        %v3799 = vadd.f32 %v3770, %v3798
        %3800 = vmatmul.bf16.gmra.mxu0 %v3315
        %v3801 = vpop.f32.mrf.mxu0
        %v3802 = vadd.f32 %v3773, %v3801
        %v3803 = vpop.f32.mrf.mxu0
        %v3804 = vadd.f32 %v3775, %v3803
        %3805 = vmatmul.bf16.gmra.mxu0 %v3318
        %v3806 = vpop.f32.mrf.mxu0
        %v3807 = vadd.f32 %v3778, %v3806
        %v3808 = vpop.f32.mrf.mxu0
        %v3809 = vadd.f32 %v3780, %v3808
        %3810 = vmatmul.bf16.gmra.mxu0 %v3321
        %v3811 = vpop.f32.mrf.mxu0
        %v3812 = vadd.f32 %v3783, %v3811
        %v3813 = vpop.f32.mrf.mxu0
        %v3814 = vadd.f32 %v3785, %v3813
        %3815 = vdwg.mxu0
        %3816 = vmatpush.bf16.msra.mxu0 %v2552
        %3817 = vmatpush.bf16.msra.mxu0 %v2549
        %3818 = vmatpush.bf16.msra.mxu0 %v2546
        %3819 = vmatpush.bf16.msra.mxu0 %v2543
        %3820 = vmatpush.bf16.msra.mxu0 %v2540
        %3821 = vmatpush.bf16.msra.mxu0 %v2537
        %3822 = vmatpush.bf16.msra.mxu0 %v2534
        %3823 = vmatpush.bf16.msra.mxu0 %v2531
        %3824 = vmatmul.bf16.gmra.mxu0 %v634
        %v3825 = vpop.f32.mrf.mxu0
        %v3826 = vadd.f32 %v1225, %v3825
        %v3827 = vpop.f32.mrf.mxu0
        %v3828 = vadd.f32 %v1225, %v3827
        %3829 = vmatmul.bf16.gmra.mxu0 %v651
        %v3830 = vpop.f32.mrf.mxu0
        %v3831 = vadd.f32 %v1225, %v3830
        %v3832 = vpop.f32.mrf.mxu0
        %v3833 = vadd.f32 %v1225, %v3832
        %3834 = vmatmul.bf16.gmra.mxu0 %v668
        %v3835 = vpop.f32.mrf.mxu0
        %v3836 = vadd.f32 %v1225, %v3835
        %v3837 = vpop.f32.mrf.mxu0
        %v3838 = vadd.f32 %v1225, %v3837
        %3839 = vmatmul.bf16.gmra.mxu0 %v685
        %v3840 = vpop.f32.mrf.mxu0
        %v3841 = vadd.f32 %v1225, %v3840
        %v3842 = vpop.f32.mrf.mxu0
        %v3843 = vadd.f32 %v1225, %v3842
        %3844 = vdwg.mxu0
        %3845 = vmatpush.bf16.msra.mxu0 %v2576
        %3846 = vmatpush.bf16.msra.mxu0 %v2573
        %3847 = vmatpush.bf16.msra.mxu0 %v2570
        %3848 = vmatpush.bf16.msra.mxu0 %v2567
        %3849 = vmatpush.bf16.msra.mxu0 %v2564
        %3850 = vmatpush.bf16.msra.mxu0 %v2561
        %3851 = vmatpush.bf16.msra.mxu0 %v2558
        %3852 = vmatpush.bf16.msra.mxu0 %v2555
        %3853 = vmatmul.bf16.gmra.mxu0 %v635
        %v3854 = vpop.f32.mrf.mxu0
        %v3855 = vadd.f32 %v3826, %v3854
        %v3856 = vpop.f32.mrf.mxu0
        %v3857 = vadd.f32 %v3828, %v3856
        %3858 = vmatmul.bf16.gmra.mxu0 %v652
        %v3859 = vpop.f32.mrf.mxu0
        %v3860 = vadd.f32 %v3831, %v3859
        %v3861 = vpop.f32.mrf.mxu0
        %v3862 = vadd.f32 %v3833, %v3861
        %3863 = vmatmul.bf16.gmra.mxu0 %v669
        %v3864 = vpop.f32.mrf.mxu0
        %v3865 = vadd.f32 %v3836, %v3864
        %v3866 = vpop.f32.mrf.mxu0
        %v3867 = vadd.f32 %v3838, %v3866
        %3868 = vmatmul.bf16.gmra.mxu0 %v686
        %v3869 = vpop.f32.mrf.mxu0
        %v3870 = vadd.f32 %v3841, %v3869
        %v3871 = vpop.f32.mrf.mxu0
        %v3872 = vadd.f32 %v3843, %v3871
        %3873 = vdwg.mxu0
        %3874 = vmatpush.bf16.msra.mxu0 %v2600
        %3875 = vmatpush.bf16.msra.mxu0 %v2597
        %3876 = vmatpush.bf16.msra.mxu0 %v2594
        %3877 = vmatpush.bf16.msra.mxu0 %v2591
        %3878 = vmatpush.bf16.msra.mxu0 %v2588
        %3879 = vmatpush.bf16.msra.mxu0 %v2585
        %3880 = vmatpush.bf16.msra.mxu0 %v2582
        %3881 = vmatpush.bf16.msra.mxu0 %v2579
        %3882 = vmatmul.bf16.gmra.mxu0 %v636
        %v3883 = vpop.f32.mrf.mxu0
        %v3884 = vadd.f32 %v3855, %v3883
        %v3885 = vpop.f32.mrf.mxu0
        %v3886 = vadd.f32 %v3857, %v3885
        %3887 = vmatmul.bf16.gmra.mxu0 %v653
        %v3888 = vpop.f32.mrf.mxu0
        %v3889 = vadd.f32 %v3860, %v3888
        %v3890 = vpop.f32.mrf.mxu0
        %v3891 = vadd.f32 %v3862, %v3890
        %3892 = vmatmul.bf16.gmra.mxu0 %v670
        %v3893 = vpop.f32.mrf.mxu0
        %v3894 = vadd.f32 %v3865, %v3893
        %v3895 = vpop.f32.mrf.mxu0
        %v3896 = vadd.f32 %v3867, %v3895
        %3897 = vmatmul.bf16.gmra.mxu0 %v687
        %v3898 = vpop.f32.mrf.mxu0
        %v3899 = vadd.f32 %v3870, %v3898
        %v3900 = vpop.f32.mrf.mxu0
        %v3901 = vadd.f32 %v3872, %v3900
        %3902 = vdwg.mxu0
        %3903 = vmatpush.bf16.msra.mxu0 %v2624
        %3904 = vmatpush.bf16.msra.mxu0 %v2621
        %3905 = vmatpush.bf16.msra.mxu0 %v2618
        %3906 = vmatpush.bf16.msra.mxu0 %v2615
        %3907 = vmatpush.bf16.msra.mxu0 %v2612
        %3908 = vmatpush.bf16.msra.mxu0 %v2609
        %3909 = vmatpush.bf16.msra.mxu0 %v2606
        %3910 = vmatpush.bf16.msra.mxu0 %v2603
        %3911 = vmatmul.bf16.gmra.mxu0 %v637
        %v3912 = vpop.f32.mrf.mxu0
        %v3913 = vadd.f32 %v3884, %v3912
        %v3914 = vpop.f32.mrf.mxu0
        %v3915 = vadd.f32 %v3886, %v3914
        %3916 = vmatmul.bf16.gmra.mxu0 %v654
        %v3917 = vpop.f32.mrf.mxu0
        %v3918 = vadd.f32 %v3889, %v3917
        %v3919 = vpop.f32.mrf.mxu0
        %v3920 = vadd.f32 %v3891, %v3919
        %3921 = vmatmul.bf16.gmra.mxu0 %v671
        %v3922 = vpop.f32.mrf.mxu0
        %v3923 = vadd.f32 %v3894, %v3922
        %v3924 = vpop.f32.mrf.mxu0
        %v3925 = vadd.f32 %v3896, %v3924
        %3926 = vmatmul.bf16.gmra.mxu0 %v688
        %v3927 = vpop.f32.mrf.mxu0
        %v3928 = vadd.f32 %v3899, %v3927
        %v3929 = vpop.f32.mrf.mxu0
        %v3930 = vadd.f32 %v3901, %v3929
        %3931 = vdwg.mxu0
        %3932 = vmatpush.bf16.msra.mxu0 %v2648
        %3933 = vmatpush.bf16.msra.mxu0 %v2645
        %3934 = vmatpush.bf16.msra.mxu0 %v2642
        %3935 = vmatpush.bf16.msra.mxu0 %v2639
        %3936 = vmatpush.bf16.msra.mxu0 %v2636
        %3937 = vmatpush.bf16.msra.mxu0 %v2633
        %3938 = vmatpush.bf16.msra.mxu0 %v2630
        %3939 = vmatpush.bf16.msra.mxu0 %v2627
        %3940 = vmatmul.bf16.gmra.mxu0 %v638
        %v3941 = vpop.f32.mrf.mxu0
        %v3942 = vadd.f32 %v3913, %v3941
        %v3943 = vpop.f32.mrf.mxu0
        %v3944 = vadd.f32 %v3915, %v3943
        %3945 = vmatmul.bf16.gmra.mxu0 %v655
        %v3946 = vpop.f32.mrf.mxu0
        %v3947 = vadd.f32 %v3918, %v3946
        %v3948 = vpop.f32.mrf.mxu0
        %v3949 = vadd.f32 %v3920, %v3948
        %3950 = vmatmul.bf16.gmra.mxu0 %v672
        %v3951 = vpop.f32.mrf.mxu0
        %v3952 = vadd.f32 %v3923, %v3951
        %v3953 = vpop.f32.mrf.mxu0
        %v3954 = vadd.f32 %v3925, %v3953
        %3955 = vmatmul.bf16.gmra.mxu0 %v689
        %v3956 = vpop.f32.mrf.mxu0
        %v3957 = vadd.f32 %v3928, %v3956
        %v3958 = vpop.f32.mrf.mxu0
        %v3959 = vadd.f32 %v3930, %v3958
        %3960 = vdwg.mxu0
        %3961 = vmatpush.bf16.msra.mxu0 %v2672
        %3962 = vmatpush.bf16.msra.mxu0 %v2669
        %3963 = vmatpush.bf16.msra.mxu0 %v2666
        %3964 = vmatpush.bf16.msra.mxu0 %v2663
        %3965 = vmatpush.bf16.msra.mxu0 %v2660
        %3966 = vmatpush.bf16.msra.mxu0 %v2657
        %3967 = vmatpush.bf16.msra.mxu0 %v2654
        %3968 = vmatpush.bf16.msra.mxu0 %v2651
        %3969 = vmatmul.bf16.gmra.mxu0 %v639
        %v3970 = vpop.f32.mrf.mxu0
        %v3971 = vadd.f32 %v3942, %v3970
        %v3972 = vpop.f32.mrf.mxu0
        %v3973 = vadd.f32 %v3944, %v3972
        %3974 = vmatmul.bf16.gmra.mxu0 %v656
        %v3975 = vpop.f32.mrf.mxu0
        %v3976 = vadd.f32 %v3947, %v3975
        %v3977 = vpop.f32.mrf.mxu0
        %v3978 = vadd.f32 %v3949, %v3977
        %3979 = vmatmul.bf16.gmra.mxu0 %v673
        %v3980 = vpop.f32.mrf.mxu0
        %v3981 = vadd.f32 %v3952, %v3980
        %v3982 = vpop.f32.mrf.mxu0
        %v3983 = vadd.f32 %v3954, %v3982
        %3984 = vmatmul.bf16.gmra.mxu0 %v690
        %v3985 = vpop.f32.mrf.mxu0
        %v3986 = vadd.f32 %v3957, %v3985
        %v3987 = vpop.f32.mrf.mxu0
        %v3988 = vadd.f32 %v3959, %v3987
        %3989 = vdwg.mxu0
        %3990 = vmatpush.bf16.msra.mxu0 %v2696
        %3991 = vmatpush.bf16.msra.mxu0 %v2693
        %3992 = vmatpush.bf16.msra.mxu0 %v2690
        %3993 = vmatpush.bf16.msra.mxu0 %v2687
        %3994 = vmatpush.bf16.msra.mxu0 %v2684
        %3995 = vmatpush.bf16.msra.mxu0 %v2681
        %3996 = vmatpush.bf16.msra.mxu0 %v2678
        %3997 = vmatpush.bf16.msra.mxu0 %v2675
        %3998 = vmatmul.bf16.gmra.mxu0 %v640
        %v3999 = vpop.f32.mrf.mxu0
        %v4000 = vadd.f32 %v3971, %v3999
        %v4001 = vpop.f32.mrf.mxu0
        %v4002 = vadd.f32 %v3973, %v4001
        %4003 = vmatmul.bf16.gmra.mxu0 %v657
        %v4004 = vpop.f32.mrf.mxu0
        %v4005 = vadd.f32 %v3976, %v4004
        %v4006 = vpop.f32.mrf.mxu0
        %v4007 = vadd.f32 %v3978, %v4006
        %4008 = vmatmul.bf16.gmra.mxu0 %v674
        %v4009 = vpop.f32.mrf.mxu0
        %v4010 = vadd.f32 %v3981, %v4009
        %v4011 = vpop.f32.mrf.mxu0
        %v4012 = vadd.f32 %v3983, %v4011
        %4013 = vmatmul.bf16.gmra.mxu0 %v691
        %v4014 = vpop.f32.mrf.mxu0
        %v4015 = vadd.f32 %v3986, %v4014
        %v4016 = vpop.f32.mrf.mxu0
        %v4017 = vadd.f32 %v3988, %v4016
        %4018 = vdwg.mxu0
        %4019 = vmatpush.bf16.msra.mxu0 %v2720
        %4020 = vmatpush.bf16.msra.mxu0 %v2717
        %4021 = vmatpush.bf16.msra.mxu0 %v2714
        %4022 = vmatpush.bf16.msra.mxu0 %v2711
        %4023 = vmatpush.bf16.msra.mxu0 %v2708
        %4024 = vmatpush.bf16.msra.mxu0 %v2705
        %4025 = vmatpush.bf16.msra.mxu0 %v2702
        %4026 = vmatpush.bf16.msra.mxu0 %v2699
        %4027 = vmatmul.bf16.gmra.mxu0 %v641
        %v4028 = vpop.f32.mrf.mxu0
        %v4029 = vadd.f32 %v4000, %v4028
        %v4030 = vpop.f32.mrf.mxu0
        %v4031 = vadd.f32 %v4002, %v4030
        %4032 = vmatmul.bf16.gmra.mxu0 %v658
        %v4033 = vpop.f32.mrf.mxu0
        %v4034 = vadd.f32 %v4005, %v4033
        %v4035 = vpop.f32.mrf.mxu0
        %v4036 = vadd.f32 %v4007, %v4035
        %4037 = vmatmul.bf16.gmra.mxu0 %v675
        %v4038 = vpop.f32.mrf.mxu0
        %v4039 = vadd.f32 %v4010, %v4038
        %v4040 = vpop.f32.mrf.mxu0
        %v4041 = vadd.f32 %v4012, %v4040
        %4042 = vmatmul.bf16.gmra.mxu0 %v692
        %v4043 = vpop.f32.mrf.mxu0
        %v4044 = vadd.f32 %v4015, %v4043
        %v4045 = vpop.f32.mrf.mxu0
        %v4046 = vadd.f32 %v4017, %v4045
        %4047 = vdwg.mxu0
        %4048 = vmatpush.bf16.msra.mxu0 %v2744
        %4049 = vmatpush.bf16.msra.mxu0 %v2741
        %4050 = vmatpush.bf16.msra.mxu0 %v2738
        %4051 = vmatpush.bf16.msra.mxu0 %v2735
        %4052 = vmatpush.bf16.msra.mxu0 %v2732
        %4053 = vmatpush.bf16.msra.mxu0 %v2729
        %4054 = vmatpush.bf16.msra.mxu0 %v2726
        %4055 = vmatpush.bf16.msra.mxu0 %v2723
        %4056 = vmatmul.bf16.gmra.mxu0 %v642
        %v4057 = vpop.f32.mrf.mxu0
        %v4058 = vadd.f32 %v4029, %v4057
        %v4059 = vpop.f32.mrf.mxu0
        %v4060 = vadd.f32 %v4031, %v4059
        %4061 = vmatmul.bf16.gmra.mxu0 %v659
        %v4062 = vpop.f32.mrf.mxu0
        %v4063 = vadd.f32 %v4034, %v4062
        %v4064 = vpop.f32.mrf.mxu0
        %v4065 = vadd.f32 %v4036, %v4064
        %4066 = vmatmul.bf16.gmra.mxu0 %v676
        %v4067 = vpop.f32.mrf.mxu0
        %v4068 = vadd.f32 %v4039, %v4067
        %v4069 = vpop.f32.mrf.mxu0
        %v4070 = vadd.f32 %v4041, %v4069
        %4071 = vmatmul.bf16.gmra.mxu0 %v693
        %v4072 = vpop.f32.mrf.mxu0
        %v4073 = vadd.f32 %v4044, %v4072
        %v4074 = vpop.f32.mrf.mxu0
        %v4075 = vadd.f32 %v4046, %v4074
        %4076 = vdwg.mxu0
        %4077 = vmatpush.bf16.msra.mxu0 %v2768
        %4078 = vmatpush.bf16.msra.mxu0 %v2765
        %4079 = vmatpush.bf16.msra.mxu0 %v2762
        %4080 = vmatpush.bf16.msra.mxu0 %v2759
        %4081 = vmatpush.bf16.msra.mxu0 %v2756
        %4082 = vmatpush.bf16.msra.mxu0 %v2753
        %4083 = vmatpush.bf16.msra.mxu0 %v2750
        %4084 = vmatpush.bf16.msra.mxu0 %v2747
        %4085 = vmatmul.bf16.gmra.mxu0 %v643
        %v4086 = vpop.f32.mrf.mxu0
        %v4087 = vadd.f32 %v4058, %v4086
        %v4088 = vpop.f32.mrf.mxu0
        %v4089 = vadd.f32 %v4060, %v4088
        %4090 = vmatmul.bf16.gmra.mxu0 %v660
        %v4091 = vpop.f32.mrf.mxu0
        %v4092 = vadd.f32 %v4063, %v4091
        %v4093 = vpop.f32.mrf.mxu0
        %v4094 = vadd.f32 %v4065, %v4093
        %4095 = vmatmul.bf16.gmra.mxu0 %v677
        %v4096 = vpop.f32.mrf.mxu0
        %v4097 = vadd.f32 %v4068, %v4096
        %v4098 = vpop.f32.mrf.mxu0
        %v4099 = vadd.f32 %v4070, %v4098
        %4100 = vmatmul.bf16.gmra.mxu0 %v694
        %v4101 = vpop.f32.mrf.mxu0
        %v4102 = vadd.f32 %v4073, %v4101
        %v4103 = vpop.f32.mrf.mxu0
        %v4104 = vadd.f32 %v4075, %v4103
        %4105 = vdwg.mxu0
        %4106 = vmatpush.bf16.msra.mxu0 %v2792
        %4107 = vmatpush.bf16.msra.mxu0 %v2789
        %4108 = vmatpush.bf16.msra.mxu0 %v2786
        %4109 = vmatpush.bf16.msra.mxu0 %v2783
        %4110 = vmatpush.bf16.msra.mxu0 %v2780
        %4111 = vmatpush.bf16.msra.mxu0 %v2777
        %4112 = vmatpush.bf16.msra.mxu0 %v2774
        %4113 = vmatpush.bf16.msra.mxu0 %v2771
        %4114 = vmatmul.bf16.gmra.mxu0 %v644
        %v4115 = vpop.f32.mrf.mxu0
        %v4116 = vadd.f32 %v4087, %v4115
        %v4117 = vpop.f32.mrf.mxu0
        %v4118 = vadd.f32 %v4089, %v4117
        %4119 = vmatmul.bf16.gmra.mxu0 %v661
        %v4120 = vpop.f32.mrf.mxu0
        %v4121 = vadd.f32 %v4092, %v4120
        %v4122 = vpop.f32.mrf.mxu0
        %v4123 = vadd.f32 %v4094, %v4122
        %4124 = vmatmul.bf16.gmra.mxu0 %v678
        %v4125 = vpop.f32.mrf.mxu0
        %v4126 = vadd.f32 %v4097, %v4125
        %v4127 = vpop.f32.mrf.mxu0
        %v4128 = vadd.f32 %v4099, %v4127
        %4129 = vmatmul.bf16.gmra.mxu0 %v695
        %v4130 = vpop.f32.mrf.mxu0
        %v4131 = vadd.f32 %v4102, %v4130
        %v4132 = vpop.f32.mrf.mxu0
        %v4133 = vadd.f32 %v4104, %v4132
        %4134 = vdwg.mxu0
        %4135 = vmatpush.bf16.msra.mxu0 %v2816
        %4136 = vmatpush.bf16.msra.mxu0 %v2813
        %4137 = vmatpush.bf16.msra.mxu0 %v2810
        %4138 = vmatpush.bf16.msra.mxu0 %v2807
        %4139 = vmatpush.bf16.msra.mxu0 %v2804
        %4140 = vmatpush.bf16.msra.mxu0 %v2801
        %4141 = vmatpush.bf16.msra.mxu0 %v2798
        %4142 = vmatpush.bf16.msra.mxu0 %v2795
        %4143 = vmatmul.bf16.gmra.mxu0 %v645
        %v4144 = vpop.f32.mrf.mxu0
        %v4145 = vadd.f32 %v4116, %v4144
        %v4146 = vpop.f32.mrf.mxu0
        %v4147 = vadd.f32 %v4118, %v4146
        %4148 = vmatmul.bf16.gmra.mxu0 %v662
        %v4149 = vpop.f32.mrf.mxu0
        %v4150 = vadd.f32 %v4121, %v4149
        %v4151 = vpop.f32.mrf.mxu0
        %v4152 = vadd.f32 %v4123, %v4151
        %4153 = vmatmul.bf16.gmra.mxu0 %v679
        %v4154 = vpop.f32.mrf.mxu0
        %v4155 = vadd.f32 %v4126, %v4154
        %v4156 = vpop.f32.mrf.mxu0
        %v4157 = vadd.f32 %v4128, %v4156
        %4158 = vmatmul.bf16.gmra.mxu0 %v696
        %v4159 = vpop.f32.mrf.mxu0
        %v4160 = vadd.f32 %v4131, %v4159
        %v4161 = vpop.f32.mrf.mxu0
        %v4162 = vadd.f32 %v4133, %v4161
        %4163 = vdwg.mxu0
        %4164 = vmatpush.bf16.msra.mxu0 %v2840
        %4165 = vmatpush.bf16.msra.mxu0 %v2837
        %4166 = vmatpush.bf16.msra.mxu0 %v2834
        %4167 = vmatpush.bf16.msra.mxu0 %v2831
        %4168 = vmatpush.bf16.msra.mxu0 %v2828
        %4169 = vmatpush.bf16.msra.mxu0 %v2825
        %4170 = vmatpush.bf16.msra.mxu0 %v2822
        %4171 = vmatpush.bf16.msra.mxu0 %v2819
        %4172 = vmatmul.bf16.gmra.mxu0 %v646
        %v4173 = vpop.f32.mrf.mxu0
        %v4174 = vadd.f32 %v4145, %v4173
        %v4175 = vpop.f32.mrf.mxu0
        %v4176 = vadd.f32 %v4147, %v4175
        %4177 = vmatmul.bf16.gmra.mxu0 %v663
        %v4178 = vpop.f32.mrf.mxu0
        %v4179 = vadd.f32 %v4150, %v4178
        %v4180 = vpop.f32.mrf.mxu0
        %v4181 = vadd.f32 %v4152, %v4180
        %4182 = vmatmul.bf16.gmra.mxu0 %v680
        %v4183 = vpop.f32.mrf.mxu0
        %v4184 = vadd.f32 %v4155, %v4183
        %v4185 = vpop.f32.mrf.mxu0
        %v4186 = vadd.f32 %v4157, %v4185
        %4187 = vmatmul.bf16.gmra.mxu0 %v697
        %v4188 = vpop.f32.mrf.mxu0
        %v4189 = vadd.f32 %v4160, %v4188
        %v4190 = vpop.f32.mrf.mxu0
        %v4191 = vadd.f32 %v4162, %v4190
        %4192 = vdwg.mxu0
        %4193 = vmatpush.bf16.msra.mxu0 %v2864
        %4194 = vmatpush.bf16.msra.mxu0 %v2861
        %4195 = vmatpush.bf16.msra.mxu0 %v2858
        %4196 = vmatpush.bf16.msra.mxu0 %v2855
        %4197 = vmatpush.bf16.msra.mxu0 %v2852
        %4198 = vmatpush.bf16.msra.mxu0 %v2849
        %4199 = vmatpush.bf16.msra.mxu0 %v2846
        %4200 = vmatpush.bf16.msra.mxu0 %v2843
        %4201 = vmatmul.bf16.gmra.mxu0 %v647
        %v4202 = vpop.f32.mrf.mxu0
        %v4203 = vadd.f32 %v4174, %v4202
        %v4204 = vpop.f32.mrf.mxu0
        %v4205 = vadd.f32 %v4176, %v4204
        %4206 = vmatmul.bf16.gmra.mxu0 %v664
        %v4207 = vpop.f32.mrf.mxu0
        %v4208 = vadd.f32 %v4179, %v4207
        %v4209 = vpop.f32.mrf.mxu0
        %v4210 = vadd.f32 %v4181, %v4209
        %4211 = vmatmul.bf16.gmra.mxu0 %v681
        %v4212 = vpop.f32.mrf.mxu0
        %v4213 = vadd.f32 %v4184, %v4212
        %v4214 = vpop.f32.mrf.mxu0
        %v4215 = vadd.f32 %v4186, %v4214
        %4216 = vmatmul.bf16.gmra.mxu0 %v698
        %v4217 = vpop.f32.mrf.mxu0
        %v4218 = vadd.f32 %v4189, %v4217
        %v4219 = vpop.f32.mrf.mxu0
        %v4220 = vadd.f32 %v4191, %v4219
        %4221 = vdwg.mxu0
        %4222 = vmatpush.bf16.msra.mxu0 %v2888
        %4223 = vmatpush.bf16.msra.mxu0 %v2885
        %4224 = vmatpush.bf16.msra.mxu0 %v2882
        %4225 = vmatpush.bf16.msra.mxu0 %v2879
        %4226 = vmatpush.bf16.msra.mxu0 %v2876
        %4227 = vmatpush.bf16.msra.mxu0 %v2873
        %4228 = vmatpush.bf16.msra.mxu0 %v2870
        %4229 = vmatpush.bf16.msra.mxu0 %v2867
        %4230 = vmatmul.bf16.gmra.mxu0 %v648
        %v4231 = vpop.f32.mrf.mxu0
        %v4232 = vadd.f32 %v4203, %v4231
        %v4233 = vpop.f32.mrf.mxu0
        %v4234 = vadd.f32 %v4205, %v4233
        %4235 = vmatmul.bf16.gmra.mxu0 %v665
        %v4236 = vpop.f32.mrf.mxu0
        %v4237 = vadd.f32 %v4208, %v4236
        %v4238 = vpop.f32.mrf.mxu0
        %v4239 = vadd.f32 %v4210, %v4238
        %4240 = vmatmul.bf16.gmra.mxu0 %v682
        %v4241 = vpop.f32.mrf.mxu0
        %v4242 = vadd.f32 %v4213, %v4241
        %v4243 = vpop.f32.mrf.mxu0
        %v4244 = vadd.f32 %v4215, %v4243
        %4245 = vmatmul.bf16.gmra.mxu0 %v699
        %v4246 = vpop.f32.mrf.mxu0
        %v4247 = vadd.f32 %v4218, %v4246
        %v4248 = vpop.f32.mrf.mxu0
        %v4249 = vadd.f32 %v4220, %v4248
        %4250 = vdwg.mxu0
        %4251 = vmatpush.bf16.msra.mxu0 %v2912
        %4252 = vmatpush.bf16.msra.mxu0 %v2909
        %4253 = vmatpush.bf16.msra.mxu0 %v2906
        %4254 = vmatpush.bf16.msra.mxu0 %v2903
        %4255 = vmatpush.bf16.msra.mxu0 %v2900
        %4256 = vmatpush.bf16.msra.mxu0 %v2897
        %4257 = vmatpush.bf16.msra.mxu0 %v2894
        %4258 = vmatpush.bf16.msra.mxu0 %v2891
        %4259 = vmatmul.bf16.gmra.mxu0 %v649
        %v4260 = vpop.f32.mrf.mxu0
        %v4261 = vadd.f32 %v4232, %v4260
        %v4262 = vpop.f32.mrf.mxu0
        %v4263 = vadd.f32 %v4234, %v4262
        %4264 = vmatmul.bf16.gmra.mxu0 %v666
        %v4265 = vpop.f32.mrf.mxu0
        %v4266 = vadd.f32 %v4237, %v4265
        %v4267 = vpop.f32.mrf.mxu0
        %v4268 = vadd.f32 %v4239, %v4267
        %4269 = vmatmul.bf16.gmra.mxu0 %v683
        %v4270 = vpop.f32.mrf.mxu0
        %v4271 = vadd.f32 %v4242, %v4270
        %v4272 = vpop.f32.mrf.mxu0
        %v4273 = vadd.f32 %v4244, %v4272
        %4274 = vmatmul.bf16.gmra.mxu0 %v700
        %v4275 = vpop.f32.mrf.mxu0
        %v4276 = vadd.f32 %v4247, %v4275
        %v4277 = vpop.f32.mrf.mxu0
        %v4278 = vadd.f32 %v4249, %v4277
        %4279 = vdwg.mxu0
        %4280 = vmatpush.bf16.msra.mxu0 0
        %4281 = vmatpush.bf16.msra.mxu0 0
        %4282 = vmatpush.bf16.msra.mxu0 0
        %4283 = vmatpush.bf16.msra.mxu0 0
        %4284 = vmatpush.bf16.msra.mxu0 0
        %4285 = vmatpush.bf16.msra.mxu0 0
        %4286 = vmatpush.bf16.msra.mxu0 %v2918
        %4287 = vmatpush.bf16.msra.mxu0 %v2915
        %4288 = vmatmul.bf16.gmra.mxu0 %v3312
        %v4289 = vpop.f32.mrf.mxu0
        %v4290 = vadd.f32 %v4261, %v4289
        %v4291 = vpop.f32.mrf.mxu0
        %v4292 = vadd.f32 %v4263, %v4291
        %4293 = vmatmul.bf16.gmra.mxu0 %v3315
        %v4294 = vpop.f32.mrf.mxu0
        %v4295 = vadd.f32 %v4266, %v4294
        %v4296 = vpop.f32.mrf.mxu0
        %v4297 = vadd.f32 %v4268, %v4296
        %4298 = vmatmul.bf16.gmra.mxu0 %v3318
        %v4299 = vpop.f32.mrf.mxu0
        %v4300 = vadd.f32 %v4271, %v4299
        %v4301 = vpop.f32.mrf.mxu0
        %v4302 = vadd.f32 %v4273, %v4301
        %4303 = vmatmul.bf16.gmra.mxu0 %v3321
        %v4304 = vpop.f32.mrf.mxu0
        %v4305 = vadd.f32 %v4276, %v4304
        %v4306 = vpop.f32.mrf.mxu0
        %v4307 = vadd.f32 %v4278, %v4306
        %4308 = vdwg.mxu0
        %4309 = vmatpush.bf16.msra.mxu0 %v2553
        %4310 = vmatpush.bf16.msra.mxu0 %v2550
        %4311 = vmatpush.bf16.msra.mxu0 %v2547
        %4312 = vmatpush.bf16.msra.mxu0 %v2544
        %4313 = vmatpush.bf16.msra.mxu0 %v2541
        %4314 = vmatpush.bf16.msra.mxu0 %v2538
        %4315 = vmatpush.bf16.msra.mxu0 %v2535
        %4316 = vmatpush.bf16.msra.mxu0 %v2532
        %4317 = vmatmul.bf16.gmra.mxu0 %v634
        %v4318 = vpop.f32.mrf.mxu0
        %v4319 = vadd.f32 %v1226, %v4318
        %v4320 = vpop.f32.mrf.mxu0
        %v4321 = vadd.f32 %v1226, %v4320
        %4322 = vmatmul.bf16.gmra.mxu0 %v651
        %v4323 = vpop.f32.mrf.mxu0
        %v4324 = vadd.f32 %v1226, %v4323
        %v4325 = vpop.f32.mrf.mxu0
        %v4326 = vadd.f32 %v1226, %v4325
        %4327 = vmatmul.bf16.gmra.mxu0 %v668
        %v4328 = vpop.f32.mrf.mxu0
        %v4329 = vadd.f32 %v1226, %v4328
        %v4330 = vpop.f32.mrf.mxu0
        %v4331 = vadd.f32 %v1226, %v4330
        %4332 = vmatmul.bf16.gmra.mxu0 %v685
        %v4333 = vpop.f32.mrf.mxu0
        %v4334 = vadd.f32 %v1226, %v4333
        %v4335 = vpop.f32.mrf.mxu0
        %v4336 = vadd.f32 %v1226, %v4335
        %4337 = vdwg.mxu0
        %4338 = vmatpush.bf16.msra.mxu0 %v2577
        %4339 = vmatpush.bf16.msra.mxu0 %v2574
        %4340 = vmatpush.bf16.msra.mxu0 %v2571
        %4341 = vmatpush.bf16.msra.mxu0 %v2568
        %4342 = vmatpush.bf16.msra.mxu0 %v2565
        %4343 = vmatpush.bf16.msra.mxu0 %v2562
        %4344 = vmatpush.bf16.msra.mxu0 %v2559
        %4345 = vmatpush.bf16.msra.mxu0 %v2556
        %4346 = vmatmul.bf16.gmra.mxu0 %v635
        %v4347 = vpop.f32.mrf.mxu0
        %v4348 = vadd.f32 %v4319, %v4347
        %v4349 = vpop.f32.mrf.mxu0
        %v4350 = vadd.f32 %v4321, %v4349
        %4351 = vmatmul.bf16.gmra.mxu0 %v652
        %v4352 = vpop.f32.mrf.mxu0
        %v4353 = vadd.f32 %v4324, %v4352
        %v4354 = vpop.f32.mrf.mxu0
        %v4355 = vadd.f32 %v4326, %v4354
        %4356 = vmatmul.bf16.gmra.mxu0 %v669
        %v4357 = vpop.f32.mrf.mxu0
        %v4358 = vadd.f32 %v4329, %v4357
        %v4359 = vpop.f32.mrf.mxu0
        %v4360 = vadd.f32 %v4331, %v4359
        %4361 = vmatmul.bf16.gmra.mxu0 %v686
        %v4362 = vpop.f32.mrf.mxu0
        %v4363 = vadd.f32 %v4334, %v4362
        %v4364 = vpop.f32.mrf.mxu0
        %v4365 = vadd.f32 %v4336, %v4364
        %4366 = vdwg.mxu0
        %4367 = vmatpush.bf16.msra.mxu0 %v2601
        %4368 = vmatpush.bf16.msra.mxu0 %v2598
        %4369 = vmatpush.bf16.msra.mxu0 %v2595
        %4370 = vmatpush.bf16.msra.mxu0 %v2592
        %4371 = vmatpush.bf16.msra.mxu0 %v2589
        %4372 = vmatpush.bf16.msra.mxu0 %v2586
        %4373 = vmatpush.bf16.msra.mxu0 %v2583
        %4374 = vmatpush.bf16.msra.mxu0 %v2580
        %4375 = vmatmul.bf16.gmra.mxu0 %v636
        %v4376 = vpop.f32.mrf.mxu0
        %v4377 = vadd.f32 %v4348, %v4376
        %v4378 = vpop.f32.mrf.mxu0
        %v4379 = vadd.f32 %v4350, %v4378
        %4380 = vmatmul.bf16.gmra.mxu0 %v653
        %v4381 = vpop.f32.mrf.mxu0
        %v4382 = vadd.f32 %v4353, %v4381
        %v4383 = vpop.f32.mrf.mxu0
        %v4384 = vadd.f32 %v4355, %v4383
        %4385 = vmatmul.bf16.gmra.mxu0 %v670
        %v4386 = vpop.f32.mrf.mxu0
        %v4387 = vadd.f32 %v4358, %v4386
        %v4388 = vpop.f32.mrf.mxu0
        %v4389 = vadd.f32 %v4360, %v4388
        %4390 = vmatmul.bf16.gmra.mxu0 %v687
        %v4391 = vpop.f32.mrf.mxu0
        %v4392 = vadd.f32 %v4363, %v4391
        %v4393 = vpop.f32.mrf.mxu0
        %v4394 = vadd.f32 %v4365, %v4393
        %4395 = vdwg.mxu0
        %4396 = vmatpush.bf16.msra.mxu0 %v2625
        %4397 = vmatpush.bf16.msra.mxu0 %v2622
        %4398 = vmatpush.bf16.msra.mxu0 %v2619
        %4399 = vmatpush.bf16.msra.mxu0 %v2616
        %4400 = vmatpush.bf16.msra.mxu0 %v2613
        %4401 = vmatpush.bf16.msra.mxu0 %v2610
        %4402 = vmatpush.bf16.msra.mxu0 %v2607
        %4403 = vmatpush.bf16.msra.mxu0 %v2604
        %4404 = vmatmul.bf16.gmra.mxu0 %v637
        %v4405 = vpop.f32.mrf.mxu0
        %v4406 = vadd.f32 %v4377, %v4405
        %v4407 = vpop.f32.mrf.mxu0
        %v4408 = vadd.f32 %v4379, %v4407
        %4409 = vmatmul.bf16.gmra.mxu0 %v654
        %v4410 = vpop.f32.mrf.mxu0
        %v4411 = vadd.f32 %v4382, %v4410
        %v4412 = vpop.f32.mrf.mxu0
        %v4413 = vadd.f32 %v4384, %v4412
        %4414 = vmatmul.bf16.gmra.mxu0 %v671
        %v4415 = vpop.f32.mrf.mxu0
        %v4416 = vadd.f32 %v4387, %v4415
        %v4417 = vpop.f32.mrf.mxu0
        %v4418 = vadd.f32 %v4389, %v4417
        %4419 = vmatmul.bf16.gmra.mxu0 %v688
        %v4420 = vpop.f32.mrf.mxu0
        %v4421 = vadd.f32 %v4392, %v4420
        %v4422 = vpop.f32.mrf.mxu0
        %v4423 = vadd.f32 %v4394, %v4422
        %4424 = vdwg.mxu0
        %4425 = vmatpush.bf16.msra.mxu0 %v2649
        %4426 = vmatpush.bf16.msra.mxu0 %v2646
        %4427 = vmatpush.bf16.msra.mxu0 %v2643
        %4428 = vmatpush.bf16.msra.mxu0 %v2640
        %4429 = vmatpush.bf16.msra.mxu0 %v2637
        %4430 = vmatpush.bf16.msra.mxu0 %v2634
        %4431 = vmatpush.bf16.msra.mxu0 %v2631
        %4432 = vmatpush.bf16.msra.mxu0 %v2628
        %4433 = vmatmul.bf16.gmra.mxu0 %v638
        %v4434 = vpop.f32.mrf.mxu0
        %v4435 = vadd.f32 %v4406, %v4434
        %v4436 = vpop.f32.mrf.mxu0
        %v4437 = vadd.f32 %v4408, %v4436
        %4438 = vmatmul.bf16.gmra.mxu0 %v655
        %v4439 = vpop.f32.mrf.mxu0
        %v4440 = vadd.f32 %v4411, %v4439
        %v4441 = vpop.f32.mrf.mxu0
        %v4442 = vadd.f32 %v4413, %v4441
        %4443 = vmatmul.bf16.gmra.mxu0 %v672
        %v4444 = vpop.f32.mrf.mxu0
        %v4445 = vadd.f32 %v4416, %v4444
        %v4446 = vpop.f32.mrf.mxu0
        %v4447 = vadd.f32 %v4418, %v4446
        %4448 = vmatmul.bf16.gmra.mxu0 %v689
        %v4449 = vpop.f32.mrf.mxu0
        %v4450 = vadd.f32 %v4421, %v4449
        %v4451 = vpop.f32.mrf.mxu0
        %v4452 = vadd.f32 %v4423, %v4451
        %4453 = vdwg.mxu0
        %4454 = vmatpush.bf16.msra.mxu0 %v2673
        %4455 = vmatpush.bf16.msra.mxu0 %v2670
        %4456 = vmatpush.bf16.msra.mxu0 %v2667
        %4457 = vmatpush.bf16.msra.mxu0 %v2664
        %4458 = vmatpush.bf16.msra.mxu0 %v2661
        %4459 = vmatpush.bf16.msra.mxu0 %v2658
        %4460 = vmatpush.bf16.msra.mxu0 %v2655
        %4461 = vmatpush.bf16.msra.mxu0 %v2652
        %4462 = vmatmul.bf16.gmra.mxu0 %v639
        %v4463 = vpop.f32.mrf.mxu0
        %v4464 = vadd.f32 %v4435, %v4463
        %v4465 = vpop.f32.mrf.mxu0
        %v4466 = vadd.f32 %v4437, %v4465
        %4467 = vmatmul.bf16.gmra.mxu0 %v656
        %v4468 = vpop.f32.mrf.mxu0
        %v4469 = vadd.f32 %v4440, %v4468
        %v4470 = vpop.f32.mrf.mxu0
        %v4471 = vadd.f32 %v4442, %v4470
        %4472 = vmatmul.bf16.gmra.mxu0 %v673
        %v4473 = vpop.f32.mrf.mxu0
        %v4474 = vadd.f32 %v4445, %v4473
        %v4475 = vpop.f32.mrf.mxu0
        %v4476 = vadd.f32 %v4447, %v4475
        %4477 = vmatmul.bf16.gmra.mxu0 %v690
        %v4478 = vpop.f32.mrf.mxu0
        %v4479 = vadd.f32 %v4450, %v4478
        %v4480 = vpop.f32.mrf.mxu0
        %v4481 = vadd.f32 %v4452, %v4480
        %4482 = vdwg.mxu0
        %4483 = vmatpush.bf16.msra.mxu0 %v2697
        %4484 = vmatpush.bf16.msra.mxu0 %v2694
        %4485 = vmatpush.bf16.msra.mxu0 %v2691
        %4486 = vmatpush.bf16.msra.mxu0 %v2688
        %4487 = vmatpush.bf16.msra.mxu0 %v2685
        %4488 = vmatpush.bf16.msra.mxu0 %v2682
        %4489 = vmatpush.bf16.msra.mxu0 %v2679
        %4490 = vmatpush.bf16.msra.mxu0 %v2676
        %4491 = vmatmul.bf16.gmra.mxu0 %v640
        %v4492 = vpop.f32.mrf.mxu0
        %v4493 = vadd.f32 %v4464, %v4492
        %v4494 = vpop.f32.mrf.mxu0
        %v4495 = vadd.f32 %v4466, %v4494
        %4496 = vmatmul.bf16.gmra.mxu0 %v657
        %v4497 = vpop.f32.mrf.mxu0
        %v4498 = vadd.f32 %v4469, %v4497
        %v4499 = vpop.f32.mrf.mxu0
        %v4500 = vadd.f32 %v4471, %v4499
        %4501 = vmatmul.bf16.gmra.mxu0 %v674
        %v4502 = vpop.f32.mrf.mxu0
        %v4503 = vadd.f32 %v4474, %v4502
        %v4504 = vpop.f32.mrf.mxu0
        %v4505 = vadd.f32 %v4476, %v4504
        %4506 = vmatmul.bf16.gmra.mxu0 %v691
        %v4507 = vpop.f32.mrf.mxu0
        %v4508 = vadd.f32 %v4479, %v4507
        %v4509 = vpop.f32.mrf.mxu0
        %v4510 = vadd.f32 %v4481, %v4509
        %4511 = vdwg.mxu0
        %4512 = vmatpush.bf16.msra.mxu0 %v2721
        %4513 = vmatpush.bf16.msra.mxu0 %v2718
        %4514 = vmatpush.bf16.msra.mxu0 %v2715
        %4515 = vmatpush.bf16.msra.mxu0 %v2712
        %4516 = vmatpush.bf16.msra.mxu0 %v2709
        %4517 = vmatpush.bf16.msra.mxu0 %v2706
        %4518 = vmatpush.bf16.msra.mxu0 %v2703
        %4519 = vmatpush.bf16.msra.mxu0 %v2700
        %4520 = vmatmul.bf16.gmra.mxu0 %v641
        %v4521 = vpop.f32.mrf.mxu0
        %v4522 = vadd.f32 %v4493, %v4521
        %v4523 = vpop.f32.mrf.mxu0
        %v4524 = vadd.f32 %v4495, %v4523
        %4525 = vmatmul.bf16.gmra.mxu0 %v658
        %v4526 = vpop.f32.mrf.mxu0
        %v4527 = vadd.f32 %v4498, %v4526
        %v4528 = vpop.f32.mrf.mxu0
        %v4529 = vadd.f32 %v4500, %v4528
        %4530 = vmatmul.bf16.gmra.mxu0 %v675
        %v4531 = vpop.f32.mrf.mxu0
        %v4532 = vadd.f32 %v4503, %v4531
        %v4533 = vpop.f32.mrf.mxu0
        %v4534 = vadd.f32 %v4505, %v4533
        %4535 = vmatmul.bf16.gmra.mxu0 %v692
        %v4536 = vpop.f32.mrf.mxu0
        %v4537 = vadd.f32 %v4508, %v4536
        %v4538 = vpop.f32.mrf.mxu0
        %v4539 = vadd.f32 %v4510, %v4538
        %4540 = vdwg.mxu0
        %4541 = vmatpush.bf16.msra.mxu0 %v2745
        %4542 = vmatpush.bf16.msra.mxu0 %v2742
        %4543 = vmatpush.bf16.msra.mxu0 %v2739
        %4544 = vmatpush.bf16.msra.mxu0 %v2736
        %4545 = vmatpush.bf16.msra.mxu0 %v2733
        %4546 = vmatpush.bf16.msra.mxu0 %v2730
        %4547 = vmatpush.bf16.msra.mxu0 %v2727
        %4548 = vmatpush.bf16.msra.mxu0 %v2724
        %4549 = vmatmul.bf16.gmra.mxu0 %v642
        %v4550 = vpop.f32.mrf.mxu0
        %v4551 = vadd.f32 %v4522, %v4550
        %v4552 = vpop.f32.mrf.mxu0
        %v4553 = vadd.f32 %v4524, %v4552
        %4554 = vmatmul.bf16.gmra.mxu0 %v659
        %v4555 = vpop.f32.mrf.mxu0
        %v4556 = vadd.f32 %v4527, %v4555
        %v4557 = vpop.f32.mrf.mxu0
        %v4558 = vadd.f32 %v4529, %v4557
        %4559 = vmatmul.bf16.gmra.mxu0 %v676
        %v4560 = vpop.f32.mrf.mxu0
        %v4561 = vadd.f32 %v4532, %v4560
        %v4562 = vpop.f32.mrf.mxu0
        %v4563 = vadd.f32 %v4534, %v4562
        %4564 = vmatmul.bf16.gmra.mxu0 %v693
        %v4565 = vpop.f32.mrf.mxu0
        %v4566 = vadd.f32 %v4537, %v4565
        %v4567 = vpop.f32.mrf.mxu0
        %v4568 = vadd.f32 %v4539, %v4567
        %4569 = vdwg.mxu0
        %4570 = vmatpush.bf16.msra.mxu0 %v2769
        %4571 = vmatpush.bf16.msra.mxu0 %v2766
        %4572 = vmatpush.bf16.msra.mxu0 %v2763
        %4573 = vmatpush.bf16.msra.mxu0 %v2760
        %4574 = vmatpush.bf16.msra.mxu0 %v2757
        %4575 = vmatpush.bf16.msra.mxu0 %v2754
        %4576 = vmatpush.bf16.msra.mxu0 %v2751
        %4577 = vmatpush.bf16.msra.mxu0 %v2748
        %4578 = vmatmul.bf16.gmra.mxu0 %v643
        %v4579 = vpop.f32.mrf.mxu0
        %v4580 = vadd.f32 %v4551, %v4579
        %v4581 = vpop.f32.mrf.mxu0
        %v4582 = vadd.f32 %v4553, %v4581
        %4583 = vmatmul.bf16.gmra.mxu0 %v660
        %v4584 = vpop.f32.mrf.mxu0
        %v4585 = vadd.f32 %v4556, %v4584
        %v4586 = vpop.f32.mrf.mxu0
        %v4587 = vadd.f32 %v4558, %v4586
        %4588 = vmatmul.bf16.gmra.mxu0 %v677
        %v4589 = vpop.f32.mrf.mxu0
        %v4590 = vadd.f32 %v4561, %v4589
        %v4591 = vpop.f32.mrf.mxu0
        %v4592 = vadd.f32 %v4563, %v4591
        %4593 = vmatmul.bf16.gmra.mxu0 %v694
        %v4594 = vpop.f32.mrf.mxu0
        %v4595 = vadd.f32 %v4566, %v4594
        %v4596 = vpop.f32.mrf.mxu0
        %v4597 = vadd.f32 %v4568, %v4596
        %4598 = vdwg.mxu0
        %4599 = vmatpush.bf16.msra.mxu0 %v2793
        %4600 = vmatpush.bf16.msra.mxu0 %v2790
        %4601 = vmatpush.bf16.msra.mxu0 %v2787
        %4602 = vmatpush.bf16.msra.mxu0 %v2784
        %4603 = vmatpush.bf16.msra.mxu0 %v2781
        %4604 = vmatpush.bf16.msra.mxu0 %v2778
        %4605 = vmatpush.bf16.msra.mxu0 %v2775
        %4606 = vmatpush.bf16.msra.mxu0 %v2772
        %4607 = vmatmul.bf16.gmra.mxu0 %v644
        %v4608 = vpop.f32.mrf.mxu0
        %v4609 = vadd.f32 %v4580, %v4608
        %v4610 = vpop.f32.mrf.mxu0
        %v4611 = vadd.f32 %v4582, %v4610
        %4612 = vmatmul.bf16.gmra.mxu0 %v661
        %v4613 = vpop.f32.mrf.mxu0
        %v4614 = vadd.f32 %v4585, %v4613
        %v4615 = vpop.f32.mrf.mxu0
        %v4616 = vadd.f32 %v4587, %v4615
        %4617 = vmatmul.bf16.gmra.mxu0 %v678
        %v4618 = vpop.f32.mrf.mxu0
        %v4619 = vadd.f32 %v4590, %v4618
        %v4620 = vpop.f32.mrf.mxu0
        %v4621 = vadd.f32 %v4592, %v4620
        %4622 = vmatmul.bf16.gmra.mxu0 %v695
        %v4623 = vpop.f32.mrf.mxu0
        %v4624 = vadd.f32 %v4595, %v4623
        %v4625 = vpop.f32.mrf.mxu0
        %v4626 = vadd.f32 %v4597, %v4625
        %4627 = vdwg.mxu0
        %4628 = vmatpush.bf16.msra.mxu0 %v2817
        %4629 = vmatpush.bf16.msra.mxu0 %v2814
        %4630 = vmatpush.bf16.msra.mxu0 %v2811
        %4631 = vmatpush.bf16.msra.mxu0 %v2808
        %4632 = vmatpush.bf16.msra.mxu0 %v2805
        %4633 = vmatpush.bf16.msra.mxu0 %v2802
        %4634 = vmatpush.bf16.msra.mxu0 %v2799
        %4635 = vmatpush.bf16.msra.mxu0 %v2796
        %4636 = vmatmul.bf16.gmra.mxu0 %v645
        %v4637 = vpop.f32.mrf.mxu0
        %v4638 = vadd.f32 %v4609, %v4637
        %v4639 = vpop.f32.mrf.mxu0
        %v4640 = vadd.f32 %v4611, %v4639
        %4641 = vmatmul.bf16.gmra.mxu0 %v662
        %v4642 = vpop.f32.mrf.mxu0
        %v4643 = vadd.f32 %v4614, %v4642
        %v4644 = vpop.f32.mrf.mxu0
        %v4645 = vadd.f32 %v4616, %v4644
        %4646 = vmatmul.bf16.gmra.mxu0 %v679
        %v4647 = vpop.f32.mrf.mxu0
        %v4648 = vadd.f32 %v4619, %v4647
        %v4649 = vpop.f32.mrf.mxu0
        %v4650 = vadd.f32 %v4621, %v4649
        %4651 = vmatmul.bf16.gmra.mxu0 %v696
        %v4652 = vpop.f32.mrf.mxu0
        %v4653 = vadd.f32 %v4624, %v4652
        %v4654 = vpop.f32.mrf.mxu0
        %v4655 = vadd.f32 %v4626, %v4654
        %4656 = vdwg.mxu0
        %4657 = vmatpush.bf16.msra.mxu0 %v2841
        %4658 = vmatpush.bf16.msra.mxu0 %v2838
        %4659 = vmatpush.bf16.msra.mxu0 %v2835
        %4660 = vmatpush.bf16.msra.mxu0 %v2832
        %4661 = vmatpush.bf16.msra.mxu0 %v2829
        %4662 = vmatpush.bf16.msra.mxu0 %v2826
        %4663 = vmatpush.bf16.msra.mxu0 %v2823
        %4664 = vmatpush.bf16.msra.mxu0 %v2820
        %4665 = vmatmul.bf16.gmra.mxu0 %v646
        %v4666 = vpop.f32.mrf.mxu0
        %v4667 = vadd.f32 %v4638, %v4666
        %v4668 = vpop.f32.mrf.mxu0
        %v4669 = vadd.f32 %v4640, %v4668
        %4670 = vmatmul.bf16.gmra.mxu0 %v663
        %v4671 = vpop.f32.mrf.mxu0
        %v4672 = vadd.f32 %v4643, %v4671
        %v4673 = vpop.f32.mrf.mxu0
        %v4674 = vadd.f32 %v4645, %v4673
        %4675 = vmatmul.bf16.gmra.mxu0 %v680
        %v4676 = vpop.f32.mrf.mxu0
        %v4677 = vadd.f32 %v4648, %v4676
        %v4678 = vpop.f32.mrf.mxu0
        %v4679 = vadd.f32 %v4650, %v4678
        %4680 = vmatmul.bf16.gmra.mxu0 %v697
        %v4681 = vpop.f32.mrf.mxu0
        %v4682 = vadd.f32 %v4653, %v4681
        %v4683 = vpop.f32.mrf.mxu0
        %v4684 = vadd.f32 %v4655, %v4683
        %4685 = vdwg.mxu0
        %4686 = vmatpush.bf16.msra.mxu0 %v2865
        %4687 = vmatpush.bf16.msra.mxu0 %v2862
        %4688 = vmatpush.bf16.msra.mxu0 %v2859
        %4689 = vmatpush.bf16.msra.mxu0 %v2856
        %4690 = vmatpush.bf16.msra.mxu0 %v2853
        %4691 = vmatpush.bf16.msra.mxu0 %v2850
        %4692 = vmatpush.bf16.msra.mxu0 %v2847
        %4693 = vmatpush.bf16.msra.mxu0 %v2844
        %4694 = vmatmul.bf16.gmra.mxu0 %v647
        %v4695 = vpop.f32.mrf.mxu0
        %v4696 = vadd.f32 %v4667, %v4695
        %v4697 = vpop.f32.mrf.mxu0
        %v4698 = vadd.f32 %v4669, %v4697
        %4699 = vmatmul.bf16.gmra.mxu0 %v664
        %v4700 = vpop.f32.mrf.mxu0
        %v4701 = vadd.f32 %v4672, %v4700
        %v4702 = vpop.f32.mrf.mxu0
        %v4703 = vadd.f32 %v4674, %v4702
        %4704 = vmatmul.bf16.gmra.mxu0 %v681
        %v4705 = vpop.f32.mrf.mxu0
        %v4706 = vadd.f32 %v4677, %v4705
        %v4707 = vpop.f32.mrf.mxu0
        %v4708 = vadd.f32 %v4679, %v4707
        %4709 = vmatmul.bf16.gmra.mxu0 %v698
        %v4710 = vpop.f32.mrf.mxu0
        %v4711 = vadd.f32 %v4682, %v4710
        %v4712 = vpop.f32.mrf.mxu0
        %v4713 = vadd.f32 %v4684, %v4712
        %4714 = vdwg.mxu0
        %4715 = vmatpush.bf16.msra.mxu0 %v2889
        %4716 = vmatpush.bf16.msra.mxu0 %v2886
        %4717 = vmatpush.bf16.msra.mxu0 %v2883
        %4718 = vmatpush.bf16.msra.mxu0 %v2880
        %4719 = vmatpush.bf16.msra.mxu0 %v2877
        %4720 = vmatpush.bf16.msra.mxu0 %v2874
        %4721 = vmatpush.bf16.msra.mxu0 %v2871
        %4722 = vmatpush.bf16.msra.mxu0 %v2868
        %4723 = vmatmul.bf16.gmra.mxu0 %v648
        %v4724 = vpop.f32.mrf.mxu0
        %v4725 = vadd.f32 %v4696, %v4724
        %v4726 = vpop.f32.mrf.mxu0
        %v4727 = vadd.f32 %v4698, %v4726
        %4728 = vmatmul.bf16.gmra.mxu0 %v665
        %v4729 = vpop.f32.mrf.mxu0
        %v4730 = vadd.f32 %v4701, %v4729
        %v4731 = vpop.f32.mrf.mxu0
        %v4732 = vadd.f32 %v4703, %v4731
        %4733 = vmatmul.bf16.gmra.mxu0 %v682
        %v4734 = vpop.f32.mrf.mxu0
        %v4735 = vadd.f32 %v4706, %v4734
        %v4736 = vpop.f32.mrf.mxu0
        %v4737 = vadd.f32 %v4708, %v4736
        %4738 = vmatmul.bf16.gmra.mxu0 %v699
        %v4739 = vpop.f32.mrf.mxu0
        %v4740 = vadd.f32 %v4711, %v4739
        %v4741 = vpop.f32.mrf.mxu0
        %v4742 = vadd.f32 %v4713, %v4741
        %4743 = vdwg.mxu0
        %4744 = vmatpush.bf16.msra.mxu0 %v2913
        %4745 = vmatpush.bf16.msra.mxu0 %v2910
        %4746 = vmatpush.bf16.msra.mxu0 %v2907
        %4747 = vmatpush.bf16.msra.mxu0 %v2904
        %4748 = vmatpush.bf16.msra.mxu0 %v2901
        %4749 = vmatpush.bf16.msra.mxu0 %v2898
        %4750 = vmatpush.bf16.msra.mxu0 %v2895
        %4751 = vmatpush.bf16.msra.mxu0 %v2892
        %4752 = vmatmul.bf16.gmra.mxu0 %v649
        %v4753 = vpop.f32.mrf.mxu0
        %v4754 = vadd.f32 %v4725, %v4753
        %v4755 = vpop.f32.mrf.mxu0
        %v4756 = vadd.f32 %v4727, %v4755
        %4757 = vmatmul.bf16.gmra.mxu0 %v666
        %v4758 = vpop.f32.mrf.mxu0
        %v4759 = vadd.f32 %v4730, %v4758
        %v4760 = vpop.f32.mrf.mxu0
        %v4761 = vadd.f32 %v4732, %v4760
        %4762 = vmatmul.bf16.gmra.mxu0 %v683
        %v4763 = vpop.f32.mrf.mxu0
        %v4764 = vadd.f32 %v4735, %v4763
        %v4765 = vpop.f32.mrf.mxu0
        %v4766 = vadd.f32 %v4737, %v4765
        %4767 = vmatmul.bf16.gmra.mxu0 %v700
        %v4768 = vpop.f32.mrf.mxu0
        %v4769 = vadd.f32 %v4740, %v4768
        %v4770 = vpop.f32.mrf.mxu0
        %v4771 = vadd.f32 %v4742, %v4770
        %4772 = vdwg.mxu0
        %4773 = vmatpush.bf16.msra.mxu0 0
        %4774 = vmatpush.bf16.msra.mxu0 0
        %4775 = vmatpush.bf16.msra.mxu0 0
        %4776 = vmatpush.bf16.msra.mxu0 0
        %4777 = vmatpush.bf16.msra.mxu0 0
        %4778 = vmatpush.bf16.msra.mxu0 0
        %4779 = vmatpush.bf16.msra.mxu0 %v2919
        %4780 = vmatpush.bf16.msra.mxu0 %v2916
        %4781 = vmatmul.bf16.gmra.mxu0 %v3312
        %v4782 = vpop.f32.mrf.mxu0
        %v4783 = vadd.f32 %v4754, %v4782
        %v4784 = vpop.f32.mrf.mxu0
        %v4785 = vadd.f32 %v4756, %v4784
        %4786 = vmatmul.bf16.gmra.mxu0 %v3315
        %v4787 = vpop.f32.mrf.mxu0
        %v4788 = vadd.f32 %v4759, %v4787
        %v4789 = vpop.f32.mrf.mxu0
        %v4790 = vadd.f32 %v4761, %v4789
        %4791 = vmatmul.bf16.gmra.mxu0 %v3318
        %v4792 = vpop.f32.mrf.mxu0
        %v4793 = vadd.f32 %v4764, %v4792
        %v4794 = vpop.f32.mrf.mxu0
        %v4795 = vadd.f32 %v4766, %v4794
        %4796 = vmatmul.bf16.gmra.mxu0 %v3321
        %v4797 = vpop.f32.mrf.mxu0
        %v4798 = vadd.f32 %v4769, %v4797
        %v4799 = vpop.f32.mrf.mxu0
        %v4800 = vadd.f32 %v4771, %v4799
        %4801 = vdwg.mxu0
        %v4802 = vmax.f32 %v3797, 0.0
        %v4803 = vmax.f32 %v4290, 0.0
        %v4804 = vmax.f32 %v4783, 0.0
        %v4805 = vmax.f32 %v3799, 0.0
        %v4806 = vmax.f32 %v4292, 0.0
        %v4807 = vmax.f32 %v4785, 0.0
        %v4808 = vmax.f32 %v3802, 0.0
        %v4809 = vmax.f32 %v4295, 0.0
        %v4810 = vmax.f32 %v4788, 0.0
        %v4811 = vmax.f32 %v3804, 0.0
        %v4812 = vmax.f32 %v4297, 0.0
        %v4813 = vmax.f32 %v4790, 0.0
        %v4814 = vmax.f32 %v3807, 0.0
        %v4815 = vmax.f32 %v4300, 0.0
        %v4816 = vmax.f32 %v4793, 0.0
        %v4817 = vmax.f32 %v3809, 0.0
        %v4818 = vmax.f32 %v4302, 0.0
        %v4819 = vmax.f32 %v4795, 0.0
        %v4820 = vmax.f32 %v3812, 0.0
        %v4821 = vmax.f32 %v4305, 0.0
        %v4822 = vmax.f32 %v4798, 0.0
        %v4823 = vmax.f32 %v3814, 0.0
        %v4824 = vmax.f32 %v4307, 0.0
        %v4825 = vmax.f32 %v4800, 0.0
        %4826 = vst [vmem:[#allocation2] sm:$0xff] 0.0
        %vm4827 = vcmask 523264
        %4828 = vst.msk [vmem:[#allocation2 + $0x8] sm:$0xff] %vm4827, 0.0
        %4829 = vst [vmem:[#allocation2 + $0x90] sm:$0xff] 0.0
        %4830 = vst.msk [vmem:[#allocation2 + $0x98] sm:$0xff] %vm4827, 0.0
        %4847 = vrot.lane.b32.xlu0 %v4803, 64
        %v4848 = vpop.permute.xlu0 %4847
        %4849 = vrot.lane.b32.xlu0 %v4804, 64
        %v4850 = vpop.permute.xlu0 %4849
        %4851 = vrot.lane.b32.xlu0 %v4806, 64
        %v4852 = vpop.permute.xlu0 %4851
        %4853 = vrot.lane.b32.xlu0 %v4807, 64
        %v4854 = vpop.permute.xlu0 %4853
        %4855 = vrot.lane.b32.xlu0 %v4809, 64
        %v4856 = vpop.permute.xlu0 %4855
        %4857 = vrot.lane.b32.xlu0 %v4810, 64
        %v4858 = vpop.permute.xlu0 %4857
        %4859 = vrot.lane.b32.xlu0 %v4812, 64
        %v4860 = vpop.permute.xlu0 %4859
        %4861 = vrot.lane.b32.xlu0 %v4813, 64
        %v4862 = vpop.permute.xlu0 %4861
        %4863 = vrot.lane.b32.xlu0 %v4815, 64
        %v4864 = vpop.permute.xlu0 %4863
        %4865 = vrot.lane.b32.xlu0 %v4816, 64
        %v4866 = vpop.permute.xlu0 %4865
        %4867 = vrot.lane.b32.xlu0 %v4818, 64
        %v4868 = vpop.permute.xlu0 %4867
        %4869 = vrot.lane.b32.xlu0 %v4819, 64
        %v4870 = vpop.permute.xlu0 %4869
        %4871 = vrot.lane.b32.xlu0 %v4821, 64
        %v4872 = vpop.permute.xlu0 %4871
        %4873 = vrot.lane.b32.xlu0 %v4822, 64
        %v4874 = vpop.permute.xlu0 %4873
        %4875 = vrot.lane.b32.xlu0 %v4824, 64
        %v4876 = vpop.permute.xlu0 %4875
        %4877 = vrot.lane.b32.xlu0 %v4825, 64
        %v4878 = vpop.permute.xlu0 %4877
        %v4879 = vsel %vm4827, %v4848, %v4850
        %v4880 = vsel %vm4827, %v4852, %v4854
        %v4881 = vsel %vm4827, %v4856, %v4858
        %v4882 = vsel %vm4827, %v4860, %v4862
        %v4883 = vsel %vm4827, %v4864, %v4866
        %v4884 = vsel %vm4827, %v4868, %v4870
        %v4885 = vsel %vm4827, %v4872, %v4874
        %v4886 = vsel %vm4827, %v4876, %v4878
        %4903 = vst [vmem:[#allocation2 + $0x10] sm:$0xff] %v4879
        %4904 = vst.msk [vmem:[#allocation2 + $0x18] sm:$0xff] %vm4827, %v4850
        %4905 = vst [vmem:[#allocation2 + $0x20] sm:$0xff] %v4880
        %4906 = vst.msk [vmem:[#allocation2 + $0x28] sm:$0xff] %vm4827, %v4854
        %4907 = vst [vmem:[#allocation2 + $0x30] sm:$0xff] %v4881
        %4908 = vst.msk [vmem:[#allocation2 + $0x38] sm:$0xff] %vm4827, %v4858
        %4909 = vst [vmem:[#allocation2 + $0x40] sm:$0xff] %v4882
        %4910 = vst.msk [vmem:[#allocation2 + $0x48] sm:$0xff] %vm4827, %v4862
        %4911 = vst [vmem:[#allocation2 + $0x50] sm:$0xff] %v4883
        %4912 = vst.msk [vmem:[#allocation2 + $0x58] sm:$0xff] %vm4827, %v4866
        %4913 = vst [vmem:[#allocation2 + $0x60] sm:$0xff] %v4884
        %4914 = vst.msk [vmem:[#allocation2 + $0x68] sm:$0xff] %vm4827, %v4870
        %4915 = vst [vmem:[#allocation2 + $0x70] sm:$0xff] %v4885
        %4916 = vst.msk [vmem:[#allocation2 + $0x78] sm:$0xff] %vm4827, %v4874
        %4917 = vst [vmem:[#allocation2 + $0x80] sm:$0xff] %v4886
        %4918 = vst.msk [vmem:[#allocation2 + $0x88] sm:$0xff] %vm4827, %v4878
        %v4919 = vld [vmem:[#allocation2] sm:$0x80]
        %v4920 = vld [vmem:[#allocation2 + $0x8] sm:$0x80]
        %v4921 = vld [vmem:[#allocation2 + $0x10] sm:$0xff]
        %v4922 = vld [vmem:[#allocation2 + $0x18] sm:$0xff]
        %v4923 = vld [vmem:[#allocation2 + $0x20] sm:$0xff]
        %v4924 = vld [vmem:[#allocation2 + $0x28] sm:$0xff]
        %v4925 = vld [vmem:[#allocation2 + $0x30] sm:$0xff]
        %v4926 = vld [vmem:[#allocation2 + $0x38] sm:$0xff]
        %v4927 = vld [vmem:[#allocation2 + $0x40] sm:$0xff]
        %v4928 = vld [vmem:[#allocation2 + $0x48] sm:$0xff]
        %v4929 = vld [vmem:[#allocation2 + $0x50] sm:$0xff]
        %v4930 = vld [vmem:[#allocation2 + $0x58] sm:$0xff]
        %v4931 = vld [vmem:[#allocation2 + $0x60] sm:$0xff]
        %v4932 = vld [vmem:[#allocation2 + $0x68] sm:$0xff]
        %v4933 = vld [vmem:[#allocation2 + $0x70] sm:$0xff]
        %v4934 = vld [vmem:[#allocation2 + $0x78] sm:$0xff]
        %v4935 = vld [vmem:[#allocation2 + $0x80] sm:$0x7f]
        %v4936 = vld [vmem:[#allocation2 + $0x88] sm:$0x7f]
        %v4937 = vpack.c.bf16 %v4921, %v4919
        %v4938 = vpack.c.bf16 %v4922, %v4920
        %v4939 = vpack.c.bf16 %v4925, %v4923
        %v4940 = vpack.c.bf16 %v4926, %v4924
        %v4941 = vpack.c.bf16 %v4929, %v4927
        %v4942 = vpack.c.bf16 %v4930, %v4928
        %v4943 = vpack.c.bf16 %v4933, %v4931
        %v4944 = vpack.c.bf16 %v4934, %v4932
        %v4945 = vpack.c.bf16 %v4935, %v4935
        %v4946 = vpack.c.bf16 %v4936, %v4936
        %v4947 = vld [vmem:[%s3] sm:$0xff]
        %v4948 = vld [vmem:[%s3 + $0x8] sm:$0xff]
        %v4949 = vld [vmem:[%s3 + $0x10] sm:$0xff]
        %v4950 = vld [vmem:[%s3 + $0x18] sm:$0xff]
        %v4951 = vld [vmem:[%s3 + $0x20] sm:$0xff]
        %v4952 = vld [vmem:[%s3 + $0x28] sm:$0xff]
        %v4953 = vld [vmem:[%s3 + $0x30] sm:$0xff]
        %v4954 = vld [vmem:[%s3 + $0x38] sm:$0xff]
        %v4955 = vld [vmem:[%s3 + $0x40] sm:$0xff]
        %v4956 = vld [vmem:[%s3 + $0x48] sm:$0xff]
        %v4957 = vld [vmem:[%s3 + $0x50] sm:$0xff]
        %v4958 = vld [vmem:[%s3 + $0x58] sm:$0xff]
        %v4959 = vld [vmem:[%s3 + $0x60] sm:$0xff]
        %v4960 = vld [vmem:[%s3 + $0x68] sm:$0xff]
        %v4961 = vld [vmem:[%s3 + $0x70] sm:$0xff]
        %v4962 = vld [vmem:[%s3 + $0x78] sm:$0xff]
        %v4963 = vld [vmem:[%s3 + $0x80] sm:$0xff]
        %v4964 = vld [vmem:[%s3 + $0x88] sm:$0xff]
        %v4965 = vld [vmem:[%s3 + $0x90] sm:$0xff]
        %v4966 = vld [vmem:[%s3 + $0x98] sm:$0xff]
        %v4967 = vld [vmem:[%s3 + $0xa0] sm:$0xff]
        %v4968 = vld [vmem:[%s3 + $0xa8] sm:$0xff]
        %v4969 = vld [vmem:[%s3 + $0xb0] sm:$0xff]
        %v4970 = vld [vmem:[%s3 + $0xb8] sm:$0xff]
        %vm4971 = vsmask.f32 4352
        %v4973 = vshrl.u32 %v4937, 16
        %v4975 = vrot.slane %v4973, 3
        %v4976 = vshll.u32 %v4937, 16
        %v4978 = vrot.slane %v4976, 4
        %v4979 = vor.u32 %v4975, %v4978
        %v4981 = vshrl.u32 %v4939, 16
        %v4983 = vrot.slane %v4981, 3
        %v4984 = vshll.u32 %v4939, 16
        %v4986 = vrot.slane %v4984, 4
        %v4987 = vor.u32 %v4983, %v4986
        %v4988 = vsel %vm4971, %v4979, %v4987
        %v4990 = vshrl.u32 %v4938, 16
        %v4992 = vrot.slane %v4990, 3
        %v4993 = vshll.u32 %v4938, 16
        %v4995 = vrot.slane %v4993, 4
        %v4996 = vor.u32 %v4992, %v4995
        %v4998 = vshrl.u32 %v4940, 16
        %v5000 = vrot.slane %v4998, 3
        %v5001 = vshll.u32 %v4940, 16
        %v5003 = vrot.slane %v5001, 4
        %v5004 = vor.u32 %v5000, %v5003
        %v5005 = vsel %vm4971, %v4996, %v5004
        %v5007 = vshrl.u32 %v4941, 16
        %v5009 = vrot.slane %v5007, 3
        %v5010 = vshll.u32 %v4941, 16
        %v5012 = vrot.slane %v5010, 4
        %v5013 = vor.u32 %v5009, %v5012
        %v5014 = vsel %vm4971, %v4987, %v5013
        %v5016 = vshrl.u32 %v4942, 16
        %v5018 = vrot.slane %v5016, 3
        %v5019 = vshll.u32 %v4942, 16
        %v5021 = vrot.slane %v5019, 4
        %v5022 = vor.u32 %v5018, %v5021
        %v5023 = vsel %vm4971, %v5004, %v5022
        %v5025 = vshrl.u32 %v4943, 16
        %v5027 = vrot.slane %v5025, 3
        %v5028 = vshll.u32 %v4943, 16
        %v5030 = vrot.slane %v5028, 4
        %v5031 = vor.u32 %v5027, %v5030
        %v5032 = vsel %vm4971, %v5013, %v5031
        %v5034 = vshrl.u32 %v4944, 16
        %v5036 = vrot.slane %v5034, 3
        %v5037 = vshll.u32 %v4944, 16
        %v5039 = vrot.slane %v5037, 4
        %v5040 = vor.u32 %v5036, %v5039
        %v5041 = vsel %vm4971, %v5022, %v5040
        %v5043 = vshrl.u32 %v4945, 16
        %v5045 = vrot.slane %v5043, 3
        %v5046 = vshll.u32 %v4945, 16
        %v5048 = vrot.slane %v5046, 4
        %v5049 = vor.u32 %v5045, %v5048
        %v5050 = vsel %vm4971, %v5031, %v5049
        %v5052 = vshrl.u32 %v4946, 16
        %v5054 = vrot.slane %v5052, 3
        %v5055 = vshll.u32 %v4946, 16
        %v5057 = vrot.slane %v5055, 4
        %v5058 = vor.u32 %v5054, %v5057
        %v5059 = vsel %vm4971, %v5040, %v5058
        %v5088 = vunpack.c.l.b16 %v4947
        %v5089 = vunpack.c.h.b16 %v4947
        %v5090 = vunpack.c.l.b16 %v4948
        %v5091 = vunpack.c.h.b16 %v4948
        %v5092 = vunpack.c.l.b16 %v4949
        %v5093 = vunpack.c.h.b16 %v4949
        %v5094 = vunpack.c.l.b16 %v4950
        %v5095 = vunpack.c.h.b16 %v4950
        %v5096 = vunpack.c.l.b16 %v4951
        %v5097 = vunpack.c.h.b16 %v4951
        %v5098 = vunpack.c.l.b16 %v4952
        %v5099 = vunpack.c.h.b16 %v4952
        %v5100 = vunpack.c.l.b16 %v4953
        %v5101 = vunpack.c.h.b16 %v4953
        %v5102 = vunpack.c.l.b16 %v4954
        %v5103 = vunpack.c.h.b16 %v4954
        %v5104 = vunpack.c.l.b16 %v4955
        %v5105 = vunpack.c.h.b16 %v4955
        %v5106 = vunpack.c.l.b16 %v4956
        %v5107 = vunpack.c.h.b16 %v4956
        %v5108 = vunpack.c.l.b16 %v4957
        %v5109 = vunpack.c.h.b16 %v4957
        %v5110 = vunpack.c.l.b16 %v4958
        %v5111 = vunpack.c.h.b16 %v4958
        %v5112 = vunpack.c.l.b16 %v4959
        %v5113 = vunpack.c.h.b16 %v4959
        %v5114 = vunpack.c.l.b16 %v4960
        %v5115 = vunpack.c.h.b16 %v4960
        %v5116 = vunpack.c.l.b16 %v4961
        %v5117 = vunpack.c.h.b16 %v4961
        %v5118 = vunpack.c.l.b16 %v4962
        %v5119 = vunpack.c.h.b16 %v4962
        %v5120 = vunpack.c.l.b16 %v4963
        %v5121 = vunpack.c.h.b16 %v4963
        %v5122 = vunpack.c.l.b16 %v4964
        %v5123 = vunpack.c.h.b16 %v4964
        %v5124 = vunpack.c.l.b16 %v4965
        %v5125 = vunpack.c.h.b16 %v4965
        %v5126 = vunpack.c.l.b16 %v4966
        %v5127 = vunpack.c.h.b16 %v4966
        %v5128 = vunpack.c.l.b16 %v4967
        %v5129 = vunpack.c.h.b16 %v4967
        %v5130 = vunpack.c.l.b16 %v4968
        %v5131 = vunpack.c.h.b16 %v4968
        %v5132 = vunpack.c.l.b16 %v4969
        %v5133 = vunpack.c.h.b16 %v4969
        %v5134 = vunpack.c.l.b16 %v4970
        %v5135 = vunpack.c.h.b16 %v4970
        %v5136 = vpack.c.b16 %v5090, %v5088
        %v5137 = vpack.c.b16 %v5091, %v5089
        %v5138 = vpack.c.b16 %v5094, %v5092
        %v5139 = vpack.c.b16 %v5095, %v5093
        %v5140 = vpack.c.b16 %v5098, %v5096
        %v5141 = vpack.c.b16 %v5099, %v5097
        %v5142 = vpack.c.b16 %v5102, %v5100
        %v5143 = vpack.c.b16 %v5103, %v5101
        %v5144 = vpack.c.b16 %v5106, %v5104
        %v5145 = vpack.c.b16 %v5107, %v5105
        %v5146 = vpack.c.b16 %v5110, %v5108
        %v5147 = vpack.c.b16 %v5111, %v5109
        %v5148 = vpack.c.b16 %v5114, %v5112
        %v5149 = vpack.c.b16 %v5115, %v5113
        %v5150 = vpack.c.b16 %v5118, %v5116
        %v5151 = vpack.c.b16 %v5119, %v5117
        %v5152 = vpack.c.b16 %v5122, %v5120
        %v5153 = vpack.c.b16 %v5123, %v5121
        %v5154 = vpack.c.b16 %v5126, %v5124
        %v5155 = vpack.c.b16 %v5127, %v5125
        %v5156 = vpack.c.b16 %v5130, %v5128
        %v5157 = vpack.c.b16 %v5131, %v5129
        %v5158 = vpack.c.b16 %v5134, %v5132
        %v5159 = vpack.c.b16 %v5135, %v5133
        %v5185 = vsel %vm4827, %v5005, 0
        %v5188 = vsel %vm4827, %v5023, 0
        %v5191 = vsel %vm4827, %v5041, 0
        %v5194 = vsel %vm4827, %v5059, 0
        %5196 = vmatpush.bf16.msra.mxu0 %v5150
        %5197 = vmatpush.bf16.msra.mxu0 %v5148
        %5198 = vmatpush.bf16.msra.mxu0 %v5146
        %5199 = vmatpush.bf16.msra.mxu0 %v5144
        %5200 = vmatpush.bf16.msra.mxu0 %v5142
        %5201 = vmatpush.bf16.msra.mxu0 %v5140
        %5202 = vmatpush.bf16.msra.mxu0 %v5138
        %5203 = vmatpush.bf16.msra.mxu0 %v5136
        %5204 = vmatmul.bf16.gmra.mxu0 %v4988
        %v5205 = vpop.f32.mrf.mxu0
        %v5206 = vadd.f32 0.0, %v5205
        %v5207 = vpop.f32.mrf.mxu0
        %v5208 = vadd.f32 0.0, %v5207
        %5209 = vmatmul.bf16.gmra.mxu0 %v5014
        %v5210 = vpop.f32.mrf.mxu0
        %v5211 = vadd.f32 0.0, %v5210
        %v5212 = vpop.f32.mrf.mxu0
        %v5213 = vadd.f32 0.0, %v5212
        %5214 = vmatmul.bf16.gmra.mxu0 %v5032
        %v5215 = vpop.f32.mrf.mxu0
        %v5216 = vadd.f32 0.0, %v5215
        %v5217 = vpop.f32.mrf.mxu0
        %v5218 = vadd.f32 0.0, %v5217
        %5219 = vmatmul.bf16.gmra.mxu0 %v5050
        %v5220 = vpop.f32.mrf.mxu0
        %v5221 = vadd.f32 0.0, %v5220
        %v5222 = vpop.f32.mrf.mxu0
        %v5223 = vadd.f32 0.0, %v5222
        %5224 = vdwg.mxu0
        %5225 = vmatpush.bf16.msra.mxu0 0
        %5226 = vmatpush.bf16.msra.mxu0 0
        %5227 = vmatpush.bf16.msra.mxu0 0
        %5228 = vmatpush.bf16.msra.mxu0 0
        %5229 = vmatpush.bf16.msra.mxu0 %v5158
        %5230 = vmatpush.bf16.msra.mxu0 %v5156
        %5231 = vmatpush.bf16.msra.mxu0 %v5154
        %5232 = vmatpush.bf16.msra.mxu0 %v5152
        %5233 = vmatmul.bf16.gmra.mxu0 %v5185
        %v5234 = vpop.f32.mrf.mxu0
        %v5235 = vadd.f32 %v5206, %v5234
        %v5236 = vpop.f32.mrf.mxu0
        %v5237 = vadd.f32 %v5208, %v5236
        %5238 = vmatmul.bf16.gmra.mxu0 %v5188
        %v5239 = vpop.f32.mrf.mxu0
        %v5240 = vadd.f32 %v5211, %v5239
        %v5241 = vpop.f32.mrf.mxu0
        %v5242 = vadd.f32 %v5213, %v5241
        %5243 = vmatmul.bf16.gmra.mxu0 %v5191
        %v5244 = vpop.f32.mrf.mxu0
        %v5245 = vadd.f32 %v5216, %v5244
        %v5246 = vpop.f32.mrf.mxu0
        %v5247 = vadd.f32 %v5218, %v5246
        %5248 = vmatmul.bf16.gmra.mxu0 %v5194
        %v5249 = vpop.f32.mrf.mxu0
        %v5250 = vadd.f32 %v5221, %v5249
        %v5251 = vpop.f32.mrf.mxu0
        %v5252 = vadd.f32 %v5223, %v5251
        %5253 = vdwg.mxu0
        %5254 = vmatpush.bf16.msra.mxu0 %v5151
        %5255 = vmatpush.bf16.msra.mxu0 %v5149
        %5256 = vmatpush.bf16.msra.mxu0 %v5147
        %5257 = vmatpush.bf16.msra.mxu0 %v5145
        %5258 = vmatpush.bf16.msra.mxu0 %v5143
        %5259 = vmatpush.bf16.msra.mxu0 %v5141
        %5260 = vmatpush.bf16.msra.mxu0 %v5139
        %5261 = vmatpush.bf16.msra.mxu0 %v5137
        %5262 = vmatmul.bf16.gmra.mxu0 %v4988
        %v5263 = vpop.f32.mrf.mxu0
        %v5264 = vadd.f32 0.0, %v5263
        %v5265 = vpop.f32.mrf.mxu0
        %v5266 = vadd.f32 0.0, %v5265
        %5267 = vmatmul.bf16.gmra.mxu0 %v5014
        %v5268 = vpop.f32.mrf.mxu0
        %v5269 = vadd.f32 0.0, %v5268
        %v5270 = vpop.f32.mrf.mxu0
        %v5271 = vadd.f32 0.0, %v5270
        %5272 = vmatmul.bf16.gmra.mxu0 %v5032
        %v5273 = vpop.f32.mrf.mxu0
        %v5274 = vadd.f32 0.0, %v5273
        %v5275 = vpop.f32.mrf.mxu0
        %v5276 = vadd.f32 0.0, %v5275
        %5277 = vmatmul.bf16.gmra.mxu0 %v5050
        %v5278 = vpop.f32.mrf.mxu0
        %v5279 = vadd.f32 0.0, %v5278
        %v5280 = vpop.f32.mrf.mxu0
        %v5281 = vadd.f32 0.0, %v5280
        %5282 = vdwg.mxu0
        %5283 = vmatpush.bf16.msra.mxu0 0
        %5284 = vmatpush.bf16.msra.mxu0 0
        %5285 = vmatpush.bf16.msra.mxu0 0
        %5286 = vmatpush.bf16.msra.mxu0 0
        %5287 = vmatpush.bf16.msra.mxu0 %v5159
        %5288 = vmatpush.bf16.msra.mxu0 %v5157
        %5289 = vmatpush.bf16.msra.mxu0 %v5155
        %5290 = vmatpush.bf16.msra.mxu0 %v5153
        %5291 = vmatmul.bf16.gmra.mxu0 %v5185
        %v5292 = vpop.f32.mrf.mxu0
        %v5293 = vadd.f32 %v5264, %v5292
        %v5294 = vpop.f32.mrf.mxu0
        %v5295 = vadd.f32 %v5266, %v5294
        %5296 = vmatmul.bf16.gmra.mxu0 %v5188
        %v5297 = vpop.f32.mrf.mxu0
        %v5298 = vadd.f32 %v5269, %v5297
        %v5299 = vpop.f32.mrf.mxu0
        %v5300 = vadd.f32 %v5271, %v5299
        %5301 = vmatmul.bf16.gmra.mxu0 %v5191
        %v5302 = vpop.f32.mrf.mxu0
        %v5303 = vadd.f32 %v5274, %v5302
        %v5304 = vpop.f32.mrf.mxu0
        %v5305 = vadd.f32 %v5276, %v5304
        %5306 = vmatmul.bf16.gmra.mxu0 %v5194
        %v5307 = vpop.f32.mrf.mxu0
        %v5308 = vadd.f32 %v5279, %v5307
        %v5309 = vpop.f32.mrf.mxu0
        %v5310 = vadd.f32 %v5281, %v5309
        %5311 = vdwg.mxu0
        %v5312 = vpack.c.bf16 %v4806, %v4803
        %v5313 = vpack.c.bf16 %v4807, %v4804
        %v5314 = vpack.c.bf16 %v4812, %v4809
        %v5315 = vpack.c.bf16 %v4813, %v4810
        %v5316 = vpack.c.bf16 %v4818, %v4815
        %v5317 = vpack.c.bf16 %v4819, %v4816
        %v5318 = vpack.c.bf16 %v4824, %v4821
        %v5319 = vpack.c.bf16 %v4825, %v4822
        %s5320 = scalar_lea.vmem %s3, 192
        %v5321 = vld [vmem:[%s5320] sm:$0xff]
        %v5322 = vld [vmem:[%s5320 + $0x8] sm:$0xff]
        %v5323 = vld [vmem:[%s5320 + $0x10] sm:$0xff]
        %v5324 = vld [vmem:[%s5320 + $0x18] sm:$0xff]
        %v5325 = vld [vmem:[%s5320 + $0x20] sm:$0xff]
        %v5326 = vld [vmem:[%s5320 + $0x28] sm:$0xff]
        %v5327 = vld [vmem:[%s5320 + $0x30] sm:$0xff]
        %v5328 = vld [vmem:[%s5320 + $0x38] sm:$0xff]
        %v5329 = vld [vmem:[%s5320 + $0x40] sm:$0xff]
        %v5330 = vld [vmem:[%s5320 + $0x48] sm:$0xff]
        %v5331 = vld [vmem:[%s5320 + $0x50] sm:$0xff]
        %v5332 = vld [vmem:[%s5320 + $0x58] sm:$0xff]
        %v5333 = vld [vmem:[%s5320 + $0x60] sm:$0xff]
        %v5334 = vld [vmem:[%s5320 + $0x68] sm:$0xff]
        %v5335 = vld [vmem:[%s5320 + $0x70] sm:$0xff]
        %v5336 = vld [vmem:[%s5320 + $0x78] sm:$0xff]
        %v5337 = vld [vmem:[%s5320 + $0x80] sm:$0xff]
        %v5338 = vld [vmem:[%s5320 + $0x88] sm:$0xff]
        %v5339 = vld [vmem:[%s5320 + $0x90] sm:$0xff]
        %v5340 = vld [vmem:[%s5320 + $0x98] sm:$0xff]
        %v5341 = vld [vmem:[%s5320 + $0xa0] sm:$0xff]
        %v5342 = vld [vmem:[%s5320 + $0xa8] sm:$0xff]
        %v5343 = vld [vmem:[%s5320 + $0xb0] sm:$0xff]
        %v5344 = vld [vmem:[%s5320 + $0xb8] sm:$0xff]
        %5353 = vrot.lane.b32.xlu0 %v5312, 64
        %v5354 = vpop.permute.xlu0 %5353
        %5355 = vrot.lane.b32.xlu0 %v5313, 64
        %v5356 = vpop.permute.xlu0 %5355
        %5357 = vrot.lane.b32.xlu0 %v5314, 64
        %v5358 = vpop.permute.xlu0 %5357
        %5359 = vrot.lane.b32.xlu0 %v5315, 64
        %v5360 = vpop.permute.xlu0 %5359
        %5361 = vrot.lane.b32.xlu0 %v5316, 64
        %v5362 = vpop.permute.xlu0 %5361
        %5363 = vrot.lane.b32.xlu0 %v5317, 64
        %v5364 = vpop.permute.xlu0 %5363
        %5365 = vrot.lane.b32.xlu0 %v5318, 64
        %v5366 = vpop.permute.xlu0 %5365
        %5367 = vrot.lane.b32.xlu0 %v5319, 64
        %v5368 = vpop.permute.xlu0 %5367
        %vm5369 = vcmask 523264
        %v5370 = vsel %vm5369, %v5354, %v5356
        %v5371 = vsel %vm5369, %v5358, %v5360
        %v5372 = vsel %vm5369, %v5362, %v5364
        %v5373 = vsel %vm5369, %v5366, %v5368
        %v5402 = vunpack.c.l.b16 %v5321
        %v5403 = vunpack.c.h.b16 %v5321
        %v5404 = vunpack.c.l.b16 %v5322
        %v5405 = vunpack.c.h.b16 %v5322
        %v5406 = vunpack.c.l.b16 %v5323
        %v5407 = vunpack.c.h.b16 %v5323
        %v5408 = vunpack.c.l.b16 %v5324
        %v5409 = vunpack.c.h.b16 %v5324
        %v5410 = vunpack.c.l.b16 %v5325
        %v5411 = vunpack.c.h.b16 %v5325
        %v5412 = vunpack.c.l.b16 %v5326
        %v5413 = vunpack.c.h.b16 %v5326
        %v5414 = vunpack.c.l.b16 %v5327
        %v5415 = vunpack.c.h.b16 %v5327
        %v5416 = vunpack.c.l.b16 %v5328
        %v5417 = vunpack.c.h.b16 %v5328
        %v5418 = vunpack.c.l.b16 %v5329
        %v5419 = vunpack.c.h.b16 %v5329
        %v5420 = vunpack.c.l.b16 %v5330
        %v5421 = vunpack.c.h.b16 %v5330
        %v5422 = vunpack.c.l.b16 %v5331
        %v5423 = vunpack.c.h.b16 %v5331
        %v5424 = vunpack.c.l.b16 %v5332
        %v5425 = vunpack.c.h.b16 %v5332
        %v5426 = vunpack.c.l.b16 %v5333
        %v5427 = vunpack.c.h.b16 %v5333
        %v5428 = vunpack.c.l.b16 %v5334
        %v5429 = vunpack.c.h.b16 %v5334
        %v5430 = vunpack.c.l.b16 %v5335
        %v5431 = vunpack.c.h.b16 %v5335
        %v5432 = vunpack.c.l.b16 %v5336
        %v5433 = vunpack.c.h.b16 %v5336
        %v5434 = vunpack.c.l.b16 %v5337
        %v5435 = vunpack.c.h.b16 %v5337
        %v5436 = vunpack.c.l.b16 %v5338
        %v5437 = vunpack.c.h.b16 %v5338
        %v5438 = vunpack.c.l.b16 %v5339
        %v5439 = vunpack.c.h.b16 %v5339
        %v5440 = vunpack.c.l.b16 %v5340
        %v5441 = vunpack.c.h.b16 %v5340
        %v5442 = vunpack.c.l.b16 %v5341
        %v5443 = vunpack.c.h.b16 %v5341
        %v5444 = vunpack.c.l.b16 %v5342
        %v5445 = vunpack.c.h.b16 %v5342
        %v5446 = vunpack.c.l.b16 %v5343
        %v5447 = vunpack.c.h.b16 %v5343
        %v5448 = vunpack.c.l.b16 %v5344
        %v5449 = vunpack.c.h.b16 %v5344
        %v5450 = vpack.c.b16 %v5404, %v5402
        %v5451 = vpack.c.b16 %v5405, %v5403
        %v5452 = vpack.c.b16 %v5408, %v5406
        %v5453 = vpack.c.b16 %v5409, %v5407
        %v5454 = vpack.c.b16 %v5412, %v5410
        %v5455 = vpack.c.b16 %v5413, %v5411
        %v5456 = vpack.c.b16 %v5416, %v5414
        %v5457 = vpack.c.b16 %v5417, %v5415
        %v5458 = vpack.c.b16 %v5420, %v5418
        %v5459 = vpack.c.b16 %v5421, %v5419
        %v5460 = vpack.c.b16 %v5424, %v5422
        %v5461 = vpack.c.b16 %v5425, %v5423
        %v5462 = vpack.c.b16 %v5428, %v5426
        %v5463 = vpack.c.b16 %v5429, %v5427
        %v5464 = vpack.c.b16 %v5432, %v5430
        %v5465 = vpack.c.b16 %v5433, %v5431
        %v5466 = vpack.c.b16 %v5436, %v5434
        %v5467 = vpack.c.b16 %v5437, %v5435
        %v5468 = vpack.c.b16 %v5440, %v5438
        %v5469 = vpack.c.b16 %v5441, %v5439
        %v5470 = vpack.c.b16 %v5444, %v5442
        %v5471 = vpack.c.b16 %v5445, %v5443
        %v5472 = vpack.c.b16 %v5448, %v5446
        %v5473 = vpack.c.b16 %v5449, %v5447
        %v5499 = vsel %vm4827, %v5356, 0
        %v5502 = vsel %vm4827, %v5360, 0
        %v5505 = vsel %vm4827, %v5364, 0
        %v5508 = vsel %vm4827, %v5368, 0
        %5510 = vmatpush.bf16.msra.mxu0 %v5464
        %5511 = vmatpush.bf16.msra.mxu0 %v5462
        %5512 = vmatpush.bf16.msra.mxu0 %v5460
        %5513 = vmatpush.bf16.msra.mxu0 %v5458
        %5514 = vmatpush.bf16.msra.mxu0 %v5456
        %5515 = vmatpush.bf16.msra.mxu0 %v5454
        %5516 = vmatpush.bf16.msra.mxu0 %v5452
        %5517 = vmatpush.bf16.msra.mxu0 %v5450
        %5518 = vmatmul.bf16.gmra.mxu0 %v5370
        %v5519 = vpop.f32.mrf.mxu0
        %v5520 = vadd.f32 0.0, %v5519
        %v5521 = vpop.f32.mrf.mxu0
        %v5522 = vadd.f32 0.0, %v5521
        %5523 = vmatmul.bf16.gmra.mxu0 %v5371
        %v5524 = vpop.f32.mrf.mxu0
        %v5525 = vadd.f32 0.0, %v5524
        %v5526 = vpop.f32.mrf.mxu0
        %v5527 = vadd.f32 0.0, %v5526
        %5528 = vmatmul.bf16.gmra.mxu0 %v5372
        %v5529 = vpop.f32.mrf.mxu0
        %v5530 = vadd.f32 0.0, %v5529
        %v5531 = vpop.f32.mrf.mxu0
        %v5532 = vadd.f32 0.0, %v5531
        %5533 = vmatmul.bf16.gmra.mxu0 %v5373
        %v5534 = vpop.f32.mrf.mxu0
        %v5535 = vadd.f32 0.0, %v5534
        %v5536 = vpop.f32.mrf.mxu0
        %v5537 = vadd.f32 0.0, %v5536
        %5538 = vdwg.mxu0
        %5539 = vmatpush.bf16.msra.mxu0 0
        %5540 = vmatpush.bf16.msra.mxu0 0
        %5541 = vmatpush.bf16.msra.mxu0 0
        %5542 = vmatpush.bf16.msra.mxu0 0
        %5543 = vmatpush.bf16.msra.mxu0 %v5472
        %5544 = vmatpush.bf16.msra.mxu0 %v5470
        %5545 = vmatpush.bf16.msra.mxu0 %v5468
        %5546 = vmatpush.bf16.msra.mxu0 %v5466
        %5547 = vmatmul.bf16.gmra.mxu0 %v5499
        %v5548 = vpop.f32.mrf.mxu0
        %v5549 = vadd.f32 %v5520, %v5548
        %v5550 = vpop.f32.mrf.mxu0
        %v5551 = vadd.f32 %v5522, %v5550
        %5552 = vmatmul.bf16.gmra.mxu0 %v5502
        %v5553 = vpop.f32.mrf.mxu0
        %v5554 = vadd.f32 %v5525, %v5553
        %v5555 = vpop.f32.mrf.mxu0
        %v5556 = vadd.f32 %v5527, %v5555
        %5557 = vmatmul.bf16.gmra.mxu0 %v5505
        %v5558 = vpop.f32.mrf.mxu0
        %v5559 = vadd.f32 %v5530, %v5558
        %v5560 = vpop.f32.mrf.mxu0
        %v5561 = vadd.f32 %v5532, %v5560
        %5562 = vmatmul.bf16.gmra.mxu0 %v5508
        %v5563 = vpop.f32.mrf.mxu0
        %v5564 = vadd.f32 %v5535, %v5563
        %v5565 = vpop.f32.mrf.mxu0
        %v5566 = vadd.f32 %v5537, %v5565
        %5567 = vdwg.mxu0
        %5568 = vmatpush.bf16.msra.mxu0 %v5465
        %5569 = vmatpush.bf16.msra.mxu0 %v5463
        %5570 = vmatpush.bf16.msra.mxu0 %v5461
        %5571 = vmatpush.bf16.msra.mxu0 %v5459
        %5572 = vmatpush.bf16.msra.mxu0 %v5457
        %5573 = vmatpush.bf16.msra.mxu0 %v5455
        %5574 = vmatpush.bf16.msra.mxu0 %v5453
        %5575 = vmatpush.bf16.msra.mxu0 %v5451
        %5576 = vmatmul.bf16.gmra.mxu0 %v5370
        %v5577 = vpop.f32.mrf.mxu0
        %v5578 = vadd.f32 0.0, %v5577
        %v5579 = vpop.f32.mrf.mxu0
        %v5580 = vadd.f32 0.0, %v5579
        %5581 = vmatmul.bf16.gmra.mxu0 %v5371
        %v5582 = vpop.f32.mrf.mxu0
        %v5583 = vadd.f32 0.0, %v5582
        %v5584 = vpop.f32.mrf.mxu0
        %v5585 = vadd.f32 0.0, %v5584
        %5586 = vmatmul.bf16.gmra.mxu0 %v5372
        %v5587 = vpop.f32.mrf.mxu0
        %v5588 = vadd.f32 0.0, %v5587
        %v5589 = vpop.f32.mrf.mxu0
        %v5590 = vadd.f32 0.0, %v5589
        %5591 = vmatmul.bf16.gmra.mxu0 %v5373
        %v5592 = vpop.f32.mrf.mxu0
        %v5593 = vadd.f32 0.0, %v5592
        %v5594 = vpop.f32.mrf.mxu0
        %v5595 = vadd.f32 0.0, %v5594
        %5596 = vdwg.mxu0
        %5597 = vmatpush.bf16.msra.mxu0 0
        %5598 = vmatpush.bf16.msra.mxu0 0
        %5599 = vmatpush.bf16.msra.mxu0 0
        %5600 = vmatpush.bf16.msra.mxu0 0
        %5601 = vmatpush.bf16.msra.mxu0 %v5473
        %5602 = vmatpush.bf16.msra.mxu0 %v5471
        %5603 = vmatpush.bf16.msra.mxu0 %v5469
        %5604 = vmatpush.bf16.msra.mxu0 %v5467
        %5605 = vmatmul.bf16.gmra.mxu0 %v5499
        %v5606 = vpop.f32.mrf.mxu0
        %v5607 = vadd.f32 %v5578, %v5606
        %v5608 = vpop.f32.mrf.mxu0
        %v5609 = vadd.f32 %v5580, %v5608
        %5610 = vmatmul.bf16.gmra.mxu0 %v5502
        %v5611 = vpop.f32.mrf.mxu0
        %v5612 = vadd.f32 %v5583, %v5611
        %v5613 = vpop.f32.mrf.mxu0
        %v5614 = vadd.f32 %v5585, %v5613
        %5615 = vmatmul.bf16.gmra.mxu0 %v5505
        %v5616 = vpop.f32.mrf.mxu0
        %v5617 = vadd.f32 %v5588, %v5616
        %v5618 = vpop.f32.mrf.mxu0
        %v5619 = vadd.f32 %v5590, %v5618
        %5620 = vmatmul.bf16.gmra.mxu0 %v5508
        %v5621 = vpop.f32.mrf.mxu0
        %v5622 = vadd.f32 %v5593, %v5621
        %v5623 = vpop.f32.mrf.mxu0
        %v5624 = vadd.f32 %v5595, %v5623
        %5625 = vdwg.mxu0
        %v5626 = vld [vmem:[#allocation2 + $0x10] sm:$0xfe]
        %v5627 = vld [vmem:[#allocation2 + $0x18] sm:$0xfe]
        %v5628 = vld [vmem:[#allocation2 + $0x20] sm:$0xff]
        %v5629 = vld [vmem:[#allocation2 + $0x28] sm:$0xff]
        %v5630 = vld [vmem:[#allocation2 + $0x30] sm:$0xff]
        %v5631 = vld [vmem:[#allocation2 + $0x38] sm:$0xff]
        %v5632 = vld [vmem:[#allocation2 + $0x40] sm:$0xff]
        %v5633 = vld [vmem:[#allocation2 + $0x48] sm:$0xff]
        %v5634 = vld [vmem:[#allocation2 + $0x50] sm:$0xff]
        %v5635 = vld [vmem:[#allocation2 + $0x58] sm:$0xff]
        %v5636 = vld [vmem:[#allocation2 + $0x60] sm:$0xff]
        %v5637 = vld [vmem:[#allocation2 + $0x68] sm:$0xff]
        %v5638 = vld [vmem:[#allocation2 + $0x70] sm:$0xff]
        %v5639 = vld [vmem:[#allocation2 + $0x78] sm:$0xff]
        %v5640 = vld [vmem:[#allocation2 + $0x80] sm:$0xff]
        %v5641 = vld [vmem:[#allocation2 + $0x88] sm:$0xff]
        %v5642 = vld [vmem:[#allocation2 + $0x90] sm:$0x1]
        %v5643 = vld [vmem:[#allocation2 + $0x98] sm:$0x1]
        %v5644 = vpack.c.bf16 %v5628, %v5626
        %v5645 = vpack.c.bf16 %v5629, %v5627
        %v5646 = vpack.c.bf16 %v5632, %v5630
        %v5647 = vpack.c.bf16 %v5633, %v5631
        %v5648 = vpack.c.bf16 %v5636, %v5634
        %v5649 = vpack.c.bf16 %v5637, %v5635
        %v5650 = vpack.c.bf16 %v5640, %v5638
        %v5651 = vpack.c.bf16 %v5641, %v5639
        %v5652 = vpack.c.bf16 %v5642, %v5642
        %v5653 = vpack.c.bf16 %v5643, %v5643
        %s5654 = scalar_lea.vmem %s3, 384
        %v5655 = vld [vmem:[%s5654] sm:$0xff]
        %v5656 = vld [vmem:[%s5654 + $0x8] sm:$0xff]
        %v5657 = vld [vmem:[%s5654 + $0x10] sm:$0xff]
        %v5658 = vld [vmem:[%s5654 + $0x18] sm:$0xff]
        %v5659 = vld [vmem:[%s5654 + $0x20] sm:$0xff]
        %v5660 = vld [vmem:[%s5654 + $0x28] sm:$0xff]
        %v5661 = vld [vmem:[%s5654 + $0x30] sm:$0xff]
        %v5662 = vld [vmem:[%s5654 + $0x38] sm:$0xff]
        %v5663 = vld [vmem:[%s5654 + $0x40] sm:$0xff]
        %v5664 = vld [vmem:[%s5654 + $0x48] sm:$0xff]
        %v5665 = vld [vmem:[%s5654 + $0x50] sm:$0xff]
        %v5666 = vld [vmem:[%s5654 + $0x58] sm:$0xff]
        %v5667 = vld [vmem:[%s5654 + $0x60] sm:$0xff]
        %v5668 = vld [vmem:[%s5654 + $0x68] sm:$0xff]
        %v5669 = vld [vmem:[%s5654 + $0x70] sm:$0xff]
        %v5670 = vld [vmem:[%s5654 + $0x78] sm:$0xff]
        %v5671 = vld [vmem:[%s5654 + $0x80] sm:$0xff]
        %v5672 = vld [vmem:[%s5654 + $0x88] sm:$0xff]
        %v5673 = vld [vmem:[%s5654 + $0x90] sm:$0xff]
        %v5674 = vld [vmem:[%s5654 + $0x98] sm:$0xff]
        %v5675 = vld [vmem:[%s5654 + $0xa0] sm:$0xff]
        %v5676 = vld [vmem:[%s5654 + $0xa8] sm:$0xff]
        %v5677 = vld [vmem:[%s5654 + $0xb0] sm:$0xff]
        %v5678 = vld [vmem:[%s5654 + $0xb8] sm:$0xff]
        %vm5679 = vsmask.f32 7424
        %v5681 = vshrl.u32 %v5644, 16
        %v5683 = vshll.u32 %v5644, 16
        %v5685 = vrot.slane %v5683, 1
        %v5686 = vor.u32 %v5681, %v5685
        %v5688 = vshll.u32 %v5646, 16
        %v5690 = vrot.slane %v5688, 1
        %v5691 = vsel %vm5679, %v5686, %v5690
        %v5693 = vshrl.u32 %v5645, 16
        %v5695 = vshll.u32 %v5645, 16
        %v5697 = vrot.slane %v5695, 1
        %v5698 = vor.u32 %v5693, %v5697
        %v5700 = vshll.u32 %v5647, 16
        %v5702 = vrot.slane %v5700, 1
        %v5703 = vsel %vm5679, %v5698, %v5702
        %v5704 = vshrl.u32 %v5646, 16
        %v5706 = vor.u32 %v5704, %v5690
        %v5708 = vshll.u32 %v5648, 16
        %v5710 = vrot.slane %v5708, 1
        %v5711 = vsel %vm5679, %v5706, %v5710
        %v5712 = vshrl.u32 %v5647, 16
        %v5714 = vor.u32 %v5712, %v5702
        %v5716 = vshll.u32 %v5649, 16
        %v5718 = vrot.slane %v5716, 1
        %v5719 = vsel %vm5679, %v5714, %v5718
        %v5720 = vshrl.u32 %v5648, 16
        %v5722 = vor.u32 %v5720, %v5710
        %v5724 = vshll.u32 %v5650, 16
        %v5726 = vrot.slane %v5724, 1
        %v5727 = vsel %vm5679, %v5722, %v5726
        %v5728 = vshrl.u32 %v5649, 16
        %v5730 = vor.u32 %v5728, %v5718
        %v5732 = vshll.u32 %v5651, 16
        %v5734 = vrot.slane %v5732, 1
        %v5735 = vsel %vm5679, %v5730, %v5734
        %v5736 = vshrl.u32 %v5650, 16
        %v5738 = vor.u32 %v5736, %v5726
        %v5740 = vshll.u32 %v5652, 16
        %v5742 = vrot.slane %v5740, 1
        %v5743 = vsel %vm5679, %v5738, %v5742
        %v5744 = vshrl.u32 %v5651, 16
        %v5746 = vor.u32 %v5744, %v5734
        %v5748 = vshll.u32 %v5653, 16
        %v5750 = vrot.slane %v5748, 1
        %v5751 = vsel %vm5679, %v5746, %v5750
        %v5780 = vunpack.c.l.b16 %v5655
        %v5781 = vunpack.c.h.b16 %v5655
        %v5782 = vunpack.c.l.b16 %v5656
        %v5783 = vunpack.c.h.b16 %v5656
        %v5784 = vunpack.c.l.b16 %v5657
        %v5785 = vunpack.c.h.b16 %v5657
        %v5786 = vunpack.c.l.b16 %v5658
        %v5787 = vunpack.c.h.b16 %v5658
        %v5788 = vunpack.c.l.b16 %v5659
        %v5789 = vunpack.c.h.b16 %v5659
        %v5790 = vunpack.c.l.b16 %v5660
        %v5791 = vunpack.c.h.b16 %v5660
        %v5792 = vunpack.c.l.b16 %v5661
        %v5793 = vunpack.c.h.b16 %v5661
        %v5794 = vunpack.c.l.b16 %v5662
        %v5795 = vunpack.c.h.b16 %v5662
        %v5796 = vunpack.c.l.b16 %v5663
        %v5797 = vunpack.c.h.b16 %v5663
        %v5798 = vunpack.c.l.b16 %v5664
        %v5799 = vunpack.c.h.b16 %v5664
        %v5800 = vunpack.c.l.b16 %v5665
        %v5801 = vunpack.c.h.b16 %v5665
        %v5802 = vunpack.c.l.b16 %v5666
        %v5803 = vunpack.c.h.b16 %v5666
        %v5804 = vunpack.c.l.b16 %v5667
        %v5805 = vunpack.c.h.b16 %v5667
        %v5806 = vunpack.c.l.b16 %v5668
        %v5807 = vunpack.c.h.b16 %v5668
        %v5808 = vunpack.c.l.b16 %v5669
        %v5809 = vunpack.c.h.b16 %v5669
        %v5810 = vunpack.c.l.b16 %v5670
        %v5811 = vunpack.c.h.b16 %v5670
        %v5812 = vunpack.c.l.b16 %v5671
        %v5813 = vunpack.c.h.b16 %v5671
        %v5814 = vunpack.c.l.b16 %v5672
        %v5815 = vunpack.c.h.b16 %v5672
        %v5816 = vunpack.c.l.b16 %v5673
        %v5817 = vunpack.c.h.b16 %v5673
        %v5818 = vunpack.c.l.b16 %v5674
        %v5819 = vunpack.c.h.b16 %v5674
        %v5820 = vunpack.c.l.b16 %v5675
        %v5821 = vunpack.c.h.b16 %v5675
        %v5822 = vunpack.c.l.b16 %v5676
        %v5823 = vunpack.c.h.b16 %v5676
        %v5824 = vunpack.c.l.b16 %v5677
        %v5825 = vunpack.c.h.b16 %v5677
        %v5826 = vunpack.c.l.b16 %v5678
        %v5827 = vunpack.c.h.b16 %v5678
        %v5828 = vpack.c.b16 %v5782, %v5780
        %v5829 = vpack.c.b16 %v5783, %v5781
        %v5830 = vpack.c.b16 %v5786, %v5784
        %v5831 = vpack.c.b16 %v5787, %v5785
        %v5832 = vpack.c.b16 %v5790, %v5788
        %v5833 = vpack.c.b16 %v5791, %v5789
        %v5834 = vpack.c.b16 %v5794, %v5792
        %v5835 = vpack.c.b16 %v5795, %v5793
        %v5836 = vpack.c.b16 %v5798, %v5796
        %v5837 = vpack.c.b16 %v5799, %v5797
        %v5838 = vpack.c.b16 %v5802, %v5800
        %v5839 = vpack.c.b16 %v5803, %v5801
        %v5840 = vpack.c.b16 %v5806, %v5804
        %v5841 = vpack.c.b16 %v5807, %v5805
        %v5842 = vpack.c.b16 %v5810, %v5808
        %v5843 = vpack.c.b16 %v5811, %v5809
        %v5844 = vpack.c.b16 %v5814, %v5812
        %v5845 = vpack.c.b16 %v5815, %v5813
        %v5846 = vpack.c.b16 %v5818, %v5816
        %v5847 = vpack.c.b16 %v5819, %v5817
        %v5848 = vpack.c.b16 %v5822, %v5820
        %v5849 = vpack.c.b16 %v5823, %v5821
        %v5850 = vpack.c.b16 %v5826, %v5824
        %v5851 = vpack.c.b16 %v5827, %v5825
        %v5877 = vsel %vm4827, %v5703, 0
        %v5880 = vsel %vm4827, %v5719, 0
        %v5883 = vsel %vm4827, %v5735, 0
        %v5886 = vsel %vm4827, %v5751, 0
        %5888 = vmatpush.bf16.msra.mxu0 %v5842
        %5889 = vmatpush.bf16.msra.mxu0 %v5840
        %5890 = vmatpush.bf16.msra.mxu0 %v5838
        %5891 = vmatpush.bf16.msra.mxu0 %v5836
        %5892 = vmatpush.bf16.msra.mxu0 %v5834
        %5893 = vmatpush.bf16.msra.mxu0 %v5832
        %5894 = vmatpush.bf16.msra.mxu0 %v5830
        %5895 = vmatpush.bf16.msra.mxu0 %v5828
        %5896 = vmatmul.bf16.gmra.mxu0 %v5691
        %v5897 = vpop.f32.mrf.mxu0
        %v5898 = vadd.f32 0.0, %v5897
        %v5899 = vpop.f32.mrf.mxu0
        %v5900 = vadd.f32 0.0, %v5899
        %5901 = vmatmul.bf16.gmra.mxu0 %v5711
        %v5902 = vpop.f32.mrf.mxu0
        %v5903 = vadd.f32 0.0, %v5902
        %v5904 = vpop.f32.mrf.mxu0
        %v5905 = vadd.f32 0.0, %v5904
        %5906 = vmatmul.bf16.gmra.mxu0 %v5727
        %v5907 = vpop.f32.mrf.mxu0
        %v5908 = vadd.f32 0.0, %v5907
        %v5909 = vpop.f32.mrf.mxu0
        %v5910 = vadd.f32 0.0, %v5909
        %5911 = vmatmul.bf16.gmra.mxu0 %v5743
        %v5912 = vpop.f32.mrf.mxu0
        %v5913 = vadd.f32 0.0, %v5912
        %v5914 = vpop.f32.mrf.mxu0
        %v5915 = vadd.f32 0.0, %v5914
        %5916 = vdwg.mxu0
        %5917 = vmatpush.bf16.msra.mxu0 0
        %5918 = vmatpush.bf16.msra.mxu0 0
        %5919 = vmatpush.bf16.msra.mxu0 0
        %5920 = vmatpush.bf16.msra.mxu0 0
        %5921 = vmatpush.bf16.msra.mxu0 %v5850
        %5922 = vmatpush.bf16.msra.mxu0 %v5848
        %5923 = vmatpush.bf16.msra.mxu0 %v5846
        %5924 = vmatpush.bf16.msra.mxu0 %v5844
        %5925 = vmatmul.bf16.gmra.mxu0 %v5877
        %v5926 = vpop.f32.mrf.mxu0
        %v5927 = vadd.f32 %v5898, %v5926
        %v5928 = vpop.f32.mrf.mxu0
        %v5929 = vadd.f32 %v5900, %v5928
        %5930 = vmatmul.bf16.gmra.mxu0 %v5880
        %v5931 = vpop.f32.mrf.mxu0
        %v5932 = vadd.f32 %v5903, %v5931
        %v5933 = vpop.f32.mrf.mxu0
        %v5934 = vadd.f32 %v5905, %v5933
        %5935 = vmatmul.bf16.gmra.mxu0 %v5883
        %v5936 = vpop.f32.mrf.mxu0
        %v5937 = vadd.f32 %v5908, %v5936
        %v5938 = vpop.f32.mrf.mxu0
        %v5939 = vadd.f32 %v5910, %v5938
        %5940 = vmatmul.bf16.gmra.mxu0 %v5886
        %v5941 = vpop.f32.mrf.mxu0
        %v5942 = vadd.f32 %v5913, %v5941
        %v5943 = vpop.f32.mrf.mxu0
        %v5944 = vadd.f32 %v5915, %v5943
        %5945 = vdwg.mxu0
        %5946 = vmatpush.bf16.msra.mxu0 %v5843
        %5947 = vmatpush.bf16.msra.mxu0 %v5841
        %5948 = vmatpush.bf16.msra.mxu0 %v5839
        %5949 = vmatpush.bf16.msra.mxu0 %v5837
        %5950 = vmatpush.bf16.msra.mxu0 %v5835
        %5951 = vmatpush.bf16.msra.mxu0 %v5833
        %5952 = vmatpush.bf16.msra.mxu0 %v5831
        %5953 = vmatpush.bf16.msra.mxu0 %v5829
        %5954 = vmatmul.bf16.gmra.mxu0 %v5691
        %v5955 = vpop.f32.mrf.mxu0
        %v5956 = vadd.f32 0.0, %v5955
        %v5957 = vpop.f32.mrf.mxu0
        %v5958 = vadd.f32 0.0, %v5957
        %5959 = vmatmul.bf16.gmra.mxu0 %v5711
        %v5960 = vpop.f32.mrf.mxu0
        %v5961 = vadd.f32 0.0, %v5960
        %v5962 = vpop.f32.mrf.mxu0
        %v5963 = vadd.f32 0.0, %v5962
        %5964 = vmatmul.bf16.gmra.mxu0 %v5727
        %v5965 = vpop.f32.mrf.mxu0
        %v5966 = vadd.f32 0.0, %v5965
        %v5967 = vpop.f32.mrf.mxu0
        %v5968 = vadd.f32 0.0, %v5967
        %5969 = vmatmul.bf16.gmra.mxu0 %v5743
        %v5970 = vpop.f32.mrf.mxu0
        %v5971 = vadd.f32 0.0, %v5970
        %v5972 = vpop.f32.mrf.mxu0
        %v5973 = vadd.f32 0.0, %v5972
        %5974 = vdwg.mxu0
        %5975 = vmatpush.bf16.msra.mxu0 0
        %5976 = vmatpush.bf16.msra.mxu0 0
        %5977 = vmatpush.bf16.msra.mxu0 0
        %5978 = vmatpush.bf16.msra.mxu0 0
        %5979 = vmatpush.bf16.msra.mxu0 %v5851
        %5980 = vmatpush.bf16.msra.mxu0 %v5849
        %5981 = vmatpush.bf16.msra.mxu0 %v5847
        %5982 = vmatpush.bf16.msra.mxu0 %v5845
        %5983 = vmatmul.bf16.gmra.mxu0 %v5877
        %v5984 = vpop.f32.mrf.mxu0
        %v5985 = vadd.f32 %v5956, %v5984
        %v5986 = vpop.f32.mrf.mxu0
        %v5987 = vadd.f32 %v5958, %v5986
        %5988 = vmatmul.bf16.gmra.mxu0 %v5880
        %v5989 = vpop.f32.mrf.mxu0
        %v5990 = vadd.f32 %v5961, %v5989
        %v5991 = vpop.f32.mrf.mxu0
        %v5992 = vadd.f32 %v5963, %v5991
        %5993 = vmatmul.bf16.gmra.mxu0 %v5883
        %v5994 = vpop.f32.mrf.mxu0
        %v5995 = vadd.f32 %v5966, %v5994
        %v5996 = vpop.f32.mrf.mxu0
        %v5997 = vadd.f32 %v5968, %v5996
        %5998 = vmatmul.bf16.gmra.mxu0 %v5886
        %v5999 = vpop.f32.mrf.mxu0
        %v6000 = vadd.f32 %v5971, %v5999
        %v6001 = vpop.f32.mrf.mxu0
        %v6002 = vadd.f32 %v5973, %v6001
        %6003 = vdwg.mxu0
        %v6004 = vld [vmem:[%s10] sm:$0xff]
        %v6005 = vld [vmem:[%s10 + $0x8] sm:$0xff]
        %v6006 = vld [vmem:[%s10 + $0x10] sm:$0xff]
        %v6007 = vld [vmem:[%s10 + $0x18] sm:$0xff]
        %v6008 = vld [vmem:[%s10 + $0x20] sm:$0xff]
        %v6009 = vld [vmem:[%s10 + $0x28] sm:$0xff]
        %v6010 = vld [vmem:[%s10 + $0x30] sm:$0xff]
        %v6011 = vld [vmem:[%s10 + $0x38] sm:$0xff]
        %6013 = vset.pattern.permute.xlu0 0
        %6014 = vperm.xlu0 %6013, %v6004
        %v6015 = vpop.permute.xlu0 %6014
        %6018 = vset.pattern.permute.xlu0 0
        %6019 = vperm.xlu0 %6018, %v6005
        %v6020 = vpop.permute.xlu0 %6019
        %6023 = vset.pattern.permute.xlu0 0
        %6024 = vperm.xlu0 %6023, %v6006
        %v6025 = vpop.permute.xlu0 %6024
        %6028 = vset.pattern.permute.xlu0 0
        %6029 = vperm.xlu0 %6028, %v6007
        %v6030 = vpop.permute.xlu0 %6029
        %6033 = vset.pattern.permute.xlu0 0
        %6034 = vperm.xlu0 %6033, %v6008
        %v6035 = vpop.permute.xlu0 %6034
        %6038 = vset.pattern.permute.xlu0 0
        %6039 = vperm.xlu0 %6038, %v6009
        %v6040 = vpop.permute.xlu0 %6039
        %6043 = vset.pattern.permute.xlu0 0
        %6044 = vperm.xlu0 %6043, %v6010
        %v6045 = vpop.permute.xlu0 %6044
        %6048 = vset.pattern.permute.xlu0 0
        %6049 = vperm.xlu0 %6048, %v6011
        %v6050 = vpop.permute.xlu0 %6049
        %v6052 = vmul.f32 %v6015, %v5235
        %v6053 = vmul.f32 %v6015, %v5293
        %v6054 = vmul.f32 %v6020, %v5237
        %v6055 = vmul.f32 %v6020, %v5295
        %v6056 = vmul.f32 %v6025, %v5240
        %v6057 = vmul.f32 %v6025, %v5298
        %v6058 = vmul.f32 %v6030, %v5242
        %v6059 = vmul.f32 %v6030, %v5300
        %v6060 = vmul.f32 %v6035, %v5245
        %v6061 = vmul.f32 %v6035, %v5303
        %v6062 = vmul.f32 %v6040, %v5247
        %v6063 = vmul.f32 %v6040, %v5305
        %v6064 = vmul.f32 %v6045, %v5250
        %v6065 = vmul.f32 %v6045, %v5308
        %v6066 = vmul.f32 %v6050, %v5252
        %v6067 = vmul.f32 %v6050, %v5310
        %v6068 = vadd.f32 %v6052, %v5549
        %v6069 = vadd.f32 %v6053, %v5607
        %v6070 = vadd.f32 %v6054, %v5551
        %v6071 = vadd.f32 %v6055, %v5609
        %v6072 = vadd.f32 %v6056, %v5554
        %v6073 = vadd.f32 %v6057, %v5612
        %v6074 = vadd.f32 %v6058, %v5556
        %v6075 = vadd.f32 %v6059, %v5614
        %v6076 = vadd.f32 %v6060, %v5559
        %v6077 = vadd.f32 %v6061, %v5617
        %v6078 = vadd.f32 %v6062, %v5561
        %v6079 = vadd.f32 %v6063, %v5619
        %v6080 = vadd.f32 %v6064, %v5564
        %v6081 = vadd.f32 %v6065, %v5622
        %v6082 = vadd.f32 %v6066, %v5566
        %v6083 = vadd.f32 %v6067, %v5624
        %v6084 = vld [vmem:[%s11] sm:$0xff]
        %v6085 = vld [vmem:[%s11 + $0x8] sm:$0xff]
        %v6086 = vld [vmem:[%s11 + $0x10] sm:$0xff]
        %v6087 = vld [vmem:[%s11 + $0x18] sm:$0xff]
        %v6088 = vld [vmem:[%s11 + $0x20] sm:$0xff]
        %v6089 = vld [vmem:[%s11 + $0x28] sm:$0xff]
        %v6090 = vld [vmem:[%s11 + $0x30] sm:$0xff]
        %v6091 = vld [vmem:[%s11 + $0x38] sm:$0xff]
        %6093 = vset.pattern.permute.xlu0 0
        %6094 = vperm.xlu0 %6093, %v6084
        %v6095 = vpop.permute.xlu0 %6094
        %6098 = vset.pattern.permute.xlu0 0
        %6099 = vperm.xlu0 %6098, %v6085
        %v6100 = vpop.permute.xlu0 %6099
        %6103 = vset.pattern.permute.xlu0 0
        %6104 = vperm.xlu0 %6103, %v6086
        %v6105 = vpop.permute.xlu0 %6104
        %6108 = vset.pattern.permute.xlu0 0
        %6109 = vperm.xlu0 %6108, %v6087
        %v6110 = vpop.permute.xlu0 %6109
        %6113 = vset.pattern.permute.xlu0 0
        %6114 = vperm.xlu0 %6113, %v6088
        %v6115 = vpop.permute.xlu0 %6114
        %6118 = vset.pattern.permute.xlu0 0
        %6119 = vperm.xlu0 %6118, %v6089
        %v6120 = vpop.permute.xlu0 %6119
        %6123 = vset.pattern.permute.xlu0 0
        %6124 = vperm.xlu0 %6123, %v6090
        %v6125 = vpop.permute.xlu0 %6124
        %6128 = vset.pattern.permute.xlu0 0
        %6129 = vperm.xlu0 %6128, %v6091
        %v6130 = vpop.permute.xlu0 %6129
        %v6132 = vmul.f32 %v6095, %v5927
        %v6133 = vmul.f32 %v6095, %v5985
        %v6134 = vmul.f32 %v6100, %v5929
        %v6135 = vmul.f32 %v6100, %v5987
        %v6136 = vmul.f32 %v6105, %v5932
        %v6137 = vmul.f32 %v6105, %v5990
        %v6138 = vmul.f32 %v6110, %v5934
        %v6139 = vmul.f32 %v6110, %v5992
        %v6140 = vmul.f32 %v6115, %v5937
        %v6141 = vmul.f32 %v6115, %v5995
        %v6142 = vmul.f32 %v6120, %v5939
        %v6143 = vmul.f32 %v6120, %v5997
        %v6144 = vmul.f32 %v6125, %v5942
        %v6145 = vmul.f32 %v6125, %v6000
        %v6146 = vmul.f32 %v6130, %v5944
        %v6147 = vmul.f32 %v6130, %v6002
        %v6148 = vadd.f32 %v6068, %v6132
        %v6149 = vadd.f32 %v6069, %v6133
        %v6150 = vadd.f32 %v6070, %v6134
        %v6151 = vadd.f32 %v6071, %v6135
        %v6152 = vadd.f32 %v6072, %v6136
        %v6153 = vadd.f32 %v6073, %v6137
        %v6154 = vadd.f32 %v6074, %v6138
        %v6155 = vadd.f32 %v6075, %v6139
        %v6156 = vadd.f32 %v6076, %v6140
        %v6157 = vadd.f32 %v6077, %v6141
        %v6158 = vadd.f32 %v6078, %v6142
        %v6159 = vadd.f32 %v6079, %v6143
        %v6160 = vadd.f32 %v6080, %v6144
        %v6161 = vadd.f32 %v6081, %v6145
        %v6162 = vadd.f32 %v6082, %v6146
        %v6163 = vadd.f32 %v6083, %v6147
        %v6164 = vld [vmem:[#allocation9] sm:$0x3]
        %v6166 = vperm.slane %v6164, 0
        %v6167 = vperm.slane %v6164, 1
        %v6170 = vadd.f32 %v6148, %v6166
        %v6171 = vadd.f32 %v6149, %v6167
        %v6172 = vadd.f32 %v6150, %v6166
        %v6173 = vadd.f32 %v6151, %v6167
        %v6174 = vadd.f32 %v6152, %v6166
        %v6175 = vadd.f32 %v6153, %v6167
        %v6176 = vadd.f32 %v6154, %v6166
        %v6177 = vadd.f32 %v6155, %v6167
        %v6178 = vadd.f32 %v6156, %v6166
        %v6179 = vadd.f32 %v6157, %v6167
        %v6180 = vadd.f32 %v6158, %v6166
        %v6181 = vadd.f32 %v6159, %v6167
        %v6182 = vadd.f32 %v6160, %v6166
        %v6183 = vadd.f32 %v6161, %v6167
        %v6184 = vadd.f32 %v6162, %v6166
        %v6185 = vadd.f32 %v6163, %v6167
        %v6186 = vmax.f32 %v6170, 0.0
        %v6187 = vmax.f32 %v6171, 0.0
        %v6188 = vmax.f32 %v6172, 0.0
        %v6189 = vmax.f32 %v6173, 0.0
        %v6190 = vmax.f32 %v6174, 0.0
        %v6191 = vmax.f32 %v6175, 0.0
        %v6192 = vmax.f32 %v6176, 0.0
        %v6193 = vmax.f32 %v6177, 0.0
        %v6194 = vmax.f32 %v6178, 0.0
        %v6195 = vmax.f32 %v6179, 0.0
        %v6196 = vmax.f32 %v6180, 0.0
        %v6197 = vmax.f32 %v6181, 0.0
        %v6198 = vmax.f32 %v6182, 0.0
        %v6199 = vmax.f32 %v6183, 0.0
        %v6200 = vmax.f32 %v6184, 0.0
        %v6201 = vmax.f32 %v6185, 0.0
        %6202 = vst [vmem:[#allocation3] sm:$0xff] 0.0
        %vm6203 = vcmask 785408
        %6204 = vst.msk [vmem:[#allocation3 + $0x8] sm:$0xff] %vm6203, 0.0
        %6205 = vst [vmem:[#allocation3 + $0x90] sm:$0xff] 0.0
        %6206 = vst.msk [vmem:[#allocation3 + $0x98] sm:$0xff] %vm6203, 0.0
        %6207 = vst [vmem:[#allocation3 + $0x10] sm:$0xff] %v6186
        %6208 = vst.msk [vmem:[#allocation3 + $0x18] sm:$0xff] %vm6203, %v6187
        %6209 = vst [vmem:[#allocation3 + $0x20] sm:$0xff] %v6188
        %6210 = vst.msk [vmem:[#allocation3 + $0x28] sm:$0xff] %vm6203, %v6189
        %6211 = vst [vmem:[#allocation3 + $0x30] sm:$0xff] %v6190
        %6212 = vst.msk [vmem:[#allocation3 + $0x38] sm:$0xff] %vm6203, %v6191
        %6213 = vst [vmem:[#allocation3 + $0x40] sm:$0xff] %v6192
        %6214 = vst.msk [vmem:[#allocation3 + $0x48] sm:$0xff] %vm6203, %v6193
        %6215 = vst [vmem:[#allocation3 + $0x50] sm:$0xff] %v6194
        %6216 = vst.msk [vmem:[#allocation3 + $0x58] sm:$0xff] %vm6203, %v6195
        %6217 = vst [vmem:[#allocation3 + $0x60] sm:$0xff] %v6196
        %6218 = vst.msk [vmem:[#allocation3 + $0x68] sm:$0xff] %vm6203, %v6197
        %6219 = vst [vmem:[#allocation3 + $0x70] sm:$0xff] %v6198
        %6220 = vst.msk [vmem:[#allocation3 + $0x78] sm:$0xff] %vm6203, %v6199
        %6221 = vst [vmem:[#allocation3 + $0x80] sm:$0xff] %v6200
        %6222 = vst.msk [vmem:[#allocation3 + $0x88] sm:$0xff] %vm6203, %v6201
        %v6223 = vld [vmem:[#allocation3] sm:$0xff]
        %v6224 = vld [vmem:[#allocation3 + $0x8] sm:$0xff]
        %v6225 = vld [vmem:[#allocation3 + $0x10] sm:$0xff]
        %v6226 = vld [vmem:[#allocation3 + $0x18] sm:$0xff]
        %v6227 = vld [vmem:[#allocation3 + $0x20] sm:$0xff]
        %v6228 = vld [vmem:[#allocation3 + $0x28] sm:$0xff]
        %v6229 = vld [vmem:[#allocation3 + $0x30] sm:$0xff]
        %v6230 = vld [vmem:[#allocation3 + $0x38] sm:$0xff]
        %v6231 = vld [vmem:[#allocation3 + $0x40] sm:$0xff]
        %v6232 = vld [vmem:[#allocation3 + $0x48] sm:$0xff]
        %v6233 = vld [vmem:[#allocation3 + $0x50] sm:$0xff]
        %v6234 = vld [vmem:[#allocation3 + $0x58] sm:$0xff]
        %v6235 = vld [vmem:[#allocation3 + $0x60] sm:$0xff]
        %v6236 = vld [vmem:[#allocation3 + $0x68] sm:$0xff]
        %v6237 = vld [vmem:[#allocation3 + $0x70] sm:$0xff]
        %v6238 = vld [vmem:[#allocation3 + $0x78] sm:$0xff]
        %v6239 = vpack.c.bf16 %v6225, %v6223
        %v6240 = vpack.c.bf16 %v6226, %v6224
        %v6241 = vpack.c.bf16 %v6229, %v6227
        %v6242 = vpack.c.bf16 %v6230, %v6228
        %v6243 = vpack.c.bf16 %v6233, %v6231
        %v6244 = vpack.c.bf16 %v6234, %v6232
        %v6245 = vpack.c.bf16 %v6237, %v6235
        %v6246 = vpack.c.bf16 %v6238, %v6236
        %v6247 = vld [vmem:[%s5] sm:$0xff]
        %v6248 = vld [vmem:[%s5 + $0x8] sm:$0xff]
        %v6249 = vld [vmem:[%s5 + $0x10] sm:$0xff]
        %v6250 = vld [vmem:[%s5 + $0x18] sm:$0xff]
        %v6251 = vld [vmem:[%s5 + $0x20] sm:$0xff]
        %v6252 = vld [vmem:[%s5 + $0x28] sm:$0xff]
        %v6253 = vld [vmem:[%s5 + $0x30] sm:$0xff]
        %v6254 = vld [vmem:[%s5 + $0x38] sm:$0xff]
        %v6255 = vld [vmem:[%s5 + $0x40] sm:$0xff]
        %v6256 = vld [vmem:[%s5 + $0x48] sm:$0xff]
        %v6257 = vld [vmem:[%s5 + $0x50] sm:$0xff]
        %v6258 = vld [vmem:[%s5 + $0x58] sm:$0xff]
        %v6259 = vld [vmem:[%s5 + $0x60] sm:$0xff]
        %v6260 = vld [vmem:[%s5 + $0x68] sm:$0xff]
        %v6261 = vld [vmem:[%s5 + $0x70] sm:$0xff]
        %v6262 = vld [vmem:[%s5 + $0x78] sm:$0xff]
        %v6263 = vld [vmem:[%s5 + $0x80] sm:$0xff]
        %v6264 = vld [vmem:[%s5 + $0x88] sm:$0xff]
        %v6265 = vld [vmem:[%s5 + $0x90] sm:$0xff]
        %v6266 = vld [vmem:[%s5 + $0x98] sm:$0xff]
        %v6267 = vld [vmem:[%s5 + $0xa0] sm:$0xff]
        %v6268 = vld [vmem:[%s5 + $0xa8] sm:$0xff]
        %v6269 = vld [vmem:[%s5 + $0xb0] sm:$0xff]
        %v6270 = vld [vmem:[%s5 + $0xb8] sm:$0xff]
        %v6271 = vld [vmem:[%s5 + $0xc0] sm:$0xff]
        %v6272 = vld [vmem:[%s5 + $0xc8] sm:$0xff]
        %v6273 = vld [vmem:[%s5 + $0xd0] sm:$0xff]
        %v6274 = vld [vmem:[%s5 + $0xd8] sm:$0xff]
        %v6275 = vpack.c.bf16 %v6188, %v6186
        %v6276 = vpack.c.bf16 %v6189, %v6187
        %v6277 = vpack.c.bf16 %v6192, %v6190
        %v6278 = vpack.c.bf16 %v6193, %v6191
        %v6279 = vpack.c.bf16 %v6196, %v6194
        %v6280 = vpack.c.bf16 %v6197, %v6195
        %v6281 = vpack.c.bf16 %v6200, %v6198
        %v6282 = vpack.c.bf16 %v6201, %v6199
        %s6283 = scalar_lea.vmem %s5, 224
        %v6284 = vld [vmem:[%s6283] sm:$0xff]
        %v6285 = vld [vmem:[%s6283 + $0x8] sm:$0xff]
        %v6286 = vld [vmem:[%s6283 + $0x10] sm:$0xff]
        %v6287 = vld [vmem:[%s6283 + $0x18] sm:$0xff]
        %v6288 = vld [vmem:[%s6283 + $0x20] sm:$0xff]
        %v6289 = vld [vmem:[%s6283 + $0x28] sm:$0xff]
        %v6290 = vld [vmem:[%s6283 + $0x30] sm:$0xff]
        %v6291 = vld [vmem:[%s6283 + $0x38] sm:$0xff]
        %v6292 = vld [vmem:[%s6283 + $0x40] sm:$0xff]
        %v6293 = vld [vmem:[%s6283 + $0x48] sm:$0xff]
        %v6294 = vld [vmem:[%s6283 + $0x50] sm:$0xff]
        %v6295 = vld [vmem:[%s6283 + $0x58] sm:$0xff]
        %v6296 = vld [vmem:[%s6283 + $0x60] sm:$0xff]
        %v6297 = vld [vmem:[%s6283 + $0x68] sm:$0xff]
        %v6298 = vld [vmem:[%s6283 + $0x70] sm:$0xff]
        %v6299 = vld [vmem:[%s6283 + $0x78] sm:$0xff]
        %v6300 = vld [vmem:[%s6283 + $0x80] sm:$0xff]
        %v6301 = vld [vmem:[%s6283 + $0x88] sm:$0xff]
        %v6302 = vld [vmem:[%s6283 + $0x90] sm:$0xff]
        %v6303 = vld [vmem:[%s6283 + $0x98] sm:$0xff]
        %v6304 = vld [vmem:[%s6283 + $0xa0] sm:$0xff]
        %v6305 = vld [vmem:[%s6283 + $0xa8] sm:$0xff]
        %v6306 = vld [vmem:[%s6283 + $0xb0] sm:$0xff]
        %v6307 = vld [vmem:[%s6283 + $0xb8] sm:$0xff]
        %v6308 = vld [vmem:[%s6283 + $0xc0] sm:$0xff]
        %v6309 = vld [vmem:[%s6283 + $0xc8] sm:$0xff]
        %v6310 = vld [vmem:[%s6283 + $0xd0] sm:$0xff]
        %v6311 = vld [vmem:[%s6283 + $0xd8] sm:$0xff]
        %v6340 = vunpack.c.l.b16 %v6284
        %v6341 = vunpack.c.h.b16 %v6284
        %v6342 = vunpack.c.l.b16 %v6285
        %v6343 = vunpack.c.h.b16 %v6285
        %v6344 = vunpack.c.l.b16 %v6286
        %v6345 = vunpack.c.h.b16 %v6286
        %v6346 = vunpack.c.l.b16 %v6287
        %v6347 = vunpack.c.h.b16 %v6287
        %v6348 = vunpack.c.l.b16 %v6288
        %v6349 = vunpack.c.h.b16 %v6288
        %v6350 = vunpack.c.l.b16 %v6289
        %v6351 = vunpack.c.h.b16 %v6289
        %v6352 = vunpack.c.l.b16 %v6290
        %v6353 = vunpack.c.h.b16 %v6290
        %v6354 = vunpack.c.l.b16 %v6291
        %v6355 = vunpack.c.h.b16 %v6291
        %v6356 = vunpack.c.l.b16 %v6292
        %v6357 = vunpack.c.h.b16 %v6292
        %v6358 = vunpack.c.l.b16 %v6293
        %v6359 = vunpack.c.h.b16 %v6293
        %v6360 = vunpack.c.l.b16 %v6294
        %v6361 = vunpack.c.h.b16 %v6294
        %v6362 = vunpack.c.l.b16 %v6295
        %v6363 = vunpack.c.h.b16 %v6295
        %v6364 = vunpack.c.l.b16 %v6296
        %v6365 = vunpack.c.h.b16 %v6296
        %v6366 = vunpack.c.l.b16 %v6297
        %v6367 = vunpack.c.h.b16 %v6297
        %v6368 = vunpack.c.l.b16 %v6298
        %v6369 = vunpack.c.h.b16 %v6298
        %v6370 = vunpack.c.l.b16 %v6299
        %v6371 = vunpack.c.h.b16 %v6299
        %v6372 = vunpack.c.l.b16 %v6300
        %v6373 = vunpack.c.h.b16 %v6300
        %v6374 = vunpack.c.l.b16 %v6301
        %v6375 = vunpack.c.h.b16 %v6301
        %v6376 = vunpack.c.l.b16 %v6302
        %v6377 = vunpack.c.h.b16 %v6302
        %v6378 = vunpack.c.l.b16 %v6303
        %v6379 = vunpack.c.h.b16 %v6303
        %v6380 = vunpack.c.l.b16 %v6304
        %v6381 = vunpack.c.h.b16 %v6304
        %v6382 = vunpack.c.l.b16 %v6305
        %v6383 = vunpack.c.h.b16 %v6305
        %v6384 = vunpack.c.l.b16 %v6306
        %v6385 = vunpack.c.h.b16 %v6306
        %v6386 = vunpack.c.l.b16 %v6307
        %v6387 = vunpack.c.h.b16 %v6307
        %v6388 = vunpack.c.l.b16 %v6308
        %v6389 = vunpack.c.h.b16 %v6308
        %v6390 = vunpack.c.l.b16 %v6309
        %v6391 = vunpack.c.h.b16 %v6309
        %v6392 = vunpack.c.l.b16 %v6310
        %v6393 = vunpack.c.h.b16 %v6310
        %v6394 = vunpack.c.l.b16 %v6311
        %v6395 = vunpack.c.h.b16 %v6311
        %v6396 = vpack.c.b16 %v6342, %v6340
        %v6397 = vpack.c.b16 %v6343, %v6341
        %v6398 = vpack.c.b16 %v6346, %v6344
        %v6399 = vpack.c.b16 %v6347, %v6345
        %v6400 = vpack.c.b16 %v6350, %v6348
        %v6401 = vpack.c.b16 %v6351, %v6349
        %v6402 = vpack.c.b16 %v6354, %v6352
        %v6403 = vpack.c.b16 %v6355, %v6353
        %v6404 = vpack.c.b16 %v6358, %v6356
        %v6405 = vpack.c.b16 %v6359, %v6357
        %v6406 = vpack.c.b16 %v6362, %v6360
        %v6407 = vpack.c.b16 %v6363, %v6361
        %v6408 = vpack.c.b16 %v6366, %v6364
        %v6409 = vpack.c.b16 %v6367, %v6365
        %v6410 = vpack.c.b16 %v6370, %v6368
        %v6411 = vpack.c.b16 %v6371, %v6369
        %v6412 = vpack.c.b16 %v6374, %v6372
        %v6413 = vpack.c.b16 %v6375, %v6373
        %v6414 = vpack.c.b16 %v6378, %v6376
        %v6415 = vpack.c.b16 %v6379, %v6377
        %v6416 = vpack.c.b16 %v6382, %v6380
        %v6417 = vpack.c.b16 %v6383, %v6381
        %v6418 = vpack.c.b16 %v6386, %v6384
        %v6419 = vpack.c.b16 %v6387, %v6385
        %v6420 = vpack.c.b16 %v6390, %v6388
        %v6421 = vpack.c.b16 %v6391, %v6389
        %v6422 = vpack.c.b16 %v6394, %v6392
        %v6423 = vpack.c.b16 %v6395, %v6393
        %v6453 = vsel %vm6203, %v6276, 0
        %v6456 = vsel %vm6203, %v6278, 0
        %v6459 = vsel %vm6203, %v6280, 0
        %v6462 = vsel %vm6203, %v6282, 0
        %6464 = vmatpush.bf16.msra.mxu0 %v6410
        %6465 = vmatpush.bf16.msra.mxu0 %v6408
        %6466 = vmatpush.bf16.msra.mxu0 %v6406
        %6467 = vmatpush.bf16.msra.mxu0 %v6404
        %6468 = vmatpush.bf16.msra.mxu0 %v6402
        %6469 = vmatpush.bf16.msra.mxu0 %v6400
        %6470 = vmatpush.bf16.msra.mxu0 %v6398
        %6471 = vmatpush.bf16.msra.mxu0 %v6396
        %6472 = vmatmul.bf16.gmra.mxu0 %v6275
        %v6473 = vpop.f32.mrf.mxu0
        %v6474 = vadd.f32 0.0, %v6473
        %v6475 = vpop.f32.mrf.mxu0
        %v6476 = vadd.f32 0.0, %v6475
        %6477 = vmatmul.bf16.gmra.mxu0 %v6277
        %v6478 = vpop.f32.mrf.mxu0
        %v6479 = vadd.f32 0.0, %v6478
        %v6480 = vpop.f32.mrf.mxu0
        %v6481 = vadd.f32 0.0, %v6480
        %6482 = vmatmul.bf16.gmra.mxu0 %v6279
        %v6483 = vpop.f32.mrf.mxu0
        %v6484 = vadd.f32 0.0, %v6483
        %v6485 = vpop.f32.mrf.mxu0
        %v6486 = vadd.f32 0.0, %v6485
        %6487 = vmatmul.bf16.gmra.mxu0 %v6281
        %v6488 = vpop.f32.mrf.mxu0
        %v6489 = vadd.f32 0.0, %v6488
        %v6490 = vpop.f32.mrf.mxu0
        %v6491 = vadd.f32 0.0, %v6490
        %6492 = vdwg.mxu0
        %6493 = vmatpush.bf16.msra.mxu0 0
        %6494 = vmatpush.bf16.msra.mxu0 0
        %6495 = vmatpush.bf16.msra.mxu0 %v6422
        %6496 = vmatpush.bf16.msra.mxu0 %v6420
        %6497 = vmatpush.bf16.msra.mxu0 %v6418
        %6498 = vmatpush.bf16.msra.mxu0 %v6416
        %6499 = vmatpush.bf16.msra.mxu0 %v6414
        %6500 = vmatpush.bf16.msra.mxu0 %v6412
        %6501 = vmatmul.bf16.gmra.mxu0 %v6453
        %v6502 = vpop.f32.mrf.mxu0
        %v6503 = vadd.f32 %v6474, %v6502
        %v6504 = vpop.f32.mrf.mxu0
        %v6505 = vadd.f32 %v6476, %v6504
        %6506 = vmatmul.bf16.gmra.mxu0 %v6456
        %v6507 = vpop.f32.mrf.mxu0
        %v6508 = vadd.f32 %v6479, %v6507
        %v6509 = vpop.f32.mrf.mxu0
        %v6510 = vadd.f32 %v6481, %v6509
        %6511 = vmatmul.bf16.gmra.mxu0 %v6459
        %v6512 = vpop.f32.mrf.mxu0
        %v6513 = vadd.f32 %v6484, %v6512
        %v6514 = vpop.f32.mrf.mxu0
        %v6515 = vadd.f32 %v6486, %v6514
        %6516 = vmatmul.bf16.gmra.mxu0 %v6462
        %v6517 = vpop.f32.mrf.mxu0
        %v6518 = vadd.f32 %v6489, %v6517
        %v6519 = vpop.f32.mrf.mxu0
        %v6520 = vadd.f32 %v6491, %v6519
        %6521 = vdwg.mxu0
        %6522 = vmatpush.bf16.msra.mxu0 %v6411
        %6523 = vmatpush.bf16.msra.mxu0 %v6409
        %6524 = vmatpush.bf16.msra.mxu0 %v6407
        %6525 = vmatpush.bf16.msra.mxu0 %v6405
        %6526 = vmatpush.bf16.msra.mxu0 %v6403
        %6527 = vmatpush.bf16.msra.mxu0 %v6401
        %6528 = vmatpush.bf16.msra.mxu0 %v6399
        %6529 = vmatpush.bf16.msra.mxu0 %v6397
        %6530 = vmatmul.bf16.gmra.mxu0 %v6275
        %v6531 = vpop.f32.mrf.mxu0
        %v6532 = vadd.f32 0.0, %v6531
        %v6533 = vpop.f32.mrf.mxu0
        %v6534 = vadd.f32 0.0, %v6533
        %6535 = vmatmul.bf16.gmra.mxu0 %v6277
        %v6536 = vpop.f32.mrf.mxu0
        %v6537 = vadd.f32 0.0, %v6536
        %v6538 = vpop.f32.mrf.mxu0
        %v6539 = vadd.f32 0.0, %v6538
        %6540 = vmatmul.bf16.gmra.mxu0 %v6279
        %v6541 = vpop.f32.mrf.mxu0
        %v6542 = vadd.f32 0.0, %v6541
        %v6543 = vpop.f32.mrf.mxu0
        %v6544 = vadd.f32 0.0, %v6543
        %6545 = vmatmul.bf16.gmra.mxu0 %v6281
        %v6546 = vpop.f32.mrf.mxu0
        %v6547 = vadd.f32 0.0, %v6546
        %v6548 = vpop.f32.mrf.mxu0
        %v6549 = vadd.f32 0.0, %v6548
        %6550 = vdwg.mxu0
        %6551 = vmatpush.bf16.msra.mxu0 0
        %6552 = vmatpush.bf16.msra.mxu0 0
        %6553 = vmatpush.bf16.msra.mxu0 %v6423
        %6554 = vmatpush.bf16.msra.mxu0 %v6421
        %6555 = vmatpush.bf16.msra.mxu0 %v6419
        %6556 = vmatpush.bf16.msra.mxu0 %v6417
        %6557 = vmatpush.bf16.msra.mxu0 %v6415
        %6558 = vmatpush.bf16.msra.mxu0 %v6413
        %6559 = vmatmul.bf16.gmra.mxu0 %v6453
        %v6560 = vpop.f32.mrf.mxu0
        %v6561 = vadd.f32 %v6532, %v6560
        %v6562 = vpop.f32.mrf.mxu0
        %v6563 = vadd.f32 %v6534, %v6562
        %6564 = vmatmul.bf16.gmra.mxu0 %v6456
        %v6565 = vpop.f32.mrf.mxu0
        %v6566 = vadd.f32 %v6537, %v6565
        %v6567 = vpop.f32.mrf.mxu0
        %v6568 = vadd.f32 %v6539, %v6567
        %6569 = vmatmul.bf16.gmra.mxu0 %v6459
        %v6570 = vpop.f32.mrf.mxu0
        %v6571 = vadd.f32 %v6542, %v6570
        %v6572 = vpop.f32.mrf.mxu0
        %v6573 = vadd.f32 %v6544, %v6572
        %6574 = vmatmul.bf16.gmra.mxu0 %v6462
        %v6575 = vpop.f32.mrf.mxu0
        %v6576 = vadd.f32 %v6547, %v6575
        %v6577 = vpop.f32.mrf.mxu0
        %v6578 = vadd.f32 %v6549, %v6577
        %6579 = vdwg.mxu0
        %v6580 = vld [vmem:[#allocation3 + $0x20] sm:$0xff]
        %v6581 = vld [vmem:[#allocation3 + $0x28] sm:$0xff]
        %v6582 = vld [vmem:[#allocation3 + $0x30] sm:$0xff]
        %v6583 = vld [vmem:[#allocation3 + $0x38] sm:$0xff]
        %v6584 = vld [vmem:[#allocation3 + $0x40] sm:$0xff]
        %v6585 = vld [vmem:[#allocation3 + $0x48] sm:$0xff]
        %v6586 = vld [vmem:[#allocation3 + $0x50] sm:$0xff]
        %v6587 = vld [vmem:[#allocation3 + $0x58] sm:$0xff]
        %v6588 = vld [vmem:[#allocation3 + $0x60] sm:$0xff]
        %v6589 = vld [vmem:[#allocation3 + $0x68] sm:$0xff]
        %v6590 = vld [vmem:[#allocation3 + $0x70] sm:$0xff]
        %v6591 = vld [vmem:[#allocation3 + $0x78] sm:$0xff]
        %v6592 = vld [vmem:[#allocation3 + $0x80] sm:$0xff]
        %v6593 = vld [vmem:[#allocation3 + $0x88] sm:$0xff]
        %v6594 = vld [vmem:[#allocation3 + $0x90] sm:$0xff]
        %v6595 = vld [vmem:[#allocation3 + $0x98] sm:$0xff]
        %v6596 = vpack.c.bf16 %v6582, %v6580
        %v6597 = vpack.c.bf16 %v6583, %v6581
        %v6598 = vpack.c.bf16 %v6586, %v6584
        %v6599 = vpack.c.bf16 %v6587, %v6585
        %v6600 = vpack.c.bf16 %v6590, %v6588
        %v6601 = vpack.c.bf16 %v6591, %v6589
        %v6602 = vpack.c.bf16 %v6594, %v6592
        %v6603 = vpack.c.bf16 %v6595, %v6593
        %s6604 = scalar_lea.vmem %s5, 448
        %v6605 = vld [vmem:[%s6604] sm:$0xff]
        %v6606 = vld [vmem:[%s6604 + $0x8] sm:$0xff]
        %v6607 = vld [vmem:[%s6604 + $0x10] sm:$0xff]
        %v6608 = vld [vmem:[%s6604 + $0x18] sm:$0xff]
        %v6609 = vld [vmem:[%s6604 + $0x20] sm:$0xff]
        %v6610 = vld [vmem:[%s6604 + $0x28] sm:$0xff]
        %v6611 = vld [vmem:[%s6604 + $0x30] sm:$0xff]
        %v6612 = vld [vmem:[%s6604 + $0x38] sm:$0xff]
        %v6613 = vld [vmem:[%s6604 + $0x40] sm:$0xff]
        %v6614 = vld [vmem:[%s6604 + $0x48] sm:$0xff]
        %v6615 = vld [vmem:[%s6604 + $0x50] sm:$0xff]
        %v6616 = vld [vmem:[%s6604 + $0x58] sm:$0xff]
        %v6617 = vld [vmem:[%s6604 + $0x60] sm:$0xff]
        %v6618 = vld [vmem:[%s6604 + $0x68] sm:$0xff]
        %v6619 = vld [vmem:[%s6604 + $0x70] sm:$0xff]
        %v6620 = vld [vmem:[%s6604 + $0x78] sm:$0xff]
        %v6621 = vld [vmem:[%s6604 + $0x80] sm:$0xff]
        %v6622 = vld [vmem:[%s6604 + $0x88] sm:$0xff]
        %v6623 = vld [vmem:[%s6604 + $0x90] sm:$0xff]
        %v6624 = vld [vmem:[%s6604 + $0x98] sm:$0xff]
        %v6625 = vld [vmem:[%s6604 + $0xa0] sm:$0xff]
        %v6626 = vld [vmem:[%s6604 + $0xa8] sm:$0xff]
        %v6627 = vld [vmem:[%s6604 + $0xb0] sm:$0xff]
        %v6628 = vld [vmem:[%s6604 + $0xb8] sm:$0xff]
        %v6629 = vld [vmem:[%s6604 + $0xc0] sm:$0xff]
        %v6630 = vld [vmem:[%s6604 + $0xc8] sm:$0xff]
        %v6631 = vld [vmem:[%s6604 + $0xd0] sm:$0xff]
        %v6632 = vld [vmem:[%s6604 + $0xd8] sm:$0xff]
        %v6661 = vunpack.c.l.b16 %v6605
        %v6662 = vunpack.c.h.b16 %v6605
        %v6663 = vunpack.c.l.b16 %v6606
        %v6664 = vunpack.c.h.b16 %v6606
        %v6665 = vunpack.c.l.b16 %v6607
        %v6666 = vunpack.c.h.b16 %v6607
        %v6667 = vunpack.c.l.b16 %v6608
        %v6668 = vunpack.c.h.b16 %v6608
        %v6669 = vunpack.c.l.b16 %v6609
        %v6670 = vunpack.c.h.b16 %v6609
        %v6671 = vunpack.c.l.b16 %v6610
        %v6672 = vunpack.c.h.b16 %v6610
        %v6673 = vunpack.c.l.b16 %v6611
        %v6674 = vunpack.c.h.b16 %v6611
        %v6675 = vunpack.c.l.b16 %v6612
        %v6676 = vunpack.c.h.b16 %v6612
        %v6677 = vunpack.c.l.b16 %v6613
        %v6678 = vunpack.c.h.b16 %v6613
        %v6679 = vunpack.c.l.b16 %v6614
        %v6680 = vunpack.c.h.b16 %v6614
        %v6681 = vunpack.c.l.b16 %v6615
        %v6682 = vunpack.c.h.b16 %v6615
        %v6683 = vunpack.c.l.b16 %v6616
        %v6684 = vunpack.c.h.b16 %v6616
        %v6685 = vunpack.c.l.b16 %v6617
        %v6686 = vunpack.c.h.b16 %v6617
        %v6687 = vunpack.c.l.b16 %v6618
        %v6688 = vunpack.c.h.b16 %v6618
        %v6689 = vunpack.c.l.b16 %v6619
        %v6690 = vunpack.c.h.b16 %v6619
        %v6691 = vunpack.c.l.b16 %v6620
        %v6692 = vunpack.c.h.b16 %v6620
        %v6693 = vunpack.c.l.b16 %v6621
        %v6694 = vunpack.c.h.b16 %v6621
        %v6695 = vunpack.c.l.b16 %v6622
        %v6696 = vunpack.c.h.b16 %v6622
        %v6697 = vunpack.c.l.b16 %v6623
        %v6698 = vunpack.c.h.b16 %v6623
        %v6699 = vunpack.c.l.b16 %v6624
        %v6700 = vunpack.c.h.b16 %v6624
        %v6701 = vunpack.c.l.b16 %v6625
        %v6702 = vunpack.c.h.b16 %v6625
        %v6703 = vunpack.c.l.b16 %v6626
        %v6704 = vunpack.c.h.b16 %v6626
        %v6705 = vunpack.c.l.b16 %v6627
        %v6706 = vunpack.c.h.b16 %v6627
        %v6707 = vunpack.c.l.b16 %v6628
        %v6708 = vunpack.c.h.b16 %v6628
        %v6709 = vunpack.c.l.b16 %v6629
        %v6710 = vunpack.c.h.b16 %v6629
        %v6711 = vunpack.c.l.b16 %v6630
        %v6712 = vunpack.c.h.b16 %v6630
        %v6713 = vunpack.c.l.b16 %v6631
        %v6714 = vunpack.c.h.b16 %v6631
        %v6715 = vunpack.c.l.b16 %v6632
        %v6716 = vunpack.c.h.b16 %v6632
        %v6717 = vpack.c.b16 %v6663, %v6661
        %v6718 = vpack.c.b16 %v6664, %v6662
        %v6719 = vpack.c.b16 %v6667, %v6665
        %v6720 = vpack.c.b16 %v6668, %v6666
        %v6721 = vpack.c.b16 %v6671, %v6669
        %v6722 = vpack.c.b16 %v6672, %v6670
        %v6723 = vpack.c.b16 %v6675, %v6673
        %v6724 = vpack.c.b16 %v6676, %v6674
        %v6725 = vpack.c.b16 %v6679, %v6677
        %v6726 = vpack.c.b16 %v6680, %v6678
        %v6727 = vpack.c.b16 %v6683, %v6681
        %v6728 = vpack.c.b16 %v6684, %v6682
        %v6729 = vpack.c.b16 %v6687, %v6685
        %v6730 = vpack.c.b16 %v6688, %v6686
        %v6731 = vpack.c.b16 %v6691, %v6689
        %v6732 = vpack.c.b16 %v6692, %v6690
        %v6733 = vpack.c.b16 %v6695, %v6693
        %v6734 = vpack.c.b16 %v6696, %v6694
        %v6735 = vpack.c.b16 %v6699, %v6697
        %v6736 = vpack.c.b16 %v6700, %v6698
        %v6737 = vpack.c.b16 %v6703, %v6701
        %v6738 = vpack.c.b16 %v6704, %v6702
        %v6739 = vpack.c.b16 %v6707, %v6705
        %v6740 = vpack.c.b16 %v6708, %v6706
        %v6741 = vpack.c.b16 %v6711, %v6709
        %v6742 = vpack.c.b16 %v6712, %v6710
        %v6743 = vpack.c.b16 %v6715, %v6713
        %v6744 = vpack.c.b16 %v6716, %v6714
        %v6774 = vsel %vm6203, %v6597, 0
        %v6777 = vsel %vm6203, %v6599, 0
        %v6780 = vsel %vm6203, %v6601, 0
        %v6783 = vsel %vm6203, %v6603, 0
        %6785 = vmatpush.bf16.msra.mxu0 %v6731
        %6786 = vmatpush.bf16.msra.mxu0 %v6729
        %6787 = vmatpush.bf16.msra.mxu0 %v6727
        %6788 = vmatpush.bf16.msra.mxu0 %v6725
        %6789 = vmatpush.bf16.msra.mxu0 %v6723
        %6790 = vmatpush.bf16.msra.mxu0 %v6721
        %6791 = vmatpush.bf16.msra.mxu0 %v6719
        %6792 = vmatpush.bf16.msra.mxu0 %v6717
        %6793 = vmatmul.bf16.gmra.mxu0 %v6596
        %v6794 = vpop.f32.mrf.mxu0
        %v6795 = vadd.f32 0.0, %v6794
        %v6796 = vpop.f32.mrf.mxu0
        %v6797 = vadd.f32 0.0, %v6796
        %6798 = vmatmul.bf16.gmra.mxu0 %v6598
        %v6799 = vpop.f32.mrf.mxu0
        %v6800 = vadd.f32 0.0, %v6799
        %v6801 = vpop.f32.mrf.mxu0
        %v6802 = vadd.f32 0.0, %v6801
        %6803 = vmatmul.bf16.gmra.mxu0 %v6600
        %v6804 = vpop.f32.mrf.mxu0
        %v6805 = vadd.f32 0.0, %v6804
        %v6806 = vpop.f32.mrf.mxu0
        %v6807 = vadd.f32 0.0, %v6806
        %6808 = vmatmul.bf16.gmra.mxu0 %v6602
        %v6809 = vpop.f32.mrf.mxu0
        %v6810 = vadd.f32 0.0, %v6809
        %v6811 = vpop.f32.mrf.mxu0
        %v6812 = vadd.f32 0.0, %v6811
        %6813 = vdwg.mxu0
        %6814 = vmatpush.bf16.msra.mxu0 0
        %6815 = vmatpush.bf16.msra.mxu0 0
        %6816 = vmatpush.bf16.msra.mxu0 %v6743
        %6817 = vmatpush.bf16.msra.mxu0 %v6741
        %6818 = vmatpush.bf16.msra.mxu0 %v6739
        %6819 = vmatpush.bf16.msra.mxu0 %v6737
        %6820 = vmatpush.bf16.msra.mxu0 %v6735
        %6821 = vmatpush.bf16.msra.mxu0 %v6733
        %6822 = vmatmul.bf16.gmra.mxu0 %v6774
        %v6823 = vpop.f32.mrf.mxu0
        %v6824 = vadd.f32 %v6795, %v6823
        %v6825 = vpop.f32.mrf.mxu0
        %v6826 = vadd.f32 %v6797, %v6825
        %6827 = vmatmul.bf16.gmra.mxu0 %v6777
        %v6828 = vpop.f32.mrf.mxu0
        %v6829 = vadd.f32 %v6800, %v6828
        %v6830 = vpop.f32.mrf.mxu0
        %v6831 = vadd.f32 %v6802, %v6830
        %6832 = vmatmul.bf16.gmra.mxu0 %v6780
        %v6833 = vpop.f32.mrf.mxu0
        %v6834 = vadd.f32 %v6805, %v6833
        %v6835 = vpop.f32.mrf.mxu0
        %v6836 = vadd.f32 %v6807, %v6835
        %6837 = vmatmul.bf16.gmra.mxu0 %v6783
        %v6838 = vpop.f32.mrf.mxu0
        %v6839 = vadd.f32 %v6810, %v6838
        %v6840 = vpop.f32.mrf.mxu0
        %v6841 = vadd.f32 %v6812, %v6840
        %6842 = vdwg.mxu0
        %6843 = vmatpush.bf16.msra.mxu0 %v6732
        %6844 = vmatpush.bf16.msra.mxu0 %v6730
        %6845 = vmatpush.bf16.msra.mxu0 %v6728
        %6846 = vmatpush.bf16.msra.mxu0 %v6726
        %6847 = vmatpush.bf16.msra.mxu0 %v6724
        %6848 = vmatpush.bf16.msra.mxu0 %v6722
        %6849 = vmatpush.bf16.msra.mxu0 %v6720
        %6850 = vmatpush.bf16.msra.mxu0 %v6718
        %6851 = vmatmul.bf16.gmra.mxu0 %v6596
        %v6852 = vpop.f32.mrf.mxu0
        %v6853 = vadd.f32 0.0, %v6852
        %v6854 = vpop.f32.mrf.mxu0
        %v6855 = vadd.f32 0.0, %v6854
        %6856 = vmatmul.bf16.gmra.mxu0 %v6598
        %v6857 = vpop.f32.mrf.mxu0
        %v6858 = vadd.f32 0.0, %v6857
        %v6859 = vpop.f32.mrf.mxu0
        %v6860 = vadd.f32 0.0, %v6859
        %6861 = vmatmul.bf16.gmra.mxu0 %v6600
        %v6862 = vpop.f32.mrf.mxu0
        %v6863 = vadd.f32 0.0, %v6862
        %v6864 = vpop.f32.mrf.mxu0
        %v6865 = vadd.f32 0.0, %v6864
        %6866 = vmatmul.bf16.gmra.mxu0 %v6602
        %v6867 = vpop.f32.mrf.mxu0
        %v6868 = vadd.f32 0.0, %v6867
        %v6869 = vpop.f32.mrf.mxu0
        %v6870 = vadd.f32 0.0, %v6869
        %6871 = vdwg.mxu0
        %6872 = vmatpush.bf16.msra.mxu0 0
        %6873 = vmatpush.bf16.msra.mxu0 0
        %6874 = vmatpush.bf16.msra.mxu0 %v6744
        %6875 = vmatpush.bf16.msra.mxu0 %v6742
        %6876 = vmatpush.bf16.msra.mxu0 %v6740
        %6877 = vmatpush.bf16.msra.mxu0 %v6738
        %6878 = vmatpush.bf16.msra.mxu0 %v6736
        %6879 = vmatpush.bf16.msra.mxu0 %v6734
        %6880 = vmatmul.bf16.gmra.mxu0 %v6774
        %v6881 = vpop.f32.mrf.mxu0
        %v6882 = vadd.f32 %v6853, %v6881
        %v6883 = vpop.f32.mrf.mxu0
        %v6884 = vadd.f32 %v6855, %v6883
        %6885 = vmatmul.bf16.gmra.mxu0 %v6777
        %v6886 = vpop.f32.mrf.mxu0
        %v6887 = vadd.f32 %v6858, %v6886
        %v6888 = vpop.f32.mrf.mxu0
        %v6889 = vadd.f32 %v6860, %v6888
        %6890 = vmatmul.bf16.gmra.mxu0 %v6780
        %v6891 = vpop.f32.mrf.mxu0
        %v6892 = vadd.f32 %v6863, %v6891
        %v6893 = vpop.f32.mrf.mxu0
        %v6894 = vadd.f32 %v6865, %v6893
        %6895 = vmatmul.bf16.gmra.mxu0 %v6783
        %v6896 = vpop.f32.mrf.mxu0
        %v6897 = vadd.f32 %v6868, %v6896
        %v6898 = vpop.f32.mrf.mxu0
        %v6899 = vadd.f32 %v6870, %v6898
        %6900 = vdwg.mxu0
        %v6929 = vunpack.c.l.b16 %v6247
        %v6930 = vunpack.c.h.b16 %v6247
        %v6931 = vunpack.c.l.b16 %v6248
        %v6932 = vunpack.c.h.b16 %v6248
        %v6933 = vunpack.c.l.b16 %v6249
        %v6934 = vunpack.c.h.b16 %v6249
        %v6935 = vunpack.c.l.b16 %v6250
        %v6936 = vunpack.c.h.b16 %v6250
        %v6937 = vunpack.c.l.b16 %v6251
        %v6938 = vunpack.c.h.b16 %v6251
        %v6939 = vunpack.c.l.b16 %v6252
        %v6940 = vunpack.c.h.b16 %v6252
        %v6941 = vunpack.c.l.b16 %v6253
        %v6942 = vunpack.c.h.b16 %v6253
        %v6943 = vunpack.c.l.b16 %v6254
        %v6944 = vunpack.c.h.b16 %v6254
        %v6945 = vunpack.c.l.b16 %v6255
        %v6946 = vunpack.c.h.b16 %v6255
        %v6947 = vunpack.c.l.b16 %v6256
        %v6948 = vunpack.c.h.b16 %v6256
        %v6949 = vunpack.c.l.b16 %v6257
        %v6950 = vunpack.c.h.b16 %v6257
        %v6951 = vunpack.c.l.b16 %v6258
        %v6952 = vunpack.c.h.b16 %v6258
        %v6953 = vunpack.c.l.b16 %v6259
        %v6954 = vunpack.c.h.b16 %v6259
        %v6955 = vunpack.c.l.b16 %v6260
        %v6956 = vunpack.c.h.b16 %v6260
        %v6957 = vunpack.c.l.b16 %v6261
        %v6958 = vunpack.c.h.b16 %v6261
        %v6959 = vunpack.c.l.b16 %v6262
        %v6960 = vunpack.c.h.b16 %v6262
        %v6961 = vunpack.c.l.b16 %v6263
        %v6962 = vunpack.c.h.b16 %v6263
        %v6963 = vunpack.c.l.b16 %v6264
        %v6964 = vunpack.c.h.b16 %v6264
        %v6965 = vunpack.c.l.b16 %v6265
        %v6966 = vunpack.c.h.b16 %v6265
        %v6967 = vunpack.c.l.b16 %v6266
        %v6968 = vunpack.c.h.b16 %v6266
        %v6969 = vunpack.c.l.b16 %v6267
        %v6970 = vunpack.c.h.b16 %v6267
        %v6971 = vunpack.c.l.b16 %v6268
        %v6972 = vunpack.c.h.b16 %v6268
        %v6973 = vunpack.c.l.b16 %v6269
        %v6974 = vunpack.c.h.b16 %v6269
        %v6975 = vunpack.c.l.b16 %v6270
        %v6976 = vunpack.c.h.b16 %v6270
        %v6977 = vunpack.c.l.b16 %v6271
        %v6978 = vunpack.c.h.b16 %v6271
        %v6979 = vunpack.c.l.b16 %v6272
        %v6980 = vunpack.c.h.b16 %v6272
        %v6981 = vunpack.c.l.b16 %v6273
        %v6982 = vunpack.c.h.b16 %v6273
        %v6983 = vunpack.c.l.b16 %v6274
        %v6984 = vunpack.c.h.b16 %v6274
        %v6985 = vpack.c.b16 %v6931, %v6929
        %v6986 = vpack.c.b16 %v6932, %v6930
        %v6987 = vpack.c.b16 %v6935, %v6933
        %v6988 = vpack.c.b16 %v6936, %v6934
        %v6989 = vpack.c.b16 %v6939, %v6937
        %v6990 = vpack.c.b16 %v6940, %v6938
        %v6991 = vpack.c.b16 %v6943, %v6941
        %v6992 = vpack.c.b16 %v6944, %v6942
        %v6993 = vpack.c.b16 %v6947, %v6945
        %v6994 = vpack.c.b16 %v6948, %v6946
        %v6995 = vpack.c.b16 %v6951, %v6949
        %v6996 = vpack.c.b16 %v6952, %v6950
        %v6997 = vpack.c.b16 %v6955, %v6953
        %v6998 = vpack.c.b16 %v6956, %v6954
        %v6999 = vpack.c.b16 %v6959, %v6957
        %v7000 = vpack.c.b16 %v6960, %v6958
        %v7001 = vpack.c.b16 %v6963, %v6961
        %v7002 = vpack.c.b16 %v6964, %v6962
        %v7003 = vpack.c.b16 %v6967, %v6965
        %v7004 = vpack.c.b16 %v6968, %v6966
        %v7005 = vpack.c.b16 %v6971, %v6969
        %v7006 = vpack.c.b16 %v6972, %v6970
        %v7007 = vpack.c.b16 %v6975, %v6973
        %v7008 = vpack.c.b16 %v6976, %v6974
        %v7009 = vpack.c.b16 %v6979, %v6977
        %v7010 = vpack.c.b16 %v6980, %v6978
        %v7011 = vpack.c.b16 %v6983, %v6981
        %v7012 = vpack.c.b16 %v6984, %v6982
        %v7042 = vsel %vm6203, %v6240, 0
        %v7045 = vsel %vm6203, %v6242, 0
        %v7048 = vsel %vm6203, %v6244, 0
        %v7051 = vsel %vm6203, %v6246, 0
        %7053 = vmatpush.bf16.msra.mxu0 %v6999
        %7054 = vmatpush.bf16.msra.mxu0 %v6997
        %7055 = vmatpush.bf16.msra.mxu0 %v6995
        %7056 = vmatpush.bf16.msra.mxu0 %v6993
        %7057 = vmatpush.bf16.msra.mxu0 %v6991
        %7058 = vmatpush.bf16.msra.mxu0 %v6989
        %7059 = vmatpush.bf16.msra.mxu0 %v6987
        %7060 = vmatpush.bf16.msra.mxu0 %v6985
        %7061 = vmatmul.bf16.gmra.mxu0 %v6239
        %v7062 = vpop.f32.mrf.mxu0
        %v7063 = vadd.f32 %v6503, %v7062
        %v7064 = vpop.f32.mrf.mxu0
        %v7065 = vadd.f32 %v6505, %v7064
        %7066 = vmatmul.bf16.gmra.mxu0 %v6241
        %v7067 = vpop.f32.mrf.mxu0
        %v7068 = vadd.f32 %v6508, %v7067
        %v7069 = vpop.f32.mrf.mxu0
        %v7070 = vadd.f32 %v6510, %v7069
        %7071 = vmatmul.bf16.gmra.mxu0 %v6243
        %v7072 = vpop.f32.mrf.mxu0
        %v7073 = vadd.f32 %v6513, %v7072
        %v7074 = vpop.f32.mrf.mxu0
        %v7075 = vadd.f32 %v6515, %v7074
        %7076 = vmatmul.bf16.gmra.mxu0 %v6245
        %v7077 = vpop.f32.mrf.mxu0
        %v7078 = vadd.f32 %v6518, %v7077
        %v7079 = vpop.f32.mrf.mxu0
        %v7080 = vadd.f32 %v6520, %v7079
        %7081 = vdwg.mxu0
        %7082 = vmatpush.bf16.msra.mxu0 0
        %7083 = vmatpush.bf16.msra.mxu0 0
        %7084 = vmatpush.bf16.msra.mxu0 %v7011
        %7085 = vmatpush.bf16.msra.mxu0 %v7009
        %7086 = vmatpush.bf16.msra.mxu0 %v7007
        %7087 = vmatpush.bf16.msra.mxu0 %v7005
        %7088 = vmatpush.bf16.msra.mxu0 %v7003
        %7089 = vmatpush.bf16.msra.mxu0 %v7001
        %7090 = vmatmul.bf16.gmra.mxu0 %v7042
        %v7091 = vpop.f32.mrf.mxu0
        %v7092 = vadd.f32 %v7063, %v7091
        %v7093 = vpop.f32.mrf.mxu0
        %v7094 = vadd.f32 %v7065, %v7093
        %7095 = vmatmul.bf16.gmra.mxu0 %v7045
        %v7096 = vpop.f32.mrf.mxu0
        %v7097 = vadd.f32 %v7068, %v7096
        %v7098 = vpop.f32.mrf.mxu0
        %v7099 = vadd.f32 %v7070, %v7098
        %7100 = vmatmul.bf16.gmra.mxu0 %v7048
        %v7101 = vpop.f32.mrf.mxu0
        %v7102 = vadd.f32 %v7073, %v7101
        %v7103 = vpop.f32.mrf.mxu0
        %v7104 = vadd.f32 %v7075, %v7103
        %7105 = vmatmul.bf16.gmra.mxu0 %v7051
        %v7106 = vpop.f32.mrf.mxu0
        %v7107 = vadd.f32 %v7078, %v7106
        %v7108 = vpop.f32.mrf.mxu0
        %v7109 = vadd.f32 %v7080, %v7108
        %7110 = vdwg.mxu0
        %7111 = vmatpush.bf16.msra.mxu0 %v7000
        %7112 = vmatpush.bf16.msra.mxu0 %v6998
        %7113 = vmatpush.bf16.msra.mxu0 %v6996
        %7114 = vmatpush.bf16.msra.mxu0 %v6994
        %7115 = vmatpush.bf16.msra.mxu0 %v6992
        %7116 = vmatpush.bf16.msra.mxu0 %v6990
        %7117 = vmatpush.bf16.msra.mxu0 %v6988
        %7118 = vmatpush.bf16.msra.mxu0 %v6986
        %7119 = vmatmul.bf16.gmra.mxu0 %v6239
        %v7120 = vpop.f32.mrf.mxu0
        %v7121 = vadd.f32 %v6561, %v7120
        %v7122 = vpop.f32.mrf.mxu0
        %v7123 = vadd.f32 %v6563, %v7122
        %7124 = vmatmul.bf16.gmra.mxu0 %v6241
        %v7125 = vpop.f32.mrf.mxu0
        %v7126 = vadd.f32 %v6566, %v7125
        %v7127 = vpop.f32.mrf.mxu0
        %v7128 = vadd.f32 %v6568, %v7127
        %7129 = vmatmul.bf16.gmra.mxu0 %v6243
        %v7130 = vpop.f32.mrf.mxu0
        %v7131 = vadd.f32 %v6571, %v7130
        %v7132 = vpop.f32.mrf.mxu0
        %v7133 = vadd.f32 %v6573, %v7132
        %7134 = vmatmul.bf16.gmra.mxu0 %v6245
        %v7135 = vpop.f32.mrf.mxu0
        %v7136 = vadd.f32 %v6576, %v7135
        %v7137 = vpop.f32.mrf.mxu0
        %v7138 = vadd.f32 %v6578, %v7137
        %7139 = vdwg.mxu0
        %7140 = vmatpush.bf16.msra.mxu0 0
        %7141 = vmatpush.bf16.msra.mxu0 0
        %7142 = vmatpush.bf16.msra.mxu0 %v7012
        %7143 = vmatpush.bf16.msra.mxu0 %v7010
        %7144 = vmatpush.bf16.msra.mxu0 %v7008
        %7145 = vmatpush.bf16.msra.mxu0 %v7006
        %7146 = vmatpush.bf16.msra.mxu0 %v7004
        %7147 = vmatpush.bf16.msra.mxu0 %v7002
        %7148 = vmatmul.bf16.gmra.mxu0 %v7042
        %v7149 = vpop.f32.mrf.mxu0
        %v7150 = vadd.f32 %v7121, %v7149
        %v7151 = vpop.f32.mrf.mxu0
        %v7152 = vadd.f32 %v7123, %v7151
        %7153 = vmatmul.bf16.gmra.mxu0 %v7045
        %v7154 = vpop.f32.mrf.mxu0
        %v7155 = vadd.f32 %v7126, %v7154
        %v7156 = vpop.f32.mrf.mxu0
        %v7157 = vadd.f32 %v7128, %v7156
        %7158 = vmatmul.bf16.gmra.mxu0 %v7048
        %v7159 = vpop.f32.mrf.mxu0
        %v7160 = vadd.f32 %v7131, %v7159
        %v7161 = vpop.f32.mrf.mxu0
        %v7162 = vadd.f32 %v7133, %v7161
        %7163 = vmatmul.bf16.gmra.mxu0 %v7051
        %v7164 = vpop.f32.mrf.mxu0
        %v7165 = vadd.f32 %v7136, %v7164
        %v7166 = vpop.f32.mrf.mxu0
        %v7167 = vadd.f32 %v7138, %v7166
        %7168 = vdwg.mxu0
        %v7169 = vadd.f32 %v7092, %v6824
        %v7170 = vadd.f32 %v7150, %v6882
        %v7171 = vadd.f32 %v7094, %v6826
        %v7172 = vadd.f32 %v7152, %v6884
        %v7173 = vadd.f32 %v7097, %v6829
        %v7174 = vadd.f32 %v7155, %v6887
        %v7175 = vadd.f32 %v7099, %v6831
        %v7176 = vadd.f32 %v7157, %v6889
        %v7177 = vadd.f32 %v7102, %v6834
        %v7178 = vadd.f32 %v7160, %v6892
        %v7179 = vadd.f32 %v7104, %v6836
        %v7180 = vadd.f32 %v7162, %v6894
        %v7181 = vadd.f32 %v7107, %v6839
        %v7182 = vadd.f32 %v7165, %v6897
        %v7183 = vadd.f32 %v7109, %v6841
        %v7184 = vadd.f32 %v7167, %v6899
        %v7185 = vld [vmem:[#allocation10] sm:$0x3]
        %v7187 = vperm.slane %v7185, 0
        %v7188 = vperm.slane %v7185, 1
        %v7191 = vadd.f32 %v7169, %v7187
        %v7192 = vadd.f32 %v7170, %v7188
        %v7193 = vadd.f32 %v7171, %v7187
        %v7194 = vadd.f32 %v7172, %v7188
        %v7195 = vadd.f32 %v7173, %v7187
        %v7196 = vadd.f32 %v7174, %v7188
        %v7197 = vadd.f32 %v7175, %v7187
        %v7198 = vadd.f32 %v7176, %v7188
        %v7199 = vadd.f32 %v7177, %v7187
        %v7200 = vadd.f32 %v7178, %v7188
        %v7201 = vadd.f32 %v7179, %v7187
        %v7202 = vadd.f32 %v7180, %v7188
        %v7203 = vadd.f32 %v7181, %v7187
        %v7204 = vadd.f32 %v7182, %v7188
        %v7205 = vadd.f32 %v7183, %v7187
        %v7206 = vadd.f32 %v7184, %v7188
        %v7207 = vmax.f32 %v7191, 0.0
        %v7208 = vmax.f32 %v7192, 0.0
        %v7209 = vmax.f32 %v7193, 0.0
        %v7210 = vmax.f32 %v7194, 0.0
        %v7211 = vmax.f32 %v7195, 0.0
        %v7212 = vmax.f32 %v7196, 0.0
        %v7213 = vmax.f32 %v7197, 0.0
        %v7214 = vmax.f32 %v7198, 0.0
        %v7215 = vmax.f32 %v7199, 0.0
        %v7216 = vmax.f32 %v7200, 0.0
        %v7217 = vmax.f32 %v7201, 0.0
        %v7218 = vmax.f32 %v7202, 0.0
        %v7219 = vmax.f32 %v7203, 0.0
        %v7220 = vmax.f32 %v7204, 0.0
        %v7221 = vmax.f32 %v7205, 0.0
        %v7222 = vmax.f32 %v7206, 0.0
        %v7223 = vpack.c.bf16 %v4805, %v4802
        %v7224 = vpack.c.bf16 %v4811, %v4808
        %v7225 = vpack.c.bf16 %v4817, %v4814
        %v7226 = vpack.c.bf16 %v4823, %v4820
        %v7227 = vld [vmem:[#allocation12] sm:$0xff]
        %v7228 = vld [vmem:[#allocation12 + $0x8] sm:$0xff]
        %v7229 = vld [vmem:[#allocation12 + $0x10] sm:$0xff]
        %v7230 = vld [vmem:[#allocation12 + $0x18] sm:$0xff]
        %v7231 = vld [vmem:[#allocation12 + $0x20] sm:$0xff]
        %v7232 = vld [vmem:[#allocation12 + $0x28] sm:$0xff]
        %v7233 = vld [vmem:[#allocation12 + $0x30] sm:$0xff]
        %v7234 = vld [vmem:[#allocation12 + $0x38] sm:$0xff]
        %v7235 = vld [vmem:[#allocation12 + $0x40] sm:$0xf]
        %v7236 = vld [vmem:[#allocation12 + $0x44] sm:$0xff]
        %v7237 = vld [vmem:[#allocation12 + $0x4c] sm:$0xff]
        %v7238 = vld [vmem:[#allocation12 + $0x54] sm:$0xff]
        %v7239 = vld [vmem:[#allocation12 + $0x5c] sm:$0xff]
        %v7240 = vld [vmem:[#allocation12 + $0x64] sm:$0xff]
        %v7241 = vld [vmem:[#allocation12 + $0x6c] sm:$0xff]
        %v7242 = vld [vmem:[#allocation12 + $0x74] sm:$0xff]
        %v7243 = vld [vmem:[#allocation12 + $0x7c] sm:$0xff]
        %v7244 = vld [vmem:[#allocation12 + $0x84] sm:$0xf]
        %v7245 = vld [vmem:[#allocation12 + $0x88] sm:$0xff]
        %v7246 = vld [vmem:[#allocation12 + $0x90] sm:$0xff]
        %v7247 = vld [vmem:[#allocation12 + $0x98] sm:$0xff]
        %v7248 = vld [vmem:[#allocation12 + $0xa0] sm:$0xff]
        %v7249 = vld [vmem:[#allocation12 + $0xa8] sm:$0xff]
        %v7250 = vld [vmem:[#allocation12 + $0xb0] sm:$0xff]
        %v7251 = vld [vmem:[#allocation12 + $0xb8] sm:$0xff]
        %v7252 = vld [vmem:[#allocation12 + $0xc0] sm:$0xff]
        %v7253 = vld [vmem:[#allocation12 + $0xc8] sm:$0xf]
        %v7254 = vld [vmem:[#allocation12 + $0xcc] sm:$0xff]
        %v7255 = vld [vmem:[#allocation12 + $0xd4] sm:$0xff]
        %v7256 = vld [vmem:[#allocation12 + $0xdc] sm:$0xff]
        %v7257 = vld [vmem:[#allocation12 + $0xe4] sm:$0xff]
        %v7258 = vld [vmem:[#allocation12 + $0xec] sm:$0xff]
        %v7259 = vld [vmem:[#allocation12 + $0xf4] sm:$0xff]
        %v7260 = vld [vmem:[#allocation12 + $0xfc] sm:$0xff]
        %v7261 = vld [vmem:[#allocation12 + $0x104] sm:$0xff]
        %v7262 = vld [vmem:[#allocation12 + $0x10c] sm:$0xf]
        %v7263 = vld [vmem:[#allocation12 + $0x110] sm:$0xff]
        %v7264 = vld [vmem:[#allocation12 + $0x118] sm:$0xff]
        %v7265 = vld [vmem:[#allocation12 + $0x120] sm:$0xff]
        %v7266 = vld [vmem:[#allocation12 + $0x128] sm:$0xff]
        %v7267 = vld [vmem:[#allocation12 + $0x130] sm:$0xff]
        %v7268 = vld [vmem:[#allocation12 + $0x138] sm:$0xff]
        %v7269 = vld [vmem:[#allocation12 + $0x140] sm:$0xff]
        %v7270 = vld [vmem:[#allocation12 + $0x148] sm:$0xff]
        %v7271 = vld [vmem:[#allocation12 + $0x150] sm:$0xf]
        %v7272 = vld [vmem:[#allocation12 + $0x154] sm:$0xff]
        %v7273 = vld [vmem:[#allocation12 + $0x15c] sm:$0xff]
        %v7274 = vld [vmem:[#allocation12 + $0x164] sm:$0xff]
        %v7275 = vld [vmem:[#allocation12 + $0x16c] sm:$0xff]
        %v7276 = vld [vmem:[#allocation12 + $0x174] sm:$0xff]
        %v7277 = vld [vmem:[#allocation12 + $0x17c] sm:$0xff]
        %v7278 = vld [vmem:[#allocation12 + $0x184] sm:$0xff]
        %v7279 = vld [vmem:[#allocation12 + $0x18c] sm:$0xff]
        %v7280 = vld [vmem:[#allocation12 + $0x194] sm:$0xf]
        %v7281 = vld [vmem:[#allocation12 + $0x198] sm:$0xff]
        %v7282 = vld [vmem:[#allocation12 + $0x1a0] sm:$0xff]
        %v7283 = vld [vmem:[#allocation12 + $0x1a8] sm:$0xff]
        %v7284 = vld [vmem:[#allocation12 + $0x1b0] sm:$0xff]
        %v7285 = vld [vmem:[#allocation12 + $0x1b8] sm:$0xff]
        %v7286 = vld [vmem:[#allocation12 + $0x1c0] sm:$0xff]
        %v7287 = vld [vmem:[#allocation12 + $0x1c8] sm:$0xff]
        %v7288 = vld [vmem:[#allocation12 + $0x1d0] sm:$0xff]
        %v7289 = vld [vmem:[#allocation12 + $0x1d8] sm:$0xf]
        %v7290 = vld [vmem:[#allocation12 + $0x1dc] sm:$0xff]
        %v7291 = vld [vmem:[#allocation12 + $0x1e4] sm:$0xff]
        %v7292 = vld [vmem:[#allocation12 + $0x1ec] sm:$0xff]
        %v7293 = vld [vmem:[#allocation12 + $0x1f4] sm:$0xff]
        %v7294 = vld [vmem:[#allocation12 + $0x1fc] sm:$0xff]
        %v7295 = vld [vmem:[#allocation12 + $0x204] sm:$0xff]
        %v7296 = vld [vmem:[#allocation12 + $0x20c] sm:$0xff]
        %v7297 = vld [vmem:[#allocation12 + $0x214] sm:$0xff]
        %v7298 = vld [vmem:[#allocation12 + $0x21c] sm:$0xf]
        %v7299 = vld [vmem:[#allocation12 + $0x220] sm:$0xff]
        %v7300 = vld [vmem:[#allocation12 + $0x228] sm:$0xff]
        %v7301 = vld [vmem:[#allocation12 + $0x230] sm:$0xff]
        %v7302 = vld [vmem:[#allocation12 + $0x238] sm:$0xff]
        %v7303 = vld [vmem:[#allocation12 + $0x240] sm:$0xff]
        %v7304 = vld [vmem:[#allocation12 + $0x248] sm:$0xff]
        %v7305 = vld [vmem:[#allocation12 + $0x250] sm:$0xff]
        %v7306 = vld [vmem:[#allocation12 + $0x258] sm:$0xff]
        %v7307 = vld [vmem:[#allocation12 + $0x260] sm:$0xf]
        %v7308 = vld [vmem:[#allocation12 + $0x264] sm:$0xff]
        %v7309 = vld [vmem:[#allocation12 + $0x26c] sm:$0xff]
        %v7310 = vld [vmem:[#allocation12 + $0x274] sm:$0xff]
        %v7311 = vld [vmem:[#allocation12 + $0x27c] sm:$0xff]
        %v7312 = vld [vmem:[#allocation12 + $0x284] sm:$0xff]
        %v7313 = vld [vmem:[#allocation12 + $0x28c] sm:$0xff]
        %v7314 = vld [vmem:[#allocation12 + $0x294] sm:$0xff]
        %v7315 = vld [vmem:[#allocation12 + $0x29c] sm:$0xff]
        %v7316 = vld [vmem:[#allocation12 + $0x2a4] sm:$0xf]
        %v7317 = vld [vmem:[#allocation12 + $0x2a8] sm:$0xff]
        %v7318 = vld [vmem:[#allocation12 + $0x2b0] sm:$0xff]
        %v7319 = vld [vmem:[#allocation12 + $0x2b8] sm:$0xff]
        %v7320 = vld [vmem:[#allocation12 + $0x2c0] sm:$0xff]
        %v7321 = vld [vmem:[#allocation12 + $0x2c8] sm:$0xff]
        %v7322 = vld [vmem:[#allocation12 + $0x2d0] sm:$0xff]
        %v7323 = vld [vmem:[#allocation12 + $0x2d8] sm:$0xff]
        %v7324 = vld [vmem:[#allocation12 + $0x2e0] sm:$0xff]
        %v7325 = vld [vmem:[#allocation12 + $0x2e8] sm:$0xf]
        %v7326 = vld [vmem:[#allocation12 + $0x2ec] sm:$0xff]
        %v7327 = vld [vmem:[#allocation12 + $0x2f4] sm:$0xff]
        %v7328 = vld [vmem:[#allocation12 + $0x2fc] sm:$0xff]
        %v7329 = vld [vmem:[#allocation12 + $0x304] sm:$0xff]
        %v7330 = vld [vmem:[#allocation12 + $0x30c] sm:$0xff]
        %v7331 = vld [vmem:[#allocation12 + $0x314] sm:$0xff]
        %v7332 = vld [vmem:[#allocation12 + $0x31c] sm:$0xff]
        %v7333 = vld [vmem:[#allocation12 + $0x324] sm:$0xff]
        %v7334 = vld [vmem:[#allocation12 + $0x32c] sm:$0xf]
        %v7335 = vld [vmem:[#allocation12 + $0x330] sm:$0xff]
        %v7336 = vld [vmem:[#allocation12 + $0x338] sm:$0xff]
        %v7337 = vld [vmem:[#allocation12 + $0x340] sm:$0xff]
        %v7338 = vld [vmem:[#allocation12 + $0x348] sm:$0xff]
        %v7339 = vld [vmem:[#allocation12 + $0x350] sm:$0xff]
        %v7340 = vld [vmem:[#allocation12 + $0x358] sm:$0xff]
        %v7341 = vld [vmem:[#allocation12 + $0x360] sm:$0xff]
        %v7342 = vld [vmem:[#allocation12 + $0x368] sm:$0xff]
        %v7343 = vld [vmem:[#allocation12 + $0x370] sm:$0xf]
        %v7344 = vld [vmem:[#allocation12 + $0x374] sm:$0xff]
        %v7345 = vld [vmem:[#allocation12 + $0x37c] sm:$0xff]
        %v7346 = vld [vmem:[#allocation12 + $0x384] sm:$0xff]
        %v7347 = vld [vmem:[#allocation12 + $0x38c] sm:$0xff]
        %v7348 = vld [vmem:[#allocation12 + $0x394] sm:$0xff]
        %v7349 = vld [vmem:[#allocation12 + $0x39c] sm:$0xff]
        %v7350 = vld [vmem:[#allocation12 + $0x3a4] sm:$0xff]
        %v7351 = vld [vmem:[#allocation12 + $0x3ac] sm:$0xff]
        %v7352 = vld [vmem:[#allocation12 + $0x3b4] sm:$0xf]
        %v7353 = vld [vmem:[#allocation12 + $0x3b8] sm:$0xff]
        %v7354 = vld [vmem:[#allocation12 + $0x3c0] sm:$0xff]
        %v7355 = vld [vmem:[#allocation12 + $0x3c8] sm:$0xff]
        %v7356 = vld [vmem:[#allocation12 + $0x3d0] sm:$0xff]
        %v7357 = vld [vmem:[#allocation12 + $0x3d8] sm:$0xff]
        %v7358 = vld [vmem:[#allocation12 + $0x3e0] sm:$0xff]
        %v7359 = vld [vmem:[#allocation12 + $0x3e8] sm:$0xff]
        %v7360 = vld [vmem:[#allocation12 + $0x3f0] sm:$0xff]
        %v7361 = vld [vmem:[#allocation12 + $0x3f8] sm:$0xf]
        %v7362 = vld [vmem:[#allocation12 + $0x3fc] sm:$0xff]
        %v7363 = vld [vmem:[#allocation12 + $0x404] sm:$0xff]
        %v7364 = vld [vmem:[#allocation12 + $0x40c] sm:$0xff]
        %v7365 = vld [vmem:[#allocation12 + $0x414] sm:$0xff]
        %v7366 = vld [vmem:[#allocation12 + $0x41c] sm:$0xff]
        %v7367 = vld [vmem:[#allocation12 + $0x424] sm:$0xff]
        %v7368 = vld [vmem:[#allocation12 + $0x42c] sm:$0xff]
        %v7369 = vld [vmem:[#allocation12 + $0x434] sm:$0xff]
        %v7370 = vld [vmem:[#allocation12 + $0x43c] sm:$0xf]
        %v7371 = vld [vmem:[#allocation12 + $0x440] sm:$0xff]
        %v7372 = vld [vmem:[#allocation12 + $0x448] sm:$0xff]
        %v7373 = vld [vmem:[#allocation12 + $0x450] sm:$0xff]
        %v7374 = vld [vmem:[#allocation12 + $0x458] sm:$0xff]
        %v7375 = vld [vmem:[#allocation12 + $0x460] sm:$0xff]
        %v7376 = vld [vmem:[#allocation12 + $0x468] sm:$0xff]
        %v7377 = vld [vmem:[#allocation12 + $0x470] sm:$0xff]
        %v7378 = vld [vmem:[#allocation12 + $0x478] sm:$0xff]
        %v7379 = vld [vmem:[#allocation12 + $0x480] sm:$0xf]
        %v7380 = vld [vmem:[#allocation12 + $0x484] sm:$0xff]
        %v7381 = vld [vmem:[#allocation12 + $0x48c] sm:$0xff]
        %v7382 = vld [vmem:[#allocation12 + $0x494] sm:$0xff]
        %v7383 = vld [vmem:[#allocation12 + $0x49c] sm:$0xff]
        %v7384 = vld [vmem:[#allocation12 + $0x4a4] sm:$0xff]
        %v7385 = vld [vmem:[#allocation12 + $0x4ac] sm:$0xff]
        %v7386 = vld [vmem:[#allocation12 + $0x4b4] sm:$0xff]
        %v7387 = vld [vmem:[#allocation12 + $0x4bc] sm:$0xff]
        %v7388 = vld [vmem:[#allocation12 + $0x4c4] sm:$0xf]
        %v7389 = vld [vmem:[#allocation12 + $0x4c8] sm:$0xff]
        %v7390 = vld [vmem:[#allocation12 + $0x4d0] sm:$0xff]
        %v7391 = vld [vmem:[#allocation12 + $0x4d8] sm:$0xff]
        %v7392 = vld [vmem:[#allocation12 + $0x4e0] sm:$0xff]
        %v7393 = vld [vmem:[#allocation12 + $0x4e8] sm:$0xff]
        %v7394 = vld [vmem:[#allocation12 + $0x4f0] sm:$0xff]
        %v7395 = vld [vmem:[#allocation12 + $0x4f8] sm:$0xff]
        %v7396 = vld [vmem:[#allocation12 + $0x500] sm:$0xff]
        %v7397 = vld [vmem:[#allocation12 + $0x508] sm:$0xf]
        %v7398 = vld [vmem:[#allocation12 + $0x50c] sm:$0xff]
        %v7399 = vld [vmem:[#allocation12 + $0x514] sm:$0xff]
        %v7400 = vld [vmem:[#allocation12 + $0x51c] sm:$0xff]
        %v7401 = vld [vmem:[#allocation12 + $0x524] sm:$0xff]
        %v7402 = vld [vmem:[#allocation12 + $0x52c] sm:$0xff]
        %v7403 = vld [vmem:[#allocation12 + $0x534] sm:$0xff]
        %v7404 = vld [vmem:[#allocation12 + $0x53c] sm:$0xff]
        %v7405 = vld [vmem:[#allocation12 + $0x544] sm:$0xff]
        %v7406 = vld [vmem:[#allocation12 + $0x54c] sm:$0xf]
        %v7407 = vld [vmem:[#allocation12 + $0x550] sm:$0xff]
        %v7408 = vld [vmem:[#allocation12 + $0x558] sm:$0xff]
        %v7409 = vld [vmem:[#allocation12 + $0x560] sm:$0xff]
        %v7410 = vld [vmem:[#allocation12 + $0x568] sm:$0xff]
        %v7411 = vld [vmem:[#allocation12 + $0x570] sm:$0xff]
        %v7412 = vld [vmem:[#allocation12 + $0x578] sm:$0xff]
        %v7413 = vld [vmem:[#allocation12 + $0x580] sm:$0xff]
        %v7414 = vld [vmem:[#allocation12 + $0x588] sm:$0xff]
        %v7415 = vld [vmem:[#allocation12 + $0x590] sm:$0xf]
        %v7416 = vld [vmem:[#allocation12 + $0x594] sm:$0xff]
        %v7417 = vld [vmem:[#allocation12 + $0x59c] sm:$0xff]
        %v7418 = vld [vmem:[#allocation12 + $0x5a4] sm:$0xff]
        %v7419 = vld [vmem:[#allocation12 + $0x5ac] sm:$0xff]
        %v7420 = vld [vmem:[#allocation12 + $0x5b4] sm:$0xff]
        %v7421 = vld [vmem:[#allocation12 + $0x5bc] sm:$0xff]
        %v7422 = vld [vmem:[#allocation12 + $0x5c4] sm:$0xff]
        %v7423 = vld [vmem:[#allocation12 + $0x5cc] sm:$0xff]
        %v7424 = vld [vmem:[#allocation12 + $0x5d4] sm:$0xf]
        %v7425 = vld [vmem:[#allocation12 + $0x5d8] sm:$0xff]
        %v7426 = vld [vmem:[#allocation12 + $0x5e0] sm:$0xff]
        %v7427 = vld [vmem:[#allocation12 + $0x5e8] sm:$0xff]
        %v7428 = vld [vmem:[#allocation12 + $0x5f0] sm:$0xff]
        %v7429 = vld [vmem:[#allocation12 + $0x5f8] sm:$0xff]
        %v7430 = vld [vmem:[#allocation12 + $0x600] sm:$0xff]
        %v7431 = vld [vmem:[#allocation12 + $0x608] sm:$0xff]
        %v7432 = vld [vmem:[#allocation12 + $0x610] sm:$0xff]
        %v7433 = vld [vmem:[#allocation12 + $0x618] sm:$0xf]
        %v7434 = vld [vmem:[#allocation12 + $0x61c] sm:$0xff]
        %v7435 = vld [vmem:[#allocation12 + $0x624] sm:$0xff]
        %v7436 = vld [vmem:[#allocation12 + $0x62c] sm:$0xff]
        %v7437 = vld [vmem:[#allocation12 + $0x634] sm:$0xff]
        %v7438 = vld [vmem:[#allocation12 + $0x63c] sm:$0xff]
        %v7439 = vld [vmem:[#allocation12 + $0x644] sm:$0xff]
        %v7440 = vld [vmem:[#allocation12 + $0x64c] sm:$0xff]
        %v7441 = vld [vmem:[#allocation12 + $0x654] sm:$0xff]
        %v7442 = vld [vmem:[#allocation12 + $0x65c] sm:$0xf]
        %v7443 = vpack.c.bf16 %v7209, %v7207
        %v7444 = vpack.c.bf16 %v7210, %v7208
        %v7445 = vpack.c.bf16 %v7213, %v7211
        %v7446 = vpack.c.bf16 %v7214, %v7212
        %v7447 = vpack.c.bf16 %v7217, %v7215
        %v7448 = vpack.c.bf16 %v7218, %v7216
        %v7449 = vpack.c.bf16 %v7221, %v7219
        %v7450 = vpack.c.bf16 %v7222, %v7220
        %v7451 = vld [vmem:[%s8] sm:$0xff]
        %v7452 = vld [vmem:[%s8 + $0x8] sm:$0xff]
        %v7453 = vld [vmem:[%s8 + $0x10] sm:$0xff]
        %v7454 = vld [vmem:[%s8 + $0x18] sm:$0xff]
        %v7455 = vld [vmem:[%s8 + $0x20] sm:$0xff]
        %v7456 = vld [vmem:[%s8 + $0x28] sm:$0xff]
        %v7457 = vld [vmem:[%s8 + $0x30] sm:$0xff]
        %v7458 = vld [vmem:[%s8 + $0x38] sm:$0xff]
        %v7459 = vld [vmem:[%s8 + $0x40] sm:$0xf]
        %v7460 = vld [vmem:[%s8 + $0x44] sm:$0xff]
        %v7461 = vld [vmem:[%s8 + $0x4c] sm:$0xff]
        %v7462 = vld [vmem:[%s8 + $0x54] sm:$0xff]
        %v7463 = vld [vmem:[%s8 + $0x5c] sm:$0xff]
        %v7464 = vld [vmem:[%s8 + $0x64] sm:$0xff]
        %v7465 = vld [vmem:[%s8 + $0x6c] sm:$0xff]
        %v7466 = vld [vmem:[%s8 + $0x74] sm:$0xff]
        %v7467 = vld [vmem:[%s8 + $0x7c] sm:$0xff]
        %v7468 = vld [vmem:[%s8 + $0x84] sm:$0xf]
        %v7469 = vld [vmem:[%s8 + $0x88] sm:$0xff]
        %v7470 = vld [vmem:[%s8 + $0x90] sm:$0xff]
        %v7471 = vld [vmem:[%s8 + $0x98] sm:$0xff]
        %v7472 = vld [vmem:[%s8 + $0xa0] sm:$0xff]
        %v7473 = vld [vmem:[%s8 + $0xa8] sm:$0xff]
        %v7474 = vld [vmem:[%s8 + $0xb0] sm:$0xff]
        %v7475 = vld [vmem:[%s8 + $0xb8] sm:$0xff]
        %v7476 = vld [vmem:[%s8 + $0xc0] sm:$0xff]
        %v7477 = vld [vmem:[%s8 + $0xc8] sm:$0xf]
        %v7478 = vld [vmem:[%s8 + $0xcc] sm:$0xff]
        %v7479 = vld [vmem:[%s8 + $0xd4] sm:$0xff]
        %v7480 = vld [vmem:[%s8 + $0xdc] sm:$0xff]
        %v7481 = vld [vmem:[%s8 + $0xe4] sm:$0xff]
        %v7482 = vld [vmem:[%s8 + $0xec] sm:$0xff]
        %v7483 = vld [vmem:[%s8 + $0xf4] sm:$0xff]
        %v7484 = vld [vmem:[%s8 + $0xfc] sm:$0xff]
        %v7485 = vld [vmem:[%s8 + $0x104] sm:$0xff]
        %v7486 = vld [vmem:[%s8 + $0x10c] sm:$0xf]
        %v7487 = vld [vmem:[%s8 + $0x110] sm:$0xff]
        %v7488 = vld [vmem:[%s8 + $0x118] sm:$0xff]
        %v7489 = vld [vmem:[%s8 + $0x120] sm:$0xff]
        %v7490 = vld [vmem:[%s8 + $0x128] sm:$0xff]
        %v7491 = vld [vmem:[%s8 + $0x130] sm:$0xff]
        %v7492 = vld [vmem:[%s8 + $0x138] sm:$0xff]
        %v7493 = vld [vmem:[%s8 + $0x140] sm:$0xff]
        %v7494 = vld [vmem:[%s8 + $0x148] sm:$0xff]
        %v7495 = vld [vmem:[%s8 + $0x150] sm:$0xf]
        %v7496 = vld [vmem:[%s8 + $0x154] sm:$0xff]
        %v7497 = vld [vmem:[%s8 + $0x15c] sm:$0xff]
        %v7498 = vld [vmem:[%s8 + $0x164] sm:$0xff]
        %v7499 = vld [vmem:[%s8 + $0x16c] sm:$0xff]
        %v7500 = vld [vmem:[%s8 + $0x174] sm:$0xff]
        %v7501 = vld [vmem:[%s8 + $0x17c] sm:$0xff]
        %v7502 = vld [vmem:[%s8 + $0x184] sm:$0xff]
        %v7503 = vld [vmem:[%s8 + $0x18c] sm:$0xff]
        %v7504 = vld [vmem:[%s8 + $0x194] sm:$0xf]
        %v7505 = vld [vmem:[%s8 + $0x198] sm:$0xff]
        %v7506 = vld [vmem:[%s8 + $0x1a0] sm:$0xff]
        %v7507 = vld [vmem:[%s8 + $0x1a8] sm:$0xff]
        %v7508 = vld [vmem:[%s8 + $0x1b0] sm:$0xff]
        %v7509 = vld [vmem:[%s8 + $0x1b8] sm:$0xff]
        %v7510 = vld [vmem:[%s8 + $0x1c0] sm:$0xff]
        %v7511 = vld [vmem:[%s8 + $0x1c8] sm:$0xff]
        %v7512 = vld [vmem:[%s8 + $0x1d0] sm:$0xff]
        %v7513 = vld [vmem:[%s8 + $0x1d8] sm:$0xf]
        %v7514 = vld [vmem:[%s8 + $0x1dc] sm:$0xff]
        %v7515 = vld [vmem:[%s8 + $0x1e4] sm:$0xff]
        %v7516 = vld [vmem:[%s8 + $0x1ec] sm:$0xff]
        %v7517 = vld [vmem:[%s8 + $0x1f4] sm:$0xff]
        %v7518 = vld [vmem:[%s8 + $0x1fc] sm:$0xff]
        %v7519 = vld [vmem:[%s8 + $0x204] sm:$0xff]
        %v7520 = vld [vmem:[%s8 + $0x20c] sm:$0xff]
        %v7521 = vld [vmem:[%s8 + $0x214] sm:$0xff]
        %v7522 = vld [vmem:[%s8 + $0x21c] sm:$0xf]
        %v7523 = vld [vmem:[%s8 + $0x220] sm:$0xff]
        %v7524 = vld [vmem:[%s8 + $0x228] sm:$0xff]
        %v7525 = vld [vmem:[%s8 + $0x230] sm:$0xff]
        %v7526 = vld [vmem:[%s8 + $0x238] sm:$0xff]
        %v7527 = vld [vmem:[%s8 + $0x240] sm:$0xff]
        %v7528 = vld [vmem:[%s8 + $0x248] sm:$0xff]
        %v7529 = vld [vmem:[%s8 + $0x250] sm:$0xff]
        %v7530 = vld [vmem:[%s8 + $0x258] sm:$0xff]
        %v7531 = vld [vmem:[%s8 + $0x260] sm:$0xf]
        %v7532 = vld [vmem:[%s8 + $0x264] sm:$0xff]
        %v7533 = vld [vmem:[%s8 + $0x26c] sm:$0xff]
        %v7534 = vld [vmem:[%s8 + $0x274] sm:$0xff]
        %v7535 = vld [vmem:[%s8 + $0x27c] sm:$0xff]
        %v7536 = vld [vmem:[%s8 + $0x284] sm:$0xff]
        %v7537 = vld [vmem:[%s8 + $0x28c] sm:$0xff]
        %v7538 = vld [vmem:[%s8 + $0x294] sm:$0xff]
        %v7539 = vld [vmem:[%s8 + $0x29c] sm:$0xff]
        %v7540 = vld [vmem:[%s8 + $0x2a4] sm:$0xf]
        %v7541 = vld [vmem:[%s8 + $0x2a8] sm:$0xff]
        %v7542 = vld [vmem:[%s8 + $0x2b0] sm:$0xff]
        %v7543 = vld [vmem:[%s8 + $0x2b8] sm:$0xff]
        %v7544 = vld [vmem:[%s8 + $0x2c0] sm:$0xff]
        %v7545 = vld [vmem:[%s8 + $0x2c8] sm:$0xff]
        %v7546 = vld [vmem:[%s8 + $0x2d0] sm:$0xff]
        %v7547 = vld [vmem:[%s8 + $0x2d8] sm:$0xff]
        %v7548 = vld [vmem:[%s8 + $0x2e0] sm:$0xff]
        %v7549 = vld [vmem:[%s8 + $0x2e8] sm:$0xf]
        %v7550 = vld [vmem:[%s8 + $0x2ec] sm:$0xff]
        %v7551 = vld [vmem:[%s8 + $0x2f4] sm:$0xff]
        %v7552 = vld [vmem:[%s8 + $0x2fc] sm:$0xff]
        %v7553 = vld [vmem:[%s8 + $0x304] sm:$0xff]
        %v7554 = vld [vmem:[%s8 + $0x30c] sm:$0xff]
        %v7555 = vld [vmem:[%s8 + $0x314] sm:$0xff]
        %v7556 = vld [vmem:[%s8 + $0x31c] sm:$0xff]
        %v7557 = vld [vmem:[%s8 + $0x324] sm:$0xff]
        %v7558 = vld [vmem:[%s8 + $0x32c] sm:$0xf]
        %v7559 = vld [vmem:[%s8 + $0x330] sm:$0xff]
        %v7560 = vld [vmem:[%s8 + $0x338] sm:$0xff]
        %v7561 = vld [vmem:[%s8 + $0x340] sm:$0xff]
        %v7562 = vld [vmem:[%s8 + $0x348] sm:$0xff]
        %v7563 = vld [vmem:[%s8 + $0x350] sm:$0xff]
        %v7564 = vld [vmem:[%s8 + $0x358] sm:$0xff]
        %v7565 = vld [vmem:[%s8 + $0x360] sm:$0xff]
        %v7566 = vld [vmem:[%s8 + $0x368] sm:$0xff]
        %v7567 = vld [vmem:[%s8 + $0x370] sm:$0xf]
        %v7568 = vld [vmem:[%s8 + $0x374] sm:$0xff]
        %v7569 = vld [vmem:[%s8 + $0x37c] sm:$0xff]
        %v7570 = vld [vmem:[%s8 + $0x384] sm:$0xff]
        %v7571 = vld [vmem:[%s8 + $0x38c] sm:$0xff]
        %v7572 = vld [vmem:[%s8 + $0x394] sm:$0xff]
        %v7573 = vld [vmem:[%s8 + $0x39c] sm:$0xff]
        %v7574 = vld [vmem:[%s8 + $0x3a4] sm:$0xff]
        %v7575 = vld [vmem:[%s8 + $0x3ac] sm:$0xff]
        %v7576 = vld [vmem:[%s8 + $0x3b4] sm:$0xf]
        %v7577 = vld [vmem:[%s8 + $0x3b8] sm:$0xff]
        %v7578 = vld [vmem:[%s8 + $0x3c0] sm:$0xff]
        %v7579 = vld [vmem:[%s8 + $0x3c8] sm:$0xff]
        %v7580 = vld [vmem:[%s8 + $0x3d0] sm:$0xff]
        %v7581 = vld [vmem:[%s8 + $0x3d8] sm:$0xff]
        %v7582 = vld [vmem:[%s8 + $0x3e0] sm:$0xff]
        %v7583 = vld [vmem:[%s8 + $0x3e8] sm:$0xff]
        %v7584 = vld [vmem:[%s8 + $0x3f0] sm:$0xff]
        %v7585 = vld [vmem:[%s8 + $0x3f8] sm:$0xf]
        %v7586 = vld [vmem:[%s8 + $0x3fc] sm:$0xff]
        %v7587 = vld [vmem:[%s8 + $0x404] sm:$0xff]
        %v7588 = vld [vmem:[%s8 + $0x40c] sm:$0xff]
        %v7589 = vld [vmem:[%s8 + $0x414] sm:$0xff]
        %v7590 = vld [vmem:[%s8 + $0x41c] sm:$0xff]
        %v7591 = vld [vmem:[%s8 + $0x424] sm:$0xff]
        %v7592 = vld [vmem:[%s8 + $0x42c] sm:$0xff]
        %v7593 = vld [vmem:[%s8 + $0x434] sm:$0xff]
        %v7594 = vld [vmem:[%s8 + $0x43c] sm:$0xf]
        %v7595 = vld [vmem:[%s8 + $0x440] sm:$0xff]
        %v7596 = vld [vmem:[%s8 + $0x448] sm:$0xff]
        %v7597 = vld [vmem:[%s8 + $0x450] sm:$0xff]
        %v7598 = vld [vmem:[%s8 + $0x458] sm:$0xff]
        %v7599 = vld [vmem:[%s8 + $0x460] sm:$0xff]
        %v7600 = vld [vmem:[%s8 + $0x468] sm:$0xff]
        %v7601 = vld [vmem:[%s8 + $0x470] sm:$0xff]
        %v7602 = vld [vmem:[%s8 + $0x478] sm:$0xff]
        %v7603 = vld [vmem:[%s8 + $0x480] sm:$0xf]
        %v7604 = vld [vmem:[%s8 + $0x484] sm:$0xff]
        %v7605 = vld [vmem:[%s8 + $0x48c] sm:$0xff]
        %v7606 = vld [vmem:[%s8 + $0x494] sm:$0xff]
        %v7607 = vld [vmem:[%s8 + $0x49c] sm:$0xff]
        %v7608 = vld [vmem:[%s8 + $0x4a4] sm:$0xff]
        %v7609 = vld [vmem:[%s8 + $0x4ac] sm:$0xff]
        %v7610 = vld [vmem:[%s8 + $0x4b4] sm:$0xff]
        %v7611 = vld [vmem:[%s8 + $0x4bc] sm:$0xff]
        %v7612 = vld [vmem:[%s8 + $0x4c4] sm:$0xf]
        %v7613 = vld [vmem:[%s8 + $0x4c8] sm:$0xff]
        %v7614 = vld [vmem:[%s8 + $0x4d0] sm:$0xff]
        %v7615 = vld [vmem:[%s8 + $0x4d8] sm:$0xff]
        %v7616 = vld [vmem:[%s8 + $0x4e0] sm:$0xff]
        %v7617 = vld [vmem:[%s8 + $0x4e8] sm:$0xff]
        %v7618 = vld [vmem:[%s8 + $0x4f0] sm:$0xff]
        %v7619 = vld [vmem:[%s8 + $0x4f8] sm:$0xff]
        %v7620 = vld [vmem:[%s8 + $0x500] sm:$0xff]
        %v7621 = vld [vmem:[%s8 + $0x508] sm:$0xf]
        %v7622 = vld [vmem:[%s8 + $0x50c] sm:$0xff]
        %v7623 = vld [vmem:[%s8 + $0x514] sm:$0xff]
        %v7624 = vld [vmem:[%s8 + $0x51c] sm:$0xff]
        %v7625 = vld [vmem:[%s8 + $0x524] sm:$0xff]
        %v7626 = vld [vmem:[%s8 + $0x52c] sm:$0xff]
        %v7627 = vld [vmem:[%s8 + $0x534] sm:$0xff]
        %v7628 = vld [vmem:[%s8 + $0x53c] sm:$0xff]
        %v7629 = vld [vmem:[%s8 + $0x544] sm:$0xff]
        %v7630 = vld [vmem:[%s8 + $0x54c] sm:$0xf]
        %v7631 = vld [vmem:[%s8 + $0x550] sm:$0xff]
        %v7632 = vld [vmem:[%s8 + $0x558] sm:$0xff]
        %v7633 = vld [vmem:[%s8 + $0x560] sm:$0xff]
        %v7634 = vld [vmem:[%s8 + $0x568] sm:$0xff]
        %v7635 = vld [vmem:[%s8 + $0x570] sm:$0xff]
        %v7636 = vld [vmem:[%s8 + $0x578] sm:$0xff]
        %v7637 = vld [vmem:[%s8 + $0x580] sm:$0xff]
        %v7638 = vld [vmem:[%s8 + $0x588] sm:$0xff]
        %v7639 = vld [vmem:[%s8 + $0x590] sm:$0xf]
        %v7640 = vld [vmem:[%s8 + $0x594] sm:$0xff]
        %v7641 = vld [vmem:[%s8 + $0x59c] sm:$0xff]
        %v7642 = vld [vmem:[%s8 + $0x5a4] sm:$0xff]
        %v7643 = vld [vmem:[%s8 + $0x5ac] sm:$0xff]
        %v7644 = vld [vmem:[%s8 + $0x5b4] sm:$0xff]
        %v7645 = vld [vmem:[%s8 + $0x5bc] sm:$0xff]
        %v7646 = vld [vmem:[%s8 + $0x5c4] sm:$0xff]
        %v7647 = vld [vmem:[%s8 + $0x5cc] sm:$0xff]
        %v7648 = vld [vmem:[%s8 + $0x5d4] sm:$0xf]
        %v7649 = vld [vmem:[%s8 + $0x5d8] sm:$0xff]
        %v7650 = vld [vmem:[%s8 + $0x5e0] sm:$0xff]
        %v7651 = vld [vmem:[%s8 + $0x5e8] sm:$0xff]
        %v7652 = vld [vmem:[%s8 + $0x5f0] sm:$0xff]
        %v7653 = vld [vmem:[%s8 + $0x5f8] sm:$0xff]
        %v7654 = vld [vmem:[%s8 + $0x600] sm:$0xff]
        %v7655 = vld [vmem:[%s8 + $0x608] sm:$0xff]
        %v7656 = vld [vmem:[%s8 + $0x610] sm:$0xff]
        %v7657 = vld [vmem:[%s8 + $0x618] sm:$0xf]
        %v7658 = vld [vmem:[%s8 + $0x61c] sm:$0xff]
        %v7659 = vld [vmem:[%s8 + $0x624] sm:$0xff]
        %v7660 = vld [vmem:[%s8 + $0x62c] sm:$0xff]
        %v7661 = vld [vmem:[%s8 + $0x634] sm:$0xff]
        %v7662 = vld [vmem:[%s8 + $0x63c] sm:$0xff]
        %v7663 = vld [vmem:[%s8 + $0x644] sm:$0xff]
        %v7664 = vld [vmem:[%s8 + $0x64c] sm:$0xff]
        %v7665 = vld [vmem:[%s8 + $0x654] sm:$0xff]
        %v7666 = vld [vmem:[%s8 + $0x65c] sm:$0xf]
        %v7667 = vld [vmem:[%s8 + $0x660] sm:$0xff]
        %v7668 = vld [vmem:[%s8 + $0x668] sm:$0xff]
        %v7669 = vld [vmem:[%s8 + $0x670] sm:$0xff]
        %v7670 = vld [vmem:[%s8 + $0x678] sm:$0xff]
        %v7671 = vld [vmem:[%s8 + $0x680] sm:$0xff]
        %v7672 = vld [vmem:[%s8 + $0x688] sm:$0xff]
        %v7673 = vld [vmem:[%s8 + $0x690] sm:$0xff]
        %v7674 = vld [vmem:[%s8 + $0x698] sm:$0xff]
        %v7675 = vld [vmem:[%s8 + $0x6a0] sm:$0xf]
        %v7676 = vld [vmem:[%s8 + $0x6a4] sm:$0xff]
        %v7677 = vld [vmem:[%s8 + $0x6ac] sm:$0xff]
        %v7678 = vld [vmem:[%s8 + $0x6b4] sm:$0xff]
        %v7679 = vld [vmem:[%s8 + $0x6bc] sm:$0xff]
        %v7680 = vld [vmem:[%s8 + $0x6c4] sm:$0xff]
        %v7681 = vld [vmem:[%s8 + $0x6cc] sm:$0xff]
        %v7682 = vld [vmem:[%s8 + $0x6d4] sm:$0xff]
        %v7683 = vld [vmem:[%s8 + $0x6dc] sm:$0xff]
        %v7684 = vld [vmem:[%s8 + $0x6e4] sm:$0xf]
        %v7685 = vld [vmem:[%s8 + $0x6e8] sm:$0xff]
        %v7686 = vld [vmem:[%s8 + $0x6f0] sm:$0xff]
        %v7687 = vld [vmem:[%s8 + $0x6f8] sm:$0xff]
        %v7688 = vld [vmem:[%s8 + $0x700] sm:$0xff]
        %v7689 = vld [vmem:[%s8 + $0x708] sm:$0xff]
        %v7690 = vld [vmem:[%s8 + $0x710] sm:$0xff]
        %v7691 = vld [vmem:[%s8 + $0x718] sm:$0xff]
        %v7692 = vld [vmem:[%s8 + $0x720] sm:$0xff]
        %v7693 = vld [vmem:[%s8 + $0x728] sm:$0xf]
        %v7694 = vld [vmem:[%s8 + $0x72c] sm:$0xff]
        %v7695 = vld [vmem:[%s8 + $0x734] sm:$0xff]
        %v7696 = vld [vmem:[%s8 + $0x73c] sm:$0xff]
        %v7697 = vld [vmem:[%s8 + $0x744] sm:$0xff]
        %v7698 = vld [vmem:[%s8 + $0x74c] sm:$0xff]
        %v7699 = vld [vmem:[%s8 + $0x754] sm:$0xff]
        %v7700 = vld [vmem:[%s8 + $0x75c] sm:$0xff]
        %v7701 = vld [vmem:[%s8 + $0x764] sm:$0xff]
        %v7702 = vld [vmem:[%s8 + $0x76c] sm:$0xf]
        %v7703 = vld [vmem:[%s8 + $0x770] sm:$0xff]
        %v7704 = vld [vmem:[%s8 + $0x778] sm:$0xff]
        %v7705 = vld [vmem:[%s8 + $0x780] sm:$0xff]
        %v7706 = vld [vmem:[%s8 + $0x788] sm:$0xff]
        %v7707 = vld [vmem:[%s8 + $0x790] sm:$0xff]
        %v7708 = vld [vmem:[%s8 + $0x798] sm:$0xff]
        %v7709 = vld [vmem:[%s8 + $0x7a0] sm:$0xff]
        %v7710 = vld [vmem:[%s8 + $0x7a8] sm:$0xff]
        %v7711 = vld [vmem:[%s8 + $0x7b0] sm:$0xf]
        %v7712 = vld [vmem:[%s8 + $0x7b4] sm:$0xff]
        %v7713 = vld [vmem:[%s8 + $0x7bc] sm:$0xff]
        %v7714 = vld [vmem:[%s8 + $0x7c4] sm:$0xff]
        %v7715 = vld [vmem:[%s8 + $0x7cc] sm:$0xff]
        %v7716 = vld [vmem:[%s8 + $0x7d4] sm:$0xff]
        %v7717 = vld [vmem:[%s8 + $0x7dc] sm:$0xff]
        %v7718 = vld [vmem:[%s8 + $0x7e4] sm:$0xff]
        %v7719 = vld [vmem:[%s8 + $0x7ec] sm:$0xff]
        %v7720 = vld [vmem:[%s8 + $0x7f4] sm:$0xf]
        %v7721 = vld [vmem:[%s8 + $0x7f8] sm:$0xff]
        %v7722 = vld [vmem:[%s8 + $0x800] sm:$0xff]
        %v7723 = vld [vmem:[%s8 + $0x808] sm:$0xff]
        %v7724 = vld [vmem:[%s8 + $0x810] sm:$0xff]
        %v7725 = vld [vmem:[%s8 + $0x818] sm:$0xff]
        %v7726 = vld [vmem:[%s8 + $0x820] sm:$0xff]
        %v7727 = vld [vmem:[%s8 + $0x828] sm:$0xff]
        %v7728 = vld [vmem:[%s8 + $0x830] sm:$0xff]
        %v7729 = vld [vmem:[%s8 + $0x838] sm:$0xf]
        %v7730 = vld [vmem:[%s8 + $0x83c] sm:$0xff]
        %v7731 = vld [vmem:[%s8 + $0x844] sm:$0xff]
        %v7732 = vld [vmem:[%s8 + $0x84c] sm:$0xff]
        %v7733 = vld [vmem:[%s8 + $0x854] sm:$0xff]
        %v7734 = vld [vmem:[%s8 + $0x85c] sm:$0xff]
        %v7735 = vld [vmem:[%s8 + $0x864] sm:$0xff]
        %v7736 = vld [vmem:[%s8 + $0x86c] sm:$0xff]
        %v7737 = vld [vmem:[%s8 + $0x874] sm:$0xff]
        %v7738 = vld [vmem:[%s8 + $0x87c] sm:$0xf]
        %v8027 = vunpack.c.l.b16 %v7451
        %v8028 = vunpack.c.h.b16 %v7451
        %v8029 = vunpack.c.l.b16 %v7452
        %v8030 = vunpack.c.h.b16 %v7452
        %v8031 = vunpack.c.l.b16 %v7453
        %v8032 = vunpack.c.h.b16 %v7453
        %v8033 = vunpack.c.l.b16 %v7454
        %v8034 = vunpack.c.h.b16 %v7454
        %v8035 = vunpack.c.l.b16 %v7455
        %v8036 = vunpack.c.h.b16 %v7455
        %v8037 = vunpack.c.l.b16 %v7456
        %v8038 = vunpack.c.h.b16 %v7456
        %v8039 = vunpack.c.l.b16 %v7457
        %v8040 = vunpack.c.h.b16 %v7457
        %v8041 = vunpack.c.l.b16 %v7458
        %v8042 = vunpack.c.h.b16 %v7458
        %v8043 = vunpack.c.l.b16 %v7459
        %v8044 = vunpack.c.l.b16 %v7460
        %v8045 = vunpack.c.h.b16 %v7460
        %v8046 = vunpack.c.l.b16 %v7461
        %v8047 = vunpack.c.h.b16 %v7461
        %v8048 = vunpack.c.l.b16 %v7462
        %v8049 = vunpack.c.h.b16 %v7462
        %v8050 = vunpack.c.l.b16 %v7463
        %v8051 = vunpack.c.h.b16 %v7463
        %v8052 = vunpack.c.l.b16 %v7464
        %v8053 = vunpack.c.h.b16 %v7464
        %v8054 = vunpack.c.l.b16 %v7465
        %v8055 = vunpack.c.h.b16 %v7465
        %v8056 = vunpack.c.l.b16 %v7466
        %v8057 = vunpack.c.h.b16 %v7466
        %v8058 = vunpack.c.l.b16 %v7467
        %v8059 = vunpack.c.h.b16 %v7467
        %v8060 = vunpack.c.l.b16 %v7468
        %v8061 = vunpack.c.l.b16 %v7469
        %v8062 = vunpack.c.h.b16 %v7469
        %v8063 = vunpack.c.l.b16 %v7470
        %v8064 = vunpack.c.h.b16 %v7470
        %v8065 = vunpack.c.l.b16 %v7471
        %v8066 = vunpack.c.h.b16 %v7471
        %v8067 = vunpack.c.l.b16 %v7472
        %v8068 = vunpack.c.h.b16 %v7472
        %v8069 = vunpack.c.l.b16 %v7473
        %v8070 = vunpack.c.h.b16 %v7473
        %v8071 = vunpack.c.l.b16 %v7474
        %v8072 = vunpack.c.h.b16 %v7474
        %v8073 = vunpack.c.l.b16 %v7475
        %v8074 = vunpack.c.h.b16 %v7475
        %v8075 = vunpack.c.l.b16 %v7476
        %v8076 = vunpack.c.h.b16 %v7476
        %v8077 = vunpack.c.l.b16 %v7477
        %v8078 = vunpack.c.l.b16 %v7478
        %v8079 = vunpack.c.h.b16 %v7478
        %v8080 = vunpack.c.l.b16 %v7479
        %v8081 = vunpack.c.h.b16 %v7479
        %v8082 = vunpack.c.l.b16 %v7480
        %v8083 = vunpack.c.h.b16 %v7480
        %v8084 = vunpack.c.l.b16 %v7481
        %v8085 = vunpack.c.h.b16 %v7481
        %v8086 = vunpack.c.l.b16 %v7482
        %v8087 = vunpack.c.h.b16 %v7482
        %v8088 = vunpack.c.l.b16 %v7483
        %v8089 = vunpack.c.h.b16 %v7483
        %v8090 = vunpack.c.l.b16 %v7484
        %v8091 = vunpack.c.h.b16 %v7484
        %v8092 = vunpack.c.l.b16 %v7485
        %v8093 = vunpack.c.h.b16 %v7485
        %v8094 = vunpack.c.l.b16 %v7486
        %v8095 = vunpack.c.l.b16 %v7487
        %v8096 = vunpack.c.h.b16 %v7487
        %v8097 = vunpack.c.l.b16 %v7488
        %v8098 = vunpack.c.h.b16 %v7488
        %v8099 = vunpack.c.l.b16 %v7489
        %v8100 = vunpack.c.h.b16 %v7489
        %v8101 = vunpack.c.l.b16 %v7490
        %v8102 = vunpack.c.h.b16 %v7490
        %v8103 = vunpack.c.l.b16 %v7491
        %v8104 = vunpack.c.h.b16 %v7491
        %v8105 = vunpack.c.l.b16 %v7492
        %v8106 = vunpack.c.h.b16 %v7492
        %v8107 = vunpack.c.l.b16 %v7493
        %v8108 = vunpack.c.h.b16 %v7493
        %v8109 = vunpack.c.l.b16 %v7494
        %v8110 = vunpack.c.h.b16 %v7494
        %v8111 = vunpack.c.l.b16 %v7495
        %v8112 = vunpack.c.l.b16 %v7496
        %v8113 = vunpack.c.h.b16 %v7496
        %v8114 = vunpack.c.l.b16 %v7497
        %v8115 = vunpack.c.h.b16 %v7497
        %v8116 = vunpack.c.l.b16 %v7498
        %v8117 = vunpack.c.h.b16 %v7498
        %v8118 = vunpack.c.l.b16 %v7499
        %v8119 = vunpack.c.h.b16 %v7499
        %v8120 = vunpack.c.l.b16 %v7500
        %v8121 = vunpack.c.h.b16 %v7500
        %v8122 = vunpack.c.l.b16 %v7501
        %v8123 = vunpack.c.h.b16 %v7501
        %v8124 = vunpack.c.l.b16 %v7502
        %v8125 = vunpack.c.h.b16 %v7502
        %v8126 = vunpack.c.l.b16 %v7503
        %v8127 = vunpack.c.h.b16 %v7503
        %v8128 = vunpack.c.l.b16 %v7504
        %v8129 = vunpack.c.l.b16 %v7505
        %v8130 = vunpack.c.h.b16 %v7505
        %v8131 = vunpack.c.l.b16 %v7506
        %v8132 = vunpack.c.h.b16 %v7506
        %v8133 = vunpack.c.l.b16 %v7507
        %v8134 = vunpack.c.h.b16 %v7507
        %v8135 = vunpack.c.l.b16 %v7508
        %v8136 = vunpack.c.h.b16 %v7508
        %v8137 = vunpack.c.l.b16 %v7509
        %v8138 = vunpack.c.h.b16 %v7509
        %v8139 = vunpack.c.l.b16 %v7510
        %v8140 = vunpack.c.h.b16 %v7510
        %v8141 = vunpack.c.l.b16 %v7511
        %v8142 = vunpack.c.h.b16 %v7511
        %v8143 = vunpack.c.l.b16 %v7512
        %v8144 = vunpack.c.h.b16 %v7512
        %v8145 = vunpack.c.l.b16 %v7513
        %v8146 = vunpack.c.l.b16 %v7514
        %v8147 = vunpack.c.h.b16 %v7514
        %v8148 = vunpack.c.l.b16 %v7515
        %v8149 = vunpack.c.h.b16 %v7515
        %v8150 = vunpack.c.l.b16 %v7516
        %v8151 = vunpack.c.h.b16 %v7516
        %v8152 = vunpack.c.l.b16 %v7517
        %v8153 = vunpack.c.h.b16 %v7517
        %v8154 = vunpack.c.l.b16 %v7518
        %v8155 = vunpack.c.h.b16 %v7518
        %v8156 = vunpack.c.l.b16 %v7519
        %v8157 = vunpack.c.h.b16 %v7519
        %v8158 = vunpack.c.l.b16 %v7520
        %v8159 = vunpack.c.h.b16 %v7520
        %v8160 = vunpack.c.l.b16 %v7521
        %v8161 = vunpack.c.h.b16 %v7521
        %v8162 = vunpack.c.l.b16 %v7522
        %v8163 = vunpack.c.l.b16 %v7523
        %v8164 = vunpack.c.h.b16 %v7523
        %v8165 = vunpack.c.l.b16 %v7524
        %v8166 = vunpack.c.h.b16 %v7524
        %v8167 = vunpack.c.l.b16 %v7525
        %v8168 = vunpack.c.h.b16 %v7525
        %v8169 = vunpack.c.l.b16 %v7526
        %v8170 = vunpack.c.h.b16 %v7526
        %v8171 = vunpack.c.l.b16 %v7527
        %v8172 = vunpack.c.h.b16 %v7527
        %v8173 = vunpack.c.l.b16 %v7528
        %v8174 = vunpack.c.h.b16 %v7528
        %v8175 = vunpack.c.l.b16 %v7529
        %v8176 = vunpack.c.h.b16 %v7529
        %v8177 = vunpack.c.l.b16 %v7530
        %v8178 = vunpack.c.h.b16 %v7530
        %v8179 = vunpack.c.l.b16 %v7531
        %v8180 = vunpack.c.l.b16 %v7532
        %v8181 = vunpack.c.h.b16 %v7532
        %v8182 = vunpack.c.l.b16 %v7533
        %v8183 = vunpack.c.h.b16 %v7533
        %v8184 = vunpack.c.l.b16 %v7534
        %v8185 = vunpack.c.h.b16 %v7534
        %v8186 = vunpack.c.l.b16 %v7535
        %v8187 = vunpack.c.h.b16 %v7535
        %v8188 = vunpack.c.l.b16 %v7536
        %v8189 = vunpack.c.h.b16 %v7536
        %v8190 = vunpack.c.l.b16 %v7537
        %v8191 = vunpack.c.h.b16 %v7537
        %v8192 = vunpack.c.l.b16 %v7538
        %v8193 = vunpack.c.h.b16 %v7538
        %v8194 = vunpack.c.l.b16 %v7539
        %v8195 = vunpack.c.h.b16 %v7539
        %v8196 = vunpack.c.l.b16 %v7540
        %v8197 = vunpack.c.l.b16 %v7541
        %v8198 = vunpack.c.h.b16 %v7541
        %v8199 = vunpack.c.l.b16 %v7542
        %v8200 = vunpack.c.h.b16 %v7542
        %v8201 = vunpack.c.l.b16 %v7543
        %v8202 = vunpack.c.h.b16 %v7543
        %v8203 = vunpack.c.l.b16 %v7544
        %v8204 = vunpack.c.h.b16 %v7544
        %v8205 = vunpack.c.l.b16 %v7545
        %v8206 = vunpack.c.h.b16 %v7545
        %v8207 = vunpack.c.l.b16 %v7546
        %v8208 = vunpack.c.h.b16 %v7546
        %v8209 = vunpack.c.l.b16 %v7547
        %v8210 = vunpack.c.h.b16 %v7547
        %v8211 = vunpack.c.l.b16 %v7548
        %v8212 = vunpack.c.h.b16 %v7548
        %v8213 = vunpack.c.l.b16 %v7549
        %v8214 = vunpack.c.l.b16 %v7550
        %v8215 = vunpack.c.h.b16 %v7550
        %v8216 = vunpack.c.l.b16 %v7551
        %v8217 = vunpack.c.h.b16 %v7551
        %v8218 = vunpack.c.l.b16 %v7552
        %v8219 = vunpack.c.h.b16 %v7552
        %v8220 = vunpack.c.l.b16 %v7553
        %v8221 = vunpack.c.h.b16 %v7553
        %v8222 = vunpack.c.l.b16 %v7554
        %v8223 = vunpack.c.h.b16 %v7554
        %v8224 = vunpack.c.l.b16 %v7555
        %v8225 = vunpack.c.h.b16 %v7555
        %v8226 = vunpack.c.l.b16 %v7556
        %v8227 = vunpack.c.h.b16 %v7556
        %v8228 = vunpack.c.l.b16 %v7557
        %v8229 = vunpack.c.h.b16 %v7557
        %v8230 = vunpack.c.l.b16 %v7558
        %v8231 = vunpack.c.l.b16 %v7559
        %v8232 = vunpack.c.h.b16 %v7559
        %v8233 = vunpack.c.l.b16 %v7560
        %v8234 = vunpack.c.h.b16 %v7560
        %v8235 = vunpack.c.l.b16 %v7561
        %v8236 = vunpack.c.h.b16 %v7561
        %v8237 = vunpack.c.l.b16 %v7562
        %v8238 = vunpack.c.h.b16 %v7562
        %v8239 = vunpack.c.l.b16 %v7563
        %v8240 = vunpack.c.h.b16 %v7563
        %v8241 = vunpack.c.l.b16 %v7564
        %v8242 = vunpack.c.h.b16 %v7564
        %v8243 = vunpack.c.l.b16 %v7565
        %v8244 = vunpack.c.h.b16 %v7565
        %v8245 = vunpack.c.l.b16 %v7566
        %v8246 = vunpack.c.h.b16 %v7566
        %v8247 = vunpack.c.l.b16 %v7567
        %v8248 = vunpack.c.l.b16 %v7568
        %v8249 = vunpack.c.h.b16 %v7568
        %v8250 = vunpack.c.l.b16 %v7569
        %v8251 = vunpack.c.h.b16 %v7569
        %v8252 = vunpack.c.l.b16 %v7570
        %v8253 = vunpack.c.h.b16 %v7570
        %v8254 = vunpack.c.l.b16 %v7571
        %v8255 = vunpack.c.h.b16 %v7571
        %v8256 = vunpack.c.l.b16 %v7572
        %v8257 = vunpack.c.h.b16 %v7572
        %v8258 = vunpack.c.l.b16 %v7573
        %v8259 = vunpack.c.h.b16 %v7573
        %v8260 = vunpack.c.l.b16 %v7574
        %v8261 = vunpack.c.h.b16 %v7574
        %v8262 = vunpack.c.l.b16 %v7575
        %v8263 = vunpack.c.h.b16 %v7575
        %v8264 = vunpack.c.l.b16 %v7576
        %v8265 = vunpack.c.l.b16 %v7577
        %v8266 = vunpack.c.h.b16 %v7577
        %v8267 = vunpack.c.l.b16 %v7578
        %v8268 = vunpack.c.h.b16 %v7578
        %v8269 = vunpack.c.l.b16 %v7579
        %v8270 = vunpack.c.h.b16 %v7579
        %v8271 = vunpack.c.l.b16 %v7580
        %v8272 = vunpack.c.h.b16 %v7580
        %v8273 = vunpack.c.l.b16 %v7581
        %v8274 = vunpack.c.h.b16 %v7581
        %v8275 = vunpack.c.l.b16 %v7582
        %v8276 = vunpack.c.h.b16 %v7582
        %v8277 = vunpack.c.l.b16 %v7583
        %v8278 = vunpack.c.h.b16 %v7583
        %v8279 = vunpack.c.l.b16 %v7584
        %v8280 = vunpack.c.h.b16 %v7584
        %v8281 = vunpack.c.l.b16 %v7585
        %v8282 = vunpack.c.l.b16 %v7586
        %v8283 = vunpack.c.h.b16 %v7586
        %v8284 = vunpack.c.l.b16 %v7587
        %v8285 = vunpack.c.h.b16 %v7587
        %v8286 = vunpack.c.l.b16 %v7588
        %v8287 = vunpack.c.h.b16 %v7588
        %v8288 = vunpack.c.l.b16 %v7589
        %v8289 = vunpack.c.h.b16 %v7589
        %v8290 = vunpack.c.l.b16 %v7590
        %v8291 = vunpack.c.h.b16 %v7590
        %v8292 = vunpack.c.l.b16 %v7591
        %v8293 = vunpack.c.h.b16 %v7591
        %v8294 = vunpack.c.l.b16 %v7592
        %v8295 = vunpack.c.h.b16 %v7592
        %v8296 = vunpack.c.l.b16 %v7593
        %v8297 = vunpack.c.h.b16 %v7593
        %v8298 = vunpack.c.l.b16 %v7594
        %v8299 = vunpack.c.l.b16 %v7595
        %v8300 = vunpack.c.h.b16 %v7595
        %v8301 = vunpack.c.l.b16 %v7596
        %v8302 = vunpack.c.h.b16 %v7596
        %v8303 = vunpack.c.l.b16 %v7597
        %v8304 = vunpack.c.h.b16 %v7597
        %v8305 = vunpack.c.l.b16 %v7598
        %v8306 = vunpack.c.h.b16 %v7598
        %v8307 = vunpack.c.l.b16 %v7599
        %v8308 = vunpack.c.h.b16 %v7599
        %v8309 = vunpack.c.l.b16 %v7600
        %v8310 = vunpack.c.h.b16 %v7600
        %v8311 = vunpack.c.l.b16 %v7601
        %v8312 = vunpack.c.h.b16 %v7601
        %v8313 = vunpack.c.l.b16 %v7602
        %v8314 = vunpack.c.h.b16 %v7602
        %v8315 = vunpack.c.l.b16 %v7603
        %v8316 = vunpack.c.l.b16 %v7604
        %v8317 = vunpack.c.h.b16 %v7604
        %v8318 = vunpack.c.l.b16 %v7605
        %v8319 = vunpack.c.h.b16 %v7605
        %v8320 = vunpack.c.l.b16 %v7606
        %v8321 = vunpack.c.h.b16 %v7606
        %v8322 = vunpack.c.l.b16 %v7607
        %v8323 = vunpack.c.h.b16 %v7607
        %v8324 = vunpack.c.l.b16 %v7608
        %v8325 = vunpack.c.h.b16 %v7608
        %v8326 = vunpack.c.l.b16 %v7609
        %v8327 = vunpack.c.h.b16 %v7609
        %v8328 = vunpack.c.l.b16 %v7610
        %v8329 = vunpack.c.h.b16 %v7610
        %v8330 = vunpack.c.l.b16 %v7611
        %v8331 = vunpack.c.h.b16 %v7611
        %v8332 = vunpack.c.l.b16 %v7612
        %v8333 = vunpack.c.l.b16 %v7613
        %v8334 = vunpack.c.h.b16 %v7613
        %v8335 = vunpack.c.l.b16 %v7614
        %v8336 = vunpack.c.h.b16 %v7614
        %v8337 = vunpack.c.l.b16 %v7615
        %v8338 = vunpack.c.h.b16 %v7615
        %v8339 = vunpack.c.l.b16 %v7616
        %v8340 = vunpack.c.h.b16 %v7616
        %v8341 = vunpack.c.l.b16 %v7617
        %v8342 = vunpack.c.h.b16 %v7617
        %v8343 = vunpack.c.l.b16 %v7618
        %v8344 = vunpack.c.h.b16 %v7618
        %v8345 = vunpack.c.l.b16 %v7619
        %v8346 = vunpack.c.h.b16 %v7619
        %v8347 = vunpack.c.l.b16 %v7620
        %v8348 = vunpack.c.h.b16 %v7620
        %v8349 = vunpack.c.l.b16 %v7621
        %v8350 = vunpack.c.l.b16 %v7622
        %v8351 = vunpack.c.h.b16 %v7622
        %v8352 = vunpack.c.l.b16 %v7623
        %v8353 = vunpack.c.h.b16 %v7623
        %v8354 = vunpack.c.l.b16 %v7624
        %v8355 = vunpack.c.h.b16 %v7624
        %v8356 = vunpack.c.l.b16 %v7625
        %v8357 = vunpack.c.h.b16 %v7625
        %v8358 = vunpack.c.l.b16 %v7626
        %v8359 = vunpack.c.h.b16 %v7626
        %v8360 = vunpack.c.l.b16 %v7627
        %v8361 = vunpack.c.h.b16 %v7627
        %v8362 = vunpack.c.l.b16 %v7628
        %v8363 = vunpack.c.h.b16 %v7628
        %v8364 = vunpack.c.l.b16 %v7629
        %v8365 = vunpack.c.h.b16 %v7629
        %v8366 = vunpack.c.l.b16 %v7630
        %v8367 = vunpack.c.l.b16 %v7631
        %v8368 = vunpack.c.h.b16 %v7631
        %v8369 = vunpack.c.l.b16 %v7632
        %v8370 = vunpack.c.h.b16 %v7632
        %v8371 = vunpack.c.l.b16 %v7633
        %v8372 = vunpack.c.h.b16 %v7633
        %v8373 = vunpack.c.l.b16 %v7634
        %v8374 = vunpack.c.h.b16 %v7634
        %v8375 = vunpack.c.l.b16 %v7635
        %v8376 = vunpack.c.h.b16 %v7635
        %v8377 = vunpack.c.l.b16 %v7636
        %v8378 = vunpack.c.h.b16 %v7636
        %v8379 = vunpack.c.l.b16 %v7637
        %v8380 = vunpack.c.h.b16 %v7637
        %v8381 = vunpack.c.l.b16 %v7638
        %v8382 = vunpack.c.h.b16 %v7638
        %v8383 = vunpack.c.l.b16 %v7639
        %v8384 = vunpack.c.l.b16 %v7640
        %v8385 = vunpack.c.h.b16 %v7640
        %v8386 = vunpack.c.l.b16 %v7641
        %v8387 = vunpack.c.h.b16 %v7641
        %v8388 = vunpack.c.l.b16 %v7642
        %v8389 = vunpack.c.h.b16 %v7642
        %v8390 = vunpack.c.l.b16 %v7643
        %v8391 = vunpack.c.h.b16 %v7643
        %v8392 = vunpack.c.l.b16 %v7644
        %v8393 = vunpack.c.h.b16 %v7644
        %v8394 = vunpack.c.l.b16 %v7645
        %v8395 = vunpack.c.h.b16 %v7645
        %v8396 = vunpack.c.l.b16 %v7646
        %v8397 = vunpack.c.h.b16 %v7646
        %v8398 = vunpack.c.l.b16 %v7647
        %v8399 = vunpack.c.h.b16 %v7647
        %v8400 = vunpack.c.l.b16 %v7648
        %v8401 = vunpack.c.l.b16 %v7649
        %v8402 = vunpack.c.h.b16 %v7649
        %v8403 = vunpack.c.l.b16 %v7650
        %v8404 = vunpack.c.h.b16 %v7650
        %v8405 = vunpack.c.l.b16 %v7651
        %v8406 = vunpack.c.h.b16 %v7651
        %v8407 = vunpack.c.l.b16 %v7652
        %v8408 = vunpack.c.h.b16 %v7652
        %v8409 = vunpack.c.l.b16 %v7653
        %v8410 = vunpack.c.h.b16 %v7653
        %v8411 = vunpack.c.l.b16 %v7654
        %v8412 = vunpack.c.h.b16 %v7654
        %v8413 = vunpack.c.l.b16 %v7655
        %v8414 = vunpack.c.h.b16 %v7655
        %v8415 = vunpack.c.l.b16 %v7656
        %v8416 = vunpack.c.h.b16 %v7656
        %v8417 = vunpack.c.l.b16 %v7657
        %v8418 = vunpack.c.l.b16 %v7658
        %v8419 = vunpack.c.h.b16 %v7658
        %v8420 = vunpack.c.l.b16 %v7659
        %v8421 = vunpack.c.h.b16 %v7659
        %v8422 = vunpack.c.l.b16 %v7660
        %v8423 = vunpack.c.h.b16 %v7660
        %v8424 = vunpack.c.l.b16 %v7661
        %v8425 = vunpack.c.h.b16 %v7661
        %v8426 = vunpack.c.l.b16 %v7662
        %v8427 = vunpack.c.h.b16 %v7662
        %v8428 = vunpack.c.l.b16 %v7663
        %v8429 = vunpack.c.h.b16 %v7663
        %v8430 = vunpack.c.l.b16 %v7664
        %v8431 = vunpack.c.h.b16 %v7664
        %v8432 = vunpack.c.l.b16 %v7665
        %v8433 = vunpack.c.h.b16 %v7665
        %v8434 = vunpack.c.l.b16 %v7666
        %v8435 = vunpack.c.l.b16 %v7667
        %v8436 = vunpack.c.h.b16 %v7667
        %v8437 = vunpack.c.l.b16 %v7668
        %v8438 = vunpack.c.h.b16 %v7668
        %v8439 = vunpack.c.l.b16 %v7669
        %v8440 = vunpack.c.h.b16 %v7669
        %v8441 = vunpack.c.l.b16 %v7670
        %v8442 = vunpack.c.h.b16 %v7670
        %v8443 = vunpack.c.l.b16 %v7671
        %v8444 = vunpack.c.h.b16 %v7671
        %v8445 = vunpack.c.l.b16 %v7672
        %v8446 = vunpack.c.h.b16 %v7672
        %v8447 = vunpack.c.l.b16 %v7673
        %v8448 = vunpack.c.h.b16 %v7673
        %v8449 = vunpack.c.l.b16 %v7674
        %v8450 = vunpack.c.h.b16 %v7674
        %v8451 = vunpack.c.l.b16 %v7675
        %v8452 = vunpack.c.l.b16 %v7676
        %v8453 = vunpack.c.h.b16 %v7676
        %v8454 = vunpack.c.l.b16 %v7677
        %v8455 = vunpack.c.h.b16 %v7677
        %v8456 = vunpack.c.l.b16 %v7678
        %v8457 = vunpack.c.h.b16 %v7678
        %v8458 = vunpack.c.l.b16 %v7679
        %v8459 = vunpack.c.h.b16 %v7679
        %v8460 = vunpack.c.l.b16 %v7680
        %v8461 = vunpack.c.h.b16 %v7680
        %v8462 = vunpack.c.l.b16 %v7681
        %v8463 = vunpack.c.h.b16 %v7681
        %v8464 = vunpack.c.l.b16 %v7682
        %v8465 = vunpack.c.h.b16 %v7682
        %v8466 = vunpack.c.l.b16 %v7683
        %v8467 = vunpack.c.h.b16 %v7683
        %v8468 = vunpack.c.l.b16 %v7684
        %v8469 = vunpack.c.l.b16 %v7685
        %v8470 = vunpack.c.h.b16 %v7685
        %v8471 = vunpack.c.l.b16 %v7686
        %v8472 = vunpack.c.h.b16 %v7686
        %v8473 = vunpack.c.l.b16 %v7687
        %v8474 = vunpack.c.h.b16 %v7687
        %v8475 = vunpack.c.l.b16 %v7688
        %v8476 = vunpack.c.h.b16 %v7688
        %v8477 = vunpack.c.l.b16 %v7689
        %v8478 = vunpack.c.h.b16 %v7689
        %v8479 = vunpack.c.l.b16 %v7690
        %v8480 = vunpack.c.h.b16 %v7690
        %v8481 = vunpack.c.l.b16 %v7691
        %v8482 = vunpack.c.h.b16 %v7691
        %v8483 = vunpack.c.l.b16 %v7692
        %v8484 = vunpack.c.h.b16 %v7692
        %v8485 = vunpack.c.l.b16 %v7693
        %v8486 = vunpack.c.l.b16 %v7694
        %v8487 = vunpack.c.h.b16 %v7694
        %v8488 = vunpack.c.l.b16 %v7695
        %v8489 = vunpack.c.h.b16 %v7695
        %v8490 = vunpack.c.l.b16 %v7696
        %v8491 = vunpack.c.h.b16 %v7696
        %v8492 = vunpack.c.l.b16 %v7697
        %v8493 = vunpack.c.h.b16 %v7697
        %v8494 = vunpack.c.l.b16 %v7698
        %v8495 = vunpack.c.h.b16 %v7698
        %v8496 = vunpack.c.l.b16 %v7699
        %v8497 = vunpack.c.h.b16 %v7699
        %v8498 = vunpack.c.l.b16 %v7700
        %v8499 = vunpack.c.h.b16 %v7700
        %v8500 = vunpack.c.l.b16 %v7701
        %v8501 = vunpack.c.h.b16 %v7701
        %v8502 = vunpack.c.l.b16 %v7702
        %v8503 = vunpack.c.l.b16 %v7703
        %v8504 = vunpack.c.h.b16 %v7703
        %v8505 = vunpack.c.l.b16 %v7704
        %v8506 = vunpack.c.h.b16 %v7704
        %v8507 = vunpack.c.l.b16 %v7705
        %v8508 = vunpack.c.h.b16 %v7705
        %v8509 = vunpack.c.l.b16 %v7706
        %v8510 = vunpack.c.h.b16 %v7706
        %v8511 = vunpack.c.l.b16 %v7707
        %v8512 = vunpack.c.h.b16 %v7707
        %v8513 = vunpack.c.l.b16 %v7708
        %v8514 = vunpack.c.h.b16 %v7708
        %v8515 = vunpack.c.l.b16 %v7709
        %v8516 = vunpack.c.h.b16 %v7709
        %v8517 = vunpack.c.l.b16 %v7710
        %v8518 = vunpack.c.h.b16 %v7710
        %v8519 = vunpack.c.l.b16 %v7711
        %v8520 = vunpack.c.l.b16 %v7712
        %v8521 = vunpack.c.h.b16 %v7712
        %v8522 = vunpack.c.l.b16 %v7713
        %v8523 = vunpack.c.h.b16 %v7713
        %v8524 = vunpack.c.l.b16 %v7714
        %v8525 = vunpack.c.h.b16 %v7714
        %v8526 = vunpack.c.l.b16 %v7715
        %v8527 = vunpack.c.h.b16 %v7715
        %v8528 = vunpack.c.l.b16 %v7716
        %v8529 = vunpack.c.h.b16 %v7716
        %v8530 = vunpack.c.l.b16 %v7717
        %v8531 = vunpack.c.h.b16 %v7717
        %v8532 = vunpack.c.l.b16 %v7718
        %v8533 = vunpack.c.h.b16 %v7718
        %v8534 = vunpack.c.l.b16 %v7719
        %v8535 = vunpack.c.h.b16 %v7719
        %v8536 = vunpack.c.l.b16 %v7720
        %v8537 = vunpack.c.l.b16 %v7721
        %v8538 = vunpack.c.h.b16 %v7721
        %v8539 = vunpack.c.l.b16 %v7722
        %v8540 = vunpack.c.h.b16 %v7722
        %v8541 = vunpack.c.l.b16 %v7723
        %v8542 = vunpack.c.h.b16 %v7723
        %v8543 = vunpack.c.l.b16 %v7724
        %v8544 = vunpack.c.h.b16 %v7724
        %v8545 = vunpack.c.l.b16 %v7725
        %v8546 = vunpack.c.h.b16 %v7725
        %v8547 = vunpack.c.l.b16 %v7726
        %v8548 = vunpack.c.h.b16 %v7726
        %v8549 = vunpack.c.l.b16 %v7727
        %v8550 = vunpack.c.h.b16 %v7727
        %v8551 = vunpack.c.l.b16 %v7728
        %v8552 = vunpack.c.h.b16 %v7728
        %v8553 = vunpack.c.l.b16 %v7729
        %v8554 = vunpack.c.l.b16 %v7730
        %v8555 = vunpack.c.h.b16 %v7730
        %v8556 = vunpack.c.l.b16 %v7731
        %v8557 = vunpack.c.h.b16 %v7731
        %v8558 = vunpack.c.l.b16 %v7732
        %v8559 = vunpack.c.h.b16 %v7732
        %v8560 = vunpack.c.l.b16 %v7733
        %v8561 = vunpack.c.h.b16 %v7733
        %v8562 = vunpack.c.l.b16 %v7734
        %v8563 = vunpack.c.h.b16 %v7734
        %v8564 = vunpack.c.l.b16 %v7735
        %v8565 = vunpack.c.h.b16 %v7735
        %v8566 = vunpack.c.l.b16 %v7736
        %v8567 = vunpack.c.h.b16 %v7736
        %v8568 = vunpack.c.l.b16 %v7737
        %v8569 = vunpack.c.h.b16 %v7737
        %v8570 = vunpack.c.l.b16 %v7738
        %v8571 = vpack.c.b16 %v8044, %v8027
        %v8572 = vpack.c.b16 %v8045, %v8028
        %v8573 = vpack.c.b16 %v8046, %v8029
        %v8574 = vpack.c.b16 %v8047, %v8030
        %v8575 = vpack.c.b16 %v8048, %v8031
        %v8576 = vpack.c.b16 %v8049, %v8032
        %v8577 = vpack.c.b16 %v8050, %v8033
        %v8578 = vpack.c.b16 %v8051, %v8034
        %v8579 = vpack.c.b16 %v8052, %v8035
        %v8580 = vpack.c.b16 %v8053, %v8036
        %v8581 = vpack.c.b16 %v8054, %v8037
        %v8582 = vpack.c.b16 %v8055, %v8038
        %v8583 = vpack.c.b16 %v8056, %v8039
        %v8584 = vpack.c.b16 %v8057, %v8040
        %v8585 = vpack.c.b16 %v8058, %v8041
        %v8586 = vpack.c.b16 %v8059, %v8042
        %v8587 = vpack.c.b16 %v8060, %v8043
        %v8588 = vpack.c.b16 %v8078, %v8061
        %v8589 = vpack.c.b16 %v8079, %v8062
        %v8590 = vpack.c.b16 %v8080, %v8063
        %v8591 = vpack.c.b16 %v8081, %v8064
        %v8592 = vpack.c.b16 %v8082, %v8065
        %v8593 = vpack.c.b16 %v8083, %v8066
        %v8594 = vpack.c.b16 %v8084, %v8067
        %v8595 = vpack.c.b16 %v8085, %v8068
        %v8596 = vpack.c.b16 %v8086, %v8069
        %v8597 = vpack.c.b16 %v8087, %v8070
        %v8598 = vpack.c.b16 %v8088, %v8071
        %v8599 = vpack.c.b16 %v8089, %v8072
        %v8600 = vpack.c.b16 %v8090, %v8073
        %v8601 = vpack.c.b16 %v8091, %v8074
        %v8602 = vpack.c.b16 %v8092, %v8075
        %v8603 = vpack.c.b16 %v8093, %v8076
        %v8604 = vpack.c.b16 %v8094, %v8077
        %v8605 = vpack.c.b16 %v8112, %v8095
        %v8606 = vpack.c.b16 %v8113, %v8096
        %v8607 = vpack.c.b16 %v8114, %v8097
        %v8608 = vpack.c.b16 %v8115, %v8098
        %v8609 = vpack.c.b16 %v8116, %v8099
        %v8610 = vpack.c.b16 %v8117, %v8100
        %v8611 = vpack.c.b16 %v8118, %v8101
        %v8612 = vpack.c.b16 %v8119, %v8102
        %v8613 = vpack.c.b16 %v8120, %v8103
        %v8614 = vpack.c.b16 %v8121, %v8104
        %v8615 = vpack.c.b16 %v8122, %v8105
        %v8616 = vpack.c.b16 %v8123, %v8106
        %v8617 = vpack.c.b16 %v8124, %v8107
        %v8618 = vpack.c.b16 %v8125, %v8108
        %v8619 = vpack.c.b16 %v8126, %v8109
        %v8620 = vpack.c.b16 %v8127, %v8110
        %v8621 = vpack.c.b16 %v8128, %v8111
        %v8622 = vpack.c.b16 %v8146, %v8129
        %v8623 = vpack.c.b16 %v8147, %v8130
        %v8624 = vpack.c.b16 %v8148, %v8131
        %v8625 = vpack.c.b16 %v8149, %v8132
        %v8626 = vpack.c.b16 %v8150, %v8133
        %v8627 = vpack.c.b16 %v8151, %v8134
        %v8628 = vpack.c.b16 %v8152, %v8135
        %v8629 = vpack.c.b16 %v8153, %v8136
        %v8630 = vpack.c.b16 %v8154, %v8137
        %v8631 = vpack.c.b16 %v8155, %v8138
        %v8632 = vpack.c.b16 %v8156, %v8139
        %v8633 = vpack.c.b16 %v8157, %v8140
        %v8634 = vpack.c.b16 %v8158, %v8141
        %v8635 = vpack.c.b16 %v8159, %v8142
        %v8636 = vpack.c.b16 %v8160, %v8143
        %v8637 = vpack.c.b16 %v8161, %v8144
        %v8638 = vpack.c.b16 %v8162, %v8145
        %v8639 = vpack.c.b16 %v8180, %v8163
        %v8640 = vpack.c.b16 %v8181, %v8164
        %v8641 = vpack.c.b16 %v8182, %v8165
        %v8642 = vpack.c.b16 %v8183, %v8166
        %v8643 = vpack.c.b16 %v8184, %v8167
        %v8644 = vpack.c.b16 %v8185, %v8168
        %v8645 = vpack.c.b16 %v8186, %v8169
        %v8646 = vpack.c.b16 %v8187, %v8170
        %v8647 = vpack.c.b16 %v8188, %v8171
        %v8648 = vpack.c.b16 %v8189, %v8172
        %v8649 = vpack.c.b16 %v8190, %v8173
        %v8650 = vpack.c.b16 %v8191, %v8174
        %v8651 = vpack.c.b16 %v8192, %v8175
        %v8652 = vpack.c.b16 %v8193, %v8176
        %v8653 = vpack.c.b16 %v8194, %v8177
        %v8654 = vpack.c.b16 %v8195, %v8178
        %v8655 = vpack.c.b16 %v8196, %v8179
        %v8656 = vpack.c.b16 %v8214, %v8197
        %v8657 = vpack.c.b16 %v8215, %v8198
        %v8658 = vpack.c.b16 %v8216, %v8199
        %v8659 = vpack.c.b16 %v8217, %v8200
        %v8660 = vpack.c.b16 %v8218, %v8201
        %v8661 = vpack.c.b16 %v8219, %v8202
        %v8662 = vpack.c.b16 %v8220, %v8203
        %v8663 = vpack.c.b16 %v8221, %v8204
        %v8664 = vpack.c.b16 %v8222, %v8205
        %v8665 = vpack.c.b16 %v8223, %v8206
        %v8666 = vpack.c.b16 %v8224, %v8207
        %v8667 = vpack.c.b16 %v8225, %v8208
        %v8668 = vpack.c.b16 %v8226, %v8209
        %v8669 = vpack.c.b16 %v8227, %v8210
        %v8670 = vpack.c.b16 %v8228, %v8211
        %v8671 = vpack.c.b16 %v8229, %v8212
        %v8672 = vpack.c.b16 %v8230, %v8213
        %v8673 = vpack.c.b16 %v8248, %v8231
        %v8674 = vpack.c.b16 %v8249, %v8232
        %v8675 = vpack.c.b16 %v8250, %v8233
        %v8676 = vpack.c.b16 %v8251, %v8234
        %v8677 = vpack.c.b16 %v8252, %v8235
        %v8678 = vpack.c.b16 %v8253, %v8236
        %v8679 = vpack.c.b16 %v8254, %v8237
        %v8680 = vpack.c.b16 %v8255, %v8238
        %v8681 = vpack.c.b16 %v8256, %v8239
        %v8682 = vpack.c.b16 %v8257, %v8240
        %v8683 = vpack.c.b16 %v8258, %v8241
        %v8684 = vpack.c.b16 %v8259, %v8242
        %v8685 = vpack.c.b16 %v8260, %v8243
        %v8686 = vpack.c.b16 %v8261, %v8244
        %v8687 = vpack.c.b16 %v8262, %v8245
        %v8688 = vpack.c.b16 %v8263, %v8246
        %v8689 = vpack.c.b16 %v8264, %v8247
        %v8690 = vpack.c.b16 %v8282, %v8265
        %v8691 = vpack.c.b16 %v8283, %v8266
        %v8692 = vpack.c.b16 %v8284, %v8267
        %v8693 = vpack.c.b16 %v8285, %v8268
        %v8694 = vpack.c.b16 %v8286, %v8269
        %v8695 = vpack.c.b16 %v8287, %v8270
        %v8696 = vpack.c.b16 %v8288, %v8271
        %v8697 = vpack.c.b16 %v8289, %v8272
        %v8698 = vpack.c.b16 %v8290, %v8273
        %v8699 = vpack.c.b16 %v8291, %v8274
        %v8700 = vpack.c.b16 %v8292, %v8275
        %v8701 = vpack.c.b16 %v8293, %v8276
        %v8702 = vpack.c.b16 %v8294, %v8277
        %v8703 = vpack.c.b16 %v8295, %v8278
        %v8704 = vpack.c.b16 %v8296, %v8279
        %v8705 = vpack.c.b16 %v8297, %v8280
        %v8706 = vpack.c.b16 %v8298, %v8281
        %v8707 = vpack.c.b16 %v8316, %v8299
        %v8708 = vpack.c.b16 %v8317, %v8300
        %v8709 = vpack.c.b16 %v8318, %v8301
        %v8710 = vpack.c.b16 %v8319, %v8302
        %v8711 = vpack.c.b16 %v8320, %v8303
        %v8712 = vpack.c.b16 %v8321, %v8304
        %v8713 = vpack.c.b16 %v8322, %v8305
        %v8714 = vpack.c.b16 %v8323, %v8306
        %v8715 = vpack.c.b16 %v8324, %v8307
        %v8716 = vpack.c.b16 %v8325, %v8308
        %v8717 = vpack.c.b16 %v8326, %v8309
        %v8718 = vpack.c.b16 %v8327, %v8310
        %v8719 = vpack.c.b16 %v8328, %v8311
        %v8720 = vpack.c.b16 %v8329, %v8312
        %v8721 = vpack.c.b16 %v8330, %v8313
        %v8722 = vpack.c.b16 %v8331, %v8314
        %v8723 = vpack.c.b16 %v8332, %v8315
        %v8724 = vpack.c.b16 %v8350, %v8333
        %v8725 = vpack.c.b16 %v8351, %v8334
        %v8726 = vpack.c.b16 %v8352, %v8335
        %v8727 = vpack.c.b16 %v8353, %v8336
        %v8728 = vpack.c.b16 %v8354, %v8337
        %v8729 = vpack.c.b16 %v8355, %v8338
        %v8730 = vpack.c.b16 %v8356, %v8339
        %v8731 = vpack.c.b16 %v8357, %v8340
        %v8732 = vpack.c.b16 %v8358, %v8341
        %v8733 = vpack.c.b16 %v8359, %v8342
        %v8734 = vpack.c.b16 %v8360, %v8343
        %v8735 = vpack.c.b16 %v8361, %v8344
        %v8736 = vpack.c.b16 %v8362, %v8345
        %v8737 = vpack.c.b16 %v8363, %v8346
        %v8738 = vpack.c.b16 %v8364, %v8347
        %v8739 = vpack.c.b16 %v8365, %v8348
        %v8740 = vpack.c.b16 %v8366, %v8349
        %v8741 = vpack.c.b16 %v8384, %v8367
        %v8742 = vpack.c.b16 %v8385, %v8368
        %v8743 = vpack.c.b16 %v8386, %v8369
        %v8744 = vpack.c.b16 %v8387, %v8370
        %v8745 = vpack.c.b16 %v8388, %v8371
        %v8746 = vpack.c.b16 %v8389, %v8372
        %v8747 = vpack.c.b16 %v8390, %v8373
        %v8748 = vpack.c.b16 %v8391, %v8374
        %v8749 = vpack.c.b16 %v8392, %v8375
        %v8750 = vpack.c.b16 %v8393, %v8376
        %v8751 = vpack.c.b16 %v8394, %v8377
        %v8752 = vpack.c.b16 %v8395, %v8378
        %v8753 = vpack.c.b16 %v8396, %v8379
        %v8754 = vpack.c.b16 %v8397, %v8380
        %v8755 = vpack.c.b16 %v8398, %v8381
        %v8756 = vpack.c.b16 %v8399, %v8382
        %v8757 = vpack.c.b16 %v8400, %v8383
        %v8758 = vpack.c.b16 %v8418, %v8401
        %v8759 = vpack.c.b16 %v8419, %v8402
        %v8760 = vpack.c.b16 %v8420, %v8403
        %v8761 = vpack.c.b16 %v8421, %v8404
        %v8762 = vpack.c.b16 %v8422, %v8405
        %v8763 = vpack.c.b16 %v8423, %v8406
        %v8764 = vpack.c.b16 %v8424, %v8407
        %v8765 = vpack.c.b16 %v8425, %v8408
        %v8766 = vpack.c.b16 %v8426, %v8409
        %v8767 = vpack.c.b16 %v8427, %v8410
        %v8768 = vpack.c.b16 %v8428, %v8411
        %v8769 = vpack.c.b16 %v8429, %v8412
        %v8770 = vpack.c.b16 %v8430, %v8413
        %v8771 = vpack.c.b16 %v8431, %v8414
        %v8772 = vpack.c.b16 %v8432, %v8415
        %v8773 = vpack.c.b16 %v8433, %v8416
        %v8774 = vpack.c.b16 %v8434, %v8417
        %v8775 = vpack.c.b16 %v8452, %v8435
        %v8776 = vpack.c.b16 %v8453, %v8436
        %v8777 = vpack.c.b16 %v8454, %v8437
        %v8778 = vpack.c.b16 %v8455, %v8438
        %v8779 = vpack.c.b16 %v8456, %v8439
        %v8780 = vpack.c.b16 %v8457, %v8440
        %v8781 = vpack.c.b16 %v8458, %v8441
        %v8782 = vpack.c.b16 %v8459, %v8442
        %v8783 = vpack.c.b16 %v8460, %v8443
        %v8784 = vpack.c.b16 %v8461, %v8444
        %v8785 = vpack.c.b16 %v8462, %v8445
        %v8786 = vpack.c.b16 %v8463, %v8446
        %v8787 = vpack.c.b16 %v8464, %v8447
        %v8788 = vpack.c.b16 %v8465, %v8448
        %v8789 = vpack.c.b16 %v8466, %v8449
        %v8790 = vpack.c.b16 %v8467, %v8450
        %v8791 = vpack.c.b16 %v8468, %v8451
        %v8792 = vpack.c.b16 %v8486, %v8469
        %v8793 = vpack.c.b16 %v8487, %v8470
        %v8794 = vpack.c.b16 %v8488, %v8471
        %v8795 = vpack.c.b16 %v8489, %v8472
        %v8796 = vpack.c.b16 %v8490, %v8473
        %v8797 = vpack.c.b16 %v8491, %v8474
        %v8798 = vpack.c.b16 %v8492, %v8475
        %v8799 = vpack.c.b16 %v8493, %v8476
        %v8800 = vpack.c.b16 %v8494, %v8477
        %v8801 = vpack.c.b16 %v8495, %v8478
        %v8802 = vpack.c.b16 %v8496, %v8479
        %v8803 = vpack.c.b16 %v8497, %v8480
        %v8804 = vpack.c.b16 %v8498, %v8481
        %v8805 = vpack.c.b16 %v8499, %v8482
        %v8806 = vpack.c.b16 %v8500, %v8483
        %v8807 = vpack.c.b16 %v8501, %v8484
        %v8808 = vpack.c.b16 %v8502, %v8485
        %v8809 = vpack.c.b16 %v8520, %v8503
        %v8810 = vpack.c.b16 %v8521, %v8504
        %v8811 = vpack.c.b16 %v8522, %v8505
        %v8812 = vpack.c.b16 %v8523, %v8506
        %v8813 = vpack.c.b16 %v8524, %v8507
        %v8814 = vpack.c.b16 %v8525, %v8508
        %v8815 = vpack.c.b16 %v8526, %v8509
        %v8816 = vpack.c.b16 %v8527, %v8510
        %v8817 = vpack.c.b16 %v8528, %v8511
        %v8818 = vpack.c.b16 %v8529, %v8512
        %v8819 = vpack.c.b16 %v8530, %v8513
        %v8820 = vpack.c.b16 %v8531, %v8514
        %v8821 = vpack.c.b16 %v8532, %v8515
        %v8822 = vpack.c.b16 %v8533, %v8516
        %v8823 = vpack.c.b16 %v8534, %v8517
        %v8824 = vpack.c.b16 %v8535, %v8518
        %v8825 = vpack.c.b16 %v8536, %v8519
        %v8826 = vpack.c.b16 %v8554, %v8537
        %v8827 = vpack.c.b16 %v8555, %v8538
        %v8828 = vpack.c.b16 %v8556, %v8539
        %v8829 = vpack.c.b16 %v8557, %v8540
        %v8830 = vpack.c.b16 %v8558, %v8541
        %v8831 = vpack.c.b16 %v8559, %v8542
        %v8832 = vpack.c.b16 %v8560, %v8543
        %v8833 = vpack.c.b16 %v8561, %v8544
        %v8834 = vpack.c.b16 %v8562, %v8545
        %v8835 = vpack.c.b16 %v8563, %v8546
        %v8836 = vpack.c.b16 %v8564, %v8547
        %v8837 = vpack.c.b16 %v8565, %v8548
        %v8838 = vpack.c.b16 %v8566, %v8549
        %v8839 = vpack.c.b16 %v8567, %v8550
        %v8840 = vpack.c.b16 %v8568, %v8551
        %v8841 = vpack.c.b16 %v8569, %v8552
        %v8842 = vpack.c.b16 %v8570, %v8553
        %9115 = vmatpush.bf16.msra.mxu0 %v8690
        %9116 = vmatpush.bf16.msra.mxu0 %v8673
        %9117 = vmatpush.bf16.msra.mxu0 %v8656
        %9118 = vmatpush.bf16.msra.mxu0 %v8639
        %9119 = vmatpush.bf16.msra.mxu0 %v8622
        %9120 = vmatpush.bf16.msra.mxu0 %v8605
        %9121 = vmatpush.bf16.msra.mxu0 %v8588
        %9122 = vmatpush.bf16.msra.mxu0 %v8571
        %9123 = vmatmul.bf16.gmra.mxu0 %v7443
        %v9124 = vpop.f32.mrf.mxu0
        %v9125 = vadd.f32 0.0, %v9124
        %v9126 = vpop.f32.mrf.mxu0
        %v9127 = vadd.f32 0.0, %v9126
        %9128 = vmatmul.bf16.gmra.mxu0 %v7445
        %v9129 = vpop.f32.mrf.mxu0
        %v9130 = vadd.f32 0.0, %v9129
        %v9131 = vpop.f32.mrf.mxu0
        %v9132 = vadd.f32 0.0, %v9131
        %9133 = vmatmul.bf16.gmra.mxu0 %v7447
        %v9134 = vpop.f32.mrf.mxu0
        %v9135 = vadd.f32 0.0, %v9134
        %v9136 = vpop.f32.mrf.mxu0
        %v9137 = vadd.f32 0.0, %v9136
        %9138 = vmatmul.bf16.gmra.mxu0 %v7449
        %v9139 = vpop.f32.mrf.mxu0
        %v9140 = vadd.f32 0.0, %v9139
        %v9141 = vpop.f32.mrf.mxu0
        %v9142 = vadd.f32 0.0, %v9141
        %9143 = vdwg.mxu0
        %9144 = vmatpush.bf16.msra.mxu0 %v8826
        %9145 = vmatpush.bf16.msra.mxu0 %v8809
        %9146 = vmatpush.bf16.msra.mxu0 %v8792
        %9147 = vmatpush.bf16.msra.mxu0 %v8775
        %9148 = vmatpush.bf16.msra.mxu0 %v8758
        %9149 = vmatpush.bf16.msra.mxu0 %v8741
        %9150 = vmatpush.bf16.msra.mxu0 %v8724
        %9151 = vmatpush.bf16.msra.mxu0 %v8707
        %9152 = vmatmul.bf16.gmra.mxu0 %v7444
        %v9153 = vpop.f32.mrf.mxu0
        %v9154 = vadd.f32 %v9125, %v9153
        %v9155 = vpop.f32.mrf.mxu0
        %v9156 = vadd.f32 %v9127, %v9155
        %9157 = vmatmul.bf16.gmra.mxu0 %v7446
        %v9158 = vpop.f32.mrf.mxu0
        %v9159 = vadd.f32 %v9130, %v9158
        %v9160 = vpop.f32.mrf.mxu0
        %v9161 = vadd.f32 %v9132, %v9160
        %9162 = vmatmul.bf16.gmra.mxu0 %v7448
        %v9163 = vpop.f32.mrf.mxu0
        %v9164 = vadd.f32 %v9135, %v9163
        %v9165 = vpop.f32.mrf.mxu0
        %v9166 = vadd.f32 %v9137, %v9165
        %9167 = vmatmul.bf16.gmra.mxu0 %v7450
        %v9168 = vpop.f32.mrf.mxu0
        %v9169 = vadd.f32 %v9140, %v9168
        %v9170 = vpop.f32.mrf.mxu0
        %v9171 = vadd.f32 %v9142, %v9170
        %9172 = vdwg.mxu0
        %9173 = vmatpush.bf16.msra.mxu0 %v8691
        %9174 = vmatpush.bf16.msra.mxu0 %v8674
        %9175 = vmatpush.bf16.msra.mxu0 %v8657
        %9176 = vmatpush.bf16.msra.mxu0 %v8640
        %9177 = vmatpush.bf16.msra.mxu0 %v8623
        %9178 = vmatpush.bf16.msra.mxu0 %v8606
        %9179 = vmatpush.bf16.msra.mxu0 %v8589
        %9180 = vmatpush.bf16.msra.mxu0 %v8572
        %9181 = vmatmul.bf16.gmra.mxu0 %v7443
        %v9182 = vpop.f32.mrf.mxu0
        %v9183 = vadd.f32 0.0, %v9182
        %v9184 = vpop.f32.mrf.mxu0
        %v9185 = vadd.f32 0.0, %v9184
        %9186 = vmatmul.bf16.gmra.mxu0 %v7445
        %v9187 = vpop.f32.mrf.mxu0
        %v9188 = vadd.f32 0.0, %v9187
        %v9189 = vpop.f32.mrf.mxu0
        %v9190 = vadd.f32 0.0, %v9189
        %9191 = vmatmul.bf16.gmra.mxu0 %v7447
        %v9192 = vpop.f32.mrf.mxu0
        %v9193 = vadd.f32 0.0, %v9192
        %v9194 = vpop.f32.mrf.mxu0
        %v9195 = vadd.f32 0.0, %v9194
        %9196 = vmatmul.bf16.gmra.mxu0 %v7449
        %v9197 = vpop.f32.mrf.mxu0
        %v9198 = vadd.f32 0.0, %v9197
        %v9199 = vpop.f32.mrf.mxu0
        %v9200 = vadd.f32 0.0, %v9199
        %9201 = vdwg.mxu0
        %9202 = vmatpush.bf16.msra.mxu0 %v8827
        %9203 = vmatpush.bf16.msra.mxu0 %v8810
        %9204 = vmatpush.bf16.msra.mxu0 %v8793
        %9205 = vmatpush.bf16.msra.mxu0 %v8776
        %9206 = vmatpush.bf16.msra.mxu0 %v8759
        %9207 = vmatpush.bf16.msra.mxu0 %v8742
        %9208 = vmatpush.bf16.msra.mxu0 %v8725
        %9209 = vmatpush.bf16.msra.mxu0 %v8708
        %9210 = vmatmul.bf16.gmra.mxu0 %v7444
        %v9211 = vpop.f32.mrf.mxu0
        %v9212 = vadd.f32 %v9183, %v9211
        %v9213 = vpop.f32.mrf.mxu0
        %v9214 = vadd.f32 %v9185, %v9213
        %9215 = vmatmul.bf16.gmra.mxu0 %v7446
        %v9216 = vpop.f32.mrf.mxu0
        %v9217 = vadd.f32 %v9188, %v9216
        %v9218 = vpop.f32.mrf.mxu0
        %v9219 = vadd.f32 %v9190, %v9218
        %9220 = vmatmul.bf16.gmra.mxu0 %v7448
        %v9221 = vpop.f32.mrf.mxu0
        %v9222 = vadd.f32 %v9193, %v9221
        %v9223 = vpop.f32.mrf.mxu0
        %v9224 = vadd.f32 %v9195, %v9223
        %9225 = vmatmul.bf16.gmra.mxu0 %v7450
        %v9226 = vpop.f32.mrf.mxu0
        %v9227 = vadd.f32 %v9198, %v9226
        %v9228 = vpop.f32.mrf.mxu0
        %v9229 = vadd.f32 %v9200, %v9228
        %9230 = vdwg.mxu0
        %9231 = vmatpush.bf16.msra.mxu0 %v8692
        %9232 = vmatpush.bf16.msra.mxu0 %v8675
        %9233 = vmatpush.bf16.msra.mxu0 %v8658
        %9234 = vmatpush.bf16.msra.mxu0 %v8641
        %9235 = vmatpush.bf16.msra.mxu0 %v8624
        %9236 = vmatpush.bf16.msra.mxu0 %v8607
        %9237 = vmatpush.bf16.msra.mxu0 %v8590
        %9238 = vmatpush.bf16.msra.mxu0 %v8573
        %9239 = vmatmul.bf16.gmra.mxu0 %v7443
        %v9240 = vpop.f32.mrf.mxu0
        %v9241 = vadd.f32 0.0, %v9240
        %v9242 = vpop.f32.mrf.mxu0
        %v9243 = vadd.f32 0.0, %v9242
        %9244 = vmatmul.bf16.gmra.mxu0 %v7445
        %v9245 = vpop.f32.mrf.mxu0
        %v9246 = vadd.f32 0.0, %v9245
        %v9247 = vpop.f32.mrf.mxu0
        %v9248 = vadd.f32 0.0, %v9247
        %9249 = vmatmul.bf16.gmra.mxu0 %v7447
        %v9250 = vpop.f32.mrf.mxu0
        %v9251 = vadd.f32 0.0, %v9250
        %v9252 = vpop.f32.mrf.mxu0
        %v9253 = vadd.f32 0.0, %v9252
        %9254 = vmatmul.bf16.gmra.mxu0 %v7449
        %v9255 = vpop.f32.mrf.mxu0
        %v9256 = vadd.f32 0.0, %v9255
        %v9257 = vpop.f32.mrf.mxu0
        %v9258 = vadd.f32 0.0, %v9257
        %9259 = vdwg.mxu0
        %9260 = vmatpush.bf16.msra.mxu0 %v8828
        %9261 = vmatpush.bf16.msra.mxu0 %v8811
        %9262 = vmatpush.bf16.msra.mxu0 %v8794
        %9263 = vmatpush.bf16.msra.mxu0 %v8777
        %9264 = vmatpush.bf16.msra.mxu0 %v8760
        %9265 = vmatpush.bf16.msra.mxu0 %v8743
        %9266 = vmatpush.bf16.msra.mxu0 %v8726
        %9267 = vmatpush.bf16.msra.mxu0 %v8709
        %9268 = vmatmul.bf16.gmra.mxu0 %v7444
        %v9269 = vpop.f32.mrf.mxu0
        %v9270 = vadd.f32 %v9241, %v9269
        %v9271 = vpop.f32.mrf.mxu0
        %v9272 = vadd.f32 %v9243, %v9271
        %9273 = vmatmul.bf16.gmra.mxu0 %v7446
        %v9274 = vpop.f32.mrf.mxu0
        %v9275 = vadd.f32 %v9246, %v9274
        %v9276 = vpop.f32.mrf.mxu0
        %v9277 = vadd.f32 %v9248, %v9276
        %9278 = vmatmul.bf16.gmra.mxu0 %v7448
        %v9279 = vpop.f32.mrf.mxu0
        %v9280 = vadd.f32 %v9251, %v9279
        %v9281 = vpop.f32.mrf.mxu0
        %v9282 = vadd.f32 %v9253, %v9281
        %9283 = vmatmul.bf16.gmra.mxu0 %v7450
        %v9284 = vpop.f32.mrf.mxu0
        %v9285 = vadd.f32 %v9256, %v9284
        %v9286 = vpop.f32.mrf.mxu0
        %v9287 = vadd.f32 %v9258, %v9286
        %9288 = vdwg.mxu0
        %9289 = vmatpush.bf16.msra.mxu0 %v8693
        %9290 = vmatpush.bf16.msra.mxu0 %v8676
        %9291 = vmatpush.bf16.msra.mxu0 %v8659
        %9292 = vmatpush.bf16.msra.mxu0 %v8642
        %9293 = vmatpush.bf16.msra.mxu0 %v8625
        %9294 = vmatpush.bf16.msra.mxu0 %v8608
        %9295 = vmatpush.bf16.msra.mxu0 %v8591
        %9296 = vmatpush.bf16.msra.mxu0 %v8574
        %9297 = vmatmul.bf16.gmra.mxu0 %v7443
        %v9298 = vpop.f32.mrf.mxu0
        %v9299 = vadd.f32 0.0, %v9298
        %v9300 = vpop.f32.mrf.mxu0
        %v9301 = vadd.f32 0.0, %v9300
        %9302 = vmatmul.bf16.gmra.mxu0 %v7445
        %v9303 = vpop.f32.mrf.mxu0
        %v9304 = vadd.f32 0.0, %v9303
        %v9305 = vpop.f32.mrf.mxu0
        %v9306 = vadd.f32 0.0, %v9305
        %9307 = vmatmul.bf16.gmra.mxu0 %v7447
        %v9308 = vpop.f32.mrf.mxu0
        %v9309 = vadd.f32 0.0, %v9308
        %v9310 = vpop.f32.mrf.mxu0
        %v9311 = vadd.f32 0.0, %v9310
        %9312 = vmatmul.bf16.gmra.mxu0 %v7449
        %v9313 = vpop.f32.mrf.mxu0
        %v9314 = vadd.f32 0.0, %v9313
        %v9315 = vpop.f32.mrf.mxu0
        %v9316 = vadd.f32 0.0, %v9315
        %9317 = vdwg.mxu0
        %9318 = vmatpush.bf16.msra.mxu0 %v8829
        %9319 = vmatpush.bf16.msra.mxu0 %v8812
        %9320 = vmatpush.bf16.msra.mxu0 %v8795
        %9321 = vmatpush.bf16.msra.mxu0 %v8778
        %9322 = vmatpush.bf16.msra.mxu0 %v8761
        %9323 = vmatpush.bf16.msra.mxu0 %v8744
        %9324 = vmatpush.bf16.msra.mxu0 %v8727
        %9325 = vmatpush.bf16.msra.mxu0 %v8710
        %9326 = vmatmul.bf16.gmra.mxu0 %v7444
        %v9327 = vpop.f32.mrf.mxu0
        %v9328 = vadd.f32 %v9299, %v9327
        %v9329 = vpop.f32.mrf.mxu0
        %v9330 = vadd.f32 %v9301, %v9329
        %9331 = vmatmul.bf16.gmra.mxu0 %v7446
        %v9332 = vpop.f32.mrf.mxu0
        %v9333 = vadd.f32 %v9304, %v9332
        %v9334 = vpop.f32.mrf.mxu0
        %v9335 = vadd.f32 %v9306, %v9334
        %9336 = vmatmul.bf16.gmra.mxu0 %v7448
        %v9337 = vpop.f32.mrf.mxu0
        %v9338 = vadd.f32 %v9309, %v9337
        %v9339 = vpop.f32.mrf.mxu0
        %v9340 = vadd.f32 %v9311, %v9339
        %9341 = vmatmul.bf16.gmra.mxu0 %v7450
        %v9342 = vpop.f32.mrf.mxu0
        %v9343 = vadd.f32 %v9314, %v9342
        %v9344 = vpop.f32.mrf.mxu0
        %v9345 = vadd.f32 %v9316, %v9344
        %9346 = vdwg.mxu0
        %9347 = vmatpush.bf16.msra.mxu0 %v8694
        %9348 = vmatpush.bf16.msra.mxu0 %v8677
        %9349 = vmatpush.bf16.msra.mxu0 %v8660
        %9350 = vmatpush.bf16.msra.mxu0 %v8643
        %9351 = vmatpush.bf16.msra.mxu0 %v8626
        %9352 = vmatpush.bf16.msra.mxu0 %v8609
        %9353 = vmatpush.bf16.msra.mxu0 %v8592
        %9354 = vmatpush.bf16.msra.mxu0 %v8575
        %9355 = vmatmul.bf16.gmra.mxu0 %v7443
        %v9356 = vpop.f32.mrf.mxu0
        %v9357 = vadd.f32 0.0, %v9356
        %v9358 = vpop.f32.mrf.mxu0
        %v9359 = vadd.f32 0.0, %v9358
        %9360 = vmatmul.bf16.gmra.mxu0 %v7445
        %v9361 = vpop.f32.mrf.mxu0
        %v9362 = vadd.f32 0.0, %v9361
        %v9363 = vpop.f32.mrf.mxu0
        %v9364 = vadd.f32 0.0, %v9363
        %9365 = vmatmul.bf16.gmra.mxu0 %v7447
        %v9366 = vpop.f32.mrf.mxu0
        %v9367 = vadd.f32 0.0, %v9366
        %v9368 = vpop.f32.mrf.mxu0
        %v9369 = vadd.f32 0.0, %v9368
        %9370 = vmatmul.bf16.gmra.mxu0 %v7449
        %v9371 = vpop.f32.mrf.mxu0
        %v9372 = vadd.f32 0.0, %v9371
        %v9373 = vpop.f32.mrf.mxu0
        %v9374 = vadd.f32 0.0, %v9373
        %9375 = vdwg.mxu0
        %9376 = vmatpush.bf16.msra.mxu0 %v8830
        %9377 = vmatpush.bf16.msra.mxu0 %v8813
        %9378 = vmatpush.bf16.msra.mxu0 %v8796
        %9379 = vmatpush.bf16.msra.mxu0 %v8779
        %9380 = vmatpush.bf16.msra.mxu0 %v8762
        %9381 = vmatpush.bf16.msra.mxu0 %v8745
        %9382 = vmatpush.bf16.msra.mxu0 %v8728
        %9383 = vmatpush.bf16.msra.mxu0 %v8711
        %9384 = vmatmul.bf16.gmra.mxu0 %v7444
        %v9385 = vpop.f32.mrf.mxu0
        %v9386 = vadd.f32 %v9357, %v9385
        %v9387 = vpop.f32.mrf.mxu0
        %v9388 = vadd.f32 %v9359, %v9387
        %9389 = vmatmul.bf16.gmra.mxu0 %v7446
        %v9390 = vpop.f32.mrf.mxu0
        %v9391 = vadd.f32 %v9362, %v9390
        %v9392 = vpop.f32.mrf.mxu0
        %v9393 = vadd.f32 %v9364, %v9392
        %9394 = vmatmul.bf16.gmra.mxu0 %v7448
        %v9395 = vpop.f32.mrf.mxu0
        %v9396 = vadd.f32 %v9367, %v9395
        %v9397 = vpop.f32.mrf.mxu0
        %v9398 = vadd.f32 %v9369, %v9397
        %9399 = vmatmul.bf16.gmra.mxu0 %v7450
        %v9400 = vpop.f32.mrf.mxu0
        %v9401 = vadd.f32 %v9372, %v9400
        %v9402 = vpop.f32.mrf.mxu0
        %v9403 = vadd.f32 %v9374, %v9402
        %9404 = vdwg.mxu0
        %9405 = vmatpush.bf16.msra.mxu0 %v8695
        %9406 = vmatpush.bf16.msra.mxu0 %v8678
        %9407 = vmatpush.bf16.msra.mxu0 %v8661
        %9408 = vmatpush.bf16.msra.mxu0 %v8644
        %9409 = vmatpush.bf16.msra.mxu0 %v8627
        %9410 = vmatpush.bf16.msra.mxu0 %v8610
        %9411 = vmatpush.bf16.msra.mxu0 %v8593
        %9412 = vmatpush.bf16.msra.mxu0 %v8576
        %9413 = vmatmul.bf16.gmra.mxu0 %v7443
        %v9414 = vpop.f32.mrf.mxu0
        %v9415 = vadd.f32 0.0, %v9414
        %v9416 = vpop.f32.mrf.mxu0
        %v9417 = vadd.f32 0.0, %v9416
        %9418 = vmatmul.bf16.gmra.mxu0 %v7445
        %v9419 = vpop.f32.mrf.mxu0
        %v9420 = vadd.f32 0.0, %v9419
        %v9421 = vpop.f32.mrf.mxu0
        %v9422 = vadd.f32 0.0, %v9421
        %9423 = vmatmul.bf16.gmra.mxu0 %v7447
        %v9424 = vpop.f32.mrf.mxu0
        %v9425 = vadd.f32 0.0, %v9424
        %v9426 = vpop.f32.mrf.mxu0
        %v9427 = vadd.f32 0.0, %v9426
        %9428 = vmatmul.bf16.gmra.mxu0 %v7449
        %v9429 = vpop.f32.mrf.mxu0
        %v9430 = vadd.f32 0.0, %v9429
        %v9431 = vpop.f32.mrf.mxu0
        %v9432 = vadd.f32 0.0, %v9431
        %9433 = vdwg.mxu0
        %9434 = vmatpush.bf16.msra.mxu0 %v8831
        %9435 = vmatpush.bf16.msra.mxu0 %v8814
        %9436 = vmatpush.bf16.msra.mxu0 %v8797
        %9437 = vmatpush.bf16.msra.mxu0 %v8780
        %9438 = vmatpush.bf16.msra.mxu0 %v8763
        %9439 = vmatpush.bf16.msra.mxu0 %v8746
        %9440 = vmatpush.bf16.msra.mxu0 %v8729
        %9441 = vmatpush.bf16.msra.mxu0 %v8712
        %9442 = vmatmul.bf16.gmra.mxu0 %v7444
        %v9443 = vpop.f32.mrf.mxu0
        %v9444 = vadd.f32 %v9415, %v9443
        %v9445 = vpop.f32.mrf.mxu0
        %v9446 = vadd.f32 %v9417, %v9445
        %9447 = vmatmul.bf16.gmra.mxu0 %v7446
        %v9448 = vpop.f32.mrf.mxu0
        %v9449 = vadd.f32 %v9420, %v9448
        %v9450 = vpop.f32.mrf.mxu0
        %v9451 = vadd.f32 %v9422, %v9450
        %9452 = vmatmul.bf16.gmra.mxu0 %v7448
        %v9453 = vpop.f32.mrf.mxu0
        %v9454 = vadd.f32 %v9425, %v9453
        %v9455 = vpop.f32.mrf.mxu0
        %v9456 = vadd.f32 %v9427, %v9455
        %9457 = vmatmul.bf16.gmra.mxu0 %v7450
        %v9458 = vpop.f32.mrf.mxu0
        %v9459 = vadd.f32 %v9430, %v9458
        %v9460 = vpop.f32.mrf.mxu0
        %v9461 = vadd.f32 %v9432, %v9460
        %9462 = vdwg.mxu0
        %9463 = vmatpush.bf16.msra.mxu0 %v8696
        %9464 = vmatpush.bf16.msra.mxu0 %v8679
        %9465 = vmatpush.bf16.msra.mxu0 %v8662
        %9466 = vmatpush.bf16.msra.mxu0 %v8645
        %9467 = vmatpush.bf16.msra.mxu0 %v8628
        %9468 = vmatpush.bf16.msra.mxu0 %v8611
        %9469 = vmatpush.bf16.msra.mxu0 %v8594
        %9470 = vmatpush.bf16.msra.mxu0 %v8577
        %9471 = vmatmul.bf16.gmra.mxu0 %v7443
        %v9472 = vpop.f32.mrf.mxu0
        %v9473 = vadd.f32 0.0, %v9472
        %v9474 = vpop.f32.mrf.mxu0
        %v9475 = vadd.f32 0.0, %v9474
        %9476 = vmatmul.bf16.gmra.mxu0 %v7445
        %v9477 = vpop.f32.mrf.mxu0
        %v9478 = vadd.f32 0.0, %v9477
        %v9479 = vpop.f32.mrf.mxu0
        %v9480 = vadd.f32 0.0, %v9479
        %9481 = vmatmul.bf16.gmra.mxu0 %v7447
        %v9482 = vpop.f32.mrf.mxu0
        %v9483 = vadd.f32 0.0, %v9482
        %v9484 = vpop.f32.mrf.mxu0
        %v9485 = vadd.f32 0.0, %v9484
        %9486 = vmatmul.bf16.gmra.mxu0 %v7449
        %v9487 = vpop.f32.mrf.mxu0
        %v9488 = vadd.f32 0.0, %v9487
        %v9489 = vpop.f32.mrf.mxu0
        %v9490 = vadd.f32 0.0, %v9489
        %9491 = vdwg.mxu0
        %9492 = vmatpush.bf16.msra.mxu0 %v8832
        %9493 = vmatpush.bf16.msra.mxu0 %v8815
        %9494 = vmatpush.bf16.msra.mxu0 %v8798
        %9495 = vmatpush.bf16.msra.mxu0 %v8781
        %9496 = vmatpush.bf16.msra.mxu0 %v8764
        %9497 = vmatpush.bf16.msra.mxu0 %v8747
        %9498 = vmatpush.bf16.msra.mxu0 %v8730
        %9499 = vmatpush.bf16.msra.mxu0 %v8713
        %9500 = vmatmul.bf16.gmra.mxu0 %v7444
        %v9501 = vpop.f32.mrf.mxu0
        %v9502 = vadd.f32 %v9473, %v9501
        %v9503 = vpop.f32.mrf.mxu0
        %v9504 = vadd.f32 %v9475, %v9503
        %9505 = vmatmul.bf16.gmra.mxu0 %v7446
        %v9506 = vpop.f32.mrf.mxu0
        %v9507 = vadd.f32 %v9478, %v9506
        %v9508 = vpop.f32.mrf.mxu0
        %v9509 = vadd.f32 %v9480, %v9508
        %9510 = vmatmul.bf16.gmra.mxu0 %v7448
        %v9511 = vpop.f32.mrf.mxu0
        %v9512 = vadd.f32 %v9483, %v9511
        %v9513 = vpop.f32.mrf.mxu0
        %v9514 = vadd.f32 %v9485, %v9513
        %9515 = vmatmul.bf16.gmra.mxu0 %v7450
        %v9516 = vpop.f32.mrf.mxu0
        %v9517 = vadd.f32 %v9488, %v9516
        %v9518 = vpop.f32.mrf.mxu0
        %v9519 = vadd.f32 %v9490, %v9518
        %9520 = vdwg.mxu0
        %9521 = vmatpush.bf16.msra.mxu0 %v8697
        %9522 = vmatpush.bf16.msra.mxu0 %v8680
        %9523 = vmatpush.bf16.msra.mxu0 %v8663
        %9524 = vmatpush.bf16.msra.mxu0 %v8646
        %9525 = vmatpush.bf16.msra.mxu0 %v8629
        %9526 = vmatpush.bf16.msra.mxu0 %v8612
        %9527 = vmatpush.bf16.msra.mxu0 %v8595
        %9528 = vmatpush.bf16.msra.mxu0 %v8578
        %9529 = vmatmul.bf16.gmra.mxu0 %v7443
        %v9530 = vpop.f32.mrf.mxu0
        %v9531 = vadd.f32 0.0, %v9530
        %v9532 = vpop.f32.mrf.mxu0
        %v9533 = vadd.f32 0.0, %v9532
        %9534 = vmatmul.bf16.gmra.mxu0 %v7445
        %v9535 = vpop.f32.mrf.mxu0
        %v9536 = vadd.f32 0.0, %v9535
        %v9537 = vpop.f32.mrf.mxu0
        %v9538 = vadd.f32 0.0, %v9537
        %9539 = vmatmul.bf16.gmra.mxu0 %v7447
        %v9540 = vpop.f32.mrf.mxu0
        %v9541 = vadd.f32 0.0, %v9540
        %v9542 = vpop.f32.mrf.mxu0
        %v9543 = vadd.f32 0.0, %v9542
        %9544 = vmatmul.bf16.gmra.mxu0 %v7449
        %v9545 = vpop.f32.mrf.mxu0
        %v9546 = vadd.f32 0.0, %v9545
        %v9547 = vpop.f32.mrf.mxu0
        %v9548 = vadd.f32 0.0, %v9547
        %9549 = vdwg.mxu0
        %9550 = vmatpush.bf16.msra.mxu0 %v8833
        %9551 = vmatpush.bf16.msra.mxu0 %v8816
        %9552 = vmatpush.bf16.msra.mxu0 %v8799
        %9553 = vmatpush.bf16.msra.mxu0 %v8782
        %9554 = vmatpush.bf16.msra.mxu0 %v8765
        %9555 = vmatpush.bf16.msra.mxu0 %v8748
        %9556 = vmatpush.bf16.msra.mxu0 %v8731
        %9557 = vmatpush.bf16.msra.mxu0 %v8714
        %9558 = vmatmul.bf16.gmra.mxu0 %v7444
        %v9559 = vpop.f32.mrf.mxu0
        %v9560 = vadd.f32 %v9531, %v9559
        %v9561 = vpop.f32.mrf.mxu0
        %v9562 = vadd.f32 %v9533, %v9561
        %9563 = vmatmul.bf16.gmra.mxu0 %v7446
        %v9564 = vpop.f32.mrf.mxu0
        %v9565 = vadd.f32 %v9536, %v9564
        %v9566 = vpop.f32.mrf.mxu0
        %v9567 = vadd.f32 %v9538, %v9566
        %9568 = vmatmul.bf16.gmra.mxu0 %v7448
        %v9569 = vpop.f32.mrf.mxu0
        %v9570 = vadd.f32 %v9541, %v9569
        %v9571 = vpop.f32.mrf.mxu0
        %v9572 = vadd.f32 %v9543, %v9571
        %9573 = vmatmul.bf16.gmra.mxu0 %v7450
        %v9574 = vpop.f32.mrf.mxu0
        %v9575 = vadd.f32 %v9546, %v9574
        %v9576 = vpop.f32.mrf.mxu0
        %v9577 = vadd.f32 %v9548, %v9576
        %9578 = vdwg.mxu0
        %9579 = vmatpush.bf16.msra.mxu0 %v8698
        %9580 = vmatpush.bf16.msra.mxu0 %v8681
        %9581 = vmatpush.bf16.msra.mxu0 %v8664
        %9582 = vmatpush.bf16.msra.mxu0 %v8647
        %9583 = vmatpush.bf16.msra.mxu0 %v8630
        %9584 = vmatpush.bf16.msra.mxu0 %v8613
        %9585 = vmatpush.bf16.msra.mxu0 %v8596
        %9586 = vmatpush.bf16.msra.mxu0 %v8579
        %9587 = vmatmul.bf16.gmra.mxu0 %v7443
        %v9588 = vpop.f32.mrf.mxu0
        %v9589 = vadd.f32 0.0, %v9588
        %v9590 = vpop.f32.mrf.mxu0
        %v9591 = vadd.f32 0.0, %v9590
        %9592 = vmatmul.bf16.gmra.mxu0 %v7445
        %v9593 = vpop.f32.mrf.mxu0
        %v9594 = vadd.f32 0.0, %v9593
        %v9595 = vpop.f32.mrf.mxu0
        %v9596 = vadd.f32 0.0, %v9595
        %9597 = vmatmul.bf16.gmra.mxu0 %v7447
        %v9598 = vpop.f32.mrf.mxu0
        %v9599 = vadd.f32 0.0, %v9598
        %v9600 = vpop.f32.mrf.mxu0
        %v9601 = vadd.f32 0.0, %v9600
        %9602 = vmatmul.bf16.gmra.mxu0 %v7449
        %v9603 = vpop.f32.mrf.mxu0
        %v9604 = vadd.f32 0.0, %v9603
        %v9605 = vpop.f32.mrf.mxu0
        %v9606 = vadd.f32 0.0, %v9605
        %9607 = vdwg.mxu0
        %9608 = vmatpush.bf16.msra.mxu0 %v8834
        %9609 = vmatpush.bf16.msra.mxu0 %v8817
        %9610 = vmatpush.bf16.msra.mxu0 %v8800
        %9611 = vmatpush.bf16.msra.mxu0 %v8783
        %9612 = vmatpush.bf16.msra.mxu0 %v8766
        %9613 = vmatpush.bf16.msra.mxu0 %v8749
        %9614 = vmatpush.bf16.msra.mxu0 %v8732
        %9615 = vmatpush.bf16.msra.mxu0 %v8715
        %9616 = vmatmul.bf16.gmra.mxu0 %v7444
        %v9617 = vpop.f32.mrf.mxu0
        %v9618 = vadd.f32 %v9589, %v9617
        %v9619 = vpop.f32.mrf.mxu0
        %v9620 = vadd.f32 %v9591, %v9619
        %9621 = vmatmul.bf16.gmra.mxu0 %v7446
        %v9622 = vpop.f32.mrf.mxu0
        %v9623 = vadd.f32 %v9594, %v9622
        %v9624 = vpop.f32.mrf.mxu0
        %v9625 = vadd.f32 %v9596, %v9624
        %9626 = vmatmul.bf16.gmra.mxu0 %v7448
        %v9627 = vpop.f32.mrf.mxu0
        %v9628 = vadd.f32 %v9599, %v9627
        %v9629 = vpop.f32.mrf.mxu0
        %v9630 = vadd.f32 %v9601, %v9629
        %9631 = vmatmul.bf16.gmra.mxu0 %v7450
        %v9632 = vpop.f32.mrf.mxu0
        %v9633 = vadd.f32 %v9604, %v9632
        %v9634 = vpop.f32.mrf.mxu0
        %v9635 = vadd.f32 %v9606, %v9634
        %9636 = vdwg.mxu0
        %9637 = vmatpush.bf16.msra.mxu0 %v8699
        %9638 = vmatpush.bf16.msra.mxu0 %v8682
        %9639 = vmatpush.bf16.msra.mxu0 %v8665
        %9640 = vmatpush.bf16.msra.mxu0 %v8648
        %9641 = vmatpush.bf16.msra.mxu0 %v8631
        %9642 = vmatpush.bf16.msra.mxu0 %v8614
        %9643 = vmatpush.bf16.msra.mxu0 %v8597
        %9644 = vmatpush.bf16.msra.mxu0 %v8580
        %9645 = vmatmul.bf16.gmra.mxu0 %v7443
        %v9646 = vpop.f32.mrf.mxu0
        %v9647 = vadd.f32 0.0, %v9646
        %v9648 = vpop.f32.mrf.mxu0
        %v9649 = vadd.f32 0.0, %v9648
        %9650 = vmatmul.bf16.gmra.mxu0 %v7445
        %v9651 = vpop.f32.mrf.mxu0
        %v9652 = vadd.f32 0.0, %v9651
        %v9653 = vpop.f32.mrf.mxu0
        %v9654 = vadd.f32 0.0, %v9653
        %9655 = vmatmul.bf16.gmra.mxu0 %v7447
        %v9656 = vpop.f32.mrf.mxu0
        %v9657 = vadd.f32 0.0, %v9656
        %v9658 = vpop.f32.mrf.mxu0
        %v9659 = vadd.f32 0.0, %v9658
        %9660 = vmatmul.bf16.gmra.mxu0 %v7449
        %v9661 = vpop.f32.mrf.mxu0
        %v9662 = vadd.f32 0.0, %v9661
        %v9663 = vpop.f32.mrf.mxu0
        %v9664 = vadd.f32 0.0, %v9663
        %9665 = vdwg.mxu0
        %9666 = vmatpush.bf16.msra.mxu0 %v8835
        %9667 = vmatpush.bf16.msra.mxu0 %v8818
        %9668 = vmatpush.bf16.msra.mxu0 %v8801
        %9669 = vmatpush.bf16.msra.mxu0 %v8784
        %9670 = vmatpush.bf16.msra.mxu0 %v8767
        %9671 = vmatpush.bf16.msra.mxu0 %v8750
        %9672 = vmatpush.bf16.msra.mxu0 %v8733
        %9673 = vmatpush.bf16.msra.mxu0 %v8716
        %9674 = vmatmul.bf16.gmra.mxu0 %v7444
        %v9675 = vpop.f32.mrf.mxu0
        %v9676 = vadd.f32 %v9647, %v9675
        %v9677 = vpop.f32.mrf.mxu0
        %v9678 = vadd.f32 %v9649, %v9677
        %9679 = vmatmul.bf16.gmra.mxu0 %v7446
        %v9680 = vpop.f32.mrf.mxu0
        %v9681 = vadd.f32 %v9652, %v9680
        %v9682 = vpop.f32.mrf.mxu0
        %v9683 = vadd.f32 %v9654, %v9682
        %9684 = vmatmul.bf16.gmra.mxu0 %v7448
        %v9685 = vpop.f32.mrf.mxu0
        %v9686 = vadd.f32 %v9657, %v9685
        %v9687 = vpop.f32.mrf.mxu0
        %v9688 = vadd.f32 %v9659, %v9687
        %9689 = vmatmul.bf16.gmra.mxu0 %v7450
        %v9690 = vpop.f32.mrf.mxu0
        %v9691 = vadd.f32 %v9662, %v9690
        %v9692 = vpop.f32.mrf.mxu0
        %v9693 = vadd.f32 %v9664, %v9692
        %9694 = vdwg.mxu0
        %9695 = vmatpush.bf16.msra.mxu0 %v8700
        %9696 = vmatpush.bf16.msra.mxu0 %v8683
        %9697 = vmatpush.bf16.msra.mxu0 %v8666
        %9698 = vmatpush.bf16.msra.mxu0 %v8649
        %9699 = vmatpush.bf16.msra.mxu0 %v8632
        %9700 = vmatpush.bf16.msra.mxu0 %v8615
        %9701 = vmatpush.bf16.msra.mxu0 %v8598
        %9702 = vmatpush.bf16.msra.mxu0 %v8581
        %9703 = vmatmul.bf16.gmra.mxu0 %v7443
        %v9704 = vpop.f32.mrf.mxu0
        %v9705 = vadd.f32 0.0, %v9704
        %v9706 = vpop.f32.mrf.mxu0
        %v9707 = vadd.f32 0.0, %v9706
        %9708 = vmatmul.bf16.gmra.mxu0 %v7445
        %v9709 = vpop.f32.mrf.mxu0
        %v9710 = vadd.f32 0.0, %v9709
        %v9711 = vpop.f32.mrf.mxu0
        %v9712 = vadd.f32 0.0, %v9711
        %9713 = vmatmul.bf16.gmra.mxu0 %v7447
        %v9714 = vpop.f32.mrf.mxu0
        %v9715 = vadd.f32 0.0, %v9714
        %v9716 = vpop.f32.mrf.mxu0
        %v9717 = vadd.f32 0.0, %v9716
        %9718 = vmatmul.bf16.gmra.mxu0 %v7449
        %v9719 = vpop.f32.mrf.mxu0
        %v9720 = vadd.f32 0.0, %v9719
        %v9721 = vpop.f32.mrf.mxu0
        %v9722 = vadd.f32 0.0, %v9721
        %9723 = vdwg.mxu0
        %9724 = vmatpush.bf16.msra.mxu0 %v8836
        %9725 = vmatpush.bf16.msra.mxu0 %v8819
        %9726 = vmatpush.bf16.msra.mxu0 %v8802
        %9727 = vmatpush.bf16.msra.mxu0 %v8785
        %9728 = vmatpush.bf16.msra.mxu0 %v8768
        %9729 = vmatpush.bf16.msra.mxu0 %v8751
        %9730 = vmatpush.bf16.msra.mxu0 %v8734
        %9731 = vmatpush.bf16.msra.mxu0 %v8717
        %9732 = vmatmul.bf16.gmra.mxu0 %v7444
        %v9733 = vpop.f32.mrf.mxu0
        %v9734 = vadd.f32 %v9705, %v9733
        %v9735 = vpop.f32.mrf.mxu0
        %v9736 = vadd.f32 %v9707, %v9735
        %9737 = vmatmul.bf16.gmra.mxu0 %v7446
        %v9738 = vpop.f32.mrf.mxu0
        %v9739 = vadd.f32 %v9710, %v9738
        %v9740 = vpop.f32.mrf.mxu0
        %v9741 = vadd.f32 %v9712, %v9740
        %9742 = vmatmul.bf16.gmra.mxu0 %v7448
        %v9743 = vpop.f32.mrf.mxu0
        %v9744 = vadd.f32 %v9715, %v9743
        %v9745 = vpop.f32.mrf.mxu0
        %v9746 = vadd.f32 %v9717, %v9745
        %9747 = vmatmul.bf16.gmra.mxu0 %v7450
        %v9748 = vpop.f32.mrf.mxu0
        %v9749 = vadd.f32 %v9720, %v9748
        %v9750 = vpop.f32.mrf.mxu0
        %v9751 = vadd.f32 %v9722, %v9750
        %9752 = vdwg.mxu0
        %9753 = vmatpush.bf16.msra.mxu0 %v8701
        %9754 = vmatpush.bf16.msra.mxu0 %v8684
        %9755 = vmatpush.bf16.msra.mxu0 %v8667
        %9756 = vmatpush.bf16.msra.mxu0 %v8650
        %9757 = vmatpush.bf16.msra.mxu0 %v8633
        %9758 = vmatpush.bf16.msra.mxu0 %v8616
        %9759 = vmatpush.bf16.msra.mxu0 %v8599
        %9760 = vmatpush.bf16.msra.mxu0 %v8582
        %9761 = vmatmul.bf16.gmra.mxu0 %v7443
        %v9762 = vpop.f32.mrf.mxu0
        %v9763 = vadd.f32 0.0, %v9762
        %v9764 = vpop.f32.mrf.mxu0
        %v9765 = vadd.f32 0.0, %v9764
        %9766 = vmatmul.bf16.gmra.mxu0 %v7445
        %v9767 = vpop.f32.mrf.mxu0
        %v9768 = vadd.f32 0.0, %v9767
        %v9769 = vpop.f32.mrf.mxu0
        %v9770 = vadd.f32 0.0, %v9769
        %9771 = vmatmul.bf16.gmra.mxu0 %v7447
        %v9772 = vpop.f32.mrf.mxu0
        %v9773 = vadd.f32 0.0, %v9772
        %v9774 = vpop.f32.mrf.mxu0
        %v9775 = vadd.f32 0.0, %v9774
        %9776 = vmatmul.bf16.gmra.mxu0 %v7449
        %v9777 = vpop.f32.mrf.mxu0
        %v9778 = vadd.f32 0.0, %v9777
        %v9779 = vpop.f32.mrf.mxu0
        %v9780 = vadd.f32 0.0, %v9779
        %9781 = vdwg.mxu0
        %9782 = vmatpush.bf16.msra.mxu0 %v8837
        %9783 = vmatpush.bf16.msra.mxu0 %v8820
        %9784 = vmatpush.bf16.msra.mxu0 %v8803
        %9785 = vmatpush.bf16.msra.mxu0 %v8786
        %9786 = vmatpush.bf16.msra.mxu0 %v8769
        %9787 = vmatpush.bf16.msra.mxu0 %v8752
        %9788 = vmatpush.bf16.msra.mxu0 %v8735
        %9789 = vmatpush.bf16.msra.mxu0 %v8718
        %9790 = vmatmul.bf16.gmra.mxu0 %v7444
        %v9791 = vpop.f32.mrf.mxu0
        %v9792 = vadd.f32 %v9763, %v9791
        %v9793 = vpop.f32.mrf.mxu0
        %v9794 = vadd.f32 %v9765, %v9793
        %9795 = vmatmul.bf16.gmra.mxu0 %v7446
        %v9796 = vpop.f32.mrf.mxu0
        %v9797 = vadd.f32 %v9768, %v9796
        %v9798 = vpop.f32.mrf.mxu0
        %v9799 = vadd.f32 %v9770, %v9798
        %9800 = vmatmul.bf16.gmra.mxu0 %v7448
        %v9801 = vpop.f32.mrf.mxu0
        %v9802 = vadd.f32 %v9773, %v9801
        %v9803 = vpop.f32.mrf.mxu0
        %v9804 = vadd.f32 %v9775, %v9803
        %9805 = vmatmul.bf16.gmra.mxu0 %v7450
        %v9806 = vpop.f32.mrf.mxu0
        %v9807 = vadd.f32 %v9778, %v9806
        %v9808 = vpop.f32.mrf.mxu0
        %v9809 = vadd.f32 %v9780, %v9808
        %9810 = vdwg.mxu0
        %9811 = vmatpush.bf16.msra.mxu0 %v8702
        %9812 = vmatpush.bf16.msra.mxu0 %v8685
        %9813 = vmatpush.bf16.msra.mxu0 %v8668
        %9814 = vmatpush.bf16.msra.mxu0 %v8651
        %9815 = vmatpush.bf16.msra.mxu0 %v8634
        %9816 = vmatpush.bf16.msra.mxu0 %v8617
        %9817 = vmatpush.bf16.msra.mxu0 %v8600
        %9818 = vmatpush.bf16.msra.mxu0 %v8583
        %9819 = vmatmul.bf16.gmra.mxu0 %v7443
        %v9820 = vpop.f32.mrf.mxu0
        %v9821 = vadd.f32 0.0, %v9820
        %v9822 = vpop.f32.mrf.mxu0
        %v9823 = vadd.f32 0.0, %v9822
        %9824 = vmatmul.bf16.gmra.mxu0 %v7445
        %v9825 = vpop.f32.mrf.mxu0
        %v9826 = vadd.f32 0.0, %v9825
        %v9827 = vpop.f32.mrf.mxu0
        %v9828 = vadd.f32 0.0, %v9827
        %9829 = vmatmul.bf16.gmra.mxu0 %v7447
        %v9830 = vpop.f32.mrf.mxu0
        %v9831 = vadd.f32 0.0, %v9830
        %v9832 = vpop.f32.mrf.mxu0
        %v9833 = vadd.f32 0.0, %v9832
        %9834 = vmatmul.bf16.gmra.mxu0 %v7449
        %v9835 = vpop.f32.mrf.mxu0
        %v9836 = vadd.f32 0.0, %v9835
        %v9837 = vpop.f32.mrf.mxu0
        %v9838 = vadd.f32 0.0, %v9837
        %9839 = vdwg.mxu0
        %9840 = vmatpush.bf16.msra.mxu0 %v8838
        %9841 = vmatpush.bf16.msra.mxu0 %v8821
        %9842 = vmatpush.bf16.msra.mxu0 %v8804
        %9843 = vmatpush.bf16.msra.mxu0 %v8787
        %9844 = vmatpush.bf16.msra.mxu0 %v8770
        %9845 = vmatpush.bf16.msra.mxu0 %v8753
        %9846 = vmatpush.bf16.msra.mxu0 %v8736
        %9847 = vmatpush.bf16.msra.mxu0 %v8719
        %9848 = vmatmul.bf16.gmra.mxu0 %v7444
        %v9849 = vpop.f32.mrf.mxu0
        %v9850 = vadd.f32 %v9821, %v9849
        %v9851 = vpop.f32.mrf.mxu0
        %v9852 = vadd.f32 %v9823, %v9851
        %9853 = vmatmul.bf16.gmra.mxu0 %v7446
        %v9854 = vpop.f32.mrf.mxu0
        %v9855 = vadd.f32 %v9826, %v9854
        %v9856 = vpop.f32.mrf.mxu0
        %v9857 = vadd.f32 %v9828, %v9856
        %9858 = vmatmul.bf16.gmra.mxu0 %v7448
        %v9859 = vpop.f32.mrf.mxu0
        %v9860 = vadd.f32 %v9831, %v9859
        %v9861 = vpop.f32.mrf.mxu0
        %v9862 = vadd.f32 %v9833, %v9861
        %9863 = vmatmul.bf16.gmra.mxu0 %v7450
        %v9864 = vpop.f32.mrf.mxu0
        %v9865 = vadd.f32 %v9836, %v9864
        %v9866 = vpop.f32.mrf.mxu0
        %v9867 = vadd.f32 %v9838, %v9866
        %9868 = vdwg.mxu0
        %9869 = vmatpush.bf16.msra.mxu0 %v8703
        %9870 = vmatpush.bf16.msra.mxu0 %v8686
        %9871 = vmatpush.bf16.msra.mxu0 %v8669
        %9872 = vmatpush.bf16.msra.mxu0 %v8652
        %9873 = vmatpush.bf16.msra.mxu0 %v8635
        %9874 = vmatpush.bf16.msra.mxu0 %v8618
        %9875 = vmatpush.bf16.msra.mxu0 %v8601
        %9876 = vmatpush.bf16.msra.mxu0 %v8584
        %9877 = vmatmul.bf16.gmra.mxu0 %v7443
        %v9878 = vpop.f32.mrf.mxu0
        %v9879 = vadd.f32 0.0, %v9878
        %v9880 = vpop.f32.mrf.mxu0
        %v9881 = vadd.f32 0.0, %v9880
        %9882 = vmatmul.bf16.gmra.mxu0 %v7445
        %v9883 = vpop.f32.mrf.mxu0
        %v9884 = vadd.f32 0.0, %v9883
        %v9885 = vpop.f32.mrf.mxu0
        %v9886 = vadd.f32 0.0, %v9885
        %9887 = vmatmul.bf16.gmra.mxu0 %v7447
        %v9888 = vpop.f32.mrf.mxu0
        %v9889 = vadd.f32 0.0, %v9888
        %v9890 = vpop.f32.mrf.mxu0
        %v9891 = vadd.f32 0.0, %v9890
        %9892 = vmatmul.bf16.gmra.mxu0 %v7449
        %v9893 = vpop.f32.mrf.mxu0
        %v9894 = vadd.f32 0.0, %v9893
        %v9895 = vpop.f32.mrf.mxu0
        %v9896 = vadd.f32 0.0, %v9895
        %9897 = vdwg.mxu0
        %9898 = vmatpush.bf16.msra.mxu0 %v8839
        %9899 = vmatpush.bf16.msra.mxu0 %v8822
        %9900 = vmatpush.bf16.msra.mxu0 %v8805
        %9901 = vmatpush.bf16.msra.mxu0 %v8788
        %9902 = vmatpush.bf16.msra.mxu0 %v8771
        %9903 = vmatpush.bf16.msra.mxu0 %v8754
        %9904 = vmatpush.bf16.msra.mxu0 %v8737
        %9905 = vmatpush.bf16.msra.mxu0 %v8720
        %9906 = vmatmul.bf16.gmra.mxu0 %v7444
        %v9907 = vpop.f32.mrf.mxu0
        %v9908 = vadd.f32 %v9879, %v9907
        %v9909 = vpop.f32.mrf.mxu0
        %v9910 = vadd.f32 %v9881, %v9909
        %9911 = vmatmul.bf16.gmra.mxu0 %v7446
        %v9912 = vpop.f32.mrf.mxu0
        %v9913 = vadd.f32 %v9884, %v9912
        %v9914 = vpop.f32.mrf.mxu0
        %v9915 = vadd.f32 %v9886, %v9914
        %9916 = vmatmul.bf16.gmra.mxu0 %v7448
        %v9917 = vpop.f32.mrf.mxu0
        %v9918 = vadd.f32 %v9889, %v9917
        %v9919 = vpop.f32.mrf.mxu0
        %v9920 = vadd.f32 %v9891, %v9919
        %9921 = vmatmul.bf16.gmra.mxu0 %v7450
        %v9922 = vpop.f32.mrf.mxu0
        %v9923 = vadd.f32 %v9894, %v9922
        %v9924 = vpop.f32.mrf.mxu0
        %v9925 = vadd.f32 %v9896, %v9924
        %9926 = vdwg.mxu0
        %9927 = vmatpush.bf16.msra.mxu0 %v8704
        %9928 = vmatpush.bf16.msra.mxu0 %v8687
        %9929 = vmatpush.bf16.msra.mxu0 %v8670
        %9930 = vmatpush.bf16.msra.mxu0 %v8653
        %9931 = vmatpush.bf16.msra.mxu0 %v8636
        %9932 = vmatpush.bf16.msra.mxu0 %v8619
        %9933 = vmatpush.bf16.msra.mxu0 %v8602
        %9934 = vmatpush.bf16.msra.mxu0 %v8585
        %9935 = vmatmul.bf16.gmra.mxu0 %v7443
        %v9936 = vpop.f32.mrf.mxu0
        %v9937 = vadd.f32 0.0, %v9936
        %v9938 = vpop.f32.mrf.mxu0
        %v9939 = vadd.f32 0.0, %v9938
        %9940 = vmatmul.bf16.gmra.mxu0 %v7445
        %v9941 = vpop.f32.mrf.mxu0
        %v9942 = vadd.f32 0.0, %v9941
        %v9943 = vpop.f32.mrf.mxu0
        %v9944 = vadd.f32 0.0, %v9943
        %9945 = vmatmul.bf16.gmra.mxu0 %v7447
        %v9946 = vpop.f32.mrf.mxu0
        %v9947 = vadd.f32 0.0, %v9946
        %v9948 = vpop.f32.mrf.mxu0
        %v9949 = vadd.f32 0.0, %v9948
        %9950 = vmatmul.bf16.gmra.mxu0 %v7449
        %v9951 = vpop.f32.mrf.mxu0
        %v9952 = vadd.f32 0.0, %v9951
        %v9953 = vpop.f32.mrf.mxu0
        %v9954 = vadd.f32 0.0, %v9953
        %9955 = vdwg.mxu0
        %9956 = vmatpush.bf16.msra.mxu0 %v8840
        %9957 = vmatpush.bf16.msra.mxu0 %v8823
        %9958 = vmatpush.bf16.msra.mxu0 %v8806
        %9959 = vmatpush.bf16.msra.mxu0 %v8789
        %9960 = vmatpush.bf16.msra.mxu0 %v8772
        %9961 = vmatpush.bf16.msra.mxu0 %v8755
        %9962 = vmatpush.bf16.msra.mxu0 %v8738
        %9963 = vmatpush.bf16.msra.mxu0 %v8721
        %9964 = vmatmul.bf16.gmra.mxu0 %v7444
        %v9965 = vpop.f32.mrf.mxu0
        %v9966 = vadd.f32 %v9937, %v9965
        %v9967 = vpop.f32.mrf.mxu0
        %v9968 = vadd.f32 %v9939, %v9967
        %9969 = vmatmul.bf16.gmra.mxu0 %v7446
        %v9970 = vpop.f32.mrf.mxu0
        %v9971 = vadd.f32 %v9942, %v9970
        %v9972 = vpop.f32.mrf.mxu0
        %v9973 = vadd.f32 %v9944, %v9972
        %9974 = vmatmul.bf16.gmra.mxu0 %v7448
        %v9975 = vpop.f32.mrf.mxu0
        %v9976 = vadd.f32 %v9947, %v9975
        %v9977 = vpop.f32.mrf.mxu0
        %v9978 = vadd.f32 %v9949, %v9977
        %9979 = vmatmul.bf16.gmra.mxu0 %v7450
        %v9980 = vpop.f32.mrf.mxu0
        %v9981 = vadd.f32 %v9952, %v9980
        %v9982 = vpop.f32.mrf.mxu0
        %v9983 = vadd.f32 %v9954, %v9982
        %9984 = vdwg.mxu0
        %9985 = vmatpush.bf16.msra.mxu0 %v8705
        %9986 = vmatpush.bf16.msra.mxu0 %v8688
        %9987 = vmatpush.bf16.msra.mxu0 %v8671
        %9988 = vmatpush.bf16.msra.mxu0 %v8654
        %9989 = vmatpush.bf16.msra.mxu0 %v8637
        %9990 = vmatpush.bf16.msra.mxu0 %v8620
        %9991 = vmatpush.bf16.msra.mxu0 %v8603
        %9992 = vmatpush.bf16.msra.mxu0 %v8586
        %9993 = vmatmul.bf16.gmra.mxu0 %v7443
        %v9994 = vpop.f32.mrf.mxu0
        %v9995 = vadd.f32 0.0, %v9994
        %v9996 = vpop.f32.mrf.mxu0
        %v9997 = vadd.f32 0.0, %v9996
        %9998 = vmatmul.bf16.gmra.mxu0 %v7445
        %v9999 = vpop.f32.mrf.mxu0
        %v10000 = vadd.f32 0.0, %v9999
        %v10001 = vpop.f32.mrf.mxu0
        %v10002 = vadd.f32 0.0, %v10001
        %10003 = vmatmul.bf16.gmra.mxu0 %v7447
        %v10004 = vpop.f32.mrf.mxu0
        %v10005 = vadd.f32 0.0, %v10004
        %v10006 = vpop.f32.mrf.mxu0
        %v10007 = vadd.f32 0.0, %v10006
        %10008 = vmatmul.bf16.gmra.mxu0 %v7449
        %v10009 = vpop.f32.mrf.mxu0
        %v10010 = vadd.f32 0.0, %v10009
        %v10011 = vpop.f32.mrf.mxu0
        %v10012 = vadd.f32 0.0, %v10011
        %10013 = vdwg.mxu0
        %10014 = vmatpush.bf16.msra.mxu0 %v8841
        %10015 = vmatpush.bf16.msra.mxu0 %v8824
        %10016 = vmatpush.bf16.msra.mxu0 %v8807
        %10017 = vmatpush.bf16.msra.mxu0 %v8790
        %10018 = vmatpush.bf16.msra.mxu0 %v8773
        %10019 = vmatpush.bf16.msra.mxu0 %v8756
        %10020 = vmatpush.bf16.msra.mxu0 %v8739
        %10021 = vmatpush.bf16.msra.mxu0 %v8722
        %10022 = vmatmul.bf16.gmra.mxu0 %v7444
        %v10023 = vpop.f32.mrf.mxu0
        %v10024 = vadd.f32 %v9995, %v10023
        %v10025 = vpop.f32.mrf.mxu0
        %v10026 = vadd.f32 %v9997, %v10025
        %10027 = vmatmul.bf16.gmra.mxu0 %v7446
        %v10028 = vpop.f32.mrf.mxu0
        %v10029 = vadd.f32 %v10000, %v10028
        %v10030 = vpop.f32.mrf.mxu0
        %v10031 = vadd.f32 %v10002, %v10030
        %10032 = vmatmul.bf16.gmra.mxu0 %v7448
        %v10033 = vpop.f32.mrf.mxu0
        %v10034 = vadd.f32 %v10005, %v10033
        %v10035 = vpop.f32.mrf.mxu0
        %v10036 = vadd.f32 %v10007, %v10035
        %10037 = vmatmul.bf16.gmra.mxu0 %v7450
        %v10038 = vpop.f32.mrf.mxu0
        %v10039 = vadd.f32 %v10010, %v10038
        %v10040 = vpop.f32.mrf.mxu0
        %v10041 = vadd.f32 %v10012, %v10040
        %10042 = vdwg.mxu0
        %10043 = vmatpush.bf16.msra.mxu0 %v8706
        %10044 = vmatpush.bf16.msra.mxu0 %v8689
        %10045 = vmatpush.bf16.msra.mxu0 %v8672
        %10046 = vmatpush.bf16.msra.mxu0 %v8655
        %10047 = vmatpush.bf16.msra.mxu0 %v8638
        %10048 = vmatpush.bf16.msra.mxu0 %v8621
        %10049 = vmatpush.bf16.msra.mxu0 %v8604
        %10050 = vmatpush.bf16.msra.mxu0 %v8587
        %10051 = vmatmul.bf16.gmra.mxu0 %v7443
        %v10052 = vpop.f32.mrf.mxu0
        %v10053 = vadd.f32 0.0, %v10052
        %v10054 = vpop.f32.mrf.mxu0
        %v10055 = vadd.f32 0.0, %v10054
        %10056 = vmatmul.bf16.gmra.mxu0 %v7445
        %v10057 = vpop.f32.mrf.mxu0
        %v10058 = vadd.f32 0.0, %v10057
        %v10059 = vpop.f32.mrf.mxu0
        %v10060 = vadd.f32 0.0, %v10059
        %10061 = vmatmul.bf16.gmra.mxu0 %v7447
        %v10062 = vpop.f32.mrf.mxu0
        %v10063 = vadd.f32 0.0, %v10062
        %v10064 = vpop.f32.mrf.mxu0
        %v10065 = vadd.f32 0.0, %v10064
        %10066 = vmatmul.bf16.gmra.mxu0 %v7449
        %v10067 = vpop.f32.mrf.mxu0
        %v10068 = vadd.f32 0.0, %v10067
        %v10069 = vpop.f32.mrf.mxu0
        %v10070 = vadd.f32 0.0, %v10069
        %10071 = vdwg.mxu0
        %10072 = vmatpush.bf16.msra.mxu0 %v8842
        %10073 = vmatpush.bf16.msra.mxu0 %v8825
        %10074 = vmatpush.bf16.msra.mxu0 %v8808
        %10075 = vmatpush.bf16.msra.mxu0 %v8791
        %10076 = vmatpush.bf16.msra.mxu0 %v8774
        %10077 = vmatpush.bf16.msra.mxu0 %v8757
        %10078 = vmatpush.bf16.msra.mxu0 %v8740
        %10079 = vmatpush.bf16.msra.mxu0 %v8723
        %10080 = vmatmul.bf16.gmra.mxu0 %v7444
        %v10081 = vpop.f32.mrf.mxu0
        %v10082 = vadd.f32 %v10053, %v10081
        %v10083 = vpop.f32.mrf.mxu0
        %v10084 = vadd.f32 %v10055, %v10083
        %10085 = vmatmul.bf16.gmra.mxu0 %v7446
        %v10086 = vpop.f32.mrf.mxu0
        %v10087 = vadd.f32 %v10058, %v10086
        %v10088 = vpop.f32.mrf.mxu0
        %v10089 = vadd.f32 %v10060, %v10088
        %10090 = vmatmul.bf16.gmra.mxu0 %v7448
        %v10091 = vpop.f32.mrf.mxu0
        %v10092 = vadd.f32 %v10063, %v10091
        %v10093 = vpop.f32.mrf.mxu0
        %v10094 = vadd.f32 %v10065, %v10093
        %10095 = vmatmul.bf16.gmra.mxu0 %v7450
        %v10096 = vpop.f32.mrf.mxu0
        %v10097 = vadd.f32 %v10068, %v10096
        %v10098 = vpop.f32.mrf.mxu0
        %v10099 = vadd.f32 %v10070, %v10098
        %10100 = vdwg.mxu0
        %v10317 = vunpack.c.l.b16 %v7227
        %v10318 = vunpack.c.h.b16 %v7227
        %v10319 = vunpack.c.l.b16 %v7228
        %v10320 = vunpack.c.h.b16 %v7228
        %v10321 = vunpack.c.l.b16 %v7229
        %v10322 = vunpack.c.h.b16 %v7229
        %v10323 = vunpack.c.l.b16 %v7230
        %v10324 = vunpack.c.h.b16 %v7230
        %v10325 = vunpack.c.l.b16 %v7231
        %v10326 = vunpack.c.h.b16 %v7231
        %v10327 = vunpack.c.l.b16 %v7232
        %v10328 = vunpack.c.h.b16 %v7232
        %v10329 = vunpack.c.l.b16 %v7233
        %v10330 = vunpack.c.h.b16 %v7233
        %v10331 = vunpack.c.l.b16 %v7234
        %v10332 = vunpack.c.h.b16 %v7234
        %v10333 = vunpack.c.l.b16 %v7235
        %v10334 = vunpack.c.l.b16 %v7236
        %v10335 = vunpack.c.h.b16 %v7236
        %v10336 = vunpack.c.l.b16 %v7237
        %v10337 = vunpack.c.h.b16 %v7237
        %v10338 = vunpack.c.l.b16 %v7238
        %v10339 = vunpack.c.h.b16 %v7238
        %v10340 = vunpack.c.l.b16 %v7239
        %v10341 = vunpack.c.h.b16 %v7239
        %v10342 = vunpack.c.l.b16 %v7240
        %v10343 = vunpack.c.h.b16 %v7240
        %v10344 = vunpack.c.l.b16 %v7241
        %v10345 = vunpack.c.h.b16 %v7241
        %v10346 = vunpack.c.l.b16 %v7242
        %v10347 = vunpack.c.h.b16 %v7242
        %v10348 = vunpack.c.l.b16 %v7243
        %v10349 = vunpack.c.h.b16 %v7243
        %v10350 = vunpack.c.l.b16 %v7244
        %v10351 = vunpack.c.l.b16 %v7245
        %v10352 = vunpack.c.h.b16 %v7245
        %v10353 = vunpack.c.l.b16 %v7246
        %v10354 = vunpack.c.h.b16 %v7246
        %v10355 = vunpack.c.l.b16 %v7247
        %v10356 = vunpack.c.h.b16 %v7247
        %v10357 = vunpack.c.l.b16 %v7248
        %v10358 = vunpack.c.h.b16 %v7248
        %v10359 = vunpack.c.l.b16 %v7249
        %v10360 = vunpack.c.h.b16 %v7249
        %v10361 = vunpack.c.l.b16 %v7250
        %v10362 = vunpack.c.h.b16 %v7250
        %v10363 = vunpack.c.l.b16 %v7251
        %v10364 = vunpack.c.h.b16 %v7251
        %v10365 = vunpack.c.l.b16 %v7252
        %v10366 = vunpack.c.h.b16 %v7252
        %v10367 = vunpack.c.l.b16 %v7253
        %v10368 = vunpack.c.l.b16 %v7254
        %v10369 = vunpack.c.h.b16 %v7254
        %v10370 = vunpack.c.l.b16 %v7255
        %v10371 = vunpack.c.h.b16 %v7255
        %v10372 = vunpack.c.l.b16 %v7256
        %v10373 = vunpack.c.h.b16 %v7256
        %v10374 = vunpack.c.l.b16 %v7257
        %v10375 = vunpack.c.h.b16 %v7257
        %v10376 = vunpack.c.l.b16 %v7258
        %v10377 = vunpack.c.h.b16 %v7258
        %v10378 = vunpack.c.l.b16 %v7259
        %v10379 = vunpack.c.h.b16 %v7259
        %v10380 = vunpack.c.l.b16 %v7260
        %v10381 = vunpack.c.h.b16 %v7260
        %v10382 = vunpack.c.l.b16 %v7261
        %v10383 = vunpack.c.h.b16 %v7261
        %v10384 = vunpack.c.l.b16 %v7262
        %v10385 = vunpack.c.l.b16 %v7263
        %v10386 = vunpack.c.h.b16 %v7263
        %v10387 = vunpack.c.l.b16 %v7264
        %v10388 = vunpack.c.h.b16 %v7264
        %v10389 = vunpack.c.l.b16 %v7265
        %v10390 = vunpack.c.h.b16 %v7265
        %v10391 = vunpack.c.l.b16 %v7266
        %v10392 = vunpack.c.h.b16 %v7266
        %v10393 = vunpack.c.l.b16 %v7267
        %v10394 = vunpack.c.h.b16 %v7267
        %v10395 = vunpack.c.l.b16 %v7268
        %v10396 = vunpack.c.h.b16 %v7268
        %v10397 = vunpack.c.l.b16 %v7269
        %v10398 = vunpack.c.h.b16 %v7269
        %v10399 = vunpack.c.l.b16 %v7270
        %v10400 = vunpack.c.h.b16 %v7270
        %v10401 = vunpack.c.l.b16 %v7271
        %v10402 = vunpack.c.l.b16 %v7272
        %v10403 = vunpack.c.h.b16 %v7272
        %v10404 = vunpack.c.l.b16 %v7273
        %v10405 = vunpack.c.h.b16 %v7273
        %v10406 = vunpack.c.l.b16 %v7274
        %v10407 = vunpack.c.h.b16 %v7274
        %v10408 = vunpack.c.l.b16 %v7275
        %v10409 = vunpack.c.h.b16 %v7275
        %v10410 = vunpack.c.l.b16 %v7276
        %v10411 = vunpack.c.h.b16 %v7276
        %v10412 = vunpack.c.l.b16 %v7277
        %v10413 = vunpack.c.h.b16 %v7277
        %v10414 = vunpack.c.l.b16 %v7278
        %v10415 = vunpack.c.h.b16 %v7278
        %v10416 = vunpack.c.l.b16 %v7279
        %v10417 = vunpack.c.h.b16 %v7279
        %v10418 = vunpack.c.l.b16 %v7280
        %v10419 = vunpack.c.l.b16 %v7281
        %v10420 = vunpack.c.h.b16 %v7281
        %v10421 = vunpack.c.l.b16 %v7282
        %v10422 = vunpack.c.h.b16 %v7282
        %v10423 = vunpack.c.l.b16 %v7283
        %v10424 = vunpack.c.h.b16 %v7283
        %v10425 = vunpack.c.l.b16 %v7284
        %v10426 = vunpack.c.h.b16 %v7284
        %v10427 = vunpack.c.l.b16 %v7285
        %v10428 = vunpack.c.h.b16 %v7285
        %v10429 = vunpack.c.l.b16 %v7286
        %v10430 = vunpack.c.h.b16 %v7286
        %v10431 = vunpack.c.l.b16 %v7287
        %v10432 = vunpack.c.h.b16 %v7287
        %v10433 = vunpack.c.l.b16 %v7288
        %v10434 = vunpack.c.h.b16 %v7288
        %v10435 = vunpack.c.l.b16 %v7289
        %v10436 = vunpack.c.l.b16 %v7290
        %v10437 = vunpack.c.h.b16 %v7290
        %v10438 = vunpack.c.l.b16 %v7291
        %v10439 = vunpack.c.h.b16 %v7291
        %v10440 = vunpack.c.l.b16 %v7292
        %v10441 = vunpack.c.h.b16 %v7292
        %v10442 = vunpack.c.l.b16 %v7293
        %v10443 = vunpack.c.h.b16 %v7293
        %v10444 = vunpack.c.l.b16 %v7294
        %v10445 = vunpack.c.h.b16 %v7294
        %v10446 = vunpack.c.l.b16 %v7295
        %v10447 = vunpack.c.h.b16 %v7295
        %v10448 = vunpack.c.l.b16 %v7296
        %v10449 = vunpack.c.h.b16 %v7296
        %v10450 = vunpack.c.l.b16 %v7297
        %v10451 = vunpack.c.h.b16 %v7297
        %v10452 = vunpack.c.l.b16 %v7298
        %v10453 = vunpack.c.l.b16 %v7299
        %v10454 = vunpack.c.h.b16 %v7299
        %v10455 = vunpack.c.l.b16 %v7300
        %v10456 = vunpack.c.h.b16 %v7300
        %v10457 = vunpack.c.l.b16 %v7301
        %v10458 = vunpack.c.h.b16 %v7301
        %v10459 = vunpack.c.l.b16 %v7302
        %v10460 = vunpack.c.h.b16 %v7302
        %v10461 = vunpack.c.l.b16 %v7303
        %v10462 = vunpack.c.h.b16 %v7303
        %v10463 = vunpack.c.l.b16 %v7304
        %v10464 = vunpack.c.h.b16 %v7304
        %v10465 = vunpack.c.l.b16 %v7305
        %v10466 = vunpack.c.h.b16 %v7305
        %v10467 = vunpack.c.l.b16 %v7306
        %v10468 = vunpack.c.h.b16 %v7306
        %v10469 = vunpack.c.l.b16 %v7307
        %v10470 = vunpack.c.l.b16 %v7308
        %v10471 = vunpack.c.h.b16 %v7308
        %v10472 = vunpack.c.l.b16 %v7309
        %v10473 = vunpack.c.h.b16 %v7309
        %v10474 = vunpack.c.l.b16 %v7310
        %v10475 = vunpack.c.h.b16 %v7310
        %v10476 = vunpack.c.l.b16 %v7311
        %v10477 = vunpack.c.h.b16 %v7311
        %v10478 = vunpack.c.l.b16 %v7312
        %v10479 = vunpack.c.h.b16 %v7312
        %v10480 = vunpack.c.l.b16 %v7313
        %v10481 = vunpack.c.h.b16 %v7313
        %v10482 = vunpack.c.l.b16 %v7314
        %v10483 = vunpack.c.h.b16 %v7314
        %v10484 = vunpack.c.l.b16 %v7315
        %v10485 = vunpack.c.h.b16 %v7315
        %v10486 = vunpack.c.l.b16 %v7316
        %v10487 = vunpack.c.l.b16 %v7317
        %v10488 = vunpack.c.h.b16 %v7317
        %v10489 = vunpack.c.l.b16 %v7318
        %v10490 = vunpack.c.h.b16 %v7318
        %v10491 = vunpack.c.l.b16 %v7319
        %v10492 = vunpack.c.h.b16 %v7319
        %v10493 = vunpack.c.l.b16 %v7320
        %v10494 = vunpack.c.h.b16 %v7320
        %v10495 = vunpack.c.l.b16 %v7321
        %v10496 = vunpack.c.h.b16 %v7321
        %v10497 = vunpack.c.l.b16 %v7322
        %v10498 = vunpack.c.h.b16 %v7322
        %v10499 = vunpack.c.l.b16 %v7323
        %v10500 = vunpack.c.h.b16 %v7323
        %v10501 = vunpack.c.l.b16 %v7324
        %v10502 = vunpack.c.h.b16 %v7324
        %v10503 = vunpack.c.l.b16 %v7325
        %v10504 = vunpack.c.l.b16 %v7326
        %v10505 = vunpack.c.h.b16 %v7326
        %v10506 = vunpack.c.l.b16 %v7327
        %v10507 = vunpack.c.h.b16 %v7327
        %v10508 = vunpack.c.l.b16 %v7328
        %v10509 = vunpack.c.h.b16 %v7328
        %v10510 = vunpack.c.l.b16 %v7329
        %v10511 = vunpack.c.h.b16 %v7329
        %v10512 = vunpack.c.l.b16 %v7330
        %v10513 = vunpack.c.h.b16 %v7330
        %v10514 = vunpack.c.l.b16 %v7331
        %v10515 = vunpack.c.h.b16 %v7331
        %v10516 = vunpack.c.l.b16 %v7332
        %v10517 = vunpack.c.h.b16 %v7332
        %v10518 = vunpack.c.l.b16 %v7333
        %v10519 = vunpack.c.h.b16 %v7333
        %v10520 = vunpack.c.l.b16 %v7334
        %v10521 = vunpack.c.l.b16 %v7335
        %v10522 = vunpack.c.h.b16 %v7335
        %v10523 = vunpack.c.l.b16 %v7336
        %v10524 = vunpack.c.h.b16 %v7336
        %v10525 = vunpack.c.l.b16 %v7337
        %v10526 = vunpack.c.h.b16 %v7337
        %v10527 = vunpack.c.l.b16 %v7338
        %v10528 = vunpack.c.h.b16 %v7338
        %v10529 = vunpack.c.l.b16 %v7339
        %v10530 = vunpack.c.h.b16 %v7339
        %v10531 = vunpack.c.l.b16 %v7340
        %v10532 = vunpack.c.h.b16 %v7340
        %v10533 = vunpack.c.l.b16 %v7341
        %v10534 = vunpack.c.h.b16 %v7341
        %v10535 = vunpack.c.l.b16 %v7342
        %v10536 = vunpack.c.h.b16 %v7342
        %v10537 = vunpack.c.l.b16 %v7343
        %v10538 = vunpack.c.l.b16 %v7344
        %v10539 = vunpack.c.h.b16 %v7344
        %v10540 = vunpack.c.l.b16 %v7345
        %v10541 = vunpack.c.h.b16 %v7345
        %v10542 = vunpack.c.l.b16 %v7346
        %v10543 = vunpack.c.h.b16 %v7346
        %v10544 = vunpack.c.l.b16 %v7347
        %v10545 = vunpack.c.h.b16 %v7347
        %v10546 = vunpack.c.l.b16 %v7348
        %v10547 = vunpack.c.h.b16 %v7348
        %v10548 = vunpack.c.l.b16 %v7349
        %v10549 = vunpack.c.h.b16 %v7349
        %v10550 = vunpack.c.l.b16 %v7350
        %v10551 = vunpack.c.h.b16 %v7350
        %v10552 = vunpack.c.l.b16 %v7351
        %v10553 = vunpack.c.h.b16 %v7351
        %v10554 = vunpack.c.l.b16 %v7352
        %v10555 = vunpack.c.l.b16 %v7353
        %v10556 = vunpack.c.h.b16 %v7353
        %v10557 = vunpack.c.l.b16 %v7354
        %v10558 = vunpack.c.h.b16 %v7354
        %v10559 = vunpack.c.l.b16 %v7355
        %v10560 = vunpack.c.h.b16 %v7355
        %v10561 = vunpack.c.l.b16 %v7356
        %v10562 = vunpack.c.h.b16 %v7356
        %v10563 = vunpack.c.l.b16 %v7357
        %v10564 = vunpack.c.h.b16 %v7357
        %v10565 = vunpack.c.l.b16 %v7358
        %v10566 = vunpack.c.h.b16 %v7358
        %v10567 = vunpack.c.l.b16 %v7359
        %v10568 = vunpack.c.h.b16 %v7359
        %v10569 = vunpack.c.l.b16 %v7360
        %v10570 = vunpack.c.h.b16 %v7360
        %v10571 = vunpack.c.l.b16 %v7361
        %v10572 = vunpack.c.l.b16 %v7362
        %v10573 = vunpack.c.h.b16 %v7362
        %v10574 = vunpack.c.l.b16 %v7363
        %v10575 = vunpack.c.h.b16 %v7363
        %v10576 = vunpack.c.l.b16 %v7364
        %v10577 = vunpack.c.h.b16 %v7364
        %v10578 = vunpack.c.l.b16 %v7365
        %v10579 = vunpack.c.h.b16 %v7365
        %v10580 = vunpack.c.l.b16 %v7366
        %v10581 = vunpack.c.h.b16 %v7366
        %v10582 = vunpack.c.l.b16 %v7367
        %v10583 = vunpack.c.h.b16 %v7367
        %v10584 = vunpack.c.l.b16 %v7368
        %v10585 = vunpack.c.h.b16 %v7368
        %v10586 = vunpack.c.l.b16 %v7369
        %v10587 = vunpack.c.h.b16 %v7369
        %v10588 = vunpack.c.l.b16 %v7370
        %v10589 = vunpack.c.l.b16 %v7371
        %v10590 = vunpack.c.h.b16 %v7371
        %v10591 = vunpack.c.l.b16 %v7372
        %v10592 = vunpack.c.h.b16 %v7372
        %v10593 = vunpack.c.l.b16 %v7373
        %v10594 = vunpack.c.h.b16 %v7373
        %v10595 = vunpack.c.l.b16 %v7374
        %v10596 = vunpack.c.h.b16 %v7374
        %v10597 = vunpack.c.l.b16 %v7375
        %v10598 = vunpack.c.h.b16 %v7375
        %v10599 = vunpack.c.l.b16 %v7376
        %v10600 = vunpack.c.h.b16 %v7376
        %v10601 = vunpack.c.l.b16 %v7377
        %v10602 = vunpack.c.h.b16 %v7377
        %v10603 = vunpack.c.l.b16 %v7378
        %v10604 = vunpack.c.h.b16 %v7378
        %v10605 = vunpack.c.l.b16 %v7379
        %v10606 = vunpack.c.l.b16 %v7380
        %v10607 = vunpack.c.h.b16 %v7380
        %v10608 = vunpack.c.l.b16 %v7381
        %v10609 = vunpack.c.h.b16 %v7381
        %v10610 = vunpack.c.l.b16 %v7382
        %v10611 = vunpack.c.h.b16 %v7382
        %v10612 = vunpack.c.l.b16 %v7383
        %v10613 = vunpack.c.h.b16 %v7383
        %v10614 = vunpack.c.l.b16 %v7384
        %v10615 = vunpack.c.h.b16 %v7384
        %v10616 = vunpack.c.l.b16 %v7385
        %v10617 = vunpack.c.h.b16 %v7385
        %v10618 = vunpack.c.l.b16 %v7386
        %v10619 = vunpack.c.h.b16 %v7386
        %v10620 = vunpack.c.l.b16 %v7387
        %v10621 = vunpack.c.h.b16 %v7387
        %v10622 = vunpack.c.l.b16 %v7388
        %v10623 = vunpack.c.l.b16 %v7389
        %v10624 = vunpack.c.h.b16 %v7389
        %v10625 = vunpack.c.l.b16 %v7390
        %v10626 = vunpack.c.h.b16 %v7390
        %v10627 = vunpack.c.l.b16 %v7391
        %v10628 = vunpack.c.h.b16 %v7391
        %v10629 = vunpack.c.l.b16 %v7392
        %v10630 = vunpack.c.h.b16 %v7392
        %v10631 = vunpack.c.l.b16 %v7393
        %v10632 = vunpack.c.h.b16 %v7393
        %v10633 = vunpack.c.l.b16 %v7394
        %v10634 = vunpack.c.h.b16 %v7394
        %v10635 = vunpack.c.l.b16 %v7395
        %v10636 = vunpack.c.h.b16 %v7395
        %v10637 = vunpack.c.l.b16 %v7396
        %v10638 = vunpack.c.h.b16 %v7396
        %v10639 = vunpack.c.l.b16 %v7397
        %v10640 = vunpack.c.l.b16 %v7398
        %v10641 = vunpack.c.h.b16 %v7398
        %v10642 = vunpack.c.l.b16 %v7399
        %v10643 = vunpack.c.h.b16 %v7399
        %v10644 = vunpack.c.l.b16 %v7400
        %v10645 = vunpack.c.h.b16 %v7400
        %v10646 = vunpack.c.l.b16 %v7401
        %v10647 = vunpack.c.h.b16 %v7401
        %v10648 = vunpack.c.l.b16 %v7402
        %v10649 = vunpack.c.h.b16 %v7402
        %v10650 = vunpack.c.l.b16 %v7403
        %v10651 = vunpack.c.h.b16 %v7403
        %v10652 = vunpack.c.l.b16 %v7404
        %v10653 = vunpack.c.h.b16 %v7404
        %v10654 = vunpack.c.l.b16 %v7405
        %v10655 = vunpack.c.h.b16 %v7405
        %v10656 = vunpack.c.l.b16 %v7406
        %v10657 = vunpack.c.l.b16 %v7407
        %v10658 = vunpack.c.h.b16 %v7407
        %v10659 = vunpack.c.l.b16 %v7408
        %v10660 = vunpack.c.h.b16 %v7408
        %v10661 = vunpack.c.l.b16 %v7409
        %v10662 = vunpack.c.h.b16 %v7409
        %v10663 = vunpack.c.l.b16 %v7410
        %v10664 = vunpack.c.h.b16 %v7410
        %v10665 = vunpack.c.l.b16 %v7411
        %v10666 = vunpack.c.h.b16 %v7411
        %v10667 = vunpack.c.l.b16 %v7412
        %v10668 = vunpack.c.h.b16 %v7412
        %v10669 = vunpack.c.l.b16 %v7413
        %v10670 = vunpack.c.h.b16 %v7413
        %v10671 = vunpack.c.l.b16 %v7414
        %v10672 = vunpack.c.h.b16 %v7414
        %v10673 = vunpack.c.l.b16 %v7415
        %v10674 = vunpack.c.l.b16 %v7416
        %v10675 = vunpack.c.h.b16 %v7416
        %v10676 = vunpack.c.l.b16 %v7417
        %v10677 = vunpack.c.h.b16 %v7417
        %v10678 = vunpack.c.l.b16 %v7418
        %v10679 = vunpack.c.h.b16 %v7418
        %v10680 = vunpack.c.l.b16 %v7419
        %v10681 = vunpack.c.h.b16 %v7419
        %v10682 = vunpack.c.l.b16 %v7420
        %v10683 = vunpack.c.h.b16 %v7420
        %v10684 = vunpack.c.l.b16 %v7421
        %v10685 = vunpack.c.h.b16 %v7421
        %v10686 = vunpack.c.l.b16 %v7422
        %v10687 = vunpack.c.h.b16 %v7422
        %v10688 = vunpack.c.l.b16 %v7423
        %v10689 = vunpack.c.h.b16 %v7423
        %v10690 = vunpack.c.l.b16 %v7424
        %v10691 = vunpack.c.l.b16 %v7425
        %v10692 = vunpack.c.h.b16 %v7425
        %v10693 = vunpack.c.l.b16 %v7426
        %v10694 = vunpack.c.h.b16 %v7426
        %v10695 = vunpack.c.l.b16 %v7427
        %v10696 = vunpack.c.h.b16 %v7427
        %v10697 = vunpack.c.l.b16 %v7428
        %v10698 = vunpack.c.h.b16 %v7428
        %v10699 = vunpack.c.l.b16 %v7429
        %v10700 = vunpack.c.h.b16 %v7429
        %v10701 = vunpack.c.l.b16 %v7430
        %v10702 = vunpack.c.h.b16 %v7430
        %v10703 = vunpack.c.l.b16 %v7431
        %v10704 = vunpack.c.h.b16 %v7431
        %v10705 = vunpack.c.l.b16 %v7432
        %v10706 = vunpack.c.h.b16 %v7432
        %v10707 = vunpack.c.l.b16 %v7433
        %v10708 = vunpack.c.l.b16 %v7434
        %v10709 = vunpack.c.h.b16 %v7434
        %v10710 = vunpack.c.l.b16 %v7435
        %v10711 = vunpack.c.h.b16 %v7435
        %v10712 = vunpack.c.l.b16 %v7436
        %v10713 = vunpack.c.h.b16 %v7436
        %v10714 = vunpack.c.l.b16 %v7437
        %v10715 = vunpack.c.h.b16 %v7437
        %v10716 = vunpack.c.l.b16 %v7438
        %v10717 = vunpack.c.h.b16 %v7438
        %v10718 = vunpack.c.l.b16 %v7439
        %v10719 = vunpack.c.h.b16 %v7439
        %v10720 = vunpack.c.l.b16 %v7440
        %v10721 = vunpack.c.h.b16 %v7440
        %v10722 = vunpack.c.l.b16 %v7441
        %v10723 = vunpack.c.h.b16 %v7441
        %v10724 = vunpack.c.l.b16 %v7442
        %v10725 = vpack.c.b16 %v10334, %v10317
        %v10726 = vpack.c.b16 %v10335, %v10318
        %v10727 = vpack.c.b16 %v10336, %v10319
        %v10728 = vpack.c.b16 %v10337, %v10320
        %v10729 = vpack.c.b16 %v10338, %v10321
        %v10730 = vpack.c.b16 %v10339, %v10322
        %v10731 = vpack.c.b16 %v10340, %v10323
        %v10732 = vpack.c.b16 %v10341, %v10324
        %v10733 = vpack.c.b16 %v10342, %v10325
        %v10734 = vpack.c.b16 %v10343, %v10326
        %v10735 = vpack.c.b16 %v10344, %v10327
        %v10736 = vpack.c.b16 %v10345, %v10328
        %v10737 = vpack.c.b16 %v10346, %v10329
        %v10738 = vpack.c.b16 %v10347, %v10330
        %v10739 = vpack.c.b16 %v10348, %v10331
        %v10740 = vpack.c.b16 %v10349, %v10332
        %v10741 = vpack.c.b16 %v10350, %v10333
        %v10742 = vpack.c.b16 %v10368, %v10351
        %v10743 = vpack.c.b16 %v10369, %v10352
        %v10744 = vpack.c.b16 %v10370, %v10353
        %v10745 = vpack.c.b16 %v10371, %v10354
        %v10746 = vpack.c.b16 %v10372, %v10355
        %v10747 = vpack.c.b16 %v10373, %v10356
        %v10748 = vpack.c.b16 %v10374, %v10357
        %v10749 = vpack.c.b16 %v10375, %v10358
        %v10750 = vpack.c.b16 %v10376, %v10359
        %v10751 = vpack.c.b16 %v10377, %v10360
        %v10752 = vpack.c.b16 %v10378, %v10361
        %v10753 = vpack.c.b16 %v10379, %v10362
        %v10754 = vpack.c.b16 %v10380, %v10363
        %v10755 = vpack.c.b16 %v10381, %v10364
        %v10756 = vpack.c.b16 %v10382, %v10365
        %v10757 = vpack.c.b16 %v10383, %v10366
        %v10758 = vpack.c.b16 %v10384, %v10367
        %v10759 = vpack.c.b16 %v10402, %v10385
        %v10760 = vpack.c.b16 %v10403, %v10386
        %v10761 = vpack.c.b16 %v10404, %v10387
        %v10762 = vpack.c.b16 %v10405, %v10388
        %v10763 = vpack.c.b16 %v10406, %v10389
        %v10764 = vpack.c.b16 %v10407, %v10390
        %v10765 = vpack.c.b16 %v10408, %v10391
        %v10766 = vpack.c.b16 %v10409, %v10392
        %v10767 = vpack.c.b16 %v10410, %v10393
        %v10768 = vpack.c.b16 %v10411, %v10394
        %v10769 = vpack.c.b16 %v10412, %v10395
        %v10770 = vpack.c.b16 %v10413, %v10396
        %v10771 = vpack.c.b16 %v10414, %v10397
        %v10772 = vpack.c.b16 %v10415, %v10398
        %v10773 = vpack.c.b16 %v10416, %v10399
        %v10774 = vpack.c.b16 %v10417, %v10400
        %v10775 = vpack.c.b16 %v10418, %v10401
        %v10776 = vpack.c.b16 %v10436, %v10419
        %v10777 = vpack.c.b16 %v10437, %v10420
        %v10778 = vpack.c.b16 %v10438, %v10421
        %v10779 = vpack.c.b16 %v10439, %v10422
        %v10780 = vpack.c.b16 %v10440, %v10423
        %v10781 = vpack.c.b16 %v10441, %v10424
        %v10782 = vpack.c.b16 %v10442, %v10425
        %v10783 = vpack.c.b16 %v10443, %v10426
        %v10784 = vpack.c.b16 %v10444, %v10427
        %v10785 = vpack.c.b16 %v10445, %v10428
        %v10786 = vpack.c.b16 %v10446, %v10429
        %v10787 = vpack.c.b16 %v10447, %v10430
        %v10788 = vpack.c.b16 %v10448, %v10431
        %v10789 = vpack.c.b16 %v10449, %v10432
        %v10790 = vpack.c.b16 %v10450, %v10433
        %v10791 = vpack.c.b16 %v10451, %v10434
        %v10792 = vpack.c.b16 %v10452, %v10435
        %v10793 = vpack.c.b16 %v10470, %v10453
        %v10794 = vpack.c.b16 %v10471, %v10454
        %v10795 = vpack.c.b16 %v10472, %v10455
        %v10796 = vpack.c.b16 %v10473, %v10456
        %v10797 = vpack.c.b16 %v10474, %v10457
        %v10798 = vpack.c.b16 %v10475, %v10458
        %v10799 = vpack.c.b16 %v10476, %v10459
        %v10800 = vpack.c.b16 %v10477, %v10460
        %v10801 = vpack.c.b16 %v10478, %v10461
        %v10802 = vpack.c.b16 %v10479, %v10462
        %v10803 = vpack.c.b16 %v10480, %v10463
        %v10804 = vpack.c.b16 %v10481, %v10464
        %v10805 = vpack.c.b16 %v10482, %v10465
        %v10806 = vpack.c.b16 %v10483, %v10466
        %v10807 = vpack.c.b16 %v10484, %v10467
        %v10808 = vpack.c.b16 %v10485, %v10468
        %v10809 = vpack.c.b16 %v10486, %v10469
        %v10810 = vpack.c.b16 %v10504, %v10487
        %v10811 = vpack.c.b16 %v10505, %v10488
        %v10812 = vpack.c.b16 %v10506, %v10489
        %v10813 = vpack.c.b16 %v10507, %v10490
        %v10814 = vpack.c.b16 %v10508, %v10491
        %v10815 = vpack.c.b16 %v10509, %v10492
        %v10816 = vpack.c.b16 %v10510, %v10493
        %v10817 = vpack.c.b16 %v10511, %v10494
        %v10818 = vpack.c.b16 %v10512, %v10495
        %v10819 = vpack.c.b16 %v10513, %v10496
        %v10820 = vpack.c.b16 %v10514, %v10497
        %v10821 = vpack.c.b16 %v10515, %v10498
        %v10822 = vpack.c.b16 %v10516, %v10499
        %v10823 = vpack.c.b16 %v10517, %v10500
        %v10824 = vpack.c.b16 %v10518, %v10501
        %v10825 = vpack.c.b16 %v10519, %v10502
        %v10826 = vpack.c.b16 %v10520, %v10503
        %v10827 = vpack.c.b16 %v10538, %v10521
        %v10828 = vpack.c.b16 %v10539, %v10522
        %v10829 = vpack.c.b16 %v10540, %v10523
        %v10830 = vpack.c.b16 %v10541, %v10524
        %v10831 = vpack.c.b16 %v10542, %v10525
        %v10832 = vpack.c.b16 %v10543, %v10526
        %v10833 = vpack.c.b16 %v10544, %v10527
        %v10834 = vpack.c.b16 %v10545, %v10528
        %v10835 = vpack.c.b16 %v10546, %v10529
        %v10836 = vpack.c.b16 %v10547, %v10530
        %v10837 = vpack.c.b16 %v10548, %v10531
        %v10838 = vpack.c.b16 %v10549, %v10532
        %v10839 = vpack.c.b16 %v10550, %v10533
        %v10840 = vpack.c.b16 %v10551, %v10534
        %v10841 = vpack.c.b16 %v10552, %v10535
        %v10842 = vpack.c.b16 %v10553, %v10536
        %v10843 = vpack.c.b16 %v10554, %v10537
        %v10844 = vpack.c.b16 %v10572, %v10555
        %v10845 = vpack.c.b16 %v10573, %v10556
        %v10846 = vpack.c.b16 %v10574, %v10557
        %v10847 = vpack.c.b16 %v10575, %v10558
        %v10848 = vpack.c.b16 %v10576, %v10559
        %v10849 = vpack.c.b16 %v10577, %v10560
        %v10850 = vpack.c.b16 %v10578, %v10561
        %v10851 = vpack.c.b16 %v10579, %v10562
        %v10852 = vpack.c.b16 %v10580, %v10563
        %v10853 = vpack.c.b16 %v10581, %v10564
        %v10854 = vpack.c.b16 %v10582, %v10565
        %v10855 = vpack.c.b16 %v10583, %v10566
        %v10856 = vpack.c.b16 %v10584, %v10567
        %v10857 = vpack.c.b16 %v10585, %v10568
        %v10858 = vpack.c.b16 %v10586, %v10569
        %v10859 = vpack.c.b16 %v10587, %v10570
        %v10860 = vpack.c.b16 %v10588, %v10571
        %v10861 = vpack.c.b16 %v10606, %v10589
        %v10862 = vpack.c.b16 %v10607, %v10590
        %v10863 = vpack.c.b16 %v10608, %v10591
        %v10864 = vpack.c.b16 %v10609, %v10592
        %v10865 = vpack.c.b16 %v10610, %v10593
        %v10866 = vpack.c.b16 %v10611, %v10594
        %v10867 = vpack.c.b16 %v10612, %v10595
        %v10868 = vpack.c.b16 %v10613, %v10596
        %v10869 = vpack.c.b16 %v10614, %v10597
        %v10870 = vpack.c.b16 %v10615, %v10598
        %v10871 = vpack.c.b16 %v10616, %v10599
        %v10872 = vpack.c.b16 %v10617, %v10600
        %v10873 = vpack.c.b16 %v10618, %v10601
        %v10874 = vpack.c.b16 %v10619, %v10602
        %v10875 = vpack.c.b16 %v10620, %v10603
        %v10876 = vpack.c.b16 %v10621, %v10604
        %v10877 = vpack.c.b16 %v10622, %v10605
        %v10878 = vpack.c.b16 %v10640, %v10623
        %v10879 = vpack.c.b16 %v10641, %v10624
        %v10880 = vpack.c.b16 %v10642, %v10625
        %v10881 = vpack.c.b16 %v10643, %v10626
        %v10882 = vpack.c.b16 %v10644, %v10627
        %v10883 = vpack.c.b16 %v10645, %v10628
        %v10884 = vpack.c.b16 %v10646, %v10629
        %v10885 = vpack.c.b16 %v10647, %v10630
        %v10886 = vpack.c.b16 %v10648, %v10631
        %v10887 = vpack.c.b16 %v10649, %v10632
        %v10888 = vpack.c.b16 %v10650, %v10633
        %v10889 = vpack.c.b16 %v10651, %v10634
        %v10890 = vpack.c.b16 %v10652, %v10635
        %v10891 = vpack.c.b16 %v10653, %v10636
        %v10892 = vpack.c.b16 %v10654, %v10637
        %v10893 = vpack.c.b16 %v10655, %v10638
        %v10894 = vpack.c.b16 %v10656, %v10639
        %v10895 = vpack.c.b16 %v10674, %v10657
        %v10896 = vpack.c.b16 %v10675, %v10658
        %v10897 = vpack.c.b16 %v10676, %v10659
        %v10898 = vpack.c.b16 %v10677, %v10660
        %v10899 = vpack.c.b16 %v10678, %v10661
        %v10900 = vpack.c.b16 %v10679, %v10662
        %v10901 = vpack.c.b16 %v10680, %v10663
        %v10902 = vpack.c.b16 %v10681, %v10664
        %v10903 = vpack.c.b16 %v10682, %v10665
        %v10904 = vpack.c.b16 %v10683, %v10666
        %v10905 = vpack.c.b16 %v10684, %v10667
        %v10906 = vpack.c.b16 %v10685, %v10668
        %v10907 = vpack.c.b16 %v10686, %v10669
        %v10908 = vpack.c.b16 %v10687, %v10670
        %v10909 = vpack.c.b16 %v10688, %v10671
        %v10910 = vpack.c.b16 %v10689, %v10672
        %v10911 = vpack.c.b16 %v10690, %v10673
        %v10912 = vpack.c.b16 %v10708, %v10691
        %v10913 = vpack.c.b16 %v10709, %v10692
        %v10914 = vpack.c.b16 %v10710, %v10693
        %v10915 = vpack.c.b16 %v10711, %v10694
        %v10916 = vpack.c.b16 %v10712, %v10695
        %v10917 = vpack.c.b16 %v10713, %v10696
        %v10918 = vpack.c.b16 %v10714, %v10697
        %v10919 = vpack.c.b16 %v10715, %v10698
        %v10920 = vpack.c.b16 %v10716, %v10699
        %v10921 = vpack.c.b16 %v10717, %v10700
        %v10922 = vpack.c.b16 %v10718, %v10701
        %v10923 = vpack.c.b16 %v10719, %v10702
        %v10924 = vpack.c.b16 %v10720, %v10703
        %v10925 = vpack.c.b16 %v10721, %v10704
        %v10926 = vpack.c.b16 %v10722, %v10705
        %v10927 = vpack.c.b16 %v10723, %v10706
        %v10928 = vpack.c.b16 %v10724, %v10707
        %v11134 = vsel %vm4827, %v5312, 0
        %v11137 = vsel %vm4827, %v5314, 0
        %v11140 = vsel %vm4827, %v5316, 0
        %v11143 = vsel %vm4827, %v5318, 0
        %11145 = vmatpush.bf16.msra.mxu0 %v10844
        %11146 = vmatpush.bf16.msra.mxu0 %v10827
        %11147 = vmatpush.bf16.msra.mxu0 %v10810
        %11148 = vmatpush.bf16.msra.mxu0 %v10793
        %11149 = vmatpush.bf16.msra.mxu0 %v10776
        %11150 = vmatpush.bf16.msra.mxu0 %v10759
        %11151 = vmatpush.bf16.msra.mxu0 %v10742
        %11152 = vmatpush.bf16.msra.mxu0 %v10725
        %11153 = vmatmul.bf16.gmra.mxu0 %v7223
        %v11154 = vpop.f32.mrf.mxu0
        %v11155 = vadd.f32 %v9154, %v11154
        %v11156 = vpop.f32.mrf.mxu0
        %v11157 = vadd.f32 %v9156, %v11156
        %11158 = vmatmul.bf16.gmra.mxu0 %v7224
        %v11159 = vpop.f32.mrf.mxu0
        %v11160 = vadd.f32 %v9159, %v11159
        %v11161 = vpop.f32.mrf.mxu0
        %v11162 = vadd.f32 %v9161, %v11161
        %11163 = vmatmul.bf16.gmra.mxu0 %v7225
        %v11164 = vpop.f32.mrf.mxu0
        %v11165 = vadd.f32 %v9164, %v11164
        %v11166 = vpop.f32.mrf.mxu0
        %v11167 = vadd.f32 %v9166, %v11166
        %11168 = vmatmul.bf16.gmra.mxu0 %v7226
        %v11169 = vpop.f32.mrf.mxu0
        %v11170 = vadd.f32 %v9169, %v11169
        %v11171 = vpop.f32.mrf.mxu0
        %v11172 = vadd.f32 %v9171, %v11171
        %11173 = vdwg.mxu0
        %11174 = vmatpush.bf16.msra.mxu0 0
        %11175 = vmatpush.bf16.msra.mxu0 0
        %11176 = vmatpush.bf16.msra.mxu0 0
        %11177 = vmatpush.bf16.msra.mxu0 0
        %11178 = vmatpush.bf16.msra.mxu0 %v10912
        %11179 = vmatpush.bf16.msra.mxu0 %v10895
        %11180 = vmatpush.bf16.msra.mxu0 %v10878
        %11181 = vmatpush.bf16.msra.mxu0 %v10861
        %11182 = vmatmul.bf16.gmra.mxu0 %v11134
        %v11183 = vpop.f32.mrf.mxu0
        %v11184 = vadd.f32 %v11155, %v11183
        %v11185 = vpop.f32.mrf.mxu0
        %v11186 = vadd.f32 %v11157, %v11185
        %11187 = vmatmul.bf16.gmra.mxu0 %v11137
        %v11188 = vpop.f32.mrf.mxu0
        %v11189 = vadd.f32 %v11160, %v11188
        %v11190 = vpop.f32.mrf.mxu0
        %v11191 = vadd.f32 %v11162, %v11190
        %11192 = vmatmul.bf16.gmra.mxu0 %v11140
        %v11193 = vpop.f32.mrf.mxu0
        %v11194 = vadd.f32 %v11165, %v11193
        %v11195 = vpop.f32.mrf.mxu0
        %v11196 = vadd.f32 %v11167, %v11195
        %11197 = vmatmul.bf16.gmra.mxu0 %v11143
        %v11198 = vpop.f32.mrf.mxu0
        %v11199 = vadd.f32 %v11170, %v11198
        %v11200 = vpop.f32.mrf.mxu0
        %v11201 = vadd.f32 %v11172, %v11200
        %11202 = vdwg.mxu0
        %11203 = vmatpush.bf16.msra.mxu0 %v10845
        %11204 = vmatpush.bf16.msra.mxu0 %v10828
        %11205 = vmatpush.bf16.msra.mxu0 %v10811
        %11206 = vmatpush.bf16.msra.mxu0 %v10794
        %11207 = vmatpush.bf16.msra.mxu0 %v10777
        %11208 = vmatpush.bf16.msra.mxu0 %v10760
        %11209 = vmatpush.bf16.msra.mxu0 %v10743
        %11210 = vmatpush.bf16.msra.mxu0 %v10726
        %11211 = vmatmul.bf16.gmra.mxu0 %v7223
        %v11212 = vpop.f32.mrf.mxu0
        %v11213 = vadd.f32 %v9212, %v11212
        %v11214 = vpop.f32.mrf.mxu0
        %v11215 = vadd.f32 %v9214, %v11214
        %11216 = vmatmul.bf16.gmra.mxu0 %v7224
        %v11217 = vpop.f32.mrf.mxu0
        %v11218 = vadd.f32 %v9217, %v11217
        %v11219 = vpop.f32.mrf.mxu0
        %v11220 = vadd.f32 %v9219, %v11219
        %11221 = vmatmul.bf16.gmra.mxu0 %v7225
        %v11222 = vpop.f32.mrf.mxu0
        %v11223 = vadd.f32 %v9222, %v11222
        %v11224 = vpop.f32.mrf.mxu0
        %v11225 = vadd.f32 %v9224, %v11224
        %11226 = vmatmul.bf16.gmra.mxu0 %v7226
        %v11227 = vpop.f32.mrf.mxu0
        %v11228 = vadd.f32 %v9227, %v11227
        %v11229 = vpop.f32.mrf.mxu0
        %v11230 = vadd.f32 %v9229, %v11229
        %11231 = vdwg.mxu0
        %11232 = vmatpush.bf16.msra.mxu0 0
        %11233 = vmatpush.bf16.msra.mxu0 0
        %11234 = vmatpush.bf16.msra.mxu0 0
        %11235 = vmatpush.bf16.msra.mxu0 0
        %11236 = vmatpush.bf16.msra.mxu0 %v10913
        %11237 = vmatpush.bf16.msra.mxu0 %v10896
        %11238 = vmatpush.bf16.msra.mxu0 %v10879
        %11239 = vmatpush.bf16.msra.mxu0 %v10862
        %11240 = vmatmul.bf16.gmra.mxu0 %v11134
        %v11241 = vpop.f32.mrf.mxu0
        %v11242 = vadd.f32 %v11213, %v11241
        %v11243 = vpop.f32.mrf.mxu0
        %v11244 = vadd.f32 %v11215, %v11243
        %11245 = vmatmul.bf16.gmra.mxu0 %v11137
        %v11246 = vpop.f32.mrf.mxu0
        %v11247 = vadd.f32 %v11218, %v11246
        %v11248 = vpop.f32.mrf.mxu0
        %v11249 = vadd.f32 %v11220, %v11248
        %11250 = vmatmul.bf16.gmra.mxu0 %v11140
        %v11251 = vpop.f32.mrf.mxu0
        %v11252 = vadd.f32 %v11223, %v11251
        %v11253 = vpop.f32.mrf.mxu0
        %v11254 = vadd.f32 %v11225, %v11253
        %11255 = vmatmul.bf16.gmra.mxu0 %v11143
        %v11256 = vpop.f32.mrf.mxu0
        %v11257 = vadd.f32 %v11228, %v11256
        %v11258 = vpop.f32.mrf.mxu0
        %v11259 = vadd.f32 %v11230, %v11258
        %11260 = vdwg.mxu0
        %11261 = vmatpush.bf16.msra.mxu0 %v10846
        %11262 = vmatpush.bf16.msra.mxu0 %v10829
        %11263 = vmatpush.bf16.msra.mxu0 %v10812
        %11264 = vmatpush.bf16.msra.mxu0 %v10795
        %11265 = vmatpush.bf16.msra.mxu0 %v10778
        %11266 = vmatpush.bf16.msra.mxu0 %v10761
        %11267 = vmatpush.bf16.msra.mxu0 %v10744
        %11268 = vmatpush.bf16.msra.mxu0 %v10727
        %11269 = vmatmul.bf16.gmra.mxu0 %v7223
        %v11270 = vpop.f32.mrf.mxu0
        %v11271 = vadd.f32 %v9270, %v11270
        %v11272 = vpop.f32.mrf.mxu0
        %v11273 = vadd.f32 %v9272, %v11272
        %11274 = vmatmul.bf16.gmra.mxu0 %v7224
        %v11275 = vpop.f32.mrf.mxu0
        %v11276 = vadd.f32 %v9275, %v11275
        %v11277 = vpop.f32.mrf.mxu0
        %v11278 = vadd.f32 %v9277, %v11277
        %11279 = vmatmul.bf16.gmra.mxu0 %v7225
        %v11280 = vpop.f32.mrf.mxu0
        %v11281 = vadd.f32 %v9280, %v11280
        %v11282 = vpop.f32.mrf.mxu0
        %v11283 = vadd.f32 %v9282, %v11282
        %11284 = vmatmul.bf16.gmra.mxu0 %v7226
        %v11285 = vpop.f32.mrf.mxu0
        %v11286 = vadd.f32 %v9285, %v11285
        %v11287 = vpop.f32.mrf.mxu0
        %v11288 = vadd.f32 %v9287, %v11287
        %11289 = vdwg.mxu0
        %11290 = vmatpush.bf16.msra.mxu0 0
        %11291 = vmatpush.bf16.msra.mxu0 0
        %11292 = vmatpush.bf16.msra.mxu0 0
        %11293 = vmatpush.bf16.msra.mxu0 0
        %11294 = vmatpush.bf16.msra.mxu0 %v10914
        %11295 = vmatpush.bf16.msra.mxu0 %v10897
        %11296 = vmatpush.bf16.msra.mxu0 %v10880
        %11297 = vmatpush.bf16.msra.mxu0 %v10863
        %11298 = vmatmul.bf16.gmra.mxu0 %v11134
        %v11299 = vpop.f32.mrf.mxu0
        %v11300 = vadd.f32 %v11271, %v11299
        %v11301 = vpop.f32.mrf.mxu0
        %v11302 = vadd.f32 %v11273, %v11301
        %11303 = vmatmul.bf16.gmra.mxu0 %v11137
        %v11304 = vpop.f32.mrf.mxu0
        %v11305 = vadd.f32 %v11276, %v11304
        %v11306 = vpop.f32.mrf.mxu0
        %v11307 = vadd.f32 %v11278, %v11306
        %11308 = vmatmul.bf16.gmra.mxu0 %v11140
        %v11309 = vpop.f32.mrf.mxu0
        %v11310 = vadd.f32 %v11281, %v11309
        %v11311 = vpop.f32.mrf.mxu0
        %v11312 = vadd.f32 %v11283, %v11311
        %11313 = vmatmul.bf16.gmra.mxu0 %v11143
        %v11314 = vpop.f32.mrf.mxu0
        %v11315 = vadd.f32 %v11286, %v11314
        %v11316 = vpop.f32.mrf.mxu0
        %v11317 = vadd.f32 %v11288, %v11316
        %11318 = vdwg.mxu0
        %11319 = vmatpush.bf16.msra.mxu0 %v10847
        %11320 = vmatpush.bf16.msra.mxu0 %v10830
        %11321 = vmatpush.bf16.msra.mxu0 %v10813
        %11322 = vmatpush.bf16.msra.mxu0 %v10796
        %11323 = vmatpush.bf16.msra.mxu0 %v10779
        %11324 = vmatpush.bf16.msra.mxu0 %v10762
        %11325 = vmatpush.bf16.msra.mxu0 %v10745
        %11326 = vmatpush.bf16.msra.mxu0 %v10728
        %11327 = vmatmul.bf16.gmra.mxu0 %v7223
        %v11328 = vpop.f32.mrf.mxu0
        %v11329 = vadd.f32 %v9328, %v11328
        %v11330 = vpop.f32.mrf.mxu0
        %v11331 = vadd.f32 %v9330, %v11330
        %11332 = vmatmul.bf16.gmra.mxu0 %v7224
        %v11333 = vpop.f32.mrf.mxu0
        %v11334 = vadd.f32 %v9333, %v11333
        %v11335 = vpop.f32.mrf.mxu0
        %v11336 = vadd.f32 %v9335, %v11335
        %11337 = vmatmul.bf16.gmra.mxu0 %v7225
        %v11338 = vpop.f32.mrf.mxu0
        %v11339 = vadd.f32 %v9338, %v11338
        %v11340 = vpop.f32.mrf.mxu0
        %v11341 = vadd.f32 %v9340, %v11340
        %11342 = vmatmul.bf16.gmra.mxu0 %v7226
        %v11343 = vpop.f32.mrf.mxu0
        %v11344 = vadd.f32 %v9343, %v11343
        %v11345 = vpop.f32.mrf.mxu0
        %v11346 = vadd.f32 %v9345, %v11345
        %11347 = vdwg.mxu0
        %11348 = vmatpush.bf16.msra.mxu0 0
        %11349 = vmatpush.bf16.msra.mxu0 0
        %11350 = vmatpush.bf16.msra.mxu0 0
        %11351 = vmatpush.bf16.msra.mxu0 0
        %11352 = vmatpush.bf16.msra.mxu0 %v10915
        %11353 = vmatpush.bf16.msra.mxu0 %v10898
        %11354 = vmatpush.bf16.msra.mxu0 %v10881
        %11355 = vmatpush.bf16.msra.mxu0 %v10864
        %11356 = vmatmul.bf16.gmra.mxu0 %v11134
        %v11357 = vpop.f32.mrf.mxu0
        %v11358 = vadd.f32 %v11329, %v11357
        %v11359 = vpop.f32.mrf.mxu0
        %v11360 = vadd.f32 %v11331, %v11359
        %11361 = vmatmul.bf16.gmra.mxu0 %v11137
        %v11362 = vpop.f32.mrf.mxu0
        %v11363 = vadd.f32 %v11334, %v11362
        %v11364 = vpop.f32.mrf.mxu0
        %v11365 = vadd.f32 %v11336, %v11364
        %11366 = vmatmul.bf16.gmra.mxu0 %v11140
        %v11367 = vpop.f32.mrf.mxu0
        %v11368 = vadd.f32 %v11339, %v11367
        %v11369 = vpop.f32.mrf.mxu0
        %v11370 = vadd.f32 %v11341, %v11369
        %11371 = vmatmul.bf16.gmra.mxu0 %v11143
        %v11372 = vpop.f32.mrf.mxu0
        %v11373 = vadd.f32 %v11344, %v11372
        %v11374 = vpop.f32.mrf.mxu0
        %v11375 = vadd.f32 %v11346, %v11374
        %11376 = vdwg.mxu0
        %11377 = vmatpush.bf16.msra.mxu0 %v10848
        %11378 = vmatpush.bf16.msra.mxu0 %v10831
        %11379 = vmatpush.bf16.msra.mxu0 %v10814
        %11380 = vmatpush.bf16.msra.mxu0 %v10797
        %11381 = vmatpush.bf16.msra.mxu0 %v10780
        %11382 = vmatpush.bf16.msra.mxu0 %v10763
        %11383 = vmatpush.bf16.msra.mxu0 %v10746
        %11384 = vmatpush.bf16.msra.mxu0 %v10729
        %11385 = vmatmul.bf16.gmra.mxu0 %v7223
        %v11386 = vpop.f32.mrf.mxu0
        %v11387 = vadd.f32 %v9386, %v11386
        %v11388 = vpop.f32.mrf.mxu0
        %v11389 = vadd.f32 %v9388, %v11388
        %11390 = vmatmul.bf16.gmra.mxu0 %v7224
        %v11391 = vpop.f32.mrf.mxu0
        %v11392 = vadd.f32 %v9391, %v11391
        %v11393 = vpop.f32.mrf.mxu0
        %v11394 = vadd.f32 %v9393, %v11393
        %11395 = vmatmul.bf16.gmra.mxu0 %v7225
        %v11396 = vpop.f32.mrf.mxu0
        %v11397 = vadd.f32 %v9396, %v11396
        %v11398 = vpop.f32.mrf.mxu0
        %v11399 = vadd.f32 %v9398, %v11398
        %11400 = vmatmul.bf16.gmra.mxu0 %v7226
        %v11401 = vpop.f32.mrf.mxu0
        %v11402 = vadd.f32 %v9401, %v11401
        %v11403 = vpop.f32.mrf.mxu0
        %v11404 = vadd.f32 %v9403, %v11403
        %11405 = vdwg.mxu0
        %11406 = vmatpush.bf16.msra.mxu0 0
        %11407 = vmatpush.bf16.msra.mxu0 0
        %11408 = vmatpush.bf16.msra.mxu0 0
        %11409 = vmatpush.bf16.msra.mxu0 0
        %11410 = vmatpush.bf16.msra.mxu0 %v10916
        %11411 = vmatpush.bf16.msra.mxu0 %v10899
        %11412 = vmatpush.bf16.msra.mxu0 %v10882
        %11413 = vmatpush.bf16.msra.mxu0 %v10865
        %11414 = vmatmul.bf16.gmra.mxu0 %v11134
        %v11415 = vpop.f32.mrf.mxu0
        %v11416 = vadd.f32 %v11387, %v11415
        %v11417 = vpop.f32.mrf.mxu0
        %v11418 = vadd.f32 %v11389, %v11417
        %11419 = vmatmul.bf16.gmra.mxu0 %v11137
        %v11420 = vpop.f32.mrf.mxu0
        %v11421 = vadd.f32 %v11392, %v11420
        %v11422 = vpop.f32.mrf.mxu0
        %v11423 = vadd.f32 %v11394, %v11422
        %11424 = vmatmul.bf16.gmra.mxu0 %v11140
        %v11425 = vpop.f32.mrf.mxu0
        %v11426 = vadd.f32 %v11397, %v11425
        %v11427 = vpop.f32.mrf.mxu0
        %v11428 = vadd.f32 %v11399, %v11427
        %11429 = vmatmul.bf16.gmra.mxu0 %v11143
        %v11430 = vpop.f32.mrf.mxu0
        %v11431 = vadd.f32 %v11402, %v11430
        %v11432 = vpop.f32.mrf.mxu0
        %v11433 = vadd.f32 %v11404, %v11432
        %11434 = vdwg.mxu0
        %11435 = vmatpush.bf16.msra.mxu0 %v10849
        %11436 = vmatpush.bf16.msra.mxu0 %v10832
        %11437 = vmatpush.bf16.msra.mxu0 %v10815
        %11438 = vmatpush.bf16.msra.mxu0 %v10798
        %11439 = vmatpush.bf16.msra.mxu0 %v10781
        %11440 = vmatpush.bf16.msra.mxu0 %v10764
        %11441 = vmatpush.bf16.msra.mxu0 %v10747
        %11442 = vmatpush.bf16.msra.mxu0 %v10730
        %11443 = vmatmul.bf16.gmra.mxu0 %v7223
        %v11444 = vpop.f32.mrf.mxu0
        %v11445 = vadd.f32 %v9444, %v11444
        %v11446 = vpop.f32.mrf.mxu0
        %v11447 = vadd.f32 %v9446, %v11446
        %11448 = vmatmul.bf16.gmra.mxu0 %v7224
        %v11449 = vpop.f32.mrf.mxu0
        %v11450 = vadd.f32 %v9449, %v11449
        %v11451 = vpop.f32.mrf.mxu0
        %v11452 = vadd.f32 %v9451, %v11451
        %11453 = vmatmul.bf16.gmra.mxu0 %v7225
        %v11454 = vpop.f32.mrf.mxu0
        %v11455 = vadd.f32 %v9454, %v11454
        %v11456 = vpop.f32.mrf.mxu0
        %v11457 = vadd.f32 %v9456, %v11456
        %11458 = vmatmul.bf16.gmra.mxu0 %v7226
        %v11459 = vpop.f32.mrf.mxu0
        %v11460 = vadd.f32 %v9459, %v11459
        %v11461 = vpop.f32.mrf.mxu0
        %v11462 = vadd.f32 %v9461, %v11461
        %11463 = vdwg.mxu0
        %11464 = vmatpush.bf16.msra.mxu0 0
        %11465 = vmatpush.bf16.msra.mxu0 0
        %11466 = vmatpush.bf16.msra.mxu0 0
        %11467 = vmatpush.bf16.msra.mxu0 0
        %11468 = vmatpush.bf16.msra.mxu0 %v10917
        %11469 = vmatpush.bf16.msra.mxu0 %v10900
        %11470 = vmatpush.bf16.msra.mxu0 %v10883
        %11471 = vmatpush.bf16.msra.mxu0 %v10866
        %11472 = vmatmul.bf16.gmra.mxu0 %v11134
        %v11473 = vpop.f32.mrf.mxu0
        %v11474 = vadd.f32 %v11445, %v11473
        %v11475 = vpop.f32.mrf.mxu0
        %v11476 = vadd.f32 %v11447, %v11475
        %11477 = vmatmul.bf16.gmra.mxu0 %v11137
        %v11478 = vpop.f32.mrf.mxu0
        %v11479 = vadd.f32 %v11450, %v11478
        %v11480 = vpop.f32.mrf.mxu0
        %v11481 = vadd.f32 %v11452, %v11480
        %11482 = vmatmul.bf16.gmra.mxu0 %v11140
        %v11483 = vpop.f32.mrf.mxu0
        %v11484 = vadd.f32 %v11455, %v11483
        %v11485 = vpop.f32.mrf.mxu0
        %v11486 = vadd.f32 %v11457, %v11485
        %11487 = vmatmul.bf16.gmra.mxu0 %v11143
        %v11488 = vpop.f32.mrf.mxu0
        %v11489 = vadd.f32 %v11460, %v11488
        %v11490 = vpop.f32.mrf.mxu0
        %v11491 = vadd.f32 %v11462, %v11490
        %11492 = vdwg.mxu0
        %11493 = vmatpush.bf16.msra.mxu0 %v10850
        %11494 = vmatpush.bf16.msra.mxu0 %v10833
        %11495 = vmatpush.bf16.msra.mxu0 %v10816
        %11496 = vmatpush.bf16.msra.mxu0 %v10799
        %11497 = vmatpush.bf16.msra.mxu0 %v10782
        %11498 = vmatpush.bf16.msra.mxu0 %v10765
        %11499 = vmatpush.bf16.msra.mxu0 %v10748
        %11500 = vmatpush.bf16.msra.mxu0 %v10731
        %11501 = vmatmul.bf16.gmra.mxu0 %v7223
        %v11502 = vpop.f32.mrf.mxu0
        %v11503 = vadd.f32 %v9502, %v11502
        %v11504 = vpop.f32.mrf.mxu0
        %v11505 = vadd.f32 %v9504, %v11504
        %11506 = vmatmul.bf16.gmra.mxu0 %v7224
        %v11507 = vpop.f32.mrf.mxu0
        %v11508 = vadd.f32 %v9507, %v11507
        %v11509 = vpop.f32.mrf.mxu0
        %v11510 = vadd.f32 %v9509, %v11509
        %11511 = vmatmul.bf16.gmra.mxu0 %v7225
        %v11512 = vpop.f32.mrf.mxu0
        %v11513 = vadd.f32 %v9512, %v11512
        %v11514 = vpop.f32.mrf.mxu0
        %v11515 = vadd.f32 %v9514, %v11514
        %11516 = vmatmul.bf16.gmra.mxu0 %v7226
        %v11517 = vpop.f32.mrf.mxu0
        %v11518 = vadd.f32 %v9517, %v11517
        %v11519 = vpop.f32.mrf.mxu0
        %v11520 = vadd.f32 %v9519, %v11519
        %11521 = vdwg.mxu0
        %11522 = vmatpush.bf16.msra.mxu0 0
        %11523 = vmatpush.bf16.msra.mxu0 0
        %11524 = vmatpush.bf16.msra.mxu0 0
        %11525 = vmatpush.bf16.msra.mxu0 0
        %11526 = vmatpush.bf16.msra.mxu0 %v10918
        %11527 = vmatpush.bf16.msra.mxu0 %v10901
        %11528 = vmatpush.bf16.msra.mxu0 %v10884
        %11529 = vmatpush.bf16.msra.mxu0 %v10867
        %11530 = vmatmul.bf16.gmra.mxu0 %v11134
        %v11531 = vpop.f32.mrf.mxu0
        %v11532 = vadd.f32 %v11503, %v11531
        %v11533 = vpop.f32.mrf.mxu0
        %v11534 = vadd.f32 %v11505, %v11533
        %11535 = vmatmul.bf16.gmra.mxu0 %v11137
        %v11536 = vpop.f32.mrf.mxu0
        %v11537 = vadd.f32 %v11508, %v11536
        %v11538 = vpop.f32.mrf.mxu0
        %v11539 = vadd.f32 %v11510, %v11538
        %11540 = vmatmul.bf16.gmra.mxu0 %v11140
        %v11541 = vpop.f32.mrf.mxu0
        %v11542 = vadd.f32 %v11513, %v11541
        %v11543 = vpop.f32.mrf.mxu0
        %v11544 = vadd.f32 %v11515, %v11543
        %11545 = vmatmul.bf16.gmra.mxu0 %v11143
        %v11546 = vpop.f32.mrf.mxu0
        %v11547 = vadd.f32 %v11518, %v11546
        %v11548 = vpop.f32.mrf.mxu0
        %v11549 = vadd.f32 %v11520, %v11548
        %11550 = vdwg.mxu0
        %11551 = vmatpush.bf16.msra.mxu0 %v10851
        %11552 = vmatpush.bf16.msra.mxu0 %v10834
        %11553 = vmatpush.bf16.msra.mxu0 %v10817
        %11554 = vmatpush.bf16.msra.mxu0 %v10800
        %11555 = vmatpush.bf16.msra.mxu0 %v10783
        %11556 = vmatpush.bf16.msra.mxu0 %v10766
        %11557 = vmatpush.bf16.msra.mxu0 %v10749
        %11558 = vmatpush.bf16.msra.mxu0 %v10732
        %11559 = vmatmul.bf16.gmra.mxu0 %v7223
        %v11560 = vpop.f32.mrf.mxu0
        %v11561 = vadd.f32 %v9560, %v11560
        %v11562 = vpop.f32.mrf.mxu0
        %v11563 = vadd.f32 %v9562, %v11562
        %11564 = vmatmul.bf16.gmra.mxu0 %v7224
        %v11565 = vpop.f32.mrf.mxu0
        %v11566 = vadd.f32 %v9565, %v11565
        %v11567 = vpop.f32.mrf.mxu0
        %v11568 = vadd.f32 %v9567, %v11567
        %11569 = vmatmul.bf16.gmra.mxu0 %v7225
        %v11570 = vpop.f32.mrf.mxu0
        %v11571 = vadd.f32 %v9570, %v11570
        %v11572 = vpop.f32.mrf.mxu0
        %v11573 = vadd.f32 %v9572, %v11572
        %11574 = vmatmul.bf16.gmra.mxu0 %v7226
        %v11575 = vpop.f32.mrf.mxu0
        %v11576 = vadd.f32 %v9575, %v11575
        %v11577 = vpop.f32.mrf.mxu0
        %v11578 = vadd.f32 %v9577, %v11577
        %11579 = vdwg.mxu0
        %11580 = vmatpush.bf16.msra.mxu0 0
        %11581 = vmatpush.bf16.msra.mxu0 0
        %11582 = vmatpush.bf16.msra.mxu0 0
        %11583 = vmatpush.bf16.msra.mxu0 0
        %11584 = vmatpush.bf16.msra.mxu0 %v10919
        %11585 = vmatpush.bf16.msra.mxu0 %v10902
        %11586 = vmatpush.bf16.msra.mxu0 %v10885
        %11587 = vmatpush.bf16.msra.mxu0 %v10868
        %11588 = vmatmul.bf16.gmra.mxu0 %v11134
        %v11589 = vpop.f32.mrf.mxu0
        %v11590 = vadd.f32 %v11561, %v11589
        %v11591 = vpop.f32.mrf.mxu0
        %v11592 = vadd.f32 %v11563, %v11591
        %11593 = vmatmul.bf16.gmra.mxu0 %v11137
        %v11594 = vpop.f32.mrf.mxu0
        %v11595 = vadd.f32 %v11566, %v11594
        %v11596 = vpop.f32.mrf.mxu0
        %v11597 = vadd.f32 %v11568, %v11596
        %11598 = vmatmul.bf16.gmra.mxu0 %v11140
        %v11599 = vpop.f32.mrf.mxu0
        %v11600 = vadd.f32 %v11571, %v11599
        %v11601 = vpop.f32.mrf.mxu0
        %v11602 = vadd.f32 %v11573, %v11601
        %11603 = vmatmul.bf16.gmra.mxu0 %v11143
        %v11604 = vpop.f32.mrf.mxu0
        %v11605 = vadd.f32 %v11576, %v11604
        %v11606 = vpop.f32.mrf.mxu0
        %v11607 = vadd.f32 %v11578, %v11606
        %11608 = vdwg.mxu0
        %11609 = vmatpush.bf16.msra.mxu0 %v10852
        %11610 = vmatpush.bf16.msra.mxu0 %v10835
        %11611 = vmatpush.bf16.msra.mxu0 %v10818
        %11612 = vmatpush.bf16.msra.mxu0 %v10801
        %11613 = vmatpush.bf16.msra.mxu0 %v10784
        %11614 = vmatpush.bf16.msra.mxu0 %v10767
        %11615 = vmatpush.bf16.msra.mxu0 %v10750
        %11616 = vmatpush.bf16.msra.mxu0 %v10733
        %11617 = vmatmul.bf16.gmra.mxu0 %v7223
        %v11618 = vpop.f32.mrf.mxu0
        %v11619 = vadd.f32 %v9618, %v11618
        %v11620 = vpop.f32.mrf.mxu0
        %v11621 = vadd.f32 %v9620, %v11620
        %11622 = vmatmul.bf16.gmra.mxu0 %v7224
        %v11623 = vpop.f32.mrf.mxu0
        %v11624 = vadd.f32 %v9623, %v11623
        %v11625 = vpop.f32.mrf.mxu0
        %v11626 = vadd.f32 %v9625, %v11625
        %11627 = vmatmul.bf16.gmra.mxu0 %v7225
        %v11628 = vpop.f32.mrf.mxu0
        %v11629 = vadd.f32 %v9628, %v11628
        %v11630 = vpop.f32.mrf.mxu0
        %v11631 = vadd.f32 %v9630, %v11630
        %11632 = vmatmul.bf16.gmra.mxu0 %v7226
        %v11633 = vpop.f32.mrf.mxu0
        %v11634 = vadd.f32 %v9633, %v11633
        %v11635 = vpop.f32.mrf.mxu0
        %v11636 = vadd.f32 %v9635, %v11635
        %11637 = vdwg.mxu0
        %11638 = vmatpush.bf16.msra.mxu0 0
        %11639 = vmatpush.bf16.msra.mxu0 0
        %11640 = vmatpush.bf16.msra.mxu0 0
        %11641 = vmatpush.bf16.msra.mxu0 0
        %11642 = vmatpush.bf16.msra.mxu0 %v10920
        %11643 = vmatpush.bf16.msra.mxu0 %v10903
        %11644 = vmatpush.bf16.msra.mxu0 %v10886
        %11645 = vmatpush.bf16.msra.mxu0 %v10869
        %11646 = vmatmul.bf16.gmra.mxu0 %v11134
        %v11647 = vpop.f32.mrf.mxu0
        %v11648 = vadd.f32 %v11619, %v11647
        %v11649 = vpop.f32.mrf.mxu0
        %v11650 = vadd.f32 %v11621, %v11649
        %11651 = vmatmul.bf16.gmra.mxu0 %v11137
        %v11652 = vpop.f32.mrf.mxu0
        %v11653 = vadd.f32 %v11624, %v11652
        %v11654 = vpop.f32.mrf.mxu0
        %v11655 = vadd.f32 %v11626, %v11654
        %11656 = vmatmul.bf16.gmra.mxu0 %v11140
        %v11657 = vpop.f32.mrf.mxu0
        %v11658 = vadd.f32 %v11629, %v11657
        %v11659 = vpop.f32.mrf.mxu0
        %v11660 = vadd.f32 %v11631, %v11659
        %11661 = vmatmul.bf16.gmra.mxu0 %v11143
        %v11662 = vpop.f32.mrf.mxu0
        %v11663 = vadd.f32 %v11634, %v11662
        %v11664 = vpop.f32.mrf.mxu0
        %v11665 = vadd.f32 %v11636, %v11664
        %11666 = vdwg.mxu0
        %11667 = vmatpush.bf16.msra.mxu0 %v10853
        %11668 = vmatpush.bf16.msra.mxu0 %v10836
        %11669 = vmatpush.bf16.msra.mxu0 %v10819
        %11670 = vmatpush.bf16.msra.mxu0 %v10802
        %11671 = vmatpush.bf16.msra.mxu0 %v10785
        %11672 = vmatpush.bf16.msra.mxu0 %v10768
        %11673 = vmatpush.bf16.msra.mxu0 %v10751
        %11674 = vmatpush.bf16.msra.mxu0 %v10734
        %11675 = vmatmul.bf16.gmra.mxu0 %v7223
        %v11676 = vpop.f32.mrf.mxu0
        %v11677 = vadd.f32 %v9676, %v11676
        %v11678 = vpop.f32.mrf.mxu0
        %v11679 = vadd.f32 %v9678, %v11678
        %11680 = vmatmul.bf16.gmra.mxu0 %v7224
        %v11681 = vpop.f32.mrf.mxu0
        %v11682 = vadd.f32 %v9681, %v11681
        %v11683 = vpop.f32.mrf.mxu0
        %v11684 = vadd.f32 %v9683, %v11683
        %11685 = vmatmul.bf16.gmra.mxu0 %v7225
        %v11686 = vpop.f32.mrf.mxu0
        %v11687 = vadd.f32 %v9686, %v11686
        %v11688 = vpop.f32.mrf.mxu0
        %v11689 = vadd.f32 %v9688, %v11688
        %11690 = vmatmul.bf16.gmra.mxu0 %v7226
        %v11691 = vpop.f32.mrf.mxu0
        %v11692 = vadd.f32 %v9691, %v11691
        %v11693 = vpop.f32.mrf.mxu0
        %v11694 = vadd.f32 %v9693, %v11693
        %11695 = vdwg.mxu0
        %11696 = vmatpush.bf16.msra.mxu0 0
        %11697 = vmatpush.bf16.msra.mxu0 0
        %11698 = vmatpush.bf16.msra.mxu0 0
        %11699 = vmatpush.bf16.msra.mxu0 0
        %11700 = vmatpush.bf16.msra.mxu0 %v10921
        %11701 = vmatpush.bf16.msra.mxu0 %v10904
        %11702 = vmatpush.bf16.msra.mxu0 %v10887
        %11703 = vmatpush.bf16.msra.mxu0 %v10870
        %11704 = vmatmul.bf16.gmra.mxu0 %v11134
        %v11705 = vpop.f32.mrf.mxu0
        %v11706 = vadd.f32 %v11677, %v11705
        %v11707 = vpop.f32.mrf.mxu0
        %v11708 = vadd.f32 %v11679, %v11707
        %11709 = vmatmul.bf16.gmra.mxu0 %v11137
        %v11710 = vpop.f32.mrf.mxu0
        %v11711 = vadd.f32 %v11682, %v11710
        %v11712 = vpop.f32.mrf.mxu0
        %v11713 = vadd.f32 %v11684, %v11712
        %11714 = vmatmul.bf16.gmra.mxu0 %v11140
        %v11715 = vpop.f32.mrf.mxu0
        %v11716 = vadd.f32 %v11687, %v11715
        %v11717 = vpop.f32.mrf.mxu0
        %v11718 = vadd.f32 %v11689, %v11717
        %11719 = vmatmul.bf16.gmra.mxu0 %v11143
        %v11720 = vpop.f32.mrf.mxu0
        %v11721 = vadd.f32 %v11692, %v11720
        %v11722 = vpop.f32.mrf.mxu0
        %v11723 = vadd.f32 %v11694, %v11722
        %11724 = vdwg.mxu0
        %11725 = vmatpush.bf16.msra.mxu0 %v10854
        %11726 = vmatpush.bf16.msra.mxu0 %v10837
        %11727 = vmatpush.bf16.msra.mxu0 %v10820
        %11728 = vmatpush.bf16.msra.mxu0 %v10803
        %11729 = vmatpush.bf16.msra.mxu0 %v10786
        %11730 = vmatpush.bf16.msra.mxu0 %v10769
        %11731 = vmatpush.bf16.msra.mxu0 %v10752
        %11732 = vmatpush.bf16.msra.mxu0 %v10735
        %11733 = vmatmul.bf16.gmra.mxu0 %v7223
        %v11734 = vpop.f32.mrf.mxu0
        %v11735 = vadd.f32 %v9734, %v11734
        %v11736 = vpop.f32.mrf.mxu0
        %v11737 = vadd.f32 %v9736, %v11736
        %11738 = vmatmul.bf16.gmra.mxu0 %v7224
        %v11739 = vpop.f32.mrf.mxu0
        %v11740 = vadd.f32 %v9739, %v11739
        %v11741 = vpop.f32.mrf.mxu0
        %v11742 = vadd.f32 %v9741, %v11741
        %11743 = vmatmul.bf16.gmra.mxu0 %v7225
        %v11744 = vpop.f32.mrf.mxu0
        %v11745 = vadd.f32 %v9744, %v11744
        %v11746 = vpop.f32.mrf.mxu0
        %v11747 = vadd.f32 %v9746, %v11746
        %11748 = vmatmul.bf16.gmra.mxu0 %v7226
        %v11749 = vpop.f32.mrf.mxu0
        %v11750 = vadd.f32 %v9749, %v11749
        %v11751 = vpop.f32.mrf.mxu0
        %v11752 = vadd.f32 %v9751, %v11751
        %11753 = vdwg.mxu0
        %11754 = vmatpush.bf16.msra.mxu0 0
        %11755 = vmatpush.bf16.msra.mxu0 0
        %11756 = vmatpush.bf16.msra.mxu0 0
        %11757 = vmatpush.bf16.msra.mxu0 0
        %11758 = vmatpush.bf16.msra.mxu0 %v10922
        %11759 = vmatpush.bf16.msra.mxu0 %v10905
        %11760 = vmatpush.bf16.msra.mxu0 %v10888
        %11761 = vmatpush.bf16.msra.mxu0 %v10871
        %11762 = vmatmul.bf16.gmra.mxu0 %v11134
        %v11763 = vpop.f32.mrf.mxu0
        %v11764 = vadd.f32 %v11735, %v11763
        %v11765 = vpop.f32.mrf.mxu0
        %v11766 = vadd.f32 %v11737, %v11765
        %11767 = vmatmul.bf16.gmra.mxu0 %v11137
        %v11768 = vpop.f32.mrf.mxu0
        %v11769 = vadd.f32 %v11740, %v11768
        %v11770 = vpop.f32.mrf.mxu0
        %v11771 = vadd.f32 %v11742, %v11770
        %11772 = vmatmul.bf16.gmra.mxu0 %v11140
        %v11773 = vpop.f32.mrf.mxu0
        %v11774 = vadd.f32 %v11745, %v11773
        %v11775 = vpop.f32.mrf.mxu0
        %v11776 = vadd.f32 %v11747, %v11775
        %11777 = vmatmul.bf16.gmra.mxu0 %v11143
        %v11778 = vpop.f32.mrf.mxu0
        %v11779 = vadd.f32 %v11750, %v11778
        %v11780 = vpop.f32.mrf.mxu0
        %v11781 = vadd.f32 %v11752, %v11780
        %11782 = vdwg.mxu0
        %11783 = vmatpush.bf16.msra.mxu0 %v10855
        %11784 = vmatpush.bf16.msra.mxu0 %v10838
        %11785 = vmatpush.bf16.msra.mxu0 %v10821
        %11786 = vmatpush.bf16.msra.mxu0 %v10804
        %11787 = vmatpush.bf16.msra.mxu0 %v10787
        %11788 = vmatpush.bf16.msra.mxu0 %v10770
        %11789 = vmatpush.bf16.msra.mxu0 %v10753
        %11790 = vmatpush.bf16.msra.mxu0 %v10736
        %11791 = vmatmul.bf16.gmra.mxu0 %v7223
        %v11792 = vpop.f32.mrf.mxu0
        %v11793 = vadd.f32 %v9792, %v11792
        %v11794 = vpop.f32.mrf.mxu0
        %v11795 = vadd.f32 %v9794, %v11794
        %11796 = vmatmul.bf16.gmra.mxu0 %v7224
        %v11797 = vpop.f32.mrf.mxu0
        %v11798 = vadd.f32 %v9797, %v11797
        %v11799 = vpop.f32.mrf.mxu0
        %v11800 = vadd.f32 %v9799, %v11799
        %11801 = vmatmul.bf16.gmra.mxu0 %v7225
        %v11802 = vpop.f32.mrf.mxu0
        %v11803 = vadd.f32 %v9802, %v11802
        %v11804 = vpop.f32.mrf.mxu0
        %v11805 = vadd.f32 %v9804, %v11804
        %11806 = vmatmul.bf16.gmra.mxu0 %v7226
        %v11807 = vpop.f32.mrf.mxu0
        %v11808 = vadd.f32 %v9807, %v11807
        %v11809 = vpop.f32.mrf.mxu0
        %v11810 = vadd.f32 %v9809, %v11809
        %11811 = vdwg.mxu0
        %11812 = vmatpush.bf16.msra.mxu0 0
        %11813 = vmatpush.bf16.msra.mxu0 0
        %11814 = vmatpush.bf16.msra.mxu0 0
        %11815 = vmatpush.bf16.msra.mxu0 0
        %11816 = vmatpush.bf16.msra.mxu0 %v10923
        %11817 = vmatpush.bf16.msra.mxu0 %v10906
        %11818 = vmatpush.bf16.msra.mxu0 %v10889
        %11819 = vmatpush.bf16.msra.mxu0 %v10872
        %11820 = vmatmul.bf16.gmra.mxu0 %v11134
        %v11821 = vpop.f32.mrf.mxu0
        %v11822 = vadd.f32 %v11793, %v11821
        %v11823 = vpop.f32.mrf.mxu0
        %v11824 = vadd.f32 %v11795, %v11823
        %11825 = vmatmul.bf16.gmra.mxu0 %v11137
        %v11826 = vpop.f32.mrf.mxu0
        %v11827 = vadd.f32 %v11798, %v11826
        %v11828 = vpop.f32.mrf.mxu0
        %v11829 = vadd.f32 %v11800, %v11828
        %11830 = vmatmul.bf16.gmra.mxu0 %v11140
        %v11831 = vpop.f32.mrf.mxu0
        %v11832 = vadd.f32 %v11803, %v11831
        %v11833 = vpop.f32.mrf.mxu0
        %v11834 = vadd.f32 %v11805, %v11833
        %11835 = vmatmul.bf16.gmra.mxu0 %v11143
        %v11836 = vpop.f32.mrf.mxu0
        %v11837 = vadd.f32 %v11808, %v11836
        %v11838 = vpop.f32.mrf.mxu0
        %v11839 = vadd.f32 %v11810, %v11838
        %11840 = vdwg.mxu0
        %11841 = vmatpush.bf16.msra.mxu0 %v10856
        %11842 = vmatpush.bf16.msra.mxu0 %v10839
        %11843 = vmatpush.bf16.msra.mxu0 %v10822
        %11844 = vmatpush.bf16.msra.mxu0 %v10805
        %11845 = vmatpush.bf16.msra.mxu0 %v10788
        %11846 = vmatpush.bf16.msra.mxu0 %v10771
        %11847 = vmatpush.bf16.msra.mxu0 %v10754
        %11848 = vmatpush.bf16.msra.mxu0 %v10737
        %11849 = vmatmul.bf16.gmra.mxu0 %v7223
        %v11850 = vpop.f32.mrf.mxu0
        %v11851 = vadd.f32 %v9850, %v11850
        %v11852 = vpop.f32.mrf.mxu0
        %v11853 = vadd.f32 %v9852, %v11852
        %11854 = vmatmul.bf16.gmra.mxu0 %v7224
        %v11855 = vpop.f32.mrf.mxu0
        %v11856 = vadd.f32 %v9855, %v11855
        %v11857 = vpop.f32.mrf.mxu0
        %v11858 = vadd.f32 %v9857, %v11857
        %11859 = vmatmul.bf16.gmra.mxu0 %v7225
        %v11860 = vpop.f32.mrf.mxu0
        %v11861 = vadd.f32 %v9860, %v11860
        %v11862 = vpop.f32.mrf.mxu0
        %v11863 = vadd.f32 %v9862, %v11862
        %11864 = vmatmul.bf16.gmra.mxu0 %v7226
        %v11865 = vpop.f32.mrf.mxu0
        %v11866 = vadd.f32 %v9865, %v11865
        %v11867 = vpop.f32.mrf.mxu0
        %v11868 = vadd.f32 %v9867, %v11867
        %11869 = vdwg.mxu0
        %11870 = vmatpush.bf16.msra.mxu0 0
        %11871 = vmatpush.bf16.msra.mxu0 0
        %11872 = vmatpush.bf16.msra.mxu0 0
        %11873 = vmatpush.bf16.msra.mxu0 0
        %11874 = vmatpush.bf16.msra.mxu0 %v10924
        %11875 = vmatpush.bf16.msra.mxu0 %v10907
        %11876 = vmatpush.bf16.msra.mxu0 %v10890
        %11877 = vmatpush.bf16.msra.mxu0 %v10873
        %11878 = vmatmul.bf16.gmra.mxu0 %v11134
        %v11879 = vpop.f32.mrf.mxu0
        %v11880 = vadd.f32 %v11851, %v11879
        %v11881 = vpop.f32.mrf.mxu0
        %v11882 = vadd.f32 %v11853, %v11881
        %11883 = vmatmul.bf16.gmra.mxu0 %v11137
        %v11884 = vpop.f32.mrf.mxu0
        %v11885 = vadd.f32 %v11856, %v11884
        %v11886 = vpop.f32.mrf.mxu0
        %v11887 = vadd.f32 %v11858, %v11886
        %11888 = vmatmul.bf16.gmra.mxu0 %v11140
        %v11889 = vpop.f32.mrf.mxu0
        %v11890 = vadd.f32 %v11861, %v11889
        %v11891 = vpop.f32.mrf.mxu0
        %v11892 = vadd.f32 %v11863, %v11891
        %11893 = vmatmul.bf16.gmra.mxu0 %v11143
        %v11894 = vpop.f32.mrf.mxu0
        %v11895 = vadd.f32 %v11866, %v11894
        %v11896 = vpop.f32.mrf.mxu0
        %v11897 = vadd.f32 %v11868, %v11896
        %11898 = vdwg.mxu0
        %11899 = vmatpush.bf16.msra.mxu0 %v10857
        %11900 = vmatpush.bf16.msra.mxu0 %v10840
        %11901 = vmatpush.bf16.msra.mxu0 %v10823
        %11902 = vmatpush.bf16.msra.mxu0 %v10806
        %11903 = vmatpush.bf16.msra.mxu0 %v10789
        %11904 = vmatpush.bf16.msra.mxu0 %v10772
        %11905 = vmatpush.bf16.msra.mxu0 %v10755
        %11906 = vmatpush.bf16.msra.mxu0 %v10738
        %11907 = vmatmul.bf16.gmra.mxu0 %v7223
        %v11908 = vpop.f32.mrf.mxu0
        %v11909 = vadd.f32 %v9908, %v11908
        %v11910 = vpop.f32.mrf.mxu0
        %v11911 = vadd.f32 %v9910, %v11910
        %11912 = vmatmul.bf16.gmra.mxu0 %v7224
        %v11913 = vpop.f32.mrf.mxu0
        %v11914 = vadd.f32 %v9913, %v11913
        %v11915 = vpop.f32.mrf.mxu0
        %v11916 = vadd.f32 %v9915, %v11915
        %11917 = vmatmul.bf16.gmra.mxu0 %v7225
        %v11918 = vpop.f32.mrf.mxu0
        %v11919 = vadd.f32 %v9918, %v11918
        %v11920 = vpop.f32.mrf.mxu0
        %v11921 = vadd.f32 %v9920, %v11920
        %11922 = vmatmul.bf16.gmra.mxu0 %v7226
        %v11923 = vpop.f32.mrf.mxu0
        %v11924 = vadd.f32 %v9923, %v11923
        %v11925 = vpop.f32.mrf.mxu0
        %v11926 = vadd.f32 %v9925, %v11925
        %11927 = vdwg.mxu0
        %11928 = vmatpush.bf16.msra.mxu0 0
        %11929 = vmatpush.bf16.msra.mxu0 0
        %11930 = vmatpush.bf16.msra.mxu0 0
        %11931 = vmatpush.bf16.msra.mxu0 0
        %11932 = vmatpush.bf16.msra.mxu0 %v10925
        %11933 = vmatpush.bf16.msra.mxu0 %v10908
        %11934 = vmatpush.bf16.msra.mxu0 %v10891
        %11935 = vmatpush.bf16.msra.mxu0 %v10874
        %11936 = vmatmul.bf16.gmra.mxu0 %v11134
        %v11937 = vpop.f32.mrf.mxu0
        %v11938 = vadd.f32 %v11909, %v11937
        %v11939 = vpop.f32.mrf.mxu0
        %v11940 = vadd.f32 %v11911, %v11939
        %11941 = vmatmul.bf16.gmra.mxu0 %v11137
        %v11942 = vpop.f32.mrf.mxu0
        %v11943 = vadd.f32 %v11914, %v11942
        %v11944 = vpop.f32.mrf.mxu0
        %v11945 = vadd.f32 %v11916, %v11944
        %11946 = vmatmul.bf16.gmra.mxu0 %v11140
        %v11947 = vpop.f32.mrf.mxu0
        %v11948 = vadd.f32 %v11919, %v11947
        %v11949 = vpop.f32.mrf.mxu0
        %v11950 = vadd.f32 %v11921, %v11949
        %11951 = vmatmul.bf16.gmra.mxu0 %v11143
        %v11952 = vpop.f32.mrf.mxu0
        %v11953 = vadd.f32 %v11924, %v11952
        %v11954 = vpop.f32.mrf.mxu0
        %v11955 = vadd.f32 %v11926, %v11954
        %11956 = vdwg.mxu0
        %11957 = vmatpush.bf16.msra.mxu0 %v10858
        %11958 = vmatpush.bf16.msra.mxu0 %v10841
        %11959 = vmatpush.bf16.msra.mxu0 %v10824
        %11960 = vmatpush.bf16.msra.mxu0 %v10807
        %11961 = vmatpush.bf16.msra.mxu0 %v10790
        %11962 = vmatpush.bf16.msra.mxu0 %v10773
        %11963 = vmatpush.bf16.msra.mxu0 %v10756
        %11964 = vmatpush.bf16.msra.mxu0 %v10739
        %11965 = vmatmul.bf16.gmra.mxu0 %v7223
        %v11966 = vpop.f32.mrf.mxu0
        %v11967 = vadd.f32 %v9966, %v11966
        %v11968 = vpop.f32.mrf.mxu0
        %v11969 = vadd.f32 %v9968, %v11968
        %11970 = vmatmul.bf16.gmra.mxu0 %v7224
        %v11971 = vpop.f32.mrf.mxu0
        %v11972 = vadd.f32 %v9971, %v11971
        %v11973 = vpop.f32.mrf.mxu0
        %v11974 = vadd.f32 %v9973, %v11973
        %11975 = vmatmul.bf16.gmra.mxu0 %v7225
        %v11976 = vpop.f32.mrf.mxu0
        %v11977 = vadd.f32 %v9976, %v11976
        %v11978 = vpop.f32.mrf.mxu0
        %v11979 = vadd.f32 %v9978, %v11978
        %11980 = vmatmul.bf16.gmra.mxu0 %v7226
        %v11981 = vpop.f32.mrf.mxu0
        %v11982 = vadd.f32 %v9981, %v11981
        %v11983 = vpop.f32.mrf.mxu0
        %v11984 = vadd.f32 %v9983, %v11983
        %11985 = vdwg.mxu0
        %11986 = vmatpush.bf16.msra.mxu0 0
        %11987 = vmatpush.bf16.msra.mxu0 0
        %11988 = vmatpush.bf16.msra.mxu0 0
        %11989 = vmatpush.bf16.msra.mxu0 0
        %11990 = vmatpush.bf16.msra.mxu0 %v10926
        %11991 = vmatpush.bf16.msra.mxu0 %v10909
        %11992 = vmatpush.bf16.msra.mxu0 %v10892
        %11993 = vmatpush.bf16.msra.mxu0 %v10875
        %11994 = vmatmul.bf16.gmra.mxu0 %v11134
        %v11995 = vpop.f32.mrf.mxu0
        %v11996 = vadd.f32 %v11967, %v11995
        %v11997 = vpop.f32.mrf.mxu0
        %v11998 = vadd.f32 %v11969, %v11997
        %11999 = vmatmul.bf16.gmra.mxu0 %v11137
        %v12000 = vpop.f32.mrf.mxu0
        %v12001 = vadd.f32 %v11972, %v12000
        %v12002 = vpop.f32.mrf.mxu0
        %v12003 = vadd.f32 %v11974, %v12002
        %12004 = vmatmul.bf16.gmra.mxu0 %v11140
        %v12005 = vpop.f32.mrf.mxu0
        %v12006 = vadd.f32 %v11977, %v12005
        %v12007 = vpop.f32.mrf.mxu0
        %v12008 = vadd.f32 %v11979, %v12007
        %12009 = vmatmul.bf16.gmra.mxu0 %v11143
        %v12010 = vpop.f32.mrf.mxu0
        %v12011 = vadd.f32 %v11982, %v12010
        %v12012 = vpop.f32.mrf.mxu0
        %v12013 = vadd.f32 %v11984, %v12012
        %12014 = vdwg.mxu0
        %12015 = vmatpush.bf16.msra.mxu0 %v10859
        %12016 = vmatpush.bf16.msra.mxu0 %v10842
        %12017 = vmatpush.bf16.msra.mxu0 %v10825
        %12018 = vmatpush.bf16.msra.mxu0 %v10808
        %12019 = vmatpush.bf16.msra.mxu0 %v10791
        %12020 = vmatpush.bf16.msra.mxu0 %v10774
        %12021 = vmatpush.bf16.msra.mxu0 %v10757
        %12022 = vmatpush.bf16.msra.mxu0 %v10740
        %12023 = vmatmul.bf16.gmra.mxu0 %v7223
        %v12024 = vpop.f32.mrf.mxu0
        %v12025 = vadd.f32 %v10024, %v12024
        %v12026 = vpop.f32.mrf.mxu0
        %v12027 = vadd.f32 %v10026, %v12026
        %12028 = vmatmul.bf16.gmra.mxu0 %v7224
        %v12029 = vpop.f32.mrf.mxu0
        %v12030 = vadd.f32 %v10029, %v12029
        %v12031 = vpop.f32.mrf.mxu0
        %v12032 = vadd.f32 %v10031, %v12031
        %12033 = vmatmul.bf16.gmra.mxu0 %v7225
        %v12034 = vpop.f32.mrf.mxu0
        %v12035 = vadd.f32 %v10034, %v12034
        %v12036 = vpop.f32.mrf.mxu0
        %v12037 = vadd.f32 %v10036, %v12036
        %12038 = vmatmul.bf16.gmra.mxu0 %v7226
        %v12039 = vpop.f32.mrf.mxu0
        %v12040 = vadd.f32 %v10039, %v12039
        %v12041 = vpop.f32.mrf.mxu0
        %v12042 = vadd.f32 %v10041, %v12041
        %12043 = vdwg.mxu0
        %12044 = vmatpush.bf16.msra.mxu0 0
        %12045 = vmatpush.bf16.msra.mxu0 0
        %12046 = vmatpush.bf16.msra.mxu0 0
        %12047 = vmatpush.bf16.msra.mxu0 0
        %12048 = vmatpush.bf16.msra.mxu0 %v10927
        %12049 = vmatpush.bf16.msra.mxu0 %v10910
        %12050 = vmatpush.bf16.msra.mxu0 %v10893
        %12051 = vmatpush.bf16.msra.mxu0 %v10876
        %12052 = vmatmul.bf16.gmra.mxu0 %v11134
        %v12053 = vpop.f32.mrf.mxu0
        %v12054 = vadd.f32 %v12025, %v12053
        %v12055 = vpop.f32.mrf.mxu0
        %v12056 = vadd.f32 %v12027, %v12055
        %12057 = vmatmul.bf16.gmra.mxu0 %v11137
        %v12058 = vpop.f32.mrf.mxu0
        %v12059 = vadd.f32 %v12030, %v12058
        %v12060 = vpop.f32.mrf.mxu0
        %v12061 = vadd.f32 %v12032, %v12060
        %12062 = vmatmul.bf16.gmra.mxu0 %v11140
        %v12063 = vpop.f32.mrf.mxu0
        %v12064 = vadd.f32 %v12035, %v12063
        %v12065 = vpop.f32.mrf.mxu0
        %v12066 = vadd.f32 %v12037, %v12065
        %12067 = vmatmul.bf16.gmra.mxu0 %v11143
        %v12068 = vpop.f32.mrf.mxu0
        %v12069 = vadd.f32 %v12040, %v12068
        %v12070 = vpop.f32.mrf.mxu0
        %v12071 = vadd.f32 %v12042, %v12070
        %12072 = vdwg.mxu0
        %12073 = vmatpush.bf16.msra.mxu0 %v10860
        %12074 = vmatpush.bf16.msra.mxu0 %v10843
        %12075 = vmatpush.bf16.msra.mxu0 %v10826
        %12076 = vmatpush.bf16.msra.mxu0 %v10809
        %12077 = vmatpush.bf16.msra.mxu0 %v10792
        %12078 = vmatpush.bf16.msra.mxu0 %v10775
        %12079 = vmatpush.bf16.msra.mxu0 %v10758
        %12080 = vmatpush.bf16.msra.mxu0 %v10741
        %12081 = vmatmul.bf16.gmra.mxu0 %v7223
        %v12082 = vpop.f32.mrf.mxu0
        %v12083 = vadd.f32 %v10082, %v12082
        %v12084 = vpop.f32.mrf.mxu0
        %v12085 = vadd.f32 %v10084, %v12084
        %12086 = vmatmul.bf16.gmra.mxu0 %v7224
        %v12087 = vpop.f32.mrf.mxu0
        %v12088 = vadd.f32 %v10087, %v12087
        %v12089 = vpop.f32.mrf.mxu0
        %v12090 = vadd.f32 %v10089, %v12089
        %12091 = vmatmul.bf16.gmra.mxu0 %v7225
        %v12092 = vpop.f32.mrf.mxu0
        %v12093 = vadd.f32 %v10092, %v12092
        %v12094 = vpop.f32.mrf.mxu0
        %v12095 = vadd.f32 %v10094, %v12094
        %12096 = vmatmul.bf16.gmra.mxu0 %v7226
        %v12097 = vpop.f32.mrf.mxu0
        %v12098 = vadd.f32 %v10097, %v12097
        %v12099 = vpop.f32.mrf.mxu0
        %v12100 = vadd.f32 %v10099, %v12099
        %12101 = vdwg.mxu0
        %12102 = vmatpush.bf16.msra.mxu0 0
        %12103 = vmatpush.bf16.msra.mxu0 0
        %12104 = vmatpush.bf16.msra.mxu0 0
        %12105 = vmatpush.bf16.msra.mxu0 0
        %12106 = vmatpush.bf16.msra.mxu0 %v10928
        %12107 = vmatpush.bf16.msra.mxu0 %v10911
        %12108 = vmatpush.bf16.msra.mxu0 %v10894
        %12109 = vmatpush.bf16.msra.mxu0 %v10877
        %12110 = vmatmul.bf16.gmra.mxu0 %v11134
        %v12111 = vpop.f32.mrf.mxu0
        %v12112 = vadd.f32 %v12083, %v12111
        %v12113 = vpop.f32.mrf.mxu0
        %v12114 = vadd.f32 %v12085, %v12113
        %12115 = vmatmul.bf16.gmra.mxu0 %v11137
        %v12116 = vpop.f32.mrf.mxu0
        %v12117 = vadd.f32 %v12088, %v12116
        %v12118 = vpop.f32.mrf.mxu0
        %v12119 = vadd.f32 %v12090, %v12118
        %12120 = vmatmul.bf16.gmra.mxu0 %v11140
        %v12121 = vpop.f32.mrf.mxu0
        %v12122 = vadd.f32 %v12093, %v12121
        %v12123 = vpop.f32.mrf.mxu0
        %v12124 = vadd.f32 %v12095, %v12123
        %12125 = vmatmul.bf16.gmra.mxu0 %v11143
        %v12126 = vpop.f32.mrf.mxu0
        %v12127 = vadd.f32 %v12098, %v12126
        %v12128 = vpop.f32.mrf.mxu0
        %v12129 = vadd.f32 %v12100, %v12128
        %12130 = vdwg.mxu0
        %v12131 = vld [vmem:[%s9] sm:$0xff]
        %v12132 = vld [vmem:[%s9 + $0x8] sm:$0xff]
        %v12133 = vld [vmem:[%s9 + $0x10] sm:$0x1]
        %v12137 = vperm.slane %v12131, 0
        %v12138 = vperm.slane %v12131, 1
        %v12139 = vperm.slane %v12131, 2
        %v12140 = vperm.slane %v12131, 3
        %v12141 = vperm.slane %v12131, 4
        %v12142 = vperm.slane %v12131, 5
        %v12143 = vperm.slane %v12131, 6
        %v12144 = vperm.slane %v12131, 7
        %v12145 = vperm.slane %v12132, 0
        %v12146 = vperm.slane %v12132, 1
        %v12147 = vperm.slane %v12132, 2
        %v12148 = vperm.slane %v12132, 3
        %v12149 = vperm.slane %v12132, 4
        %v12150 = vperm.slane %v12132, 5
        %v12151 = vperm.slane %v12132, 6
        %v12152 = vperm.slane %v12132, 7
        %v12153 = vperm.slane %v12133, 0
        %v12171 = vadd.f32 %v11184, %v12137
        %v12172 = vadd.f32 %v11242, %v12138
        %v12173 = vadd.f32 %v11300, %v12139
        %v12174 = vadd.f32 %v11358, %v12140
        %v12175 = vadd.f32 %v11416, %v12141
        %v12176 = vadd.f32 %v11474, %v12142
        %v12177 = vadd.f32 %v11532, %v12143
        %v12178 = vadd.f32 %v11590, %v12144
        %v12179 = vadd.f32 %v11648, %v12145
        %v12180 = vadd.f32 %v11706, %v12146
        %v12181 = vadd.f32 %v11764, %v12147
        %v12182 = vadd.f32 %v11822, %v12148
        %v12183 = vadd.f32 %v11880, %v12149
        %v12184 = vadd.f32 %v11938, %v12150
        %v12185 = vadd.f32 %v11996, %v12151
        %v12186 = vadd.f32 %v12054, %v12152
        %v12187 = vadd.f32 %v12112, %v12153
        %v12188 = vadd.f32 %v11186, %v12137
        %v12189 = vadd.f32 %v11244, %v12138
        %v12190 = vadd.f32 %v11302, %v12139
        %v12191 = vadd.f32 %v11360, %v12140
        %v12192 = vadd.f32 %v11418, %v12141
        %v12193 = vadd.f32 %v11476, %v12142
        %v12194 = vadd.f32 %v11534, %v12143
        %v12195 = vadd.f32 %v11592, %v12144
        %v12196 = vadd.f32 %v11650, %v12145
        %v12197 = vadd.f32 %v11708, %v12146
        %v12198 = vadd.f32 %v11766, %v12147
        %v12199 = vadd.f32 %v11824, %v12148
        %v12200 = vadd.f32 %v11882, %v12149
        %v12201 = vadd.f32 %v11940, %v12150
        %v12202 = vadd.f32 %v11998, %v12151
        %v12203 = vadd.f32 %v12056, %v12152
        %v12204 = vadd.f32 %v12114, %v12153
        %v12205 = vadd.f32 %v11189, %v12137
        %v12206 = vadd.f32 %v11247, %v12138
        %v12207 = vadd.f32 %v11305, %v12139
        %v12208 = vadd.f32 %v11363, %v12140
        %v12209 = vadd.f32 %v11421, %v12141
        %v12210 = vadd.f32 %v11479, %v12142
        %v12211 = vadd.f32 %v11537, %v12143
        %v12212 = vadd.f32 %v11595, %v12144
        %v12213 = vadd.f32 %v11653, %v12145
        %v12214 = vadd.f32 %v11711, %v12146
        %v12215 = vadd.f32 %v11769, %v12147
        %v12216 = vadd.f32 %v11827, %v12148
        %v12217 = vadd.f32 %v11885, %v12149
        %v12218 = vadd.f32 %v11943, %v12150
        %v12219 = vadd.f32 %v12001, %v12151
        %v12220 = vadd.f32 %v12059, %v12152
        %v12221 = vadd.f32 %v12117, %v12153
        %v12222 = vadd.f32 %v11191, %v12137
        %v12223 = vadd.f32 %v11249, %v12138
        %v12224 = vadd.f32 %v11307, %v12139
        %v12225 = vadd.f32 %v11365, %v12140
        %v12226 = vadd.f32 %v11423, %v12141
        %v12227 = vadd.f32 %v11481, %v12142
        %v12228 = vadd.f32 %v11539, %v12143
        %v12229 = vadd.f32 %v11597, %v12144
        %v12230 = vadd.f32 %v11655, %v12145
        %v12231 = vadd.f32 %v11713, %v12146
        %v12232 = vadd.f32 %v11771, %v12147
        %v12233 = vadd.f32 %v11829, %v12148
        %v12234 = vadd.f32 %v11887, %v12149
        %v12235 = vadd.f32 %v11945, %v12150
        %v12236 = vadd.f32 %v12003, %v12151
        %v12237 = vadd.f32 %v12061, %v12152
        %v12238 = vadd.f32 %v12119, %v12153
        %v12239 = vadd.f32 %v11194, %v12137
        %v12240 = vadd.f32 %v11252, %v12138
        %v12241 = vadd.f32 %v11310, %v12139
        %v12242 = vadd.f32 %v11368, %v12140
        %v12243 = vadd.f32 %v11426, %v12141
        %v12244 = vadd.f32 %v11484, %v12142
        %v12245 = vadd.f32 %v11542, %v12143
        %v12246 = vadd.f32 %v11600, %v12144
        %v12247 = vadd.f32 %v11658, %v12145
        %v12248 = vadd.f32 %v11716, %v12146
        %v12249 = vadd.f32 %v11774, %v12147
        %v12250 = vadd.f32 %v11832, %v12148
        %v12251 = vadd.f32 %v11890, %v12149
        %v12252 = vadd.f32 %v11948, %v12150
        %v12253 = vadd.f32 %v12006, %v12151
        %v12254 = vadd.f32 %v12064, %v12152
        %v12255 = vadd.f32 %v12122, %v12153
        %v12256 = vadd.f32 %v11196, %v12137
        %v12257 = vadd.f32 %v11254, %v12138
        %v12258 = vadd.f32 %v11312, %v12139
        %v12259 = vadd.f32 %v11370, %v12140
        %v12260 = vadd.f32 %v11428, %v12141
        %v12261 = vadd.f32 %v11486, %v12142
        %v12262 = vadd.f32 %v11544, %v12143
        %v12263 = vadd.f32 %v11602, %v12144
        %v12264 = vadd.f32 %v11660, %v12145
        %v12265 = vadd.f32 %v11718, %v12146
        %v12266 = vadd.f32 %v11776, %v12147
        %v12267 = vadd.f32 %v11834, %v12148
        %v12268 = vadd.f32 %v11892, %v12149
        %v12269 = vadd.f32 %v11950, %v12150
        %v12270 = vadd.f32 %v12008, %v12151
        %v12271 = vadd.f32 %v12066, %v12152
        %v12272 = vadd.f32 %v12124, %v12153
        %v12273 = vadd.f32 %v11199, %v12137
        %v12274 = vadd.f32 %v11257, %v12138
        %v12275 = vadd.f32 %v11315, %v12139
        %v12276 = vadd.f32 %v11373, %v12140
        %v12277 = vadd.f32 %v11431, %v12141
        %v12278 = vadd.f32 %v11489, %v12142
        %v12279 = vadd.f32 %v11547, %v12143
        %v12280 = vadd.f32 %v11605, %v12144
        %v12281 = vadd.f32 %v11663, %v12145
        %v12282 = vadd.f32 %v11721, %v12146
        %v12283 = vadd.f32 %v11779, %v12147
        %v12284 = vadd.f32 %v11837, %v12148
        %v12285 = vadd.f32 %v11895, %v12149
        %v12286 = vadd.f32 %v11953, %v12150
        %v12287 = vadd.f32 %v12011, %v12151
        %v12288 = vadd.f32 %v12069, %v12152
        %v12289 = vadd.f32 %v12127, %v12153
        %v12290 = vadd.f32 %v11201, %v12137
        %v12291 = vadd.f32 %v11259, %v12138
        %v12292 = vadd.f32 %v11317, %v12139
        %v12293 = vadd.f32 %v11375, %v12140
        %v12294 = vadd.f32 %v11433, %v12141
        %v12295 = vadd.f32 %v11491, %v12142
        %v12296 = vadd.f32 %v11549, %v12143
        %v12297 = vadd.f32 %v11607, %v12144
        %v12298 = vadd.f32 %v11665, %v12145
        %v12299 = vadd.f32 %v11723, %v12146
        %v12300 = vadd.f32 %v11781, %v12147
        %v12301 = vadd.f32 %v11839, %v12148
        %v12302 = vadd.f32 %v11897, %v12149
        %v12303 = vadd.f32 %v11955, %v12150
        %v12304 = vadd.f32 %v12013, %v12151
        %v12305 = vadd.f32 %v12071, %v12152
        %v12306 = vadd.f32 %v12129, %v12153
        %v12307 = vld [vmem:[%s433] sm:$0xff]
        %v12308 = vld [vmem:[%s433 + $0x8] sm:$0xff]
        %v12309 = vld [vmem:[%s433 + $0x10] sm:$0xff]
        %v12310 = vld [vmem:[%s433 + $0x18] sm:$0xff]
        %v12311 = vld [vmem:[%s433 + $0x20] sm:$0xff]
        %v12312 = vld [vmem:[%s433 + $0x28] sm:$0xff]
        %v12313 = vld [vmem:[%s433 + $0x30] sm:$0xff]
        %v12314 = vld [vmem:[%s433 + $0x38] sm:$0xff]
        %v12315 = vld [vmem:[%s433 + $0x40] sm:$0xff]
        %v12316 = vld [vmem:[%s433 + $0x48] sm:$0xff]
        %v12317 = vld [vmem:[%s433 + $0x50] sm:$0xff]
        %v12318 = vld [vmem:[%s433 + $0x58] sm:$0xff]
        %v12319 = vld [vmem:[%s433 + $0x60] sm:$0xff]
        %v12320 = vld [vmem:[%s433 + $0x68] sm:$0xff]
        %v12321 = vld [vmem:[%s433 + $0x70] sm:$0xff]
        %v12322 = vld [vmem:[%s433 + $0x78] sm:$0xff]
        %v12323 = vld [vmem:[%s433 + $0x80] sm:$0xff]
        %v12324 = vld [vmem:[%s433 + $0x88] sm:$0xff]
        %v12325 = vld [vmem:[%s433 + $0x90] sm:$0xff]
        %v12326 = vld [vmem:[%s433 + $0x98] sm:$0xff]
        %v12327 = vld [vmem:[%s433 + $0xa0] sm:$0xff]
        %v12328 = vld [vmem:[%s433 + $0xa8] sm:$0xff]
        %v12329 = vld [vmem:[%s433 + $0xb0] sm:$0xff]
        %v12330 = vld [vmem:[%s433 + $0xb8] sm:$0xff]
        %v12331 = vld [vmem:[%s433 + $0xc0] sm:$0xff]
        %v12332 = vld [vmem:[%s433 + $0xc8] sm:$0xff]
        %v12333 = vld [vmem:[%s433 + $0xd0] sm:$0xff]
        %v12334 = vld [vmem:[%s433 + $0xd8] sm:$0xff]
        %v12335 = vld [vmem:[%s433 + $0xe0] sm:$0xff]
        %v12336 = vld [vmem:[%s433 + $0xe8] sm:$0xff]
        %v12337 = vld [vmem:[%s433 + $0xf0] sm:$0xff]
        %v12338 = vld [vmem:[%s433 + $0xf8] sm:$0xff]
        %v12339 = vld [vmem:[%s433 + $0x100] sm:$0xff]
        %v12340 = vld [vmem:[%s433 + $0x108] sm:$0xff]
        %v12341 = vld [vmem:[%s433 + $0x110] sm:$0xff]
        %v12342 = vld [vmem:[%s433 + $0x118] sm:$0xff]
        %v12343 = vld [vmem:[%s433 + $0x120] sm:$0xff]
        %v12344 = vld [vmem:[%s433 + $0x128] sm:$0xff]
        %v12345 = vld [vmem:[%s433 + $0x130] sm:$0xff]
        %v12346 = vld [vmem:[%s433 + $0x138] sm:$0xff]
        %v12347 = vld [vmem:[%s433 + $0x140] sm:$0xff]
        %v12348 = vld [vmem:[%s433 + $0x148] sm:$0xff]
        %v12349 = vld [vmem:[%s433 + $0x150] sm:$0xff]
        %v12350 = vld [vmem:[%s433 + $0x158] sm:$0xff]
        %v12351 = vld [vmem:[%s433 + $0x160] sm:$0xff]
        %v12352 = vld [vmem:[%s433 + $0x168] sm:$0xff]
        %v12353 = vld [vmem:[%s433 + $0x170] sm:$0xff]
        %v12354 = vld [vmem:[%s433 + $0x178] sm:$0xff]
        %v12355 = vld [vmem:[%s433 + $0x180] sm:$0xff]
        %v12356 = vld [vmem:[%s433 + $0x188] sm:$0xff]
        %v12357 = vld [vmem:[%s433 + $0x190] sm:$0xff]
        %v12358 = vld [vmem:[%s433 + $0x198] sm:$0xff]
        %v12359 = vld [vmem:[%s433 + $0x1a0] sm:$0xff]
        %v12360 = vld [vmem:[%s433 + $0x1a8] sm:$0xff]
        %v12361 = vld [vmem:[%s433 + $0x1b0] sm:$0xff]
        %v12362 = vld [vmem:[%s433 + $0x1b8] sm:$0xff]
        %v12363 = vld [vmem:[%s433 + $0x1c0] sm:$0xff]
        %v12364 = vld [vmem:[%s433 + $0x1c8] sm:$0xff]
        %v12365 = vld [vmem:[%s433 + $0x1d0] sm:$0xff]
        %v12366 = vld [vmem:[%s433 + $0x1d8] sm:$0xff]
        %v12367 = vld [vmem:[%s433 + $0x1e0] sm:$0xff]
        %v12368 = vld [vmem:[%s433 + $0x1e8] sm:$0xff]
        %v12369 = vld [vmem:[%s433 + $0x1f0] sm:$0xff]
        %v12370 = vld [vmem:[%s433 + $0x1f8] sm:$0xff]
        %v12371 = vld [vmem:[%s433 + $0x200] sm:$0xff]
        %v12372 = vld [vmem:[%s433 + $0x208] sm:$0xff]
        %v12373 = vld [vmem:[%s433 + $0x210] sm:$0xff]
        %v12374 = vld [vmem:[%s433 + $0x218] sm:$0xff]
        %v12375 = vld [vmem:[%s433 + $0x220] sm:$0xff]
        %v12376 = vld [vmem:[%s433 + $0x228] sm:$0xff]
        %v12377 = vld [vmem:[%s433 + $0x230] sm:$0xff]
        %v12378 = vld [vmem:[%s433 + $0x238] sm:$0xff]
        %v12379 = vld [vmem:[%s433 + $0x240] sm:$0xff]
        %v12380 = vld [vmem:[%s433 + $0x248] sm:$0xff]
        %v12381 = vld [vmem:[%s433 + $0x250] sm:$0xff]
        %v12382 = vld [vmem:[%s433 + $0x258] sm:$0xff]
        %v12383 = vld [vmem:[%s433 + $0x260] sm:$0xff]
        %v12384 = vld [vmem:[%s433 + $0x268] sm:$0xff]
        %v12385 = vld [vmem:[%s433 + $0x270] sm:$0xff]
        %v12386 = vld [vmem:[%s433 + $0x278] sm:$0xff]
        %v12387 = vld [vmem:[%s433 + $0x280] sm:$0xff]
        %v12388 = vld [vmem:[%s433 + $0x288] sm:$0xff]
        %v12389 = vld [vmem:[%s433 + $0x290] sm:$0xff]
        %v12390 = vld [vmem:[%s433 + $0x298] sm:$0xff]
        %v12391 = vld [vmem:[%s433 + $0x2a0] sm:$0xff]
        %v12392 = vld [vmem:[%s433 + $0x2a8] sm:$0xff]
        %v12393 = vld [vmem:[%s433 + $0x2b0] sm:$0xff]
        %v12394 = vld [vmem:[%s433 + $0x2b8] sm:$0xff]
        %v12395 = vld [vmem:[%s433 + $0x2c0] sm:$0xff]
        %v12396 = vld [vmem:[%s433 + $0x2c8] sm:$0xff]
        %v12397 = vld [vmem:[%s433 + $0x2d0] sm:$0xff]
        %v12398 = vld [vmem:[%s433 + $0x2d8] sm:$0xff]
        %v12399 = vld [vmem:[%s433 + $0x2e0] sm:$0xff]
        %v12400 = vld [vmem:[%s433 + $0x2e8] sm:$0xff]
        %v12401 = vld [vmem:[%s433 + $0x2f0] sm:$0xff]
        %v12402 = vld [vmem:[%s433 + $0x2f8] sm:$0xff]
        %v12403 = vld [vmem:[%s433 + $0x300] sm:$0xff]
        %v12404 = vld [vmem:[%s433 + $0x308] sm:$0xff]
        %v12405 = vld [vmem:[%s433 + $0x310] sm:$0xff]
        %v12406 = vld [vmem:[%s433 + $0x318] sm:$0xff]
        %v12407 = vld [vmem:[%s433 + $0x320] sm:$0xff]
        %v12408 = vld [vmem:[%s433 + $0x328] sm:$0xff]
        %v12409 = vld [vmem:[%s433 + $0x330] sm:$0xff]
        %v12410 = vld [vmem:[%s433 + $0x338] sm:$0xff]
        %v12411 = vld [vmem:[%s433 + $0x340] sm:$0xff]
        %v12412 = vld [vmem:[%s433 + $0x348] sm:$0xff]
        %v12413 = vld [vmem:[%s433 + $0x350] sm:$0xff]
        %v12414 = vld [vmem:[%s433 + $0x358] sm:$0xff]
        %v12415 = vld [vmem:[%s433 + $0x360] sm:$0xff]
        %v12416 = vld [vmem:[%s433 + $0x368] sm:$0xff]
        %v12417 = vld [vmem:[%s433 + $0x370] sm:$0xff]
        %v12418 = vld [vmem:[%s433 + $0x378] sm:$0xff]
        %v12419 = vld [vmem:[%s433 + $0x380] sm:$0xff]
        %v12420 = vld [vmem:[%s433 + $0x388] sm:$0xff]
        %v12421 = vld [vmem:[%s433 + $0x390] sm:$0xff]
        %v12422 = vld [vmem:[%s433 + $0x398] sm:$0xff]
        %v12423 = vld [vmem:[%s433 + $0x3a0] sm:$0xff]
        %v12424 = vld [vmem:[%s433 + $0x3a8] sm:$0xff]
        %v12425 = vld [vmem:[%s433 + $0x3b0] sm:$0xff]
        %v12426 = vld [vmem:[%s433 + $0x3b8] sm:$0xff]
        %v12427 = vld [vmem:[%s433 + $0x3c0] sm:$0xff]
        %v12428 = vld [vmem:[%s433 + $0x3c8] sm:$0xff]
        %v12429 = vld [vmem:[%s433 + $0x3d0] sm:$0xff]
        %v12430 = vld [vmem:[%s433 + $0x3d8] sm:$0xff]
        %v12431 = vld [vmem:[%s433 + $0x3e0] sm:$0xff]
        %v12432 = vld [vmem:[%s433 + $0x3e8] sm:$0xff]
        %v12433 = vld [vmem:[%s433 + $0x3f0] sm:$0xff]
        %v12434 = vld [vmem:[%s433 + $0x3f8] sm:$0xff]
        %v12435 = vld [vmem:[%s433 + $0x400] sm:$0xff]
        %v12436 = vld [vmem:[%s433 + $0x408] sm:$0xff]
        %v12437 = vld [vmem:[%s433 + $0x410] sm:$0xff]
        %v12438 = vld [vmem:[%s433 + $0x418] sm:$0xff]
        %v12439 = vld [vmem:[%s433 + $0x420] sm:$0xff]
        %v12440 = vld [vmem:[%s433 + $0x428] sm:$0xff]
        %v12441 = vld [vmem:[%s433 + $0x430] sm:$0xff]
        %v12442 = vld [vmem:[%s433 + $0x438] sm:$0xff]
        %v12443 = vadd.f32 %v12171, %v12307
        %v12444 = vadd.f32 %v12172, %v12308
        %v12445 = vadd.f32 %v12173, %v12309
        %v12446 = vadd.f32 %v12174, %v12310
        %v12447 = vadd.f32 %v12175, %v12311
        %v12448 = vadd.f32 %v12176, %v12312
        %v12449 = vadd.f32 %v12177, %v12313
        %v12450 = vadd.f32 %v12178, %v12314
        %v12451 = vadd.f32 %v12179, %v12315
        %v12452 = vadd.f32 %v12180, %v12316
        %v12453 = vadd.f32 %v12181, %v12317
        %v12454 = vadd.f32 %v12182, %v12318
        %v12455 = vadd.f32 %v12183, %v12319
        %v12456 = vadd.f32 %v12184, %v12320
        %v12457 = vadd.f32 %v12185, %v12321
        %v12458 = vadd.f32 %v12186, %v12322
        %v12459 = vadd.f32 %v12187, %v12323
        %v12460 = vadd.f32 %v12188, %v12324
        %v12461 = vadd.f32 %v12189, %v12325
        %v12462 = vadd.f32 %v12190, %v12326
        %v12463 = vadd.f32 %v12191, %v12327
        %v12464 = vadd.f32 %v12192, %v12328
        %v12465 = vadd.f32 %v12193, %v12329
        %v12466 = vadd.f32 %v12194, %v12330
        %v12467 = vadd.f32 %v12195, %v12331
        %v12468 = vadd.f32 %v12196, %v12332
        %v12469 = vadd.f32 %v12197, %v12333
        %v12470 = vadd.f32 %v12198, %v12334
        %v12471 = vadd.f32 %v12199, %v12335
        %v12472 = vadd.f32 %v12200, %v12336
        %v12473 = vadd.f32 %v12201, %v12337
        %v12474 = vadd.f32 %v12202, %v12338
        %v12475 = vadd.f32 %v12203, %v12339
        %v12476 = vadd.f32 %v12204, %v12340
        %v12477 = vadd.f32 %v12205, %v12341
        %v12478 = vadd.f32 %v12206, %v12342
        %v12479 = vadd.f32 %v12207, %v12343
        %v12480 = vadd.f32 %v12208, %v12344
        %v12481 = vadd.f32 %v12209, %v12345
        %v12482 = vadd.f32 %v12210, %v12346
        %v12483 = vadd.f32 %v12211, %v12347
        %v12484 = vadd.f32 %v12212, %v12348
        %v12485 = vadd.f32 %v12213, %v12349
        %v12486 = vadd.f32 %v12214, %v12350
        %v12487 = vadd.f32 %v12215, %v12351
        %v12488 = vadd.f32 %v12216, %v12352
        %v12489 = vadd.f32 %v12217, %v12353
        %v12490 = vadd.f32 %v12218, %v12354
        %v12491 = vadd.f32 %v12219, %v12355
        %v12492 = vadd.f32 %v12220, %v12356
        %v12493 = vadd.f32 %v12221, %v12357
        %v12494 = vadd.f32 %v12222, %v12358
        %v12495 = vadd.f32 %v12223, %v12359
        %v12496 = vadd.f32 %v12224, %v12360
        %v12497 = vadd.f32 %v12225, %v12361
        %v12498 = vadd.f32 %v12226, %v12362
        %v12499 = vadd.f32 %v12227, %v12363
        %v12500 = vadd.f32 %v12228, %v12364
        %v12501 = vadd.f32 %v12229, %v12365
        %v12502 = vadd.f32 %v12230, %v12366
        %v12503 = vadd.f32 %v12231, %v12367
        %v12504 = vadd.f32 %v12232, %v12368
        %v12505 = vadd.f32 %v12233, %v12369
        %v12506 = vadd.f32 %v12234, %v12370
        %v12507 = vadd.f32 %v12235, %v12371
        %v12508 = vadd.f32 %v12236, %v12372
        %v12509 = vadd.f32 %v12237, %v12373
        %v12510 = vadd.f32 %v12238, %v12374
        %v12511 = vadd.f32 %v12239, %v12375
        %v12512 = vadd.f32 %v12240, %v12376
        %v12513 = vadd.f32 %v12241, %v12377
        %v12514 = vadd.f32 %v12242, %v12378
        %v12515 = vadd.f32 %v12243, %v12379
        %v12516 = vadd.f32 %v12244, %v12380
        %v12517 = vadd.f32 %v12245, %v12381
        %v12518 = vadd.f32 %v12246, %v12382
        %v12519 = vadd.f32 %v12247, %v12383
        %v12520 = vadd.f32 %v12248, %v12384
        %v12521 = vadd.f32 %v12249, %v12385
        %v12522 = vadd.f32 %v12250, %v12386
        %v12523 = vadd.f32 %v12251, %v12387
        %v12524 = vadd.f32 %v12252, %v12388
        %v12525 = vadd.f32 %v12253, %v12389
        %v12526 = vadd.f32 %v12254, %v12390
        %v12527 = vadd.f32 %v12255, %v12391
        %v12528 = vadd.f32 %v12256, %v12392
        %v12529 = vadd.f32 %v12257, %v12393
        %v12530 = vadd.f32 %v12258, %v12394
        %v12531 = vadd.f32 %v12259, %v12395
        %v12532 = vadd.f32 %v12260, %v12396
        %v12533 = vadd.f32 %v12261, %v12397
        %v12534 = vadd.f32 %v12262, %v12398
        %v12535 = vadd.f32 %v12263, %v12399
        %v12536 = vadd.f32 %v12264, %v12400
        %v12537 = vadd.f32 %v12265, %v12401
        %v12538 = vadd.f32 %v12266, %v12402
        %v12539 = vadd.f32 %v12267, %v12403
        %v12540 = vadd.f32 %v12268, %v12404
        %v12541 = vadd.f32 %v12269, %v12405
        %v12542 = vadd.f32 %v12270, %v12406
        %v12543 = vadd.f32 %v12271, %v12407
        %v12544 = vadd.f32 %v12272, %v12408
        %v12545 = vadd.f32 %v12273, %v12409
        %v12546 = vadd.f32 %v12274, %v12410
        %v12547 = vadd.f32 %v12275, %v12411
        %v12548 = vadd.f32 %v12276, %v12412
        %v12549 = vadd.f32 %v12277, %v12413
        %v12550 = vadd.f32 %v12278, %v12414
        %v12551 = vadd.f32 %v12279, %v12415
        %v12552 = vadd.f32 %v12280, %v12416
        %v12553 = vadd.f32 %v12281, %v12417
        %v12554 = vadd.f32 %v12282, %v12418
        %v12555 = vadd.f32 %v12283, %v12419
        %v12556 = vadd.f32 %v12284, %v12420
        %v12557 = vadd.f32 %v12285, %v12421
        %v12558 = vadd.f32 %v12286, %v12422
        %v12559 = vadd.f32 %v12287, %v12423
        %v12560 = vadd.f32 %v12288, %v12424
        %v12561 = vadd.f32 %v12289, %v12425
        %v12562 = vadd.f32 %v12290, %v12426
        %v12563 = vadd.f32 %v12291, %v12427
        %v12564 = vadd.f32 %v12292, %v12428
        %v12565 = vadd.f32 %v12293, %v12429
        %v12566 = vadd.f32 %v12294, %v12430
        %v12567 = vadd.f32 %v12295, %v12431
        %v12568 = vadd.f32 %v12296, %v12432
        %v12569 = vadd.f32 %v12297, %v12433
        %v12570 = vadd.f32 %v12298, %v12434
        %v12571 = vadd.f32 %v12299, %v12435
        %v12572 = vadd.f32 %v12300, %v12436
        %v12573 = vadd.f32 %v12301, %v12437
        %v12574 = vadd.f32 %v12302, %v12438
        %v12575 = vadd.f32 %v12303, %v12439
        %v12576 = vadd.f32 %v12304, %v12440
        %v12577 = vadd.f32 %v12305, %v12441
        %v12578 = vadd.f32 %v12306, %v12442
        %v12579 = vmax.f32 %v12443, 0.0
        %v12580 = vmax.f32 %v12444, 0.0
        %v12581 = vmax.f32 %v12445, 0.0
        %v12582 = vmax.f32 %v12446, 0.0
        %v12583 = vmax.f32 %v12447, 0.0
        %v12584 = vmax.f32 %v12448, 0.0
        %v12585 = vmax.f32 %v12449, 0.0
        %v12586 = vmax.f32 %v12450, 0.0
        %v12587 = vmax.f32 %v12451, 0.0
        %v12588 = vmax.f32 %v12452, 0.0
        %v12589 = vmax.f32 %v12453, 0.0
        %v12590 = vmax.f32 %v12454, 0.0
        %v12591 = vmax.f32 %v12455, 0.0
        %v12592 = vmax.f32 %v12456, 0.0
        %v12593 = vmax.f32 %v12457, 0.0
        %v12594 = vmax.f32 %v12458, 0.0
        %v12595 = vmax.f32 %v12459, 0.0
        %v12596 = vmax.f32 %v12460, 0.0
        %v12597 = vmax.f32 %v12461, 0.0
        %v12598 = vmax.f32 %v12462, 0.0
        %v12599 = vmax.f32 %v12463, 0.0
        %v12600 = vmax.f32 %v12464, 0.0
        %v12601 = vmax.f32 %v12465, 0.0
        %v12602 = vmax.f32 %v12466, 0.0
        %v12603 = vmax.f32 %v12467, 0.0
        %v12604 = vmax.f32 %v12468, 0.0
        %v12605 = vmax.f32 %v12469, 0.0
        %v12606 = vmax.f32 %v12470, 0.0
        %v12607 = vmax.f32 %v12471, 0.0
        %v12608 = vmax.f32 %v12472, 0.0
        %v12609 = vmax.f32 %v12473, 0.0
        %v12610 = vmax.f32 %v12474, 0.0
        %v12611 = vmax.f32 %v12475, 0.0
        %v12612 = vmax.f32 %v12476, 0.0
        %v12613 = vmax.f32 %v12477, 0.0
        %v12614 = vmax.f32 %v12478, 0.0
        %v12615 = vmax.f32 %v12479, 0.0
        %v12616 = vmax.f32 %v12480, 0.0
        %v12617 = vmax.f32 %v12481, 0.0
        %v12618 = vmax.f32 %v12482, 0.0
        %v12619 = vmax.f32 %v12483, 0.0
        %v12620 = vmax.f32 %v12484, 0.0
        %v12621 = vmax.f32 %v12485, 0.0
        %v12622 = vmax.f32 %v12486, 0.0
        %v12623 = vmax.f32 %v12487, 0.0
        %v12624 = vmax.f32 %v12488, 0.0
        %v12625 = vmax.f32 %v12489, 0.0
        %v12626 = vmax.f32 %v12490, 0.0
        %v12627 = vmax.f32 %v12491, 0.0
        %v12628 = vmax.f32 %v12492, 0.0
        %v12629 = vmax.f32 %v12493, 0.0
        %v12630 = vmax.f32 %v12494, 0.0
        %v12631 = vmax.f32 %v12495, 0.0
        %v12632 = vmax.f32 %v12496, 0.0
        %v12633 = vmax.f32 %v12497, 0.0
        %v12634 = vmax.f32 %v12498, 0.0
        %v12635 = vmax.f32 %v12499, 0.0
        %v12636 = vmax.f32 %v12500, 0.0
        %v12637 = vmax.f32 %v12501, 0.0
        %v12638 = vmax.f32 %v12502, 0.0
        %v12639 = vmax.f32 %v12503, 0.0
        %v12640 = vmax.f32 %v12504, 0.0
        %v12641 = vmax.f32 %v12505, 0.0
        %v12642 = vmax.f32 %v12506, 0.0
        %v12643 = vmax.f32 %v12507, 0.0
        %v12644 = vmax.f32 %v12508, 0.0
        %v12645 = vmax.f32 %v12509, 0.0
        %v12646 = vmax.f32 %v12510, 0.0
        %v12647 = vmax.f32 %v12511, 0.0
        %v12648 = vmax.f32 %v12512, 0.0
        %v12649 = vmax.f32 %v12513, 0.0
        %v12650 = vmax.f32 %v12514, 0.0
        %v12651 = vmax.f32 %v12515, 0.0
        %v12652 = vmax.f32 %v12516, 0.0
        %v12653 = vmax.f32 %v12517, 0.0
        %v12654 = vmax.f32 %v12518, 0.0
        %v12655 = vmax.f32 %v12519, 0.0
        %v12656 = vmax.f32 %v12520, 0.0
        %v12657 = vmax.f32 %v12521, 0.0
        %v12658 = vmax.f32 %v12522, 0.0
        %v12659 = vmax.f32 %v12523, 0.0
        %v12660 = vmax.f32 %v12524, 0.0
        %v12661 = vmax.f32 %v12525, 0.0
        %v12662 = vmax.f32 %v12526, 0.0
        %v12663 = vmax.f32 %v12527, 0.0
        %v12664 = vmax.f32 %v12528, 0.0
        %v12665 = vmax.f32 %v12529, 0.0
        %v12666 = vmax.f32 %v12530, 0.0
        %v12667 = vmax.f32 %v12531, 0.0
        %v12668 = vmax.f32 %v12532, 0.0
        %v12669 = vmax.f32 %v12533, 0.0
        %v12670 = vmax.f32 %v12534, 0.0
        %v12671 = vmax.f32 %v12535, 0.0
        %v12672 = vmax.f32 %v12536, 0.0
        %v12673 = vmax.f32 %v12537, 0.0
        %v12674 = vmax.f32 %v12538, 0.0
        %v12675 = vmax.f32 %v12539, 0.0
        %v12676 = vmax.f32 %v12540, 0.0
        %v12677 = vmax.f32 %v12541, 0.0
        %v12678 = vmax.f32 %v12542, 0.0
        %v12679 = vmax.f32 %v12543, 0.0
        %v12680 = vmax.f32 %v12544, 0.0
        %v12681 = vmax.f32 %v12545, 0.0
        %v12682 = vmax.f32 %v12546, 0.0
        %v12683 = vmax.f32 %v12547, 0.0
        %v12684 = vmax.f32 %v12548, 0.0
        %v12685 = vmax.f32 %v12549, 0.0
        %v12686 = vmax.f32 %v12550, 0.0
        %v12687 = vmax.f32 %v12551, 0.0
        %v12688 = vmax.f32 %v12552, 0.0
        %v12689 = vmax.f32 %v12553, 0.0
        %v12690 = vmax.f32 %v12554, 0.0
        %v12691 = vmax.f32 %v12555, 0.0
        %v12692 = vmax.f32 %v12556, 0.0
        %v12693 = vmax.f32 %v12557, 0.0
        %v12694 = vmax.f32 %v12558, 0.0
        %v12695 = vmax.f32 %v12559, 0.0
        %v12696 = vmax.f32 %v12560, 0.0
        %v12697 = vmax.f32 %v12561, 0.0
        %v12698 = vmax.f32 %v12562, 0.0
        %v12699 = vmax.f32 %v12563, 0.0
        %v12700 = vmax.f32 %v12564, 0.0
        %v12701 = vmax.f32 %v12565, 0.0
        %v12702 = vmax.f32 %v12566, 0.0
        %v12703 = vmax.f32 %v12567, 0.0
        %v12704 = vmax.f32 %v12568, 0.0
        %v12705 = vmax.f32 %v12569, 0.0
        %v12706 = vmax.f32 %v12570, 0.0
        %v12707 = vmax.f32 %v12571, 0.0
        %v12708 = vmax.f32 %v12572, 0.0
        %v12709 = vmax.f32 %v12573, 0.0
        %v12710 = vmax.f32 %v12574, 0.0
        %v12711 = vmax.f32 %v12575, 0.0
        %v12712 = vmax.f32 %v12576, 0.0
        %v12713 = vmax.f32 %v12577, 0.0
        %v12714 = vmax.f32 %v12578, 0.0
        %12715 = vst [vmem:[%s494] sm:$0xff] %v12579
        %12716 = vst [vmem:[%s494 + $0x8] sm:$0xff] %v12580
        %12717 = vst [vmem:[%s494 + $0x10] sm:$0xff] %v12581
        %12718 = vst [vmem:[%s494 + $0x18] sm:$0xff] %v12582
        %12719 = vst [vmem:[%s494 + $0x20] sm:$0xff] %v12583
        %12720 = vst [vmem:[%s494 + $0x28] sm:$0xff] %v12584
        %12721 = vst [vmem:[%s494 + $0x30] sm:$0xff] %v12585
        %12722 = vst [vmem:[%s494 + $0x38] sm:$0xff] %v12586
        %12723 = vst [vmem:[%s494 + $0x40] sm:$0xff] %v12587
        %12724 = vst [vmem:[%s494 + $0x48] sm:$0xff] %v12588
        %12725 = vst [vmem:[%s494 + $0x50] sm:$0xff] %v12589
        %12726 = vst [vmem:[%s494 + $0x58] sm:$0xff] %v12590
        %12727 = vst [vmem:[%s494 + $0x60] sm:$0xff] %v12591
        %12728 = vst [vmem:[%s494 + $0x68] sm:$0xff] %v12592
        %12729 = vst [vmem:[%s494 + $0x70] sm:$0xff] %v12593
        %12730 = vst [vmem:[%s494 + $0x78] sm:$0xff] %v12594
        %12731 = vst.msk [vmem:[%s494 + $0x80] sm:$0xff] %vm3310, %v12595
        %12732 = vst [vmem:[%s494 + $0x88] sm:$0xff] %v12596
        %12733 = vst [vmem:[%s494 + $0x90] sm:$0xff] %v12597
        %12734 = vst [vmem:[%s494 + $0x98] sm:$0xff] %v12598
        %12735 = vst [vmem:[%s494 + $0xa0] sm:$0xff] %v12599
        %12736 = vst [vmem:[%s494 + $0xa8] sm:$0xff] %v12600
        %12737 = vst [vmem:[%s494 + $0xb0] sm:$0xff] %v12601
        %12738 = vst [vmem:[%s494 + $0xb8] sm:$0xff] %v12602
        %12739 = vst [vmem:[%s494 + $0xc0] sm:$0xff] %v12603
        %12740 = vst [vmem:[%s494 + $0xc8] sm:$0xff] %v12604
        %12741 = vst [vmem:[%s494 + $0xd0] sm:$0xff] %v12605
        %12742 = vst [vmem:[%s494 + $0xd8] sm:$0xff] %v12606
        %12743 = vst [vmem:[%s494 + $0xe0] sm:$0xff] %v12607
        %12744 = vst [vmem:[%s494 + $0xe8] sm:$0xff] %v12608
        %12745 = vst [vmem:[%s494 + $0xf0] sm:$0xff] %v12609
        %12746 = vst [vmem:[%s494 + $0xf8] sm:$0xff] %v12610
        %12747 = vst [vmem:[%s494 + $0x100] sm:$0xff] %v12611
        %12748 = vst.msk [vmem:[%s494 + $0x108] sm:$0xff] %vm3310, %v12612
        %12749 = vst [vmem:[%s494 + $0x110] sm:$0xff] %v12613
        %12750 = vst [vmem:[%s494 + $0x118] sm:$0xff] %v12614
        %12751 = vst [vmem:[%s494 + $0x120] sm:$0xff] %v12615
        %12752 = vst [vmem:[%s494 + $0x128] sm:$0xff] %v12616
        %12753 = vst [vmem:[%s494 + $0x130] sm:$0xff] %v12617
        %12754 = vst [vmem:[%s494 + $0x138] sm:$0xff] %v12618
        %12755 = vst [vmem:[%s494 + $0x140] sm:$0xff] %v12619
        %12756 = vst [vmem:[%s494 + $0x148] sm:$0xff] %v12620
        %12757 = vst [vmem:[%s494 + $0x150] sm:$0xff] %v12621
        %12758 = vst [vmem:[%s494 + $0x158] sm:$0xff] %v12622
        %12759 = vst [vmem:[%s494 + $0x160] sm:$0xff] %v12623
        %12760 = vst [vmem:[%s494 + $0x168] sm:$0xff] %v12624
        %12761 = vst [vmem:[%s494 + $0x170] sm:$0xff] %v12625
        %12762 = vst [vmem:[%s494 + $0x178] sm:$0xff] %v12626
        %12763 = vst [vmem:[%s494 + $0x180] sm:$0xff] %v12627
        %12764 = vst [vmem:[%s494 + $0x188] sm:$0xff] %v12628
        %12765 = vst.msk [vmem:[%s494 + $0x190] sm:$0xff] %vm3310, %v12629
        %12766 = vst [vmem:[%s494 + $0x198] sm:$0xff] %v12630
        %12767 = vst [vmem:[%s494 + $0x1a0] sm:$0xff] %v12631
        %12768 = vst [vmem:[%s494 + $0x1a8] sm:$0xff] %v12632
        %12769 = vst [vmem:[%s494 + $0x1b0] sm:$0xff] %v12633
        %12770 = vst [vmem:[%s494 + $0x1b8] sm:$0xff] %v12634
        %12771 = vst [vmem:[%s494 + $0x1c0] sm:$0xff] %v12635
        %12772 = vst [vmem:[%s494 + $0x1c8] sm:$0xff] %v12636
        %12773 = vst [vmem:[%s494 + $0x1d0] sm:$0xff] %v12637
        %12774 = vst [vmem:[%s494 + $0x1d8] sm:$0xff] %v12638
        %12775 = vst [vmem:[%s494 + $0x1e0] sm:$0xff] %v12639
        %12776 = vst [vmem:[%s494 + $0x1e8] sm:$0xff] %v12640
        %12777 = vst [vmem:[%s494 + $0x1f0] sm:$0xff] %v12641
        %12778 = vst [vmem:[%s494 + $0x1f8] sm:$0xff] %v12642
        %12779 = vst [vmem:[%s494 + $0x200] sm:$0xff] %v12643
        %12780 = vst [vmem:[%s494 + $0x208] sm:$0xff] %v12644
        %12781 = vst [vmem:[%s494 + $0x210] sm:$0xff] %v12645
        %12782 = vst.msk [vmem:[%s494 + $0x218] sm:$0xff] %vm3310, %v12646
        %12783 = vst [vmem:[%s494 + $0x220] sm:$0xff] %v12647
        %12784 = vst [vmem:[%s494 + $0x228] sm:$0xff] %v12648
        %12785 = vst [vmem:[%s494 + $0x230] sm:$0xff] %v12649
        %12786 = vst [vmem:[%s494 + $0x238] sm:$0xff] %v12650
        %12787 = vst [vmem:[%s494 + $0x240] sm:$0xff] %v12651
        %12788 = vst [vmem:[%s494 + $0x248] sm:$0xff] %v12652
        %12789 = vst [vmem:[%s494 + $0x250] sm:$0xff] %v12653
        %12790 = vst [vmem:[%s494 + $0x258] sm:$0xff] %v12654
        %12791 = vst [vmem:[%s494 + $0x260] sm:$0xff] %v12655
        %12792 = vst [vmem:[%s494 + $0x268] sm:$0xff] %v12656
        %12793 = vst [vmem:[%s494 + $0x270] sm:$0xff] %v12657
        %12794 = vst [vmem:[%s494 + $0x278] sm:$0xff] %v12658
        %12795 = vst [vmem:[%s494 + $0x280] sm:$0xff] %v12659
        %12796 = vst [vmem:[%s494 + $0x288] sm:$0xff] %v12660
        %12797 = vst [vmem:[%s494 + $0x290] sm:$0xff] %v12661
        %12798 = vst [vmem:[%s494 + $0x298] sm:$0xff] %v12662
        %12799 = vst.msk [vmem:[%s494 + $0x2a0] sm:$0xff] %vm3310, %v12663
        %12800 = vst [vmem:[%s494 + $0x2a8] sm:$0xff] %v12664
        %12801 = vst [vmem:[%s494 + $0x2b0] sm:$0xff] %v12665
        %12802 = vst [vmem:[%s494 + $0x2b8] sm:$0xff] %v12666
        %12803 = vst [vmem:[%s494 + $0x2c0] sm:$0xff] %v12667
        %12804 = vst [vmem:[%s494 + $0x2c8] sm:$0xff] %v12668
        %12805 = vst [vmem:[%s494 + $0x2d0] sm:$0xff] %v12669
        %12806 = vst [vmem:[%s494 + $0x2d8] sm:$0xff] %v12670
        %12807 = vst [vmem:[%s494 + $0x2e0] sm:$0xff] %v12671
        %12808 = vst [vmem:[%s494 + $0x2e8] sm:$0xff] %v12672
        %12809 = vst [vmem:[%s494 + $0x2f0] sm:$0xff] %v12673
        %12810 = vst [vmem:[%s494 + $0x2f8] sm:$0xff] %v12674
        %12811 = vst [vmem:[%s494 + $0x300] sm:$0xff] %v12675
        %12812 = vst [vmem:[%s494 + $0x308] sm:$0xff] %v12676
        %12813 = vst [vmem:[%s494 + $0x310] sm:$0xff] %v12677
        %12814 = vst [vmem:[%s494 + $0x318] sm:$0xff] %v12678
        %12815 = vst [vmem:[%s494 + $0x320] sm:$0xff] %v12679
        %12816 = vst.msk [vmem:[%s494 + $0x328] sm:$0xff] %vm3310, %v12680
        %12817 = vst [vmem:[%s494 + $0x330] sm:$0xff] %v12681
        %12818 = vst [vmem:[%s494 + $0x338] sm:$0xff] %v12682
        %12819 = vst [vmem:[%s494 + $0x340] sm:$0xff] %v12683
        %12820 = vst [vmem:[%s494 + $0x348] sm:$0xff] %v12684
        %12821 = vst [vmem:[%s494 + $0x350] sm:$0xff] %v12685
        %12822 = vst [vmem:[%s494 + $0x358] sm:$0xff] %v12686
        %12823 = vst [vmem:[%s494 + $0x360] sm:$0xff] %v12687
        %12824 = vst [vmem:[%s494 + $0x368] sm:$0xff] %v12688
        %12825 = vst [vmem:[%s494 + $0x370] sm:$0xff] %v12689
        %12826 = vst [vmem:[%s494 + $0x378] sm:$0xff] %v12690
        %12827 = vst [vmem:[%s494 + $0x380] sm:$0xff] %v12691
        %12828 = vst [vmem:[%s494 + $0x388] sm:$0xff] %v12692
        %12829 = vst [vmem:[%s494 + $0x390] sm:$0xff] %v12693
        %12830 = vst [vmem:[%s494 + $0x398] sm:$0xff] %v12694
        %12831 = vst [vmem:[%s494 + $0x3a0] sm:$0xff] %v12695
        %12832 = vst [vmem:[%s494 + $0x3a8] sm:$0xff] %v12696
        %12833 = vst.msk [vmem:[%s494 + $0x3b0] sm:$0xff] %vm3310, %v12697
        %12834 = vst [vmem:[%s494 + $0x3b8] sm:$0xff] %v12698
        %12835 = vst [vmem:[%s494 + $0x3c0] sm:$0xff] %v12699
        %12836 = vst [vmem:[%s494 + $0x3c8] sm:$0xff] %v12700
        %12837 = vst [vmem:[%s494 + $0x3d0] sm:$0xff] %v12701
        %12838 = vst [vmem:[%s494 + $0x3d8] sm:$0xff] %v12702
        %12839 = vst [vmem:[%s494 + $0x3e0] sm:$0xff] %v12703
        %12840 = vst [vmem:[%s494 + $0x3e8] sm:$0xff] %v12704
        %12841 = vst [vmem:[%s494 + $0x3f0] sm:$0xff] %v12705
        %12842 = vst [vmem:[%s494 + $0x3f8] sm:$0xff] %v12706
        %12843 = vst [vmem:[%s494 + $0x400] sm:$0xff] %v12707
        %12844 = vst [vmem:[%s494 + $0x408] sm:$0xff] %v12708
        %12845 = vst [vmem:[%s494 + $0x410] sm:$0xff] %v12709
        %12846 = vst [vmem:[%s494 + $0x418] sm:$0xff] %v12710
        %12847 = vst [vmem:[%s494 + $0x420] sm:$0xff] %v12711
        %12848 = vst [vmem:[%s494 + $0x428] sm:$0xff] %v12712
        %12849 = vst [vmem:[%s494 + $0x430] sm:$0xff] %v12713
        %12850 = vst.msk [vmem:[%s494 + $0x438] sm:$0xff] %vm3310, %v12714
        %s12851 = sand.u32 %s296, 1
        %s12852 = scalar_lea.sflag [#allocation6], %s12851
        %s12853 = sand.u32 %s296, 1
        %s12854 = smul.addr %s12853, 1088
        %s12855 = scalar_lea.vmem [#allocation13], %s12854
        // Predicated region
        $region89: #{block8_forward.1} parent=67 // pred_check
          %p12856 = pneg %p306
        $region90: #{block8_forward.1} parent=67 // pred_check_branch
          %12858 = sbr.rel (%p12856) target = $region92
        $region91: #{block8_forward.1} parent=67 // pred_region
          %s12859 = smul.u32 8, %s31
          %12861 = vsyncadd %s12852, 0
          %s12862 = smul.addr %s12859, 17
          %s12863 = smul.addr %s12862, 8
          %s12864 = scalar_lea.hbm %s12, %s12863
          %s12865 = sshll.u32 %s12855, 4
          %s12866 = int_to_ptr.vmem [resolvable:$true] %s12865
          %s12867 = sshll.u32 %s12864, 4
          %s12868 = int_to_ptr.hbm [resolvable:$true] %s12867
          %12873 = dma.vmem_to_hbm [thread:$0]  %s12866, 17408, %s12868, %s12852, 2176, 2176, 136
        $region92: #{block8_forward.1} parent=67 // pred_fallthru
          _
      $region68: #{block8_forward.1} parent=5 // pred_fallthru
        _
      %p12874 = scmp.le.s32.totalorder 2, %s26
      // Predicated region
      $region93: #{block8_forward.1} parent=5 // pred_check
        %p12875 = pneg %p12874
      $region94: #{block8_forward.1} parent=5 // pred_check_branch
        %12877 = sbr.rel (%p12875) target = $region96
      $region95: #{block8_forward.1} parent=5 // pred_region
        %s12878 = ssub.s32 %s26, 2
        // Predicated region
        $region97: #{block8_forward.1} parent=95 // pred_check
          %p12879 = pneg %p312
        $region98: #{block8_forward.1} parent=95 // pred_check_branch
          %12881 = sbr.rel (%p12879) target = $region100
        $region99: #{block8_forward.1} parent=95 // pred_region
          %s12882 = sand.u32 %s297, 1
          %s12883 = scalar_lea.sflag [#allocation6], %s12882
          %s12884 = sand.u32 %s297, 1
          %s12885 = smul.addr %s12884, 1088
          %s12886 = scalar_lea.vmem [#allocation13], %s12885
          %12888 = dma.done %s12883, 17408
        $region100: #{block8_forward.1} parent=95 // pred_fallthru
          _
      $region96: #{block8_forward.1} parent=5 // pred_fallthru
        _
    $region6: #{block8_forward.1} parent=1 // loop_footer
      %s30 = sadd.s32 1, %s26
    $region7: #{block8_forward.1} parent=1 // loop_footer_branch
      %25 = sbr.rel target = $region3
    $region8: #{block8_forward.1} parent=1 // loop_exit
      _
    %12889 = vsyncpa [#allocation5], 1
    %s12890 = scalar_lea.sflag [#allocation5], 1
    %12891 = vsyncpa %s12890, 1
    %12892 = vsyncpa [#allocation8], 1
    %12893 = vsyncpa [#allocation11], 1
    %12894 = vsyncpa [#allocation6], 1
    %s12895 = scalar_lea.sflag [#allocation6], 1
    %12896 = vsyncpa %s12895, 1

</llo_original>
